<compile_context>
chip_gen: v7x
topology: tpu7x:2x2x1
jax: 0.10.0
libtpu: 0.0.40
codegen_flags: <defaults>
</compile_context>

<pallas_src>
import math
from functools import partial

import jax
import jax.numpy as jnp
from jax.experimental import pallas as pl
from jax.experimental.pallas import tpu as pltpu


def _round_up(x, m):
    return ((x + m - 1) // m) * m


def _vmem_limit(bytes_needed):
    # Default scoped-VMEM limits (16 MiB v5e / 32 MiB v6e,v7x) are too small for
    # weight-resident kernels at realistic sizes.  Leave headroom, cap below
    # v7x's 64 MiB/TC physical VMEM (also fine on v5e/v6e).
    return int(min(max(2 * int(bytes_needed), 32 * 1024 * 1024), 56 * 1024 * 1024))


# --------- probe: is pipeline_mode=pl.Buffered(1) supported here? ----------- #

def _probe_single_buffering():
    """Single-buffering of grid-invariant blocks halves resident VMEM (key on
    v7x's 64 MiB/TC).  Probe once so we fall back cleanly on older JAX."""
    try:
        def _k(x_ref, o_ref):
            o_ref[...] = x_ref[...] + 1.0

        y = pl.pallas_call(
            _k,
            grid=(2,),
            in_specs=[pl.BlockSpec((8, 128), lambda i: (0, 0),
                                   pipeline_mode=pl.Buffered(1))],
            out_specs=pl.BlockSpec((8, 128), lambda i: (0, 0)),
            out_shape=jax.ShapeDtypeStruct((8, 128), jnp.float32),
        )(jnp.zeros((8, 128), jnp.float32))
        jax.block_until_ready(y)
        return True
    except Exception:
        return False


_SINGLE_BUF_OK = _probe_single_buffering()


def _resident(block_shape, index_map):
    """BlockSpec for a grid-invariant (resident) block."""
    if _SINGLE_BUF_OK:
        return pl.BlockSpec(block_shape, index_map, pipeline_mode=pl.Buffered(1))
    return pl.BlockSpec(block_shape, index_map)


# ----------------------------- Pallas kernels ------------------------------ #

def input_gates_kernel(emb_ref, w_ref, b_ref, out_ref):
    """Layer-0 input gates for a chunk of timesteps: (CH, Ep) @ (Ep, 3Hp) + b."""
    out_ref[...] = (
        jnp.dot(emb_ref[...], w_ref[...], preferred_element_type=jnp.float32)
        + b_ref[...])


def gru_seq_kernel(gx0_ref, wx_ref, uh_ref, uht_ref, b_ref, h0_ref,
                   top_ref, hfin_ref, *, num_layers, u_steps, h_pad, b_pad):
    """Fused stacked-GRU recurrence; each grid step advances U timesteps.

    gx0_ref : (U*Bp, 3Hp) f32   precomputed layer-0 input gates (bias included)
    wx_ref  : (max(L-1,1), Hp, 3Hp) bf16  input weights for layers >= 1 (resident)
    uh_ref  : (L, Hp, 2Hp) bf16 recurrent weights r|z (resident)
    uht_ref : (L, Hp, Hp)  bf16 recurrent weights for h~ (resident)
    b_ref   : (max(L-1,1), 1, 3Hp) f32 biases for layers >= 1 (resident)
    h0_ref  : (L, Bp, Hp)  f32  initial hidden state (resident)
    top_ref : (U*Bp, Hp)   f32  top-layer hidden states for this chunk
    hfin_ref: (L, Bp, Hp)  f32  running hidden state (constant-index output ->
                                VMEM-resident accumulator; written every step)
    """
    i = pl.program_id(0)

    @pl.when(i == 0)
    def _():
        hfin_ref[...] = h0_ref[...]

    def cell(gx, h_prev, uh, uht):
        # bf16 operands on the MXU, f32 accumulation, f32 gate elementwise math.
        gh = jnp.dot(h_prev.astype(jnp.bfloat16), uh,
                     preferred_element_type=jnp.float32)
        r = jax.nn.sigmoid(gx[:, 0:h_pad] + gh[:, 0:h_pad])
        z = jax.nn.sigmoid(gx[:, h_pad:2 * h_pad] + gh[:, h_pad:2 * h_pad])
        h_tilde = jnp.tanh(
            gx[:, 2 * h_pad:3 * h_pad]
            + jnp.dot((r * h_prev).astype(jnp.bfloat16), uht,
                      preferred_element_type=jnp.float32))
        return (1.0 - z) * h_prev + z * h_tilde

    for u in range(u_steps):                          # static unroll over time
        r0, r1 = u * b_pad, (u + 1) * b_pad
        # Layer 0: input-path gates were precomputed (hoisted out of the loop).
        h_new = cell(gx0_ref[r0:r1, :], hfin_ref[0], uh_ref[0], uht_ref[0])
        hfin_ref[0] = h_new
        x = h_new
        for l in range(1, num_layers):                # static unroll over layers
            gx = jnp.dot(x.astype(jnp.bfloat16), wx_ref[l - 1],
                         preferred_element_type=jnp.float32) + b_ref[l - 1]
            h_new = cell(gx, hfin_ref[l], uh_ref[l], uht_ref[l])
            hfin_ref[l] = h_new
            x = h_new
        top_ref[r0:r1, :] = x                          # dropout(identity)


def decode_kernel(h_ref, w_ref, b_ref, out_ref):
    """Output projection tile: (TM, Hp) @ (Hp, TV) + (1, TV)."""
    out_ref[...] = (
        jnp.dot(h_ref[...].astype(jnp.bfloat16), w_ref[...],
                preferred_element_type=jnp.float32)
        + b_ref[...])


# ------------------------------- parameters -------------------------------- #

def init_params(key, emb_size, hidden_size, vocab_size, num_layers):
    keys = jax.random.split(key, 2 + 4 * num_layers)
    params = {}
    # Embedding and decoder: uniform(-0.1, 0.1), decoder bias = 0, no emb bias.
    params["embedding"] = jax.random.uniform(
        keys[0], (vocab_size, emb_size), jnp.float32, -0.1, 0.1)
    params["decode_w_t"] = jax.random.uniform(          # stored transposed (H, V)
        keys[1], (hidden_size, vocab_size), jnp.float32, -0.1, 0.1)
    params["decode_b"] = jnp.zeros((vocab_size,), jnp.float32)

    k = math.sqrt(1.0 / hidden_size)
    cells = []
    for layer in range(num_layers):
        in_size = emb_size if layer == 0 else hidden_size
        kk = keys[2 + 4 * layer: 2 + 4 * (layer + 1)]
        cells.append({
            "W_x": jax.random.uniform(kk[0], (in_size, 3 * hidden_size),
                                      jnp.float32, -k, k),
            "U_h": jax.random.uniform(kk[1], (hidden_size, 2 * hidden_size),
                                      jnp.float32, -k, k),
            "U_h_tilde": jax.random.uniform(kk[2], (hidden_size, hidden_size),
                                            jnp.float32, -k, k),
            # init_weights_uniform first fills the bias uniform, then zeros it.
            "bias_rzh": jnp.zeros((3 * hidden_size,), jnp.float32),
        })
    params["cells"] = cells
    return params


def pack_params(params):
    """ONE-TIME pack/pad of parameters into kernel layouts (hoisted out of the
    per-call forward path).  Matmul operands stored in bf16; biases in f32."""
    cells = params["cells"]
    L = len(cells)
    V, E = params["embedding"].shape
    H = cells[0]["U_h_tilde"].shape[0]
    Hp = _round_up(H, 128)
    Ep = _round_up(E, 128)
    Vp = _round_up(V, 128)

    def pad_gates(w, in_dim, in_pad, ngates):
        out = jnp.zeros((in_pad, ngates * Hp), jnp.float32)
        for g in range(ngates):
            out = out.at[:in_dim, g * Hp:g * Hp + H].set(w[:, g * H:(g + 1) * H])
        return out

    def pad_bias(b, ngates):
        out = jnp.zeros((ngates * Hp,), jnp.float32)
        for g in range(ngates):
            out = out.at[g * Hp:g * Hp + H].set(b[g * H:(g + 1) * H])
        return out

    emb_tab = (jnp.zeros((V, Ep), jnp.float32)
               .at[:, :E].set(params["embedding"])).astype(jnp.bfloat16)

    wx0 = pad_gates(cells[0]["W_x"], E, Ep, 3).astype(jnp.bfloat16)
    b0 = pad_bias(cells[0]["bias_rzh"], 3)[None, :]                 # (1, 3Hp) f32

    n_rest = max(L - 1, 1)
    wx_rest = jnp.zeros((n_rest, Hp, 3 * Hp), jnp.bfloat16)
    b_rest = jnp.zeros((n_rest, 1, 3 * Hp), jnp.float32)
    uh = jnp.zeros((L, Hp, 2 * Hp), jnp.bfloat16)
    uht = jnp.zeros((L, Hp, Hp), jnp.bfloat16)
    for l in range(L):
        c = cells[l]
        uh = uh.at[l].set(pad_gates(c["U_h"], H, Hp, 2).astype(jnp.bfloat16))
        uht = uht.at[l, :H, :H].set(c["U_h_tilde"].astype(jnp.bfloat16))
        if l >= 1:
            wx_rest = wx_rest.at[l - 1].set(
                pad_gates(c["W_x"], H, Hp, 3).astype(jnp.bfloat16))
            b_rest = b_rest.at[l - 1, 0].set(pad_bias(c["bias_rzh"], 3))

    dec_w = (jnp.zeros((Hp, Vp), jnp.float32)
             .at[:H, :V].set(params["decode_w_t"])).astype(jnp.bfloat16)
    dec_b = jnp.zeros((1, Vp), jnp.float32).at[0, :V].set(params["decode_b"])

    return {"emb_table": emb_tab, "wx0": wx0, "b0": b0,
            "wx_rest": wx_rest, "b_rest": b_rest, "uh": uh, "uht": uht,
            "dec_w": dec_w, "dec_b": dec_b}


# --------------------------------- forward --------------------------------- #

@jax.jit
def gru_forward(tokens, hidden, packed):
    """tokens: (seq_len, batch) int32; hidden: (num_layers, batch, hidden).

    Returns (logits (seq_len, batch, vocab), final hidden (num_layers, batch, hidden)).
    """
    T, batch = tokens.shape
    L, _, H = hidden.shape
    V, Ep = packed["emb_table"].shape
    Hp = packed["uht"].shape[-1]
    Vp = packed["dec_w"].shape[-1]
    G3 = 3 * Hp
    Bp = _round_up(batch, 8)
    TB = T * Bp

    # Timesteps processed per grid step (largest divisor of T that is <= 8).
    U = 1
    for u in range(min(T, 8), 0, -1):
        if T % u == 0:
            U = u
            break
    CH = U * Bp                                   # rows per chunk

    # ---- embedding gather straight into the padded flat layout (bf16) ----
    tok_p = tokens if Bp == batch else \
        jnp.zeros((T, Bp), tokens.dtype).at[:, :batch].set(tokens)
    emb_flat = packed["emb_table"][tok_p.reshape(TB)]             # (TB, Ep) bf16

    h0_pad = jnp.zeros((L, Bp, Hp), jnp.float32).at[:, :batch, :H].set(hidden)

    # ---- layer-0 input gates for ALL timesteps: one batched, parallel call ----
    ig_bytes = 2 * CH * Ep * 2 + Ep * G3 * 2 + G3 * 4 + 2 * CH * G3 * 4
    gx0 = pl.pallas_call(
        input_gates_kernel,
        grid_spec=pltpu.PrefetchScalarGridSpec(
            num_scalar_prefetch=0,
            grid=(T // U,),
            in_specs=[
                pl.BlockSpec((CH, Ep), lambda i: (i, 0)),     # emb chunk (stream)
                _resident((Ep, G3), lambda i: (0, 0)),        # W_x[0]  (resident)
                _resident((1, G3), lambda i: (0, 0)),         # bias[0] (resident)
            ],
            out_specs=pl.BlockSpec((CH, G3), lambda i: (i, 0)),
        ),
        out_shape=jax.ShapeDtypeStruct((TB, G3), jnp.float32),
        compiler_params=pltpu.CompilerParams(
            dimension_semantics=("parallel",),
            vmem_limit_bytes=_vmem_limit(ig_bytes)),
    )(emb_flat, packed["wx0"], packed["b0"])

    # ---- fused recurrence: grid over chunks of U timesteps ----
    n_rest = max(L - 1, 1)
    nbuf = 1 if _SINGLE_BUF_OK else 2
    rec_bytes = (2 * CH * G3 * 4
                 + nbuf * (n_rest * Hp * G3 * 2 + L * Hp * 2 * Hp * 2
                           + L * Hp * Hp * 2 + n_rest * G3 * 4 + L * Bp * Hp * 4)
                 + 2 * CH * Hp * 4 + 2 * L * Bp * Hp * 4)
    kernel = partial(gru_seq_kernel, num_layers=L, u_steps=U, h_pad=Hp, b_pad=Bp)
    top_h, h_fin = pl.pallas_call(
        kernel,
        grid_spec=pltpu.PrefetchScalarGridSpec(
            num_scalar_prefetch=0,
            grid=(T // U,),
            in_specs=[
                pl.BlockSpec((CH, G3), lambda i: (i, 0)),           # gx0 chunk
                _resident((n_rest, Hp, G3), lambda i: (0, 0, 0)),   # W_x  l>=1
                _resident((L, Hp, 2 * Hp), lambda i: (0, 0, 0)),    # U_h
                _resident((L, Hp, Hp), lambda i: (0, 0, 0)),        # U_h~
                _resident((n_rest, 1, G3), lambda i: (0, 0, 0)),    # bias l>=1
                _resident((L, Bp, Hp), lambda i: (0, 0, 0)),        # h0
            ],
            out_specs=(
                pl.BlockSpec((CH, Hp), lambda i: (i, 0)),           # top-layer h
                pl.BlockSpec((L, Bp, Hp), lambda i: (0, 0, 0)),     # final hidden
            ),
        ),
        out_shape=(jax.ShapeDtypeStruct((TB, Hp), jnp.float32),
                   jax.ShapeDtypeStruct((L, Bp, Hp), jnp.float32)),
        input_output_aliases={5: 1},                  # h0 HBM buffer -> h_fin
        compiler_params=pltpu.CompilerParams(
            dimension_semantics=("arbitrary",),
            vmem_limit_bytes=_vmem_limit(rec_bytes)),
    )(gx0, packed["wx_rest"], packed["uh"], packed["uht"],
      packed["b_rest"], h0_pad)

    # ---- output projection: row- and vocab-tiled, both axes parallel ----
    TM = TB
    for cand in (1024, 512, 256):
        if TB % cand == 0:
            TM = cand
            break
    TV = 128
    for cand in (2048, 1024, 512, 256, 128):
        if Vp % cand == 0:
            TV = cand
            break
    dec_bytes = 2 * (TM * Hp * 4 + Hp * TV * 2 + TV * 4 + TM * TV * 4)
    logits_flat = pl.pallas_call(
        decode_kernel,
        grid_spec=pltpu.PrefetchScalarGridSpec(
            num_scalar_prefetch=0,
            grid=(TB // TM, Vp // TV),
            in_specs=[
                pl.BlockSpec((TM, Hp), lambda i, j: (i, 0)),   # hidden row tile
                pl.BlockSpec((Hp, TV), lambda i, j: (0, j)),   # vocab tile of W
                pl.BlockSpec((1, TV), lambda i, j: (0, j)),    # vocab tile of b
            ],
            out_specs=pl.BlockSpec((TM, TV), lambda i, j: (i, j)),
        ),
        out_shape=jax.ShapeDtypeStruct((TB, Vp), jnp.float32),
        compiler_params=pltpu.CompilerParams(
            dimension_semantics=("parallel", "parallel"),
            vmem_limit_bytes=_vmem_limit(dec_bytes)),
    )(top_h, packed["dec_w"], packed["dec_b"])

    logits = logits_flat.reshape(T, Bp, Vp)[:, :batch, :V]
    h_final = h_fin[:, :batch, :H]
    return logits, h_final


# ------------------------ pure-JAX reference (check) ------------------------ #

def gru_forward_ref(tokens, hidden, params):
    hp = jax.lax.Precision.HIGHEST
    T = tokens.shape[0]
    L, _, H = hidden.shape
    emb = params["embedding"][tokens]
    h_layers = [hidden[l] for l in range(L)]
    logits = []
    for t in range(T):
        x = emb[t]
        for l in range(L):
            c = params["cells"][l]
            h = h_layers[l]
            wx = jnp.dot(x, c["W_x"], precision=hp) + c["bias_rzh"][None, :]
            uh = jnp.dot(h, c["U_h"], precision=hp)
            r = jax.nn.sigmoid(wx[:, 0:H] + uh[:, 0:H])
            z = jax.nn.sigmoid(wx[:, H:2 * H] + uh[:, H:2 * H])
            h_tilde = jnp.tanh(wx[:, 2 * H:3 * H]
                               + jnp.dot(r * h, c["U_h_tilde"], precision=hp))
            h_new = (1.0 - z) * h + z * h_tilde
            h_layers[l] = h_new
            x = h_new
        logits.append(jnp.dot(x, params["decode_w_t"], precision=hp)
                      + params["decode_b"][None, :])
    return jnp.stack(logits), jnp.stack(h_layers)


# --------------------------------- main ------------------------------------ #

if __name__ == "__main__":
    emb_size = 32
    hidden_size = 64
    seq_len = 16          # exercises grid > 1 (U = 8 timesteps per grid step)
    batch_size = 4
    vocab_size = 128
    num_layers = 2

    key = jax.random.PRNGKey(0)
    k_par, k_tok = jax.random.split(key)
    params = init_params(k_par, emb_size, hidden_size, vocab_size, num_layers)
    packed = pack_params(params)       # one-time weight pack/pad (out of forward)

    tokens = jax.random.randint(k_tok, (seq_len, batch_size), 0, vocab_size,
                                dtype=jnp.int32)
    hidden0 = jnp.zeros((num_layers, batch_size, hidden_size), jnp.float32)

    logits, h_final = gru_forward(tokens, hidden0, packed)
    jax.block_until_ready((logits, h_final))

    assert logits.shape == (seq_len, batch_size, vocab_size)
    assert h_final.shape == (num_layers, batch_size, hidden_size)

    # Numerical sanity check against the pure-JAX (HIGHEST precision) reference.
    # The kernels use bf16 MXU operands with f32 accumulation, hence the slightly
    # relaxed tolerance.
    ref_logits, ref_h = gru_forward_ref(tokens, hidden0, params)
    assert float(jnp.max(jnp.abs(logits - ref_logits))) < 2e-2
    assert float(jnp.max(jnp.abs(h_final - ref_h))) < 2e-2

    print("KERNEL_OK")
</pallas_src>

<mosaic_0001>
module attributes {stable_mosaic.version = 11 : i64} {
  func.func @_k(%arg0: i32, %arg1: memref<8x128xf32, #tpu.memory_space<vmem>>, %arg2: memref<8x128xf32, #tpu.memory_space<vmem>>) attributes {dimension_semantics = [#tpu.dimension_semantics<arbitrary>], iteration_bounds = array<i64: 2>, scalar_prefetch = 0 : i64, scratch_operands = 0 : i64, tpu.core_type = #tpu.core_type<tc>, window_params = [{pipeline_mode = #tpu.pipeline_mode<synchronous>, transform_indices = @transform_0, window_bounds = array<i64: 8, 128>}, {pipeline_mode = #tpu.pipeline_mode<synchronous>, transform_indices = @transform_1, window_bounds = array<i64: 8, 128>}]} {
    %c0 = arith.constant 0 : index
    %c0_0 = arith.constant 0 : index
    %0 = vector.load %arg1[%c0, %c0_0] : memref<8x128xf32, #tpu.memory_space<vmem>>, vector<8x128xf32>
    %cst = arith.constant 1.000000e+00 : f32
    %1 = vector.broadcast %cst : f32 to vector<8x128xf32>
    %2 = arith.addf %0, %1 : vector<8x128xf32>
    %c0_1 = arith.constant 0 : index
    %c0_2 = arith.constant 0 : index
    %3 = vector.load %arg2[%c0_1, %c0_2] : memref<8x128xf32, #tpu.memory_space<vmem>>, vector<8x128xf32>
    tpu.vector_store %arg2[%c0_1, %c0_2], %2 {strides = array<i32>} : memref<8x128xf32, #tpu.memory_space<vmem>>, vector<8x128xf32>,
    return
  }
  func.func @transform_0(%arg0: i32) -> (i32, i32) {
    %c0_i32 = arith.constant 0 : i32
    %c0_i32_0 = arith.constant 0 : i32
    %c0_i32_1 = arith.constant 0 : i32
    return %c0_i32, %c0_i32_0 : i32, i32
  }
  func.func @transform_1(%arg0: i32) -> (i32, i32) {
    %c0_i32 = arith.constant 0 : i32
    %c0_i32_0 = arith.constant 0 : i32
    %c0_i32_1 = arith.constant 0 : i32
    return %c0_i32, %c0_i32_0 : i32, i32
  }
}

module attributes {stable_mosaic.version = 11 : i64} {
  func.func @input_gates_kernel(%arg0: i32, %arg1: memref<64x128xbf16, #tpu.memory_space<vmem>>, %arg2: memref<128x384xbf16, #tpu.memory_space<vmem>>, %arg3: memref<1x384xf32, #tpu.memory_space<vmem>>, %arg4: memref<64x384xf32, #tpu.memory_space<vmem>>) attributes {dimension_semantics = [#tpu.dimension_semantics<parallel>], iteration_bounds = array<i64: 2>, scalar_prefetch = 0 : i64, scratch_operands = 0 : i64, tpu.core_type = #tpu.core_type<tc>, window_params = [{transform_indices = @transform_0, window_bounds = array<i64: 64, 128>}, {pipeline_mode = #tpu.pipeline_mode<synchronous>, transform_indices = @transform_1, window_bounds = array<i64: 128, 384>}, {pipeline_mode = #tpu.pipeline_mode<synchronous>, transform_indices = @transform_2, window_bounds = array<i64: 1, 384>}, {transform_indices = @transform_3, window_bounds = array<i64: 64, 384>}]} {
    %c0 = arith.constant 0 : index
    %c0_0 = arith.constant 0 : index
    %0 = vector.load %arg1[%c0, %c0_0] : memref<64x128xbf16, #tpu.memory_space<vmem>>, vector<64x128xbf16>
    %c0_1 = arith.constant 0 : index
    %c0_2 = arith.constant 0 : index
    %1 = vector.load %arg2[%c0_1, %c0_2] : memref<128x384xbf16, #tpu.memory_space<vmem>>, vector<128x384xbf16>
    %cst = arith.constant dense<0.000000e+00> : vector<64x384xf32>
    %2 = tpu.matmul %0, %1, %cst {dimension_numbers = #tpu.dot_dimension_numbers<[1], [0], [0], [1], [0, 0, 1, 1], [], []>} : vector<64x128xbf16>, vector<128x384xbf16>, vector<64x384xf32> -> vector<64x384xf32>
    %c0_3 = arith.constant 0 : index
    %c0_4 = arith.constant 0 : index
    %3 = vector.load %arg3[%c0_3, %c0_4] : memref<1x384xf32, #tpu.memory_space<vmem>>, vector<1x384xf32>
    %4 = vector.broadcast %3 : vector<1x384xf32> to vector<64x384xf32>
    %5 = arith.addf %2, %4 : vector<64x384xf32>
    %c0_5 = arith.constant 0 : index
    %c0_6 = arith.constant 0 : index
    %6 = vector.load %arg4[%c0_5, %c0_6] : memref<64x384xf32, #tpu.memory_space<vmem>>, vector<64x384xf32>
    tpu.vector_store %arg4[%c0_5, %c0_6], %5 {strides = array<i32>} : memref<64x384xf32, #tpu.memory_space<vmem>>, vector<64x384xf32>,
    return
  }
  func.func @transform_0(%arg0: i32) -> (i32, i32) {
    %c0_i32 = arith.constant 0 : i32
    %c0_i32_0 = arith.constant 0 : i32
    return %arg0, %c0_i32 : i32, i32
  }
  func.func @transform_1(%arg0: i32) -> (i32, i32) {
    %c0_i32 = arith.constant 0 : i32
    %c0_i32_0 = arith.constant 0 : i32
    %c0_i32_1 = arith.constant 0 : i32
    return %c0_i32, %c0_i32_0 : i32, i32
  }
  func.func @transform_2(%arg0: i32) -> (i32, i32) {
    %c0_i32 = arith.constant 0 : i32
    %c0_i32_0 = arith.constant 0 : i32
    %c0_i32_1 = arith.constant 0 : i32
    return %c0_i32, %c0_i32_0 : i32, i32
  }
  func.func @transform_3(%arg0: i32) -> (i32, i32) {
    %c0_i32 = arith.constant 0 : i32
    %c0_i32_0 = arith.constant 0 : i32
    return %arg0, %c0_i32 : i32, i32
  }
}

module attributes {stable_mosaic.version = 11 : i64} {
  func.func @decode_kernel(%arg0: i32, %arg1: i32, %arg2: memref<128x128xf32, #tpu.memory_space<vmem>>, %arg3: memref<128x128xbf16, #tpu.memory_space<vmem>>, %arg4: memref<1x128xf32, #tpu.memory_space<vmem>>, %arg5: memref<128x128xf32, #tpu.memory_space<vmem>>) attributes {dimension_semantics = [#tpu.dimension_semantics<parallel>, #tpu.dimension_semantics<parallel>], iteration_bounds = array<i64: 1, 1>, scalar_prefetch = 0 : i64, scratch_operands = 0 : i64, tpu.core_type = #tpu.core_type<tc>, window_params = [{transform_indices = @transform_0, window_bounds = array<i64: 128, 128>}, {transform_indices = @transform_1, window_bounds = array<i64: 128, 128>}, {transform_indices = @transform_2, window_bounds = array<i64: 1, 128>}, {transform_indices = @transform_3, window_bounds = array<i64: 128, 128>}]} {
    %c0 = arith.constant 0 : index
    %c0_0 = arith.constant 0 : index
    %0 = vector.load %arg2[%c0, %c0_0] : memref<128x128xf32, #tpu.memory_space<vmem>>, vector<128x128xf32>
    %1 = arith.truncf %0 : vector<128x128xf32> to vector<128x128xbf16>
    %c0_1 = arith.constant 0 : index
    %c0_2 = arith.constant 0 : index
    %2 = vector.load %arg3[%c0_1, %c0_2] : memref<128x128xbf16, #tpu.memory_space<vmem>>, vector<128x128xbf16>
    %cst = arith.constant dense<0.000000e+00> : vector<128x128xf32>
    %3 = tpu.matmul %1, %2, %cst {dimension_numbers = #tpu.dot_dimension_numbers<[1], [0], [0], [1], [0, 0, 1, 1], [], []>} : vector<128x128xbf16>, vector<128x128xbf16>, vector<128x128xf32> -> vector<128x128xf32>
    %c0_3 = arith.constant 0 : index
    %c0_4 = arith.constant 0 : index
    %4 = vector.load %arg4[%c0_3, %c0_4] : memref<1x128xf32, #tpu.memory_space<vmem>>, vector<1x128xf32>
    %5 = vector.broadcast %4 : vector<1x128xf32> to vector<128x128xf32>
    %6 = arith.addf %3, %5 : vector<128x128xf32>
    %c0_5 = arith.constant 0 : index
    %c0_6 = arith.constant 0 : index
    %7 = vector.load %arg5[%c0_5, %c0_6] : memref<128x128xf32, #tpu.memory_space<vmem>>, vector<128x128xf32>
    tpu.vector_store %arg5[%c0_5, %c0_6], %6 {strides = array<i32>} : memref<128x128xf32, #tpu.memory_space<vmem>>, vector<128x128xf32>,
    return
  }
  func.func @transform_0(%arg0: i32, %arg1: i32) -> (i32, i32) {
    %c0_i32 = arith.constant 0 : i32
    %c0_i32_0 = arith.constant 0 : i32
    return %arg0, %c0_i32 : i32, i32
  }
  func.func @transform_1(%arg0: i32, %arg1: i32) -> (i32, i32) {
    %c0_i32 = arith.constant 0 : i32
    %c0_i32_0 = arith.constant 0 : i32
    return %c0_i32, %arg1 : i32, i32
  }
  func.func @transform_2(%arg0: i32, %arg1: i32) -> (i32, i32) {
    %c0_i32 = arith.constant 0 : i32
    %c0_i32_0 = arith.constant 0 : i32
    return %c0_i32, %arg1 : i32, i32
  }
  func.func @transform_3(%arg0: i32, %arg1: i32) -> (i32, i32) {
    %c0_i32 = arith.constant 0 : i32
    return %arg0, %arg1 : i32, i32
  }
}

module attributes {stable_mosaic.version = 11 : i64} {
  func.func @gru_seq_kernel(%arg0: i32, %arg1: memref<64x384xf32, #tpu.memory_space<vmem>>, %arg2: memref<1x128x384xbf16, #tpu.memory_space<vmem>>, %arg3: memref<2x128x256xbf16, #tpu.memory_space<vmem>>, %arg4: memref<2x128x128xbf16, #tpu.memory_space<vmem>>, %arg5: memref<1x1x384xf32, #tpu.memory_space<vmem>>, %arg6: memref<2x8x128xf32, #tpu.memory_space<vmem>>, %arg7: memref<64x128xf32, #tpu.memory_space<vmem>>, %arg8: memref<2x8x128xf32, #tpu.memory_space<vmem>>) attributes {dimension_semantics = [#tpu.dimension_semantics<arbitrary>], iteration_bounds = array<i64: 2>, scalar_prefetch = 0 : i64, scratch_operands = 0 : i64, tpu.core_type = #tpu.core_type<tc>, window_params = [{transform_indices = @transform_0, window_bounds = array<i64: 64, 384>}, {pipeline_mode = #tpu.pipeline_mode<synchronous>, transform_indices = @transform_1, window_bounds = array<i64: 1, 128, 384>}, {pipeline_mode = #tpu.pipeline_mode<synchronous>, transform_indices = @transform_2, window_bounds = array<i64: 2, 128, 256>}, {pipeline_mode = #tpu.pipeline_mode<synchronous>, transform_indices = @transform_3, window_bounds = array<i64: 2, 128, 128>}, {pipeline_mode = #tpu.pipeline_mode<synchronous>, transform_indices = @transform_4, window_bounds = array<i64: 1, 1, 384>}, {pipeline_mode = #tpu.pipeline_mode<synchronous>, transform_indices = @transform_5, window_bounds = array<i64: 2, 8, 128>}, {transform_indices = @transform_6, window_bounds = array<i64: 64, 128>}, {pipeline_mode = #tpu.pipeline_mode<synchronous>, transform_indices = @transform_7, window_bounds = array<i64: 2, 8, 128>}]} {
    %c0_i32 = arith.constant 0 : i32
    %0 = arith.cmpi eq, %arg0, %c0_i32 : i32
    %1 = arith.extui %0 : i1 to i32
    %c0_i32_0 = arith.constant 0 : i32
    %2 = arith.cmpi ne, %1, %c0_i32_0 : i32
    scf.if %2 {
      %c0_351 = arith.constant 0 : index
      %c0_352 = arith.constant 0 : index
      %c0_353 = arith.constant 0 : index
      %691 = vector.load %arg6[%c0_351, %c0_352, %c0_353] : memref<2x8x128xf32, #tpu.memory_space<vmem>>, vector<2x8x128xf32>
      %c0_354 = arith.constant 0 : index
      %c0_355 = arith.constant 0 : index
      %c0_356 = arith.constant 0 : index
      %692 = vector.load %arg8[%c0_354, %c0_355, %c0_356] : memref<2x8x128xf32, #tpu.memory_space<vmem>>, vector<2x8x128xf32>
      tpu.vector_store %arg8[%c0_354, %c0_355, %c0_356], %691 {strides = array<i32>} : memref<2x8x128xf32, #tpu.memory_space<vmem>>, vector<2x8x128xf32>,
    } else {
    }
    %c0 = arith.constant 0 : index
    %c0_1 = arith.constant 0 : index
    %3 = vector.load %arg1[%c0, %c0_1] : memref<64x384xf32, #tpu.memory_space<vmem>>, vector<8x384xf32>
    %c0_2 = arith.constant 0 : index
    %c0_3 = arith.constant 0 : index
    %c0_4 = arith.constant 0 : index
    %4 = vector.load %arg8[%c0_2, %c0_3, %c0_4] : memref<2x8x128xf32, #tpu.memory_space<vmem>>, vector<1x8x128xf32>
    %5 = vector.shape_cast %4 : vector<1x8x128xf32> to vector<8x128xf32>
    %c0_5 = arith.constant 0 : index
    %c0_6 = arith.constant 0 : index
    %c0_7 = arith.constant 0 : index
    %6 = vector.load %arg3[%c0_5, %c0_6, %c0_7] : memref<2x128x256xbf16, #tpu.memory_space<vmem>>, vector<1x128x256xbf16>
    %7 = vector.shape_cast %6 : vector<1x128x256xbf16> to vector<128x256xbf16>
    %c0_8 = arith.constant 0 : index
    %c0_9 = arith.constant 0 : index
    %c0_10 = arith.constant 0 : index
    %8 = vector.load %arg4[%c0_8, %c0_9, %c0_10] : memref<2x128x128xbf16, #tpu.memory_space<vmem>>, vector<1x128x128xbf16>
    %9 = vector.shape_cast %8 : vector<1x128x128xbf16> to vector<128x128xbf16>
    %10 = arith.truncf %5 : vector<8x128xf32> to vector<8x128xbf16>
    %cst = arith.constant dense<0.000000e+00> : vector<8x256xf32>
    %11 = tpu.matmul %10, %7, %cst {dimension_numbers = #tpu.dot_dimension_numbers<[1], [0], [0], [1], [0, 0, 1, 1], [], []>} : vector<8x128xbf16>, vector<128x256xbf16>, vector<8x256xf32> -> vector<8x256xf32>
    %12 = vector.extract_strided_slice %3 {offsets = [0, 0], sizes = [8, 128], strides = [1, 1]} : vector<8x384xf32> to vector<8x128xf32>
    %13 = vector.extract_strided_slice %11 {offsets = [0, 0], sizes = [8, 128], strides = [1, 1]} : vector<8x256xf32> to vector<8x128xf32>
    %14 = arith.addf %12, %13 : vector<8x128xf32>
    %15 = arith.negf %14 : vector<8x128xf32>
    %16 = math.exp %15 : vector<8x128xf32>
    %cst_11 = arith.constant 1.000000e+00 : f32
    %17 = vector.broadcast %cst_11 : f32 to vector<8x128xf32>
    %18 = arith.addf %17, %16 : vector<8x128xf32>
    %19 = arith.divf %17, %18 : vector<8x128xf32>
    %20 = vector.extract_strided_slice %3 {offsets = [0, 128], sizes = [8, 128], strides = [1, 1]} : vector<8x384xf32> to vector<8x128xf32>
    %21 = vector.extract_strided_slice %11 {offsets = [0, 128], sizes = [8, 128], strides = [1, 1]} : vector<8x256xf32> to vector<8x128xf32>
    %22 = arith.addf %20, %21 : vector<8x128xf32>
    %23 = arith.negf %22 : vector<8x128xf32>
    %24 = math.exp %23 : vector<8x128xf32>
    %cst_12 = arith.constant 1.000000e+00 : f32
    %25 = vector.broadcast %cst_12 : f32 to vector<8x128xf32>
    %26 = arith.addf %25, %24 : vector<8x128xf32>
    %27 = arith.divf %25, %26 : vector<8x128xf32>
    %28 = vector.extract_strided_slice %3 {offsets = [0, 256], sizes = [8, 128], strides = [1, 1]} : vector<8x384xf32> to vector<8x128xf32>
    %29 = arith.mulf %19, %5 : vector<8x128xf32>
    %30 = arith.truncf %29 : vector<8x128xf32> to vector<8x128xbf16>
    %cst_13 = arith.constant dense<0.000000e+00> : vector<8x128xf32>
    %31 = tpu.matmul %30, %9, %cst_13 {dimension_numbers = #tpu.dot_dimension_numbers<[1], [0], [0], [1], [0, 0, 1, 1], [], []>} : vector<8x128xbf16>, vector<128x128xbf16>, vector<8x128xf32> -> vector<8x128xf32>
    %32 = arith.addf %28, %31 : vector<8x128xf32>
    %33 = math.tanh %32 : vector<8x128xf32>
    %cst_14 = arith.constant 1.000000e+00 : f32
    %34 = vector.broadcast %cst_14 : f32 to vector<8x128xf32>
    %35 = arith.subf %34, %27 : vector<8x128xf32>
    %36 = arith.mulf %35, %5 : vector<8x128xf32>
    %37 = arith.mulf %27, %33 : vector<8x128xf32>
    %38 = arith.addf %36, %37 : vector<8x128xf32>
    %c0_15 = arith.constant 0 : index
    %c0_16 = arith.constant 0 : index
    %c0_17 = arith.constant 0 : index
    %39 = vector.load %arg8[%c0_15, %c0_16, %c0_17] : memref<2x8x128xf32, #tpu.memory_space<vmem>>, vector<1x8x128xf32>
    %40 = vector.shape_cast %39 : vector<1x8x128xf32> to vector<8x128xf32>
    %41 = vector.shape_cast %38 : vector<8x128xf32> to vector<1x8x128xf32>
    tpu.vector_store %arg8[%c0_15, %c0_16, %c0_17], %41 {strides = array<i32>} : memref<2x8x128xf32, #tpu.memory_space<vmem>>, vector<1x8x128xf32>,
    %42 = arith.truncf %38 : vector<8x128xf32> to vector<8x128xbf16>
    %c0_18 = arith.constant 0 : index
    %c0_19 = arith.constant 0 : index
    %c0_20 = arith.constant 0 : index
    %43 = vector.load %arg2[%c0_18, %c0_19, %c0_20] : memref<1x128x384xbf16, #tpu.memory_space<vmem>>, vector<1x128x384xbf16>
    %44 = vector.shape_cast %43 : vector<1x128x384xbf16> to vector<128x384xbf16>
    %cst_21 = arith.constant dense<0.000000e+00> : vector<8x384xf32>
    %45 = tpu.matmul %42, %44, %cst_21 {dimension_numbers = #tpu.dot_dimension_numbers<[1], [0], [0], [1], [0, 0, 1, 1], [], []>} : vector<8x128xbf16>, vector<128x384xbf16>, vector<8x384xf32> -> vector<8x384xf32>
    %c0_22 = arith.constant 0 : index
    %c0_23 = arith.constant 0 : index
    %c0_24 = arith.constant 0 : index
    %46 = vector.load %arg5[%c0_22, %c0_23, %c0_24] : memref<1x1x384xf32, #tpu.memory_space<vmem>>, vector<1x1x384xf32>
    %47 = vector.shape_cast %46 : vector<1x1x384xf32> to vector<1x384xf32>
    %48 = vector.broadcast %47 : vector<1x384xf32> to vector<8x384xf32>
    %49 = arith.addf %45, %48 : vector<8x384xf32>
    %c1 = arith.constant 1 : index
    %c0_25 = arith.constant 0 : index
    %c0_26 = arith.constant 0 : index
    %50 = vector.load %arg8[%c1, %c0_25, %c0_26] : memref<2x8x128xf32, #tpu.memory_space<vmem>>, vector<1x8x128xf32>
    %51 = vector.shape_cast %50 : vector<1x8x128xf32> to vector<8x128xf32>
    %c1_27 = arith.constant 1 : index
    %c0_28 = arith.constant 0 : index
    %c0_29 = arith.constant 0 : index
    %52 = vector.load %arg3[%c1_27, %c0_28, %c0_29] : memref<2x128x256xbf16, #tpu.memory_space<vmem>>, vector<1x128x256xbf16>
    %53 = vector.shape_cast %52 : vector<1x128x256xbf16> to vector<128x256xbf16>
    %c1_30 = arith.constant 1 : index
    %c0_31 = arith.constant 0 : index
    %c0_32 = arith.constant 0 : index
    %54 = vector.load %arg4[%c1_30, %c0_31, %c0_32] : memref<2x128x128xbf16, #tpu.memory_space<vmem>>, vector<1x128x128xbf16>
    %55 = vector.shape_cast %54 : vector<1x128x128xbf16> to vector<128x128xbf16>
    %56 = arith.truncf %51 : vector<8x128xf32> to vector<8x128xbf16>
    %cst_33 = arith.constant dense<0.000000e+00> : vector<8x256xf32>
    %57 = tpu.matmul %56, %53, %cst_33 {dimension_numbers = #tpu.dot_dimension_numbers<[1], [0], [0], [1], [0, 0, 1, 1], [], []>} : vector<8x128xbf16>, vector<128x256xbf16>, vector<8x256xf32> -> vector<8x256xf32>
    %58 = vector.extract_strided_slice %49 {offsets = [0, 0], sizes = [8, 128], strides = [1, 1]} : vector<8x384xf32> to vector<8x128xf32>
    %59 = vector.extract_strided_slice %57 {offsets = [0, 0], sizes = [8, 128], strides = [1, 1]} : vector<8x256xf32> to vector<8x128xf32>
    %60 = arith.addf %58, %59 : vector<8x128xf32>
    %61 = arith.negf %60 : vector<8x128xf32>
    %62 = math.exp %61 : vector<8x128xf32>
    %cst_34 = arith.constant 1.000000e+00 : f32
    %63 = vector.broadcast %cst_34 : f32 to vector<8x128xf32>
    %64 = arith.addf %63, %62 : vector<8x128xf32>
    %65 = arith.divf %63, %64 : vector<8x128xf32>
    %66 = vector.extract_strided_slice %49 {offsets = [0, 128], sizes = [8, 128], strides = [1, 1]} : vector<8x384xf32> to vector<8x128xf32>
    %67 = vector.extract_strided_slice %57 {offsets = [0, 128], sizes = [8, 128], strides = [1, 1]} : vector<8x256xf32> to vector<8x128xf32>
    %68 = arith.addf %66, %67 : vector<8x128xf32>
    %69 = arith.negf %68 : vector<8x128xf32>
    %70 = math.exp %69 : vector<8x128xf32>
    %cst_35 = arith.constant 1.000000e+00 : f32
    %71 = vector.broadcast %cst_35 : f32 to vector<8x128xf32>
    %72 = arith.addf %71, %70 : vector<8x128xf32>
    %73 = arith.divf %71, %72 : vector<8x128xf32>
    %74 = vector.extract_strided_slice %49 {offsets = [0, 256], sizes = [8, 128], strides = [1, 1]} : vector<8x384xf32> to vector<8x128xf32>
    %75 = arith.mulf %65, %51 : vector<8x128xf32>
    %76 = arith.truncf %75 : vector<8x128xf32> to vector<8x128xbf16>
    %cst_36 = arith.constant dense<0.000000e+00> : vector<8x128xf32>
    %77 = tpu.matmul %76, %55, %cst_36 {dimension_numbers = #tpu.dot_dimension_numbers<[1], [0], [0], [1], [0, 0, 1, 1], [], []>} : vector<8x128xbf16>, vector<128x128xbf16>, vector<8x128xf32> -> vector<8x128xf32>
    %78 = arith.addf %74, %77 : vector<8x128xf32>
    %79 = math.tanh %78 : vector<8x128xf32>
    %cst_37 = arith.constant 1.000000e+00 : f32
    %80 = vector.broadcast %cst_37 : f32 to vector<8x128xf32>
    %81 = arith.subf %80, %73 : vector<8x128xf32>
    %82 = arith.mulf %81, %51 : vector<8x128xf32>
    %83 = arith.mulf %73, %79 : vector<8x128xf32>
    %84 = arith.addf %82, %83 : vector<8x128xf32>
    %c1_38 = arith.constant 1 : index
    %c0_39 = arith.constant 0 : index
    %c0_40 = arith.constant 0 : index
    %85 = vector.load %arg8[%c1_38, %c0_39, %c0_40] : memref<2x8x128xf32, #tpu.memory_space<vmem>>, vector<1x8x128xf32>
    %86 = vector.shape_cast %85 : vector<1x8x128xf32> to vector<8x128xf32>
    %87 = vector.shape_cast %84 : vector<8x128xf32> to vector<1x8x128xf32>
    tpu.vector_store %arg8[%c1_38, %c0_39, %c0_40], %87 {strides = array<i32>} : memref<2x8x128xf32, #tpu.memory_space<vmem>>, vector<1x8x128xf32>,
    %c0_41 = arith.constant 0 : index
    %c0_42 = arith.constant 0 : index
    %88 = vector.load %arg7[%c0_41, %c0_42] : memref<64x128xf32, #tpu.memory_space<vmem>>, vector<8x128xf32>
    tpu.vector_store %arg7[%c0_41, %c0_42], %84 {strides = array<i32>} : memref<64x128xf32, #tpu.memory_space<vmem>>, vector<8x128xf32>,
    %c8 = arith.constant 8 : index
    %c0_43 = arith.constant 0 : index
    %89 = vector.load %arg1[%c8, %c0_43] : memref<64x384xf32, #tpu.memory_space<vmem>>, vector<8x384xf32>
    %c0_44 = arith.constant 0 : index
    %c0_45 = arith.constant 0 : index
    %c0_46 = arith.constant 0 : index
    %90 = vector.load %arg8[%c0_44, %c0_45, %c0_46] : memref<2x8x128xf32, #tpu.memory_space<vmem>>, vector<1x8x128xf32>
    %91 = vector.shape_cast %90 : vector<1x8x128xf32> to vector<8x128xf32>
    %c0_47 = arith.constant 0 : index
    %c0_48 = arith.constant 0 : index
    %c0_49 = arith.constant 0 : index
    %92 = vector.load %arg3[%c0_47, %c0_48, %c0_49] : memref<2x128x256xbf16, #tpu.memory_space<vmem>>, vector<1x128x256xbf16>
    %93 = vector.shape_cast %92 : vector<1x128x256xbf16> to vector<128x256xbf16>
    %c0_50 = arith.constant 0 : index
    %c0_51 = arith.constant 0 : index
    %c0_52 = arith.constant 0 : index
    %94 = vector.load %arg4[%c0_50, %c0_51, %c0_52] : memref<2x128x128xbf16, #tpu.memory_space<vmem>>, vector<1x128x128xbf16>
    %95 = vector.shape_cast %94 : vector<1x128x128xbf16> to vector<128x128xbf16>
    %96 = arith.truncf %91 : vector<8x128xf32> to vector<8x128xbf16>
    %cst_53 = arith.constant dense<0.000000e+00> : vector<8x256xf32>
    %97 = tpu.matmul %96, %93, %cst_53 {dimension_numbers = #tpu.dot_dimension_numbers<[1], [0], [0], [1], [0, 0, 1, 1], [], []>} : vector<8x128xbf16>, vector<128x256xbf16>, vector<8x256xf32> -> vector<8x256xf32>
    %98 = vector.extract_strided_slice %89 {offsets = [0, 0], sizes = [8, 128], strides = [1, 1]} : vector<8x384xf32> to vector<8x128xf32>
    %99 = vector.extract_strided_slice %97 {offsets = [0, 0], sizes = [8, 128], strides = [1, 1]} : vector<8x256xf32> to vector<8x128xf32>
    %100 = arith.addf %98, %99 : vector<8x128xf32>
    %101 = arith.negf %100 : vector<8x128xf32>
    %102 = math.exp %101 : vector<8x128xf32>
    %cst_54 = arith.constant 1.000000e+00 : f32
    %103 = vector.broadcast %cst_54 : f32 to vector<8x128xf32>
    %104 = arith.addf %103, %102 : vector<8x128xf32>
    %105 = arith.divf %103, %104 : vector<8x128xf32>
    %106 = vector.extract_strided_slice %89 {offsets = [0, 128], sizes = [8, 128], strides = [1, 1]} : vector<8x384xf32> to vector<8x128xf32>
    %107 = vector.extract_strided_slice %97 {offsets = [0, 128], sizes = [8, 128], strides = [1, 1]} : vector<8x256xf32> to vector<8x128xf32>
    %108 = arith.addf %106, %107 : vector<8x128xf32>
    %109 = arith.negf %108 : vector<8x128xf32>
    %110 = math.exp %109 : vector<8x128xf32>
    %cst_55 = arith.constant 1.000000e+00 : f32
    %111 = vector.broadcast %cst_55 : f32 to vector<8x128xf32>
    %112 = arith.addf %111, %110 : vector<8x128xf32>
    %113 = arith.divf %111, %112 : vector<8x128xf32>
    %114 = vector.extract_strided_slice %89 {offsets = [0, 256], sizes = [8, 128], strides = [1, 1]} : vector<8x384xf32> to vector<8x128xf32>
    %115 = arith.mulf %105, %91 : vector<8x128xf32>
    %116 = arith.truncf %115 : vector<8x128xf32> to vector<8x128xbf16>
    %cst_56 = arith.constant dense<0.000000e+00> : vector<8x128xf32>
    %117 = tpu.matmul %116, %95, %cst_56 {dimension_numbers = #tpu.dot_dimension_numbers<[1], [0], [0], [1], [0, 0, 1, 1], [], []>} : vector<8x128xbf16>, vector<128x128xbf16>, vector<8x128xf32> -> vector<8x128xf32>
    %118 = arith.addf %114, %117 : vector<8x128xf32>
    %119 = math.tanh %118 : vector<8x128xf32>
    %cst_57 = arith.constant 1.000000e+00 : f32
    %120 = vector.broadcast %cst_57 : f32 to vector<8x128xf32>
    %121 = arith.subf %120, %113 : vector<8x128xf32>
    %122 = arith.mulf %121, %91 : vector<8x128xf32>
    %123 = arith.mulf %113, %119 : vector<8x128xf32>
    %124 = arith.addf %122, %123 : vector<8x128xf32>
    %c0_58 = arith.constant 0 : index
    %c0_59 = arith.constant 0 : index
    %c0_60 = arith.constant 0 : index
    %125 = vector.load %arg8[%c0_58, %c0_59, %c0_60] : memref<2x8x128xf32, #tpu.memory_space<vmem>>, vector<1x8x128xf32>
    %126 = vector.shape_cast %125 : vector<1x8x128xf32> to vector<8x128xf32>
    %127 = vector.shape_cast %124 : vector<8x128xf32> to vector<1x8x128xf32>
    tpu.vector_store %arg8[%c0_58, %c0_59, %c0_60], %127 {strides = array<i32>} : memref<2x8x128xf32, #tpu.memory_space<vmem>>, vector<1x8x128xf32>,
    %128 = arith.truncf %124 : vector<8x128xf32> to vector<8x128xbf16>
    %c0_61 = arith.constant 0 : index
    %c0_62 = arith.constant 0 : index
    %c0_63 = arith.constant 0 : index
    %129 = vector.load %arg2[%c0_61, %c0_62, %c0_63] : memref<1x128x384xbf16, #tpu.memory_space<vmem>>, vector<1x128x384xbf16>
    %130 = vector.shape_cast %129 : vector<1x128x384xbf16> to vector<128x384xbf16>
    %cst_64 = arith.constant dense<0.000000e+00> : vector<8x384xf32>
    %131 = tpu.matmul %128, %130, %cst_64 {dimension_numbers = #tpu.dot_dimension_numbers<[1], [0], [0], [1], [0, 0, 1, 1], [], []>} : vector<8x128xbf16>, vector<128x384xbf16>, vector<8x384xf32> -> vector<8x384xf32>
    %c0_65 = arith.constant 0 : index
    %c0_66 = arith.constant 0 : index
    %c0_67 = arith.constant 0 : index
    %132 = vector.load %arg5[%c0_65, %c0_66, %c0_67] : memref<1x1x384xf32, #tpu.memory_space<vmem>>, vector<1x1x384xf32>
    %133 = vector.shape_cast %132 : vector<1x1x384xf32> to vector<1x384xf32>
    %134 = vector.broadcast %133 : vector<1x384xf32> to vector<8x384xf32>
    %135 = arith.addf %131, %134 : vector<8x384xf32>
    %c1_68 = arith.constant 1 : index
    %c0_69 = arith.constant 0 : index
    %c0_70 = arith.constant 0 : index
    %136 = vector.load %arg8[%c1_68, %c0_69, %c0_70] : memref<2x8x128xf32, #tpu.memory_space<vmem>>, vector<1x8x128xf32>
    %137 = vector.shape_cast %136 : vector<1x8x128xf32> to vector<8x128xf32>
    %c1_71 = arith.constant 1 : index
    %c0_72 = arith.constant 0 : index
    %c0_73 = arith.constant 0 : index
    %138 = vector.load %arg3[%c1_71, %c0_72, %c0_73] : memref<2x128x256xbf16, #tpu.memory_space<vmem>>, vector<1x128x256xbf16>
    %139 = vector.shape_cast %138 : vector<1x128x256xbf16> to vector<128x256xbf16>
    %c1_74 = arith.constant 1 : index
    %c0_75 = arith.constant 0 : index
    %c0_76 = arith.constant 0 : index
    %140 = vector.load %arg4[%c1_74, %c0_75, %c0_76] : memref<2x128x128xbf16, #tpu.memory_space<vmem>>, vector<1x128x128xbf16>
    %141 = vector.shape_cast %140 : vector<1x128x128xbf16> to vector<128x128xbf16>
    %142 = arith.truncf %137 : vector<8x128xf32> to vector<8x128xbf16>
    %cst_77 = arith.constant dense<0.000000e+00> : vector<8x256xf32>
    %143 = tpu.matmul %142, %139, %cst_77 {dimension_numbers = #tpu.dot_dimension_numbers<[1], [0], [0], [1], [0, 0, 1, 1], [], []>} : vector<8x128xbf16>, vector<128x256xbf16>, vector<8x256xf32> -> vector<8x256xf32>
    %144 = vector.extract_strided_slice %135 {offsets = [0, 0], sizes = [8, 128], strides = [1, 1]} : vector<8x384xf32> to vector<8x128xf32>
    %145 = vector.extract_strided_slice %143 {offsets = [0, 0], sizes = [8, 128], strides = [1, 1]} : vector<8x256xf32> to vector<8x128xf32>
    %146 = arith.addf %144, %145 : vector<8x128xf32>
    %147 = arith.negf %146 : vector<8x128xf32>
    %148 = math.exp %147 : vector<8x128xf32>
    %cst_78 = arith.constant 1.000000e+00 : f32
    %149 = vector.broadcast %cst_78 : f32 to vector<8x128xf32>
    %150 = arith.addf %149, %148 : vector<8x128xf32>
    %151 = arith.divf %149, %150 : vector<8x128xf32>
    %152 = vector.extract_strided_slice %135 {offsets = [0, 128], sizes = [8, 128], strides = [1, 1]} : vector<8x384xf32> to vector<8x128xf32>
    %153 = vector.extract_strided_slice %143 {offsets = [0, 128], sizes = [8, 128], strides = [1, 1]} : vector<8x256xf32> to vector<8x128xf32>
    %154 = arith.addf %152, %153 : vector<8x128xf32>
    %155 = arith.negf %154 : vector<8x128xf32>
    %156 = math.exp %155 : vector<8x128xf32>
    %cst_79 = arith.constant 1.000000e+00 : f32
    %157 = vector.broadcast %cst_79 : f32 to vector<8x128xf32>
    %158 = arith.addf %157, %156 : vector<8x128xf32>
    %159 = arith.divf %157, %158 : vector<8x128xf32>
    %160 = vector.extract_strided_slice %135 {offsets = [0, 256], sizes = [8, 128], strides = [1, 1]} : vector<8x384xf32> to vector<8x128xf32>
    %161 = arith.mulf %151, %137 : vector<8x128xf32>
    %162 = arith.truncf %161 : vector<8x128xf32> to vector<8x128xbf16>
    %cst_80 = arith.constant dense<0.000000e+00> : vector<8x128xf32>
    %163 = tpu.matmul %162, %141, %cst_80 {dimension_numbers = #tpu.dot_dimension_numbers<[1], [0], [0], [1], [0, 0, 1, 1], [], []>} : vector<8x128xbf16>, vector<128x128xbf16>, vector<8x128xf32> -> vector<8x128xf32>
    %164 = arith.addf %160, %163 : vector<8x128xf32>
    %165 = math.tanh %164 : vector<8x128xf32>
    %cst_81 = arith.constant 1.000000e+00 : f32
    %166 = vector.broadcast %cst_81 : f32 to vector<8x128xf32>
    %167 = arith.subf %166, %159 : vector<8x128xf32>
    %168 = arith.mulf %167, %137 : vector<8x128xf32>
    %169 = arith.mulf %159, %165 : vector<8x128xf32>
    %170 = arith.addf %168, %169 : vector<8x128xf32>
    %c1_82 = arith.constant 1 : index
    %c0_83 = arith.constant 0 : index
    %c0_84 = arith.constant 0 : index
    %171 = vector.load %arg8[%c1_82, %c0_83, %c0_84] : memref<2x8x128xf32, #tpu.memory_space<vmem>>, vector<1x8x128xf32>
    %172 = vector.shape_cast %171 : vector<1x8x128xf32> to vector<8x128xf32>
    %173 = vector.shape_cast %170 : vector<8x128xf32> to vector<1x8x128xf32>
    tpu.vector_store %arg8[%c1_82, %c0_83, %c0_84], %173 {strides = array<i32>} : memref<2x8x128xf32, #tpu.memory_space<vmem>>, vector<1x8x128xf32>,
    %c8_85 = arith.constant 8 : index
    %c0_86 = arith.constant 0 : index
    %174 = vector.load %arg7[%c8_85, %c0_86] : memref<64x128xf32, #tpu.memory_space<vmem>>, vector<8x128xf32>
    tpu.vector_store %arg7[%c8_85, %c0_86], %170 {strides = array<i32>} : memref<64x128xf32, #tpu.memory_space<vmem>>, vector<8x128xf32>,
    %c16 = arith.constant 16 : index
    %c0_87 = arith.constant 0 : index
    %175 = vector.load %arg1[%c16, %c0_87] : memref<64x384xf32, #tpu.memory_space<vmem>>, vector<8x384xf32>
    %c0_88 = arith.constant 0 : index
    %c0_89 = arith.constant 0 : index
    %c0_90 = arith.constant 0 : index
    %176 = vector.load %arg8[%c0_88, %c0_89, %c0_90] : memref<2x8x128xf32, #tpu.memory_space<vmem>>, vector<1x8x128xf32>
    %177 = vector.shape_cast %176 : vector<1x8x128xf32> to vector<8x128xf32>
    %c0_91 = arith.constant 0 : index
    %c0_92 = arith.constant 0 : index
    %c0_93 = arith.constant 0 : index
    %178 = vector.load %arg3[%c0_91, %c0_92, %c0_93] : memref<2x128x256xbf16, #tpu.memory_space<vmem>>, vector<1x128x256xbf16>
    %179 = vector.shape_cast %178 : vector<1x128x256xbf16> to vector<128x256xbf16>
    %c0_94 = arith.constant 0 : index
    %c0_95 = arith.constant 0 : index
    %c0_96 = arith.constant 0 : index
    %180 = vector.load %arg4[%c0_94, %c0_95, %c0_96] : memref<2x128x128xbf16, #tpu.memory_space<vmem>>, vector<1x128x128xbf16>
    %181 = vector.shape_cast %180 : vector<1x128x128xbf16> to vector<128x128xbf16>
    %182 = arith.truncf %177 : vector<8x128xf32> to vector<8x128xbf16>
    %cst_97 = arith.constant dense<0.000000e+00> : vector<8x256xf32>
    %183 = tpu.matmul %182, %179, %cst_97 {dimension_numbers = #tpu.dot_dimension_numbers<[1], [0], [0], [1], [0, 0, 1, 1], [], []>} : vector<8x128xbf16>, vector<128x256xbf16>, vector<8x256xf32> -> vector<8x256xf32>
    %184 = vector.extract_strided_slice %175 {offsets = [0, 0], sizes = [8, 128], strides = [1, 1]} : vector<8x384xf32> to vector<8x128xf32>
    %185 = vector.extract_strided_slice %183 {offsets = [0, 0], sizes = [8, 128], strides = [1, 1]} : vector<8x256xf32> to vector<8x128xf32>
    %186 = arith.addf %184, %185 : vector<8x128xf32>
    %187 = arith.negf %186 : vector<8x128xf32>
    %188 = math.exp %187 : vector<8x128xf32>
    %cst_98 = arith.constant 1.000000e+00 : f32
    %189 = vector.broadcast %cst_98 : f32 to vector<8x128xf32>
    %190 = arith.addf %189, %188 : vector<8x128xf32>
    %191 = arith.divf %189, %190 : vector<8x128xf32>
    %192 = vector.extract_strided_slice %175 {offsets = [0, 128], sizes = [8, 128], strides = [1, 1]} : vector<8x384xf32> to vector<8x128xf32>
    %193 = vector.extract_strided_slice %183 {offsets = [0, 128], sizes = [8, 128], strides = [1, 1]} : vector<8x256xf32> to vector<8x128xf32>
    %194 = arith.addf %192, %193 : vector<8x128xf32>
    %195 = arith.negf %194 : vector<8x128xf32>
    %196 = math.exp %195 : vector<8x128xf32>
    %cst_99 = arith.constant 1.000000e+00 : f32
    %197 = vector.broadcast %cst_99 : f32 to vector<8x128xf32>
    %198 = arith.addf %197, %196 : vector<8x128xf32>
    %199 = arith.divf %197, %198 : vector<8x128xf32>
    %200 = vector.extract_strided_slice %175 {offsets = [0, 256], sizes = [8, 128], strides = [1, 1]} : vector<8x384xf32> to vector<8x128xf32>
    %201 = arith.mulf %191, %177 : vector<8x128xf32>
    %202 = arith.truncf %201 : vector<8x128xf32> to vector<8x128xbf16>
    %cst_100 = arith.constant dense<0.000000e+00> : vector<8x128xf32>
    %203 = tpu.matmul %202, %181, %cst_100 {dimension_numbers = #tpu.dot_dimension_numbers<[1], [0], [0], [1], [0, 0, 1, 1], [], []>} : vector<8x128xbf16>, vector<128x128xbf16>, vector<8x128xf32> -> vector<8x128xf32>
    %204 = arith.addf %200, %203 : vector<8x128xf32>
    %205 = math.tanh %204 : vector<8x128xf32>
    %cst_101 = arith.constant 1.000000e+00 : f32
    %206 = vector.broadcast %cst_101 : f32 to vector<8x128xf32>
    %207 = arith.subf %206, %199 : vector<8x128xf32>
    %208 = arith.mulf %207, %177 : vector<8x128xf32>
    %209 = arith.mulf %199, %205 : vector<8x128xf32>
    %210 = arith.addf %208, %209 : vector<8x128xf32>
    %c0_102 = arith.constant 0 : index
    %c0_103 = arith.constant 0 : index
    %c0_104 = arith.constant 0 : index
    %211 = vector.load %arg8[%c0_102, %c0_103, %c0_104] : memref<2x8x128xf32, #tpu.memory_space<vmem>>, vector<1x8x128xf32>
    %212 = vector.shape_cast %211 : vector<1x8x128xf32> to vector<8x128xf32>
    %213 = vector.shape_cast %210 : vector<8x128xf32> to vector<1x8x128xf32>
    tpu.vector_store %arg8[%c0_102, %c0_103, %c0_104], %213 {strides = array<i32>} : memref<2x8x128xf32, #tpu.memory_space<vmem>>, vector<1x8x128xf32>,
    %214 = arith.truncf %210 : vector<8x128xf32> to vector<8x128xbf16>
    %c0_105 = arith.constant 0 : index
    %c0_106 = arith.constant 0 : index
    %c0_107 = arith.constant 0 : index
    %215 = vector.load %arg2[%c0_105, %c0_106, %c0_107] : memref<1x128x384xbf16, #tpu.memory_space<vmem>>, vector<1x128x384xbf16>
    %216 = vector.shape_cast %215 : vector<1x128x384xbf16> to vector<128x384xbf16>
    %cst_108 = arith.constant dense<0.000000e+00> : vector<8x384xf32>
    %217 = tpu.matmul %214, %216, %cst_108 {dimension_numbers = #tpu.dot_dimension_numbers<[1], [0], [0], [1], [0, 0, 1, 1], [], []>} : vector<8x128xbf16>, vector<128x384xbf16>, vector<8x384xf32> -> vector<8x384xf32>
    %c0_109 = arith.constant 0 : index
    %c0_110 = arith.constant 0 : index
    %c0_111 = arith.constant 0 : index
    %218 = vector.load %arg5[%c0_109, %c0_110, %c0_111] : memref<1x1x384xf32, #tpu.memory_space<vmem>>, vector<1x1x384xf32>
    %219 = vector.shape_cast %218 : vector<1x1x384xf32> to vector<1x384xf32>
    %220 = vector.broadcast %219 : vector<1x384xf32> to vector<8x384xf32>
    %221 = arith.addf %217, %220 : vector<8x384xf32>
    %c1_112 = arith.constant 1 : index
    %c0_113 = arith.constant 0 : index
    %c0_114 = arith.constant 0 : index
    %222 = vector.load %arg8[%c1_112, %c0_113, %c0_114] : memref<2x8x128xf32, #tpu.memory_space<vmem>>, vector<1x8x128xf32>
    %223 = vector.shape_cast %222 : vector<1x8x128xf32> to vector<8x128xf32>
    %c1_115 = arith.constant 1 : index
    %c0_116 = arith.constant 0 : index
    %c0_117 = arith.constant 0 : index
    %224 = vector.load %arg3[%c1_115, %c0_116, %c0_117] : memref<2x128x256xbf16, #tpu.memory_space<vmem>>, vector<1x128x256xbf16>
    %225 = vector.shape_cast %224 : vector<1x128x256xbf16> to vector<128x256xbf16>
    %c1_118 = arith.constant 1 : index
    %c0_119 = arith.constant 0 : index
    %c0_120 = arith.constant 0 : index
    %226 = vector.load %arg4[%c1_118, %c0_119, %c0_120] : memref<2x128x128xbf16, #tpu.memory_space<vmem>>, vector<1x128x128xbf16>
    %227 = vector.shape_cast %226 : vector<1x128x128xbf16> to vector<128x128xbf16>
    %228 = arith.truncf %223 : vector<8x128xf32> to vector<8x128xbf16>
    %cst_121 = arith.constant dense<0.000000e+00> : vector<8x256xf32>
    %229 = tpu.matmul %228, %225, %cst_121 {dimension_numbers = #tpu.dot_dimension_numbers<[1], [0], [0], [1], [0, 0, 1, 1], [], []>} : vector<8x128xbf16>, vector<128x256xbf16>, vector<8x256xf32> -> vector<8x256xf32>
    %230 = vector.extract_strided_slice %221 {offsets = [0, 0], sizes = [8, 128], strides = [1, 1]} : vector<8x384xf32> to vector<8x128xf32>
    %231 = vector.extract_strided_slice %229 {offsets = [0, 0], sizes = [8, 128], strides = [1, 1]} : vector<8x256xf32> to vector<8x128xf32>
    %232 = arith.addf %230, %231 : vector<8x128xf32>
    %233 = arith.negf %232 : vector<8x128xf32>
    %234 = math.exp %233 : vector<8x128xf32>
    %cst_122 = arith.constant 1.000000e+00 : f32
    %235 = vector.broadcast %cst_122 : f32 to vector<8x128xf32>
    %236 = arith.addf %235, %234 : vector<8x128xf32>
    %237 = arith.divf %235, %236 : vector<8x128xf32>
    %238 = vector.extract_strided_slice %221 {offsets = [0, 128], sizes = [8, 128], strides = [1, 1]} : vector<8x384xf32> to vector<8x128xf32>
    %239 = vector.extract_strided_slice %229 {offsets = [0, 128], sizes = [8, 128], strides = [1, 1]} : vector<8x256xf32> to vector<8x128xf32>
    %240 = arith.addf %238, %239 : vector<8x128xf32>
    %241 = arith.negf %240 : vector<8x128xf32>
    %242 = math.exp %241 : vector<8x128xf32>
    %cst_123 = arith.constant 1.000000e+00 : f32
    %243 = vector.broadcast %cst_123 : f32 to vector<8x128xf32>
    %244 = arith.addf %243, %242 : vector<8x128xf32>
    %245 = arith.divf %243, %244 : vector<8x128xf32>
    %246 = vector.extract_strided_slice %221 {offsets = [0, 256], sizes = [8, 128], strides = [1, 1]} : vector<8x384xf32> to vector<8x128xf32>
    %247 = arith.mulf %237, %223 : vector<8x128xf32>
    %248 = arith.truncf %247 : vector<8x128xf32> to vector<8x128xbf16>
    %cst_124 = arith.constant dense<0.000000e+00> : vector<8x128xf32>
    %249 = tpu.matmul %248, %227, %cst_124 {dimension_numbers = #tpu.dot_dimension_numbers<[1], [0], [0], [1], [0, 0, 1, 1], [], []>} : vector<8x128xbf16>, vector<128x128xbf16>, vector<8x128xf32> -> vector<8x128xf32>
    %250 = arith.addf %246, %249 : vector<8x128xf32>
    %251 = math.tanh %250 : vector<8x128xf32>
    %cst_125 = arith.constant 1.000000e+00 : f32
    %252 = vector.broadcast %cst_125 : f32 to vector<8x128xf32>
    %253 = arith.subf %252, %245 : vector<8x128xf32>
    %254 = arith.mulf %253, %223 : vector<8x128xf32>
    %255 = arith.mulf %245, %251 : vector<8x128xf32>
    %256 = arith.addf %254, %255 : vector<8x128xf32>
    %c1_126 = arith.constant 1 : index
    %c0_127 = arith.constant 0 : index
    %c0_128 = arith.constant 0 : index
    %257 = vector.load %arg8[%c1_126, %c0_127, %c0_128] : memref<2x8x128xf32, #tpu.memory_space<vmem>>, vector<1x8x128xf32>
    %258 = vector.shape_cast %257 : vector<1x8x128xf32> to vector<8x128xf32>
    %259 = vector.shape_cast %256 : vector<8x128xf32> to vector<1x8x128xf32>
    tpu.vector_store %arg8[%c1_126, %c0_127, %c0_128], %259 {strides = array<i32>} : memref<2x8x128xf32, #tpu.memory_space<vmem>>, vector<1x8x128xf32>,
    %c16_129 = arith.constant 16 : index
    %c0_130 = arith.constant 0 : index
    %260 = vector.load %arg7[%c16_129, %c0_130] : memref<64x128xf32, #tpu.memory_space<vmem>>, vector<8x128xf32>
    tpu.vector_store %arg7[%c16_129, %c0_130], %256 {strides = array<i32>} : memref<64x128xf32, #tpu.memory_space<vmem>>, vector<8x128xf32>,
    %c24 = arith.constant 24 : index
    %c0_131 = arith.constant 0 : index
    %261 = vector.load %arg1[%c24, %c0_131] : memref<64x384xf32, #tpu.memory_space<vmem>>, vector<8x384xf32>
    %c0_132 = arith.constant 0 : index
    %c0_133 = arith.constant 0 : index
    %c0_134 = arith.constant 0 : index
    %262 = vector.load %arg8[%c0_132, %c0_133, %c0_134] : memref<2x8x128xf32, #tpu.memory_space<vmem>>, vector<1x8x128xf32>
    %263 = vector.shape_cast %262 : vector<1x8x128xf32> to vector<8x128xf32>
    %c0_135 = arith.constant 0 : index
    %c0_136 = arith.constant 0 : index
    %c0_137 = arith.constant 0 : index
    %264 = vector.load %arg3[%c0_135, %c0_136, %c0_137] : memref<2x128x256xbf16, #tpu.memory_space<vmem>>, vector<1x128x256xbf16>
    %265 = vector.shape_cast %264 : vector<1x128x256xbf16> to vector<128x256xbf16>
    %c0_138 = arith.constant 0 : index
    %c0_139 = arith.constant 0 : index
    %c0_140 = arith.constant 0 : index
    %266 = vector.load %arg4[%c0_138, %c0_139, %c0_140] : memref<2x128x128xbf16, #tpu.memory_space<vmem>>, vector<1x128x128xbf16>
    %267 = vector.shape_cast %266 : vector<1x128x128xbf16> to vector<128x128xbf16>
    %268 = arith.truncf %263 : vector<8x128xf32> to vector<8x128xbf16>
    %cst_141 = arith.constant dense<0.000000e+00> : vector<8x256xf32>
    %269 = tpu.matmul %268, %265, %cst_141 {dimension_numbers = #tpu.dot_dimension_numbers<[1], [0], [0], [1], [0, 0, 1, 1], [], []>} : vector<8x128xbf16>, vector<128x256xbf16>, vector<8x256xf32> -> vector<8x256xf32>
    %270 = vector.extract_strided_slice %261 {offsets = [0, 0], sizes = [8, 128], strides = [1, 1]} : vector<8x384xf32> to vector<8x128xf32>
    %271 = vector.extract_strided_slice %269 {offsets = [0, 0], sizes = [8, 128], strides = [1, 1]} : vector<8x256xf32> to vector<8x128xf32>
    %272 = arith.addf %270, %271 : vector<8x128xf32>
    %273 = arith.negf %272 : vector<8x128xf32>
    %274 = math.exp %273 : vector<8x128xf32>
    %cst_142 = arith.constant 1.000000e+00 : f32
    %275 = vector.broadcast %cst_142 : f32 to vector<8x128xf32>
    %276 = arith.addf %275, %274 : vector<8x128xf32>
    %277 = arith.divf %275, %276 : vector<8x128xf32>
    %278 = vector.extract_strided_slice %261 {offsets = [0, 128], sizes = [8, 128], strides = [1, 1]} : vector<8x384xf32> to vector<8x128xf32>
    %279 = vector.extract_strided_slice %269 {offsets = [0, 128], sizes = [8, 128], strides = [1, 1]} : vector<8x256xf32> to vector<8x128xf32>
    %280 = arith.addf %278, %279 : vector<8x128xf32>
    %281 = arith.negf %280 : vector<8x128xf32>
    %282 = math.exp %281 : vector<8x128xf32>
    %cst_143 = arith.constant 1.000000e+00 : f32
    %283 = vector.broadcast %cst_143 : f32 to vector<8x128xf32>
    %284 = arith.addf %283, %282 : vector<8x128xf32>
    %285 = arith.divf %283, %284 : vector<8x128xf32>
    %286 = vector.extract_strided_slice %261 {offsets = [0, 256], sizes = [8, 128], strides = [1, 1]} : vector<8x384xf32> to vector<8x128xf32>
    %287 = arith.mulf %277, %263 : vector<8x128xf32>
    %288 = arith.truncf %287 : vector<8x128xf32> to vector<8x128xbf16>
    %cst_144 = arith.constant dense<0.000000e+00> : vector<8x128xf32>
    %289 = tpu.matmul %288, %267, %cst_144 {dimension_numbers = #tpu.dot_dimension_numbers<[1], [0], [0], [1], [0, 0, 1, 1], [], []>} : vector<8x128xbf16>, vector<128x128xbf16>, vector<8x128xf32> -> vector<8x128xf32>
    %290 = arith.addf %286, %289 : vector<8x128xf32>
    %291 = math.tanh %290 : vector<8x128xf32>
    %cst_145 = arith.constant 1.000000e+00 : f32
    %292 = vector.broadcast %cst_145 : f32 to vector<8x128xf32>
    %293 = arith.subf %292, %285 : vector<8x128xf32>
    %294 = arith.mulf %293, %263 : vector<8x128xf32>
    %295 = arith.mulf %285, %291 : vector<8x128xf32>
    %296 = arith.addf %294, %295 : vector<8x128xf32>
    %c0_146 = arith.constant 0 : index
    %c0_147 = arith.constant 0 : index
    %c0_148 = arith.constant 0 : index
    %297 = vector.load %arg8[%c0_146, %c0_147, %c0_148] : memref<2x8x128xf32, #tpu.memory_space<vmem>>, vector<1x8x128xf32>
    %298 = vector.shape_cast %297 : vector<1x8x128xf32> to vector<8x128xf32>
    %299 = vector.shape_cast %296 : vector<8x128xf32> to vector<1x8x128xf32>
    tpu.vector_store %arg8[%c0_146, %c0_147, %c0_148], %299 {strides = array<i32>} : memref<2x8x128xf32, #tpu.memory_space<vmem>>, vector<1x8x128xf32>,
    %300 = arith.truncf %296 : vector<8x128xf32> to vector<8x128xbf16>
    %c0_149 = arith.constant 0 : index
    %c0_150 = arith.constant 0 : index
    %c0_151 = arith.constant 0 : index
    %301 = vector.load %arg2[%c0_149, %c0_150, %c0_151] : memref<1x128x384xbf16, #tpu.memory_space<vmem>>, vector<1x128x384xbf16>
    %302 = vector.shape_cast %301 : vector<1x128x384xbf16> to vector<128x384xbf16>
    %cst_152 = arith.constant dense<0.000000e+00> : vector<8x384xf32>
    %303 = tpu.matmul %300, %302, %cst_152 {dimension_numbers = #tpu.dot_dimension_numbers<[1], [0], [0], [1], [0, 0, 1, 1], [], []>} : vector<8x128xbf16>, vector<128x384xbf16>, vector<8x384xf32> -> vector<8x384xf32>
    %c0_153 = arith.constant 0 : index
    %c0_154 = arith.constant 0 : index
    %c0_155 = arith.constant 0 : index
    %304 = vector.load %arg5[%c0_153, %c0_154, %c0_155] : memref<1x1x384xf32, #tpu.memory_space<vmem>>, vector<1x1x384xf32>
    %305 = vector.shape_cast %304 : vector<1x1x384xf32> to vector<1x384xf32>
    %306 = vector.broadcast %305 : vector<1x384xf32> to vector<8x384xf32>
    %307 = arith.addf %303, %306 : vector<8x384xf32>
    %c1_156 = arith.constant 1 : index
    %c0_157 = arith.constant 0 : index
    %c0_158 = arith.constant 0 : index
    %308 = vector.load %arg8[%c1_156, %c0_157, %c0_158] : memref<2x8x128xf32, #tpu.memory_space<vmem>>, vector<1x8x128xf32>
    %309 = vector.shape_cast %308 : vector<1x8x128xf32> to vector<8x128xf32>
    %c1_159 = arith.constant 1 : index
    %c0_160 = arith.constant 0 : index
    %c0_161 = arith.constant 0 : index
    %310 = vector.load %arg3[%c1_159, %c0_160, %c0_161] : memref<2x128x256xbf16, #tpu.memory_space<vmem>>, vector<1x128x256xbf16>
    %311 = vector.shape_cast %310 : vector<1x128x256xbf16> to vector<128x256xbf16>
    %c1_162 = arith.constant 1 : index
    %c0_163 = arith.constant 0 : index
    %c0_164 = arith.constant 0 : index
    %312 = vector.load %arg4[%c1_162, %c0_163, %c0_164] : memref<2x128x128xbf16, #tpu.memory_space<vmem>>, vector<1x128x128xbf16>
    %313 = vector.shape_cast %312 : vector<1x128x128xbf16> to vector<128x128xbf16>
    %314 = arith.truncf %309 : vector<8x128xf32> to vector<8x128xbf16>
    %cst_165 = arith.constant dense<0.000000e+00> : vector<8x256xf32>
    %315 = tpu.matmul %314, %311, %cst_165 {dimension_numbers = #tpu.dot_dimension_numbers<[1], [0], [0], [1], [0, 0, 1, 1], [], []>} : vector<8x128xbf16>, vector<128x256xbf16>, vector<8x256xf32> -> vector<8x256xf32>
    %316 = vector.extract_strided_slice %307 {offsets = [0, 0], sizes = [8, 128], strides = [1, 1]} : vector<8x384xf32> to vector<8x128xf32>
    %317 = vector.extract_strided_slice %315 {offsets = [0, 0], sizes = [8, 128], strides = [1, 1]} : vector<8x256xf32> to vector<8x128xf32>
    %318 = arith.addf %316, %317 : vector<8x128xf32>
    %319 = arith.negf %318 : vector<8x128xf32>
    %320 = math.exp %319 : vector<8x128xf32>
    %cst_166 = arith.constant 1.000000e+00 : f32
    %321 = vector.broadcast %cst_166 : f32 to vector<8x128xf32>
    %322 = arith.addf %321, %320 : vector<8x128xf32>
    %323 = arith.divf %321, %322 : vector<8x128xf32>
    %324 = vector.extract_strided_slice %307 {offsets = [0, 128], sizes = [8, 128], strides = [1, 1]} : vector<8x384xf32> to vector<8x128xf32>
    %325 = vector.extract_strided_slice %315 {offsets = [0, 128], sizes = [8, 128], strides = [1, 1]} : vector<8x256xf32> to vector<8x128xf32>
    %326 = arith.addf %324, %325 : vector<8x128xf32>
    %327 = arith.negf %326 : vector<8x128xf32>
    %328 = math.exp %327 : vector<8x128xf32>
    %cst_167 = arith.constant 1.000000e+00 : f32
    %329 = vector.broadcast %cst_167 : f32 to vector<8x128xf32>
    %330 = arith.addf %329, %328 : vector<8x128xf32>
    %331 = arith.divf %329, %330 : vector<8x128xf32>
    %332 = vector.extract_strided_slice %307 {offsets = [0, 256], sizes = [8, 128], strides = [1, 1]} : vector<8x384xf32> to vector<8x128xf32>
    %333 = arith.mulf %323, %309 : vector<8x128xf32>
    %334 = arith.truncf %333 : vector<8x128xf32> to vector<8x128xbf16>
    %cst_168 = arith.constant dense<0.000000e+00> : vector<8x128xf32>
    %335 = tpu.matmul %334, %313, %cst_168 {dimension_numbers = #tpu.dot_dimension_numbers<[1], [0], [0], [1], [0, 0, 1, 1], [], []>} : vector<8x128xbf16>, vector<128x128xbf16>, vector<8x128xf32> -> vector<8x128xf32>
    %336 = arith.addf %332, %335 : vector<8x128xf32>
    %337 = math.tanh %336 : vector<8x128xf32>
    %cst_169 = arith.constant 1.000000e+00 : f32
    %338 = vector.broadcast %cst_169 : f32 to vector<8x128xf32>
    %339 = arith.subf %338, %331 : vector<8x128xf32>
    %340 = arith.mulf %339, %309 : vector<8x128xf32>
    %341 = arith.mulf %331, %337 : vector<8x128xf32>
    %342 = arith.addf %340, %341 : vector<8x128xf32>
    %c1_170 = arith.constant 1 : index
    %c0_171 = arith.constant 0 : index
    %c0_172 = arith.constant 0 : index
    %343 = vector.load %arg8[%c1_170, %c0_171, %c0_172] : memref<2x8x128xf32, #tpu.memory_space<vmem>>, vector<1x8x128xf32>
    %344 = vector.shape_cast %343 : vector<1x8x128xf32> to vector<8x128xf32>
    %345 = vector.shape_cast %342 : vector<8x128xf32> to vector<1x8x128xf32>
    tpu.vector_store %arg8[%c1_170, %c0_171, %c0_172], %345 {strides = array<i32>} : memref<2x8x128xf32, #tpu.memory_space<vmem>>, vector<1x8x128xf32>,
    %c24_173 = arith.constant 24 : index
    %c0_174 = arith.constant 0 : index
    %346 = vector.load %arg7[%c24_173, %c0_174] : memref<64x128xf32, #tpu.memory_space<vmem>>, vector<8x128xf32>
    tpu.vector_store %arg7[%c24_173, %c0_174], %342 {strides = array<i32>} : memref<64x128xf32, #tpu.memory_space<vmem>>, vector<8x128xf32>,
    %c32 = arith.constant 32 : index
    %c0_175 = arith.constant 0 : index
    %347 = vector.load %arg1[%c32, %c0_175] : memref<64x384xf32, #tpu.memory_space<vmem>>, vector<8x384xf32>
    %c0_176 = arith.constant 0 : index
    %c0_177 = arith.constant 0 : index
    %c0_178 = arith.constant 0 : index
    %348 = vector.load %arg8[%c0_176, %c0_177, %c0_178] : memref<2x8x128xf32, #tpu.memory_space<vmem>>, vector<1x8x128xf32>
    %349 = vector.shape_cast %348 : vector<1x8x128xf32> to vector<8x128xf32>
    %c0_179 = arith.constant 0 : index
    %c0_180 = arith.constant 0 : index
    %c0_181 = arith.constant 0 : index
    %350 = vector.load %arg3[%c0_179, %c0_180, %c0_181] : memref<2x128x256xbf16, #tpu.memory_space<vmem>>, vector<1x128x256xbf16>
    %351 = vector.shape_cast %350 : vector<1x128x256xbf16> to vector<128x256xbf16>
    %c0_182 = arith.constant 0 : index
    %c0_183 = arith.constant 0 : index
    %c0_184 = arith.constant 0 : index
    %352 = vector.load %arg4[%c0_182, %c0_183, %c0_184] : memref<2x128x128xbf16, #tpu.memory_space<vmem>>, vector<1x128x128xbf16>
    %353 = vector.shape_cast %352 : vector<1x128x128xbf16> to vector<128x128xbf16>
    %354 = arith.truncf %349 : vector<8x128xf32> to vector<8x128xbf16>
    %cst_185 = arith.constant dense<0.000000e+00> : vector<8x256xf32>
    %355 = tpu.matmul %354, %351, %cst_185 {dimension_numbers = #tpu.dot_dimension_numbers<[1], [0], [0], [1], [0, 0, 1, 1], [], []>} : vector<8x128xbf16>, vector<128x256xbf16>, vector<8x256xf32> -> vector<8x256xf32>
    %356 = vector.extract_strided_slice %347 {offsets = [0, 0], sizes = [8, 128], strides = [1, 1]} : vector<8x384xf32> to vector<8x128xf32>
    %357 = vector.extract_strided_slice %355 {offsets = [0, 0], sizes = [8, 128], strides = [1, 1]} : vector<8x256xf32> to vector<8x128xf32>
    %358 = arith.addf %356, %357 : vector<8x128xf32>
    %359 = arith.negf %358 : vector<8x128xf32>
    %360 = math.exp %359 : vector<8x128xf32>
    %cst_186 = arith.constant 1.000000e+00 : f32
    %361 = vector.broadcast %cst_186 : f32 to vector<8x128xf32>
    %362 = arith.addf %361, %360 : vector<8x128xf32>
    %363 = arith.divf %361, %362 : vector<8x128xf32>
    %364 = vector.extract_strided_slice %347 {offsets = [0, 128], sizes = [8, 128], strides = [1, 1]} : vector<8x384xf32> to vector<8x128xf32>
    %365 = vector.extract_strided_slice %355 {offsets = [0, 128], sizes = [8, 128], strides = [1, 1]} : vector<8x256xf32> to vector<8x128xf32>
    %366 = arith.addf %364, %365 : vector<8x128xf32>
    %367 = arith.negf %366 : vector<8x128xf32>
    %368 = math.exp %367 : vector<8x128xf32>
    %cst_187 = arith.constant 1.000000e+00 : f32
    %369 = vector.broadcast %cst_187 : f32 to vector<8x128xf32>
    %370 = arith.addf %369, %368 : vector<8x128xf32>
    %371 = arith.divf %369, %370 : vector<8x128xf32>
    %372 = vector.extract_strided_slice %347 {offsets = [0, 256], sizes = [8, 128], strides = [1, 1]} : vector<8x384xf32> to vector<8x128xf32>
    %373 = arith.mulf %363, %349 : vector<8x128xf32>
    %374 = arith.truncf %373 : vector<8x128xf32> to vector<8x128xbf16>
    %cst_188 = arith.constant dense<0.000000e+00> : vector<8x128xf32>
    %375 = tpu.matmul %374, %353, %cst_188 {dimension_numbers = #tpu.dot_dimension_numbers<[1], [0], [0], [1], [0, 0, 1, 1], [], []>} : vector<8x128xbf16>, vector<128x128xbf16>, vector<8x128xf32> -> vector<8x128xf32>
    %376 = arith.addf %372, %375 : vector<8x128xf32>
    %377 = math.tanh %376 : vector<8x128xf32>
    %cst_189 = arith.constant 1.000000e+00 : f32
    %378 = vector.broadcast %cst_189 : f32 to vector<8x128xf32>
    %379 = arith.subf %378, %371 : vector<8x128xf32>
    %380 = arith.mulf %379, %349 : vector<8x128xf32>
    %381 = arith.mulf %371, %377 : vector<8x128xf32>
    %382 = arith.addf %380, %381 : vector<8x128xf32>
    %c0_190 = arith.constant 0 : index
    %c0_191 = arith.constant 0 : index
    %c0_192 = arith.constant 0 : index
    %383 = vector.load %arg8[%c0_190, %c0_191, %c0_192] : memref<2x8x128xf32, #tpu.memory_space<vmem>>, vector<1x8x128xf32>
    %384 = vector.shape_cast %383 : vector<1x8x128xf32> to vector<8x128xf32>
    %385 = vector.shape_cast %382 : vector<8x128xf32> to vector<1x8x128xf32>
    tpu.vector_store %arg8[%c0_190, %c0_191, %c0_192], %385 {strides = array<i32>} : memref<2x8x128xf32, #tpu.memory_space<vmem>>, vector<1x8x128xf32>,
    %386 = arith.truncf %382 : vector<8x128xf32> to vector<8x128xbf16>
    %c0_193 = arith.constant 0 : index
    %c0_194 = arith.constant 0 : index
    %c0_195 = arith.constant 0 : index
    %387 = vector.load %arg2[%c0_193, %c0_194, %c0_195] : memref<1x128x384xbf16, #tpu.memory_space<vmem>>, vector<1x128x384xbf16>
    %388 = vector.shape_cast %387 : vector<1x128x384xbf16> to vector<128x384xbf16>
    %cst_196 = arith.constant dense<0.000000e+00> : vector<8x384xf32>
    %389 = tpu.matmul %386, %388, %cst_196 {dimension_numbers = #tpu.dot_dimension_numbers<[1], [0], [0], [1], [0, 0, 1, 1], [], []>} : vector<8x128xbf16>, vector<128x384xbf16>, vector<8x384xf32> -> vector<8x384xf32>
    %c0_197 = arith.constant 0 : index
    %c0_198 = arith.constant 0 : index
    %c0_199 = arith.constant 0 : index
    %390 = vector.load %arg5[%c0_197, %c0_198, %c0_199] : memref<1x1x384xf32, #tpu.memory_space<vmem>>, vector<1x1x384xf32>
    %391 = vector.shape_cast %390 : vector<1x1x384xf32> to vector<1x384xf32>
    %392 = vector.broadcast %391 : vector<1x384xf32> to vector<8x384xf32>
    %393 = arith.addf %389, %392 : vector<8x384xf32>
    %c1_200 = arith.constant 1 : index
    %c0_201 = arith.constant 0 : index
    %c0_202 = arith.constant 0 : index
    %394 = vector.load %arg8[%c1_200, %c0_201, %c0_202] : memref<2x8x128xf32, #tpu.memory_space<vmem>>, vector<1x8x128xf32>
    %395 = vector.shape_cast %394 : vector<1x8x128xf32> to vector<8x128xf32>
    %c1_203 = arith.constant 1 : index
    %c0_204 = arith.constant 0 : index
    %c0_205 = arith.constant 0 : index
    %396 = vector.load %arg3[%c1_203, %c0_204, %c0_205] : memref<2x128x256xbf16, #tpu.memory_space<vmem>>, vector<1x128x256xbf16>
    %397 = vector.shape_cast %396 : vector<1x128x256xbf16> to vector<128x256xbf16>
    %c1_206 = arith.constant 1 : index
    %c0_207 = arith.constant 0 : index
    %c0_208 = arith.constant 0 : index
    %398 = vector.load %arg4[%c1_206, %c0_207, %c0_208] : memref<2x128x128xbf16, #tpu.memory_space<vmem>>, vector<1x128x128xbf16>
    %399 = vector.shape_cast %398 : vector<1x128x128xbf16> to vector<128x128xbf16>
    %400 = arith.truncf %395 : vector<8x128xf32> to vector<8x128xbf16>
    %cst_209 = arith.constant dense<0.000000e+00> : vector<8x256xf32>
    %401 = tpu.matmul %400, %397, %cst_209 {dimension_numbers = #tpu.dot_dimension_numbers<[1], [0], [0], [1], [0, 0, 1, 1], [], []>} : vector<8x128xbf16>, vector<128x256xbf16>, vector<8x256xf32> -> vector<8x256xf32>
    %402 = vector.extract_strided_slice %393 {offsets = [0, 0], sizes = [8, 128], strides = [1, 1]} : vector<8x384xf32> to vector<8x128xf32>
    %403 = vector.extract_strided_slice %401 {offsets = [0, 0], sizes = [8, 128], strides = [1, 1]} : vector<8x256xf32> to vector<8x128xf32>
    %404 = arith.addf %402, %403 : vector<8x128xf32>
    %405 = arith.negf %404 : vector<8x128xf32>
    %406 = math.exp %405 : vector<8x128xf32>
    %cst_210 = arith.constant 1.000000e+00 : f32
    %407 = vector.broadcast %cst_210 : f32 to vector<8x128xf32>
    %408 = arith.addf %407, %406 : vector<8x128xf32>
    %409 = arith.divf %407, %408 : vector<8x128xf32>
    %410 = vector.extract_strided_slice %393 {offsets = [0, 128], sizes = [8, 128], strides = [1, 1]} : vector<8x384xf32> to vector<8x128xf32>
    %411 = vector.extract_strided_slice %401 {offsets = [0, 128], sizes = [8, 128], strides = [1, 1]} : vector<8x256xf32> to vector<8x128xf32>
    %412 = arith.addf %410, %411 : vector<8x128xf32>
    %413 = arith.negf %412 : vector<8x128xf32>
    %414 = math.exp %413 : vector<8x128xf32>
    %cst_211 = arith.constant 1.000000e+00 : f32
    %415 = vector.broadcast %cst_211 : f32 to vector<8x128xf32>
    %416 = arith.addf %415, %414 : vector<8x128xf32>
    %417 = arith.divf %415, %416 : vector<8x128xf32>
    %418 = vector.extract_strided_slice %393 {offsets = [0, 256], sizes = [8, 128], strides = [1, 1]} : vector<8x384xf32> to vector<8x128xf32>
    %419 = arith.mulf %409, %395 : vector<8x128xf32>
    %420 = arith.truncf %419 : vector<8x128xf32> to vector<8x128xbf16>
    %cst_212 = arith.constant dense<0.000000e+00> : vector<8x128xf32>
    %421 = tpu.matmul %420, %399, %cst_212 {dimension_numbers = #tpu.dot_dimension_numbers<[1], [0], [0], [1], [0, 0, 1, 1], [], []>} : vector<8x128xbf16>, vector<128x128xbf16>, vector<8x128xf32> -> vector<8x128xf32>
    %422 = arith.addf %418, %421 : vector<8x128xf32>
    %423 = math.tanh %422 : vector<8x128xf32>
    %cst_213 = arith.constant 1.000000e+00 : f32
    %424 = vector.broadcast %cst_213 : f32 to vector<8x128xf32>
    %425 = arith.subf %424, %417 : vector<8x128xf32>
    %426 = arith.mulf %425, %395 : vector<8x128xf32>
    %427 = arith.mulf %417, %423 : vector<8x128xf32>
    %428 = arith.addf %426, %427 : vector<8x128xf32>
    %c1_214 = arith.constant 1 : index
    %c0_215 = arith.constant 0 : index
    %c0_216 = arith.constant 0 : index
    %429 = vector.load %arg8[%c1_214, %c0_215, %c0_216] : memref<2x8x128xf32, #tpu.memory_space<vmem>>, vector<1x8x128xf32>
    %430 = vector.shape_cast %429 : vector<1x8x128xf32> to vector<8x128xf32>
    %431 = vector.shape_cast %428 : vector<8x128xf32> to vector<1x8x128xf32>
    tpu.vector_store %arg8[%c1_214, %c0_215, %c0_216], %431 {strides = array<i32>} : memref<2x8x128xf32, #tpu.memory_space<vmem>>, vector<1x8x128xf32>,
    %c32_217 = arith.constant 32 : index
    %c0_218 = arith.constant 0 : index
    %432 = vector.load %arg7[%c32_217, %c0_218] : memref<64x128xf32, #tpu.memory_space<vmem>>, vector<8x128xf32>
    tpu.vector_store %arg7[%c32_217, %c0_218], %428 {strides = array<i32>} : memref<64x128xf32, #tpu.memory_space<vmem>>, vector<8x128xf32>,
    %c40 = arith.constant 40 : index
    %c0_219 = arith.constant 0 : index
    %433 = vector.load %arg1[%c40, %c0_219] : memref<64x384xf32, #tpu.memory_space<vmem>>, vector<8x384xf32>
    %c0_220 = arith.constant 0 : index
    %c0_221 = arith.constant 0 : index
    %c0_222 = arith.constant 0 : index
    %434 = vector.load %arg8[%c0_220, %c0_221, %c0_222] : memref<2x8x128xf32, #tpu.memory_space<vmem>>, vector<1x8x128xf32>
    %435 = vector.shape_cast %434 : vector<1x8x128xf32> to vector<8x128xf32>
    %c0_223 = arith.constant 0 : index
    %c0_224 = arith.constant 0 : index
    %c0_225 = arith.constant 0 : index
    %436 = vector.load %arg3[%c0_223, %c0_224, %c0_225] : memref<2x128x256xbf16, #tpu.memory_space<vmem>>, vector<1x128x256xbf16>
    %437 = vector.shape_cast %436 : vector<1x128x256xbf16> to vector<128x256xbf16>
    %c0_226 = arith.constant 0 : index
    %c0_227 = arith.constant 0 : index
    %c0_228 = arith.constant 0 : index
    %438 = vector.load %arg4[%c0_226, %c0_227, %c0_228] : memref<2x128x128xbf16, #tpu.memory_space<vmem>>, vector<1x128x128xbf16>
    %439 = vector.shape_cast %438 : vector<1x128x128xbf16> to vector<128x128xbf16>
    %440 = arith.truncf %435 : vector<8x128xf32> to vector<8x128xbf16>
    %cst_229 = arith.constant dense<0.000000e+00> : vector<8x256xf32>
    %441 = tpu.matmul %440, %437, %cst_229 {dimension_numbers = #tpu.dot_dimension_numbers<[1], [0], [0], [1], [0, 0, 1, 1], [], []>} : vector<8x128xbf16>, vector<128x256xbf16>, vector<8x256xf32> -> vector<8x256xf32>
    %442 = vector.extract_strided_slice %433 {offsets = [0, 0], sizes = [8, 128], strides = [1, 1]} : vector<8x384xf32> to vector<8x128xf32>
    %443 = vector.extract_strided_slice %441 {offsets = [0, 0], sizes = [8, 128], strides = [1, 1]} : vector<8x256xf32> to vector<8x128xf32>
    %444 = arith.addf %442, %443 : vector<8x128xf32>
    %445 = arith.negf %444 : vector<8x128xf32>
    %446 = math.exp %445 : vector<8x128xf32>
    %cst_230 = arith.constant 1.000000e+00 : f32
    %447 = vector.broadcast %cst_230 : f32 to vector<8x128xf32>
    %448 = arith.addf %447, %446 : vector<8x128xf32>
    %449 = arith.divf %447, %448 : vector<8x128xf32>
    %450 = vector.extract_strided_slice %433 {offsets = [0, 128], sizes = [8, 128], strides = [1, 1]} : vector<8x384xf32> to vector<8x128xf32>
    %451 = vector.extract_strided_slice %441 {offsets = [0, 128], sizes = [8, 128], strides = [1, 1]} : vector<8x256xf32> to vector<8x128xf32>
    %452 = arith.addf %450, %451 : vector<8x128xf32>
    %453 = arith.negf %452 : vector<8x128xf32>
    %454 = math.exp %453 : vector<8x128xf32>
    %cst_231 = arith.constant 1.000000e+00 : f32
    %455 = vector.broadcast %cst_231 : f32 to vector<8x128xf32>
    %456 = arith.addf %455, %454 : vector<8x128xf32>
    %457 = arith.divf %455, %456 : vector<8x128xf32>
    %458 = vector.extract_strided_slice %433 {offsets = [0, 256], sizes = [8, 128], strides = [1, 1]} : vector<8x384xf32> to vector<8x128xf32>
    %459 = arith.mulf %449, %435 : vector<8x128xf32>
    %460 = arith.truncf %459 : vector<8x128xf32> to vector<8x128xbf16>
    %cst_232 = arith.constant dense<0.000000e+00> : vector<8x128xf32>
    %461 = tpu.matmul %460, %439, %cst_232 {dimension_numbers = #tpu.dot_dimension_numbers<[1], [0], [0], [1], [0, 0, 1, 1], [], []>} : vector<8x128xbf16>, vector<128x128xbf16>, vector<8x128xf32> -> vector<8x128xf32>
    %462 = arith.addf %458, %461 : vector<8x128xf32>
    %463 = math.tanh %462 : vector<8x128xf32>
    %cst_233 = arith.constant 1.000000e+00 : f32
    %464 = vector.broadcast %cst_233 : f32 to vector<8x128xf32>
    %465 = arith.subf %464, %457 : vector<8x128xf32>
    %466 = arith.mulf %465, %435 : vector<8x128xf32>
    %467 = arith.mulf %457, %463 : vector<8x128xf32>
    %468 = arith.addf %466, %467 : vector<8x128xf32>
    %c0_234 = arith.constant 0 : index
    %c0_235 = arith.constant 0 : index
    %c0_236 = arith.constant 0 : index
    %469 = vector.load %arg8[%c0_234, %c0_235, %c0_236] : memref<2x8x128xf32, #tpu.memory_space<vmem>>, vector<1x8x128xf32>
    %470 = vector.shape_cast %469 : vector<1x8x128xf32> to vector<8x128xf32>
    %471 = vector.shape_cast %468 : vector<8x128xf32> to vector<1x8x128xf32>
    tpu.vector_store %arg8[%c0_234, %c0_235, %c0_236], %471 {strides = array<i32>} : memref<2x8x128xf32, #tpu.memory_space<vmem>>, vector<1x8x128xf32>,
    %472 = arith.truncf %468 : vector<8x128xf32> to vector<8x128xbf16>
    %c0_237 = arith.constant 0 : index
    %c0_238 = arith.constant 0 : index
    %c0_239 = arith.constant 0 : index
    %473 = vector.load %arg2[%c0_237, %c0_238, %c0_239] : memref<1x128x384xbf16, #tpu.memory_space<vmem>>, vector<1x128x384xbf16>
    %474 = vector.shape_cast %473 : vector<1x128x384xbf16> to vector<128x384xbf16>
    %cst_240 = arith.constant dense<0.000000e+00> : vector<8x384xf32>
    %475 = tpu.matmul %472, %474, %cst_240 {dimension_numbers = #tpu.dot_dimension_numbers<[1], [0], [0], [1], [0, 0, 1, 1], [], []>} : vector<8x128xbf16>, vector<128x384xbf16>, vector<8x384xf32> -> vector<8x384xf32>
    %c0_241 = arith.constant 0 : index
    %c0_242 = arith.constant 0 : index
    %c0_243 = arith.constant 0 : index
    %476 = vector.load %arg5[%c0_241, %c0_242, %c0_243] : memref<1x1x384xf32, #tpu.memory_space<vmem>>, vector<1x1x384xf32>
    %477 = vector.shape_cast %476 : vector<1x1x384xf32> to vector<1x384xf32>
    %478 = vector.broadcast %477 : vector<1x384xf32> to vector<8x384xf32>
    %479 = arith.addf %475, %478 : vector<8x384xf32>
    %c1_244 = arith.constant 1 : index
    %c0_245 = arith.constant 0 : index
    %c0_246 = arith.constant 0 : index
    %480 = vector.load %arg8[%c1_244, %c0_245, %c0_246] : memref<2x8x128xf32, #tpu.memory_space<vmem>>, vector<1x8x128xf32>
    %481 = vector.shape_cast %480 : vector<1x8x128xf32> to vector<8x128xf32>
    %c1_247 = arith.constant 1 : index
    %c0_248 = arith.constant 0 : index
    %c0_249 = arith.constant 0 : index
    %482 = vector.load %arg3[%c1_247, %c0_248, %c0_249] : memref<2x128x256xbf16, #tpu.memory_space<vmem>>, vector<1x128x256xbf16>
    %483 = vector.shape_cast %482 : vector<1x128x256xbf16> to vector<128x256xbf16>
    %c1_250 = arith.constant 1 : index
    %c0_251 = arith.constant 0 : index
    %c0_252 = arith.constant 0 : index
    %484 = vector.load %arg4[%c1_250, %c0_251, %c0_252] : memref<2x128x128xbf16, #tpu.memory_space<vmem>>, vector<1x128x128xbf16>
    %485 = vector.shape_cast %484 : vector<1x128x128xbf16> to vector<128x128xbf16>
    %486 = arith.truncf %481 : vector<8x128xf32> to vector<8x128xbf16>
    %cst_253 = arith.constant dense<0.000000e+00> : vector<8x256xf32>
    %487 = tpu.matmul %486, %483, %cst_253 {dimension_numbers = #tpu.dot_dimension_numbers<[1], [0], [0], [1], [0, 0, 1, 1], [], []>} : vector<8x128xbf16>, vector<128x256xbf16>, vector<8x256xf32> -> vector<8x256xf32>
    %488 = vector.extract_strided_slice %479 {offsets = [0, 0], sizes = [8, 128], strides = [1, 1]} : vector<8x384xf32> to vector<8x128xf32>
    %489 = vector.extract_strided_slice %487 {offsets = [0, 0], sizes = [8, 128], strides = [1, 1]} : vector<8x256xf32> to vector<8x128xf32>
    %490 = arith.addf %488, %489 : vector<8x128xf32>
    %491 = arith.negf %490 : vector<8x128xf32>
    %492 = math.exp %491 : vector<8x128xf32>
    %cst_254 = arith.constant 1.000000e+00 : f32
    %493 = vector.broadcast %cst_254 : f32 to vector<8x128xf32>
    %494 = arith.addf %493, %492 : vector<8x128xf32>
    %495 = arith.divf %493, %494 : vector<8x128xf32>
    %496 = vector.extract_strided_slice %479 {offsets = [0, 128], sizes = [8, 128], strides = [1, 1]} : vector<8x384xf32> to vector<8x128xf32>
    %497 = vector.extract_strided_slice %487 {offsets = [0, 128], sizes = [8, 128], strides = [1, 1]} : vector<8x256xf32> to vector<8x128xf32>
    %498 = arith.addf %496, %497 : vector<8x128xf32>
    %499 = arith.negf %498 : vector<8x128xf32>
    %500 = math.exp %499 : vector<8x128xf32>
    %cst_255 = arith.constant 1.000000e+00 : f32
    %501 = vector.broadcast %cst_255 : f32 to vector<8x128xf32>
    %502 = arith.addf %501, %500 : vector<8x128xf32>
    %503 = arith.divf %501, %502 : vector<8x128xf32>
    %504 = vector.extract_strided_slice %479 {offsets = [0, 256], sizes = [8, 128], strides = [1, 1]} : vector<8x384xf32> to vector<8x128xf32>
    %505 = arith.mulf %495, %481 : vector<8x128xf32>
    %506 = arith.truncf %505 : vector<8x128xf32> to vector<8x128xbf16>
    %cst_256 = arith.constant dense<0.000000e+00> : vector<8x128xf32>
    %507 = tpu.matmul %506, %485, %cst_256 {dimension_numbers = #tpu.dot_dimension_numbers<[1], [0], [0], [1], [0, 0, 1, 1], [], []>} : vector<8x128xbf16>, vector<128x128xbf16>, vector<8x128xf32> -> vector<8x128xf32>
    %508 = arith.addf %504, %507 : vector<8x128xf32>
    %509 = math.tanh %508 : vector<8x128xf32>
    %cst_257 = arith.constant 1.000000e+00 : f32
    %510 = vector.broadcast %cst_257 : f32 to vector<8x128xf32>
    %511 = arith.subf %510, %503 : vector<8x128xf32>
    %512 = arith.mulf %511, %481 : vector<8x128xf32>
    %513 = arith.mulf %503, %509 : vector<8x128xf32>
    %514 = arith.addf %512, %513 : vector<8x128xf32>
    %c1_258 = arith.constant 1 : index
    %c0_259 = arith.constant 0 : index
    %c0_260 = arith.constant 0 : index
    %515 = vector.load %arg8[%c1_258, %c0_259, %c0_260] : memref<2x8x128xf32, #tpu.memory_space<vmem>>, vector<1x8x128xf32>
    %516 = vector.shape_cast %515 : vector<1x8x128xf32> to vector<8x128xf32>
    %517 = vector.shape_cast %514 : vector<8x128xf32> to vector<1x8x128xf32>
    tpu.vector_store %arg8[%c1_258, %c0_259, %c0_260], %517 {strides = array<i32>} : memref<2x8x128xf32, #tpu.memory_space<vmem>>, vector<1x8x128xf32>,
    %c40_261 = arith.constant 40 : index
    %c0_262 = arith.constant 0 : index
    %518 = vector.load %arg7[%c40_261, %c0_262] : memref<64x128xf32, #tpu.memory_space<vmem>>, vector<8x128xf32>
    tpu.vector_store %arg7[%c40_261, %c0_262], %514 {strides = array<i32>} : memref<64x128xf32, #tpu.memory_space<vmem>>, vector<8x128xf32>,
    %c48 = arith.constant 48 : index
    %c0_263 = arith.constant 0 : index
    %519 = vector.load %arg1[%c48, %c0_263] : memref<64x384xf32, #tpu.memory_space<vmem>>, vector<8x384xf32>
    %c0_264 = arith.constant 0 : index
    %c0_265 = arith.constant 0 : index
    %c0_266 = arith.constant 0 : index
    %520 = vector.load %arg8[%c0_264, %c0_265, %c0_266] : memref<2x8x128xf32, #tpu.memory_space<vmem>>, vector<1x8x128xf32>
    %521 = vector.shape_cast %520 : vector<1x8x128xf32> to vector<8x128xf32>
    %c0_267 = arith.constant 0 : index
    %c0_268 = arith.constant 0 : index
    %c0_269 = arith.constant 0 : index
    %522 = vector.load %arg3[%c0_267, %c0_268, %c0_269] : memref<2x128x256xbf16, #tpu.memory_space<vmem>>, vector<1x128x256xbf16>
    %523 = vector.shape_cast %522 : vector<1x128x256xbf16> to vector<128x256xbf16>
    %c0_270 = arith.constant 0 : index
    %c0_271 = arith.constant 0 : index
    %c0_272 = arith.constant 0 : index
    %524 = vector.load %arg4[%c0_270, %c0_271, %c0_272] : memref<2x128x128xbf16, #tpu.memory_space<vmem>>, vector<1x128x128xbf16>
    %525 = vector.shape_cast %524 : vector<1x128x128xbf16> to vector<128x128xbf16>
    %526 = arith.truncf %521 : vector<8x128xf32> to vector<8x128xbf16>
    %cst_273 = arith.constant dense<0.000000e+00> : vector<8x256xf32>
    %527 = tpu.matmul %526, %523, %cst_273 {dimension_numbers = #tpu.dot_dimension_numbers<[1], [0], [0], [1], [0, 0, 1, 1], [], []>} : vector<8x128xbf16>, vector<128x256xbf16>, vector<8x256xf32> -> vector<8x256xf32>
    %528 = vector.extract_strided_slice %519 {offsets = [0, 0], sizes = [8, 128], strides = [1, 1]} : vector<8x384xf32> to vector<8x128xf32>
    %529 = vector.extract_strided_slice %527 {offsets = [0, 0], sizes = [8, 128], strides = [1, 1]} : vector<8x256xf32> to vector<8x128xf32>
    %530 = arith.addf %528, %529 : vector<8x128xf32>
    %531 = arith.negf %530 : vector<8x128xf32>
    %532 = math.exp %531 : vector<8x128xf32>
    %cst_274 = arith.constant 1.000000e+00 : f32
    %533 = vector.broadcast %cst_274 : f32 to vector<8x128xf32>
    %534 = arith.addf %533, %532 : vector<8x128xf32>
    %535 = arith.divf %533, %534 : vector<8x128xf32>
    %536 = vector.extract_strided_slice %519 {offsets = [0, 128], sizes = [8, 128], strides = [1, 1]} : vector<8x384xf32> to vector<8x128xf32>
    %537 = vector.extract_strided_slice %527 {offsets = [0, 128], sizes = [8, 128], strides = [1, 1]} : vector<8x256xf32> to vector<8x128xf32>
    %538 = arith.addf %536, %537 : vector<8x128xf32>
    %539 = arith.negf %538 : vector<8x128xf32>
    %540 = math.exp %539 : vector<8x128xf32>
    %cst_275 = arith.constant 1.000000e+00 : f32
    %541 = vector.broadcast %cst_275 : f32 to vector<8x128xf32>
    %542 = arith.addf %541, %540 : vector<8x128xf32>
    %543 = arith.divf %541, %542 : vector<8x128xf32>
    %544 = vector.extract_strided_slice %519 {offsets = [0, 256], sizes = [8, 128], strides = [1, 1]} : vector<8x384xf32> to vector<8x128xf32>
    %545 = arith.mulf %535, %521 : vector<8x128xf32>
    %546 = arith.truncf %545 : vector<8x128xf32> to vector<8x128xbf16>
    %cst_276 = arith.constant dense<0.000000e+00> : vector<8x128xf32>
    %547 = tpu.matmul %546, %525, %cst_276 {dimension_numbers = #tpu.dot_dimension_numbers<[1], [0], [0], [1], [0, 0, 1, 1], [], []>} : vector<8x128xbf16>, vector<128x128xbf16>, vector<8x128xf32> -> vector<8x128xf32>
    %548 = arith.addf %544, %547 : vector<8x128xf32>
    %549 = math.tanh %548 : vector<8x128xf32>
    %cst_277 = arith.constant 1.000000e+00 : f32
    %550 = vector.broadcast %cst_277 : f32 to vector<8x128xf32>
    %551 = arith.subf %550, %543 : vector<8x128xf32>
    %552 = arith.mulf %551, %521 : vector<8x128xf32>
    %553 = arith.mulf %543, %549 : vector<8x128xf32>
    %554 = arith.addf %552, %553 : vector<8x128xf32>
    %c0_278 = arith.constant 0 : index
    %c0_279 = arith.constant 0 : index
    %c0_280 = arith.constant 0 : index
    %555 = vector.load %arg8[%c0_278, %c0_279, %c0_280] : memref<2x8x128xf32, #tpu.memory_space<vmem>>, vector<1x8x128xf32>
    %556 = vector.shape_cast %555 : vector<1x8x128xf32> to vector<8x128xf32>
    %557 = vector.shape_cast %554 : vector<8x128xf32> to vector<1x8x128xf32>
    tpu.vector_store %arg8[%c0_278, %c0_279, %c0_280], %557 {strides = array<i32>} : memref<2x8x128xf32, #tpu.memory_space<vmem>>, vector<1x8x128xf32>,
    %558 = arith.truncf %554 : vector<8x128xf32> to vector<8x128xbf16>
    %c0_281 = arith.constant 0 : index
    %c0_282 = arith.constant 0 : index
    %c0_283 = arith.constant 0 : index
    %559 = vector.load %arg2[%c0_281, %c0_282, %c0_283] : memref<1x128x384xbf16, #tpu.memory_space<vmem>>, vector<1x128x384xbf16>
    %560 = vector.shape_cast %559 : vector<1x128x384xbf16> to vector<128x384xbf16>
    %cst_284 = arith.constant dense<0.000000e+00> : vector<8x384xf32>
    %561 = tpu.matmul %558, %560, %cst_284 {dimension_numbers = #tpu.dot_dimension_numbers<[1], [0], [0], [1], [0, 0, 1, 1], [], []>} : vector<8x128xbf16>, vector<128x384xbf16>, vector<8x384xf32> -> vector<8x384xf32>
    %c0_285 = arith.constant 0 : index
    %c0_286 = arith.constant 0 : index
    %c0_287 = arith.constant 0 : index
    %562 = vector.load %arg5[%c0_285, %c0_286, %c0_287] : memref<1x1x384xf32, #tpu.memory_space<vmem>>, vector<1x1x384xf32>
    %563 = vector.shape_cast %562 : vector<1x1x384xf32> to vector<1x384xf32>
    %564 = vector.broadcast %563 : vector<1x384xf32> to vector<8x384xf32>
    %565 = arith.addf %561, %564 : vector<8x384xf32>
    %c1_288 = arith.constant 1 : index
    %c0_289 = arith.constant 0 : index
    %c0_290 = arith.constant 0 : index
    %566 = vector.load %arg8[%c1_288, %c0_289, %c0_290] : memref<2x8x128xf32, #tpu.memory_space<vmem>>, vector<1x8x128xf32>
    %567 = vector.shape_cast %566 : vector<1x8x128xf32> to vector<8x128xf32>
    %c1_291 = arith.constant 1 : index
    %c0_292 = arith.constant 0 : index
    %c0_293 = arith.constant 0 : index
    %568 = vector.load %arg3[%c1_291, %c0_292, %c0_293] : memref<2x128x256xbf16, #tpu.memory_space<vmem>>, vector<1x128x256xbf16>
    %569 = vector.shape_cast %568 : vector<1x128x256xbf16> to vector<128x256xbf16>
    %c1_294 = arith.constant 1 : index
    %c0_295 = arith.constant 0 : index
    %c0_296 = arith.constant 0 : index
    %570 = vector.load %arg4[%c1_294, %c0_295, %c0_296] : memref<2x128x128xbf16, #tpu.memory_space<vmem>>, vector<1x128x128xbf16>
    %571 = vector.shape_cast %570 : vector<1x128x128xbf16> to vector<128x128xbf16>
    %572 = arith.truncf %567 : vector<8x128xf32> to vector<8x128xbf16>
    %cst_297 = arith.constant dense<0.000000e+00> : vector<8x256xf32>
    %573 = tpu.matmul %572, %569, %cst_297 {dimension_numbers = #tpu.dot_dimension_numbers<[1], [0], [0], [1], [0, 0, 1, 1], [], []>} : vector<8x128xbf16>, vector<128x256xbf16>, vector<8x256xf32> -> vector<8x256xf32>
    %574 = vector.extract_strided_slice %565 {offsets = [0, 0], sizes = [8, 128], strides = [1, 1]} : vector<8x384xf32> to vector<8x128xf32>
    %575 = vector.extract_strided_slice %573 {offsets = [0, 0], sizes = [8, 128], strides = [1, 1]} : vector<8x256xf32> to vector<8x128xf32>
    %576 = arith.addf %574, %575 : vector<8x128xf32>
    %577 = arith.negf %576 : vector<8x128xf32>
    %578 = math.exp %577 : vector<8x128xf32>
    %cst_298 = arith.constant 1.000000e+00 : f32
    %579 = vector.broadcast %cst_298 : f32 to vector<8x128xf32>
    %580 = arith.addf %579, %578 : vector<8x128xf32>
    %581 = arith.divf %579, %580 : vector<8x128xf32>
    %582 = vector.extract_strided_slice %565 {offsets = [0, 128], sizes = [8, 128], strides = [1, 1]} : vector<8x384xf32> to vector<8x128xf32>
    %583 = vector.extract_strided_slice %573 {offsets = [0, 128], sizes = [8, 128], strides = [1, 1]} : vector<8x256xf32> to vector<8x128xf32>
    %584 = arith.addf %582, %583 : vector<8x128xf32>
    %585 = arith.negf %584 : vector<8x128xf32>
    %586 = math.exp %585 : vector<8x128xf32>
    %cst_299 = arith.constant 1.000000e+00 : f32
    %587 = vector.broadcast %cst_299 : f32 to vector<8x128xf32>
    %588 = arith.addf %587, %586 : vector<8x128xf32>
    %589 = arith.divf %587, %588 : vector<8x128xf32>
    %590 = vector.extract_strided_slice %565 {offsets = [0, 256], sizes = [8, 128], strides = [1, 1]} : vector<8x384xf32> to vector<8x128xf32>
    %591 = arith.mulf %581, %567 : vector<8x128xf32>
    %592 = arith.truncf %591 : vector<8x128xf32> to vector<8x128xbf16>
    %cst_300 = arith.constant dense<0.000000e+00> : vector<8x128xf32>
    %593 = tpu.matmul %592, %571, %cst_300 {dimension_numbers = #tpu.dot_dimension_numbers<[1], [0], [0], [1], [0, 0, 1, 1], [], []>} : vector<8x128xbf16>, vector<128x128xbf16>, vector<8x128xf32> -> vector<8x128xf32>
    %594 = arith.addf %590, %593 : vector<8x128xf32>
    %595 = math.tanh %594 : vector<8x128xf32>
    %cst_301 = arith.constant 1.000000e+00 : f32
    %596 = vector.broadcast %cst_301 : f32 to vector<8x128xf32>
    %597 = arith.subf %596, %589 : vector<8x128xf32>
    %598 = arith.mulf %597, %567 : vector<8x128xf32>
    %599 = arith.mulf %589, %595 : vector<8x128xf32>
    %600 = arith.addf %598, %599 : vector<8x128xf32>
    %c1_302 = arith.constant 1 : index
    %c0_303 = arith.constant 0 : index
    %c0_304 = arith.constant 0 : index
    %601 = vector.load %arg8[%c1_302, %c0_303, %c0_304] : memref<2x8x128xf32, #tpu.memory_space<vmem>>, vector<1x8x128xf32>
    %602 = vector.shape_cast %601 : vector<1x8x128xf32> to vector<8x128xf32>
    %603 = vector.shape_cast %600 : vector<8x128xf32> to vector<1x8x128xf32>
    tpu.vector_store %arg8[%c1_302, %c0_303, %c0_304], %603 {strides = array<i32>} : memref<2x8x128xf32, #tpu.memory_space<vmem>>, vector<1x8x128xf32>,
    %c48_305 = arith.constant 48 : index
    %c0_306 = arith.constant 0 : index
    %604 = vector.load %arg7[%c48_305, %c0_306] : memref<64x128xf32, #tpu.memory_space<vmem>>, vector<8x128xf32>
    tpu.vector_store %arg7[%c48_305, %c0_306], %600 {strides = array<i32>} : memref<64x128xf32, #tpu.memory_space<vmem>>, vector<8x128xf32>,
    %c56 = arith.constant 56 : index
    %c0_307 = arith.constant 0 : index
    %605 = vector.load %arg1[%c56, %c0_307] : memref<64x384xf32, #tpu.memory_space<vmem>>, vector<8x384xf32>
    %c0_308 = arith.constant 0 : index
    %c0_309 = arith.constant 0 : index
    %c0_310 = arith.constant 0 : index
    %606 = vector.load %arg8[%c0_308, %c0_309, %c0_310] : memref<2x8x128xf32, #tpu.memory_space<vmem>>, vector<1x8x128xf32>
    %607 = vector.shape_cast %606 : vector<1x8x128xf32> to vector<8x128xf32>
    %c0_311 = arith.constant 0 : index
    %c0_312 = arith.constant 0 : index
    %c0_313 = arith.constant 0 : index
    %608 = vector.load %arg3[%c0_311, %c0_312, %c0_313] : memref<2x128x256xbf16, #tpu.memory_space<vmem>>, vector<1x128x256xbf16>
    %609 = vector.shape_cast %608 : vector<1x128x256xbf16> to vector<128x256xbf16>
    %c0_314 = arith.constant 0 : index
    %c0_315 = arith.constant 0 : index
    %c0_316 = arith.constant 0 : index
    %610 = vector.load %arg4[%c0_314, %c0_315, %c0_316] : memref<2x128x128xbf16, #tpu.memory_space<vmem>>, vector<1x128x128xbf16>
    %611 = vector.shape_cast %610 : vector<1x128x128xbf16> to vector<128x128xbf16>
    %612 = arith.truncf %607 : vector<8x128xf32> to vector<8x128xbf16>
    %cst_317 = arith.constant dense<0.000000e+00> : vector<8x256xf32>
    %613 = tpu.matmul %612, %609, %cst_317 {dimension_numbers = #tpu.dot_dimension_numbers<[1], [0], [0], [1], [0, 0, 1, 1], [], []>} : vector<8x128xbf16>, vector<128x256xbf16>, vector<8x256xf32> -> vector<8x256xf32>
    %614 = vector.extract_strided_slice %605 {offsets = [0, 0], sizes = [8, 128], strides = [1, 1]} : vector<8x384xf32> to vector<8x128xf32>
    %615 = vector.extract_strided_slice %613 {offsets = [0, 0], sizes = [8, 128], strides = [1, 1]} : vector<8x256xf32> to vector<8x128xf32>
    %616 = arith.addf %614, %615 : vector<8x128xf32>
    %617 = arith.negf %616 : vector<8x128xf32>
    %618 = math.exp %617 : vector<8x128xf32>
    %cst_318 = arith.constant 1.000000e+00 : f32
    %619 = vector.broadcast %cst_318 : f32 to vector<8x128xf32>
    %620 = arith.addf %619, %618 : vector<8x128xf32>
    %621 = arith.divf %619, %620 : vector<8x128xf32>
    %622 = vector.extract_strided_slice %605 {offsets = [0, 128], sizes = [8, 128], strides = [1, 1]} : vector<8x384xf32> to vector<8x128xf32>
    %623 = vector.extract_strided_slice %613 {offsets = [0, 128], sizes = [8, 128], strides = [1, 1]} : vector<8x256xf32> to vector<8x128xf32>
    %624 = arith.addf %622, %623 : vector<8x128xf32>
    %625 = arith.negf %624 : vector<8x128xf32>
    %626 = math.exp %625 : vector<8x128xf32>
    %cst_319 = arith.constant 1.000000e+00 : f32
    %627 = vector.broadcast %cst_319 : f32 to vector<8x128xf32>
    %628 = arith.addf %627, %626 : vector<8x128xf32>
    %629 = arith.divf %627, %628 : vector<8x128xf32>
    %630 = vector.extract_strided_slice %605 {offsets = [0, 256], sizes = [8, 128], strides = [1, 1]} : vector<8x384xf32> to vector<8x128xf32>
    %631 = arith.mulf %621, %607 : vector<8x128xf32>
    %632 = arith.truncf %631 : vector<8x128xf32> to vector<8x128xbf16>
    %cst_320 = arith.constant dense<0.000000e+00> : vector<8x128xf32>
    %633 = tpu.matmul %632, %611, %cst_320 {dimension_numbers = #tpu.dot_dimension_numbers<[1], [0], [0], [1], [0, 0, 1, 1], [], []>} : vector<8x128xbf16>, vector<128x128xbf16>, vector<8x128xf32> -> vector<8x128xf32>
    %634 = arith.addf %630, %633 : vector<8x128xf32>
    %635 = math.tanh %634 : vector<8x128xf32>
    %cst_321 = arith.constant 1.000000e+00 : f32
    %636 = vector.broadcast %cst_321 : f32 to vector<8x128xf32>
    %637 = arith.subf %636, %629 : vector<8x128xf32>
    %638 = arith.mulf %637, %607 : vector<8x128xf32>
    %639 = arith.mulf %629, %635 : vector<8x128xf32>
    %640 = arith.addf %638, %639 : vector<8x128xf32>
    %c0_322 = arith.constant 0 : index
    %c0_323 = arith.constant 0 : index
    %c0_324 = arith.constant 0 : index
    %641 = vector.load %arg8[%c0_322, %c0_323, %c0_324] : memref<2x8x128xf32, #tpu.memory_space<vmem>>, vector<1x8x128xf32>
    %642 = vector.shape_cast %641 : vector<1x8x128xf32> to vector<8x128xf32>
    %643 = vector.shape_cast %640 : vector<8x128xf32> to vector<1x8x128xf32>
    tpu.vector_store %arg8[%c0_322, %c0_323, %c0_324], %643 {strides = array<i32>} : memref<2x8x128xf32, #tpu.memory_space<vmem>>, vector<1x8x128xf32>,
    %644 = arith.truncf %640 : vector<8x128xf32> to vector<8x128xbf16>
    %c0_325 = arith.constant 0 : index
    %c0_326 = arith.constant 0 : index
    %c0_327 = arith.constant 0 : index
    %645 = vector.load %arg2[%c0_325, %c0_326, %c0_327] : memref<1x128x384xbf16, #tpu.memory_space<vmem>>, vector<1x128x384xbf16>
    %646 = vector.shape_cast %645 : vector<1x128x384xbf16> to vector<128x384xbf16>
    %cst_328 = arith.constant dense<0.000000e+00> : vector<8x384xf32>
    %647 = tpu.matmul %644, %646, %cst_328 {dimension_numbers = #tpu.dot_dimension_numbers<[1], [0], [0], [1], [0, 0, 1, 1], [], []>} : vector<8x128xbf16>, vector<128x384xbf16>, vector<8x384xf32> -> vector<8x384xf32>
    %c0_329 = arith.constant 0 : index
    %c0_330 = arith.constant 0 : index
    %c0_331 = arith.constant 0 : index
    %648 = vector.load %arg5[%c0_329, %c0_330, %c0_331] : memref<1x1x384xf32, #tpu.memory_space<vmem>>, vector<1x1x384xf32>
    %649 = vector.shape_cast %648 : vector<1x1x384xf32> to vector<1x384xf32>
    %650 = vector.broadcast %649 : vector<1x384xf32> to vector<8x384xf32>
    %651 = arith.addf %647, %650 : vector<8x384xf32>
    %c1_332 = arith.constant 1 : index
    %c0_333 = arith.constant 0 : index
    %c0_334 = arith.constant 0 : index
    %652 = vector.load %arg8[%c1_332, %c0_333, %c0_334] : memref<2x8x128xf32, #tpu.memory_space<vmem>>, vector<1x8x128xf32>
    %653 = vector.shape_cast %652 : vector<1x8x128xf32> to vector<8x128xf32>
    %c1_335 = arith.constant 1 : index
    %c0_336 = arith.constant 0 : index
    %c0_337 = arith.constant 0 : index
    %654 = vector.load %arg3[%c1_335, %c0_336, %c0_337] : memref<2x128x256xbf16, #tpu.memory_space<vmem>>, vector<1x128x256xbf16>
    %655 = vector.shape_cast %654 : vector<1x128x256xbf16> to vector<128x256xbf16>
    %c1_338 = arith.constant 1 : index
    %c0_339 = arith.constant 0 : index
    %c0_340 = arith.constant 0 : index
    %656 = vector.load %arg4[%c1_338, %c0_339, %c0_340] : memref<2x128x128xbf16, #tpu.memory_space<vmem>>, vector<1x128x128xbf16>
    %657 = vector.shape_cast %656 : vector<1x128x128xbf16> to vector<128x128xbf16>
    %658 = arith.truncf %653 : vector<8x128xf32> to vector<8x128xbf16>
    %cst_341 = arith.constant dense<0.000000e+00> : vector<8x256xf32>
    %659 = tpu.matmul %658, %655, %cst_341 {dimension_numbers = #tpu.dot_dimension_numbers<[1], [0], [0], [1], [0, 0, 1, 1], [], []>} : vector<8x128xbf16>, vector<128x256xbf16>, vector<8x256xf32> -> vector<8x256xf32>
    %660 = vector.extract_strided_slice %651 {offsets = [0, 0], sizes = [8, 128], strides = [1, 1]} : vector<8x384xf32> to vector<8x128xf32>
    %661 = vector.extract_strided_slice %659 {offsets = [0, 0], sizes = [8, 128], strides = [1, 1]} : vector<8x256xf32> to vector<8x128xf32>
    %662 = arith.addf %660, %661 : vector<8x128xf32>
    %663 = arith.negf %662 : vector<8x128xf32>
    %664 = math.exp %663 : vector<8x128xf32>
    %cst_342 = arith.constant 1.000000e+00 : f32
    %665 = vector.broadcast %cst_342 : f32 to vector<8x128xf32>
    %666 = arith.addf %665, %664 : vector<8x128xf32>
    %667 = arith.divf %665, %666 : vector<8x128xf32>
    %668 = vector.extract_strided_slice %651 {offsets = [0, 128], sizes = [8, 128], strides = [1, 1]} : vector<8x384xf32> to vector<8x128xf32>
    %669 = vector.extract_strided_slice %659 {offsets = [0, 128], sizes = [8, 128], strides = [1, 1]} : vector<8x256xf32> to vector<8x128xf32>
    %670 = arith.addf %668, %669 : vector<8x128xf32>
    %671 = arith.negf %670 : vector<8x128xf32>
    %672 = math.exp %671 : vector<8x128xf32>
    %cst_343 = arith.constant 1.000000e+00 : f32
    %673 = vector.broadcast %cst_343 : f32 to vector<8x128xf32>
    %674 = arith.addf %673, %672 : vector<8x128xf32>
    %675 = arith.divf %673, %674 : vector<8x128xf32>
    %676 = vector.extract_strided_slice %651 {offsets = [0, 256], sizes = [8, 128], strides = [1, 1]} : vector<8x384xf32> to vector<8x128xf32>
    %677 = arith.mulf %667, %653 : vector<8x128xf32>
    %678 = arith.truncf %677 : vector<8x128xf32> to vector<8x128xbf16>
    %cst_344 = arith.constant dense<0.000000e+00> : vector<8x128xf32>
    %679 = tpu.matmul %678, %657, %cst_344 {dimension_numbers = #tpu.dot_dimension_numbers<[1], [0], [0], [1], [0, 0, 1, 1], [], []>} : vector<8x128xbf16>, vector<128x128xbf16>, vector<8x128xf32> -> vector<8x128xf32>
    %680 = arith.addf %676, %679 : vector<8x128xf32>
    %681 = math.tanh %680 : vector<8x128xf32>
    %cst_345 = arith.constant 1.000000e+00 : f32
    %682 = vector.broadcast %cst_345 : f32 to vector<8x128xf32>
    %683 = arith.subf %682, %675 : vector<8x128xf32>
    %684 = arith.mulf %683, %653 : vector<8x128xf32>
    %685 = arith.mulf %675, %681 : vector<8x128xf32>
    %686 = arith.addf %684, %685 : vector<8x128xf32>
    %c1_346 = arith.constant 1 : index
    %c0_347 = arith.constant 0 : index
    %c0_348 = arith.constant 0 : index
    %687 = vector.load %arg8[%c1_346, %c0_347, %c0_348] : memref<2x8x128xf32, #tpu.memory_space<vmem>>, vector<1x8x128xf32>
    %688 = vector.shape_cast %687 : vector<1x8x128xf32> to vector<8x128xf32>
    %689 = vector.shape_cast %686 : vector<8x128xf32> to vector<1x8x128xf32>
    tpu.vector_store %arg8[%c1_346, %c0_347, %c0_348], %689 {strides = array<i32>} : memref<2x8x128xf32, #tpu.memory_space<vmem>>, vector<1x8x128xf32>,
    %c56_349 = arith.constant 56 : index
    %c0_350 = arith.constant 0 : index
    %690 = vector.load %arg7[%c56_349, %c0_350] : memref<64x128xf32, #tpu.memory_space<vmem>>, vector<8x128xf32>
    tpu.vector_store %arg7[%c56_349, %c0_350], %686 {strides = array<i32>} : memref<64x128xf32, #tpu.memory_space<vmem>>, vector<8x128xf32>,
    return
  }
  func.func @transform_0(%arg0: i32) -> (i32, i32) {
    %c0_i32 = arith.constant 0 : i32
    %c0_i32_0 = arith.constant 0 : i32
    return %arg0, %c0_i32 : i32, i32
  }
  func.func @transform_1(%arg0: i32) -> (i32, i32, i32) {
    %c0_i32 = arith.constant 0 : i32
    %c0_i32_0 = arith.constant 0 : i32
    %c0_i32_1 = arith.constant 0 : i32
    %c0_i32_2 = arith.constant 0 : i32
    return %c0_i32, %c0_i32_0, %c0_i32_1 : i32, i32, i32
  }
  func.func @transform_2(%arg0: i32) -> (i32, i32, i32) {
    %c0_i32 = arith.constant 0 : i32
    %c0_i32_0 = arith.constant 0 : i32
    %c0_i32_1 = arith.constant 0 : i32
    %c0_i32_2 = arith.constant 0 : i32
    return %c0_i32, %c0_i32_0, %c0_i32_1 : i32, i32, i32
  }
  func.func @transform_3(%arg0: i32) -> (i32, i32, i32) {
    %c0_i32 = arith.constant 0 : i32
    %c0_i32_0 = arith.constant 0 : i32
    %c0_i32_1 = arith.constant 0 : i32
    %c0_i32_2 = arith.constant 0 : i32
    return %c0_i32, %c0_i32_0, %c0_i32_1 : i32, i32, i32
  }
  func.func @transform_4(%arg0: i32) -> (i32, i32, i32) {
    %c0_i32 = arith.constant 0 : i32
    %c0_i32_0 = arith.constant 0 : i32
    %c0_i32_1 = arith.constant 0 : i32
    %c0_i32_2 = arith.constant 0 : i32
    return %c0_i32, %c0_i32_0, %c0_i32_1 : i32, i32, i32
  }
  func.func @transform_5(%arg0: i32) -> (i32, i32, i32) {
    %c0_i32 = arith.constant 0 : i32
    %c0_i32_0 = arith.constant 0 : i32
    %c0_i32_1 = arith.constant 0 : i32
    %c0_i32_2 = arith.constant 0 : i32
    return %c0_i32, %c0_i32_0, %c0_i32_1 : i32, i32, i32
  }
  func.func @transform_6(%arg0: i32) -> (i32, i32) {
    %c0_i32 = arith.constant 0 : i32
    %c0_i32_0 = arith.constant 0 : i32
    return %arg0, %c0_i32 : i32, i32
  }
  func.func @transform_7(%arg0: i32) -> (i32, i32, i32) {
    %c0_i32 = arith.constant 0 : i32
    %c0_i32_0 = arith.constant 0 : i32
    %c0_i32_1 = arith.constant 0 : i32
    %c0_i32_2 = arith.constant 0 : i32
    return %c0_i32, %c0_i32_0, %c0_i32_1 : i32, i32, i32
  }
}

</mosaic_0001>

<llo_original>
// kernel: tpu_custom_call.1
$region0: #{tpu_custom_call.1}
  #allocation0 [shape = 'u32[]', space=smem, size = 0x4, offset = 0x4, fixed_abs, tag = 'smem constant byte address 0x4 - core index']
  #allocation1 [shape = 'u32[144,128]{1,0:T(1,128)}', space=vmem, size = 0x12000, scoped, tag = 'internal scratch']
  %s0 = inlined_call_operand.hbm [shape: f32[8,128], index: 0, kind: input, shape index: {}]
  %s1 = inlined_call_operand.hbm [shape: f32[8,128], index: 1, kind: output, shape index: {}]
  %s2 = sld [smem:[#allocation0]]
  $region41: #{tpu_custom_call.1} parent=0
    _
  %s4 = ssub.s32 1, %s2
  %s5 = scalar_select 0, %s4, %s2
  $region1: #{tpu_custom_call.1} parent=0
    #allocation2 [shape = 'u8[4096]{0}', space=vmem, size = 0x1000, scoped, tag = 'input window, operand 0, single buffered']
    #allocation3 [shape = 's32[2]{0}', space=sflag, size = 0x8, scoped, tag = 'scoped memory for tpu_custom_call.1']
    #allocation4 [shape = 's32[2]{0}', space=sflag, size = 0x8, scoped, tag = 'scoped memory for tpu_custom_call.1']
    #allocation5 [shape = 'u8[4096]{0}', space=vmem, size = 0x1000, scoped, tag = 'output window, operand 0, single buffered']
    %6 = vsyncpa [#allocation3], 0
    %7 = vsyncpa [#allocation4], 0
    loop: start=0, step=1, limit=4
    $region2: #{tpu_custom_call.1} parent=1 // loop_pre_header
      _
    $region3: #{tpu_custom_call.1} parent=1 // loop_header
      %s9 = sphi 0, %s13
      %p10 = scmp.ge.s32.totalorder %s9, 4
      %s17 = sphi 0, %s17
      %s19 = sphi 0, %s17
      %s20 = sphi 0, %s19
      %s34 = sphi 0, %s20
      %s38 = sphi 0, %s38
      %s40 = sphi 0, %s38
      %s41 = sphi 0, %s40
      %s55 = sphi 0, %s41
    $region4: #{tpu_custom_call.1} parent=1 // loop_header_branch
      %12 = sbr.rel (%p10) target = $region8
    $region5: #{tpu_custom_call.1} parent=1 // loop_body
      %s14 = ssub.s32 %s9, 1
      %s15 = ssub.s32 %s9, 2
      %s16 = sadd.s32 %s9, 1
      %s18 = sadd.s32 %s17, 1
      %p21 = scmp.eq.s32.totalorder %s9, 1
      %p22 = scmp.ne.s32.totalorder %s17, %s19
      %p23 = scmp.eq.s32.totalorder %s9, 0
      %p24 = por %p22, %p23
      %p25 = scmp.ne.s32.totalorder %s17, %s19
      %p26 = scmp.eq.s32.totalorder %s14, 1
      %p27 = por %p25, %p26
      %p28 = scmp.ne.s32.totalorder %s19, %s20
      %p29 = scmp.eq.s32.totalorder %s14, 0
      %p30 = por %p28, %p29
      %p31 = scmp.ne.s32.totalorder %s19, %s20
      %p32 = scmp.eq.s32.totalorder %s15, 1
      %p33 = por %p31, %p32
      %p35 = scmp.ne.s32.totalorder %s20, %s34
      %p36 = scmp.eq.s32.totalorder %s15, 0
      %p37 = por %p35, %p36
      %s39 = sadd.s32 %s38, 1
      %p42 = scmp.eq.s32.totalorder %s9, 1
      %p43 = scmp.ne.s32.totalorder %s38, %s40
      %p44 = scmp.eq.s32.totalorder %s9, 0
      %p45 = por %p43, %p44
      %p46 = scmp.ne.s32.totalorder %s38, %s40
      %p47 = scmp.eq.s32.totalorder %s14, 1
      %p48 = por %p46, %p47
      %p49 = scmp.ne.s32.totalorder %s40, %s41
      %p50 = scmp.eq.s32.totalorder %s14, 0
      %p51 = por %p49, %p50
      %p52 = scmp.ne.s32.totalorder %s40, %s41
      %p53 = scmp.eq.s32.totalorder %s15, 1
      %p54 = por %p52, %p53
      %p56 = scmp.ne.s32.totalorder %s41, %s55
      %p57 = scmp.eq.s32.totalorder %s15, 0
      %p58 = por %p56, %p57
      %p59 = scmp.le.s32.totalorder 1, %s9
      %p60 = scmp.lt.s32.totalorder %s9, 3
      %p61 = pnand %p59, %p60
      %p62 = pneg %p61
      // Predicated region
      $region9: #{tpu_custom_call.1} parent=5 // pred_check
        _
      $region10: #{tpu_custom_call.1} parent=5 // pred_check_branch
        %64 = sbr.rel (%p61) target = $region12
      $region11: #{tpu_custom_call.1} parent=5 // pred_region
        %s65 = ssub.s32 %s9, 1
        // Predicated region
        $region13: #{tpu_custom_call.1} parent=11 // pred_check
          %p66 = pneg %p30
        $region14: #{tpu_custom_call.1} parent=11 // pred_check_branch
          %68 = sbr.rel (%p66) target = $region16
        $region15: #{tpu_custom_call.1} parent=11 // pred_region
          %s70 = ssub.s32 128, 128
          %71 = vsyncadd [#allocation3], %s70
          %s73 = sshll.u32 [#allocation2], 4
          %s74 = int_to_ptr.vmem [resolvable:$true] %s73
          %76 = dma.hbm_to_vmem [thread:$0]  %s0, 128, %s74, [#allocation3]
        $region16: #{tpu_custom_call.1} parent=11 // pred_fallthru
          _
      $region12: #{tpu_custom_call.1} parent=5 // pred_fallthru
        _
      %p77 = scmp.lt.s32.totalorder %s9, 2
      // Predicated region
      $region17: #{tpu_custom_call.1} parent=5 // pred_check
        %p78 = pneg %p77
      $region18: #{tpu_custom_call.1} parent=5 // pred_check_branch
        %80 = sbr.rel (%p78) target = $region20
      $region19: #{tpu_custom_call.1} parent=5 // pred_region
        _
      $region20: #{tpu_custom_call.1} parent=5 // pred_fallthru
        _
      %p81 = scmp.le.s32.totalorder 1, %s9
      %p82 = scmp.lt.s32.totalorder %s9, 3
      %p83 = pnand %p81, %p82
      %p84 = pneg %p83
      // Predicated region
      $region21: #{tpu_custom_call.1} parent=5 // pred_check
        _
      $region22: #{tpu_custom_call.1} parent=5 // pred_check_branch
        %86 = sbr.rel (%p83) target = $region24
      $region23: #{tpu_custom_call.1} parent=5 // pred_region
        %s87 = ssub.s32 %s9, 1
        // Predicated region
        $region25: #{tpu_custom_call.1} parent=23 // pred_check
          %p88 = pneg %p30
        $region26: #{tpu_custom_call.1} parent=23 // pred_check_branch
          %90 = sbr.rel (%p88) target = $region28
        $region27: #{tpu_custom_call.1} parent=23 // pred_region
          %91 = dma.done [#allocation3], 128
        $region28: #{tpu_custom_call.1} parent=23 // pred_fallthru
          _
        %p92 = pneg %p30
        %p93 = pneg %p27
        %p94 = pneg %p51
        %p95 = pneg %p48
        %v96 = vld [vmem:[#allocation2] sm:$0xff]
        %v97 = vadd.f32 %v96, 1.0
        %98 = vst [vmem:[#allocation5] sm:$0xff] %v97
        // Predicated region
        $region29: #{tpu_custom_call.1} parent=23 // pred_check
          %p99 = pneg %p48
        $region30: #{tpu_custom_call.1} parent=23 // pred_check_branch
          %101 = sbr.rel (%p99) target = $region32
        $region31: #{tpu_custom_call.1} parent=23 // pred_region
          %s103 = ssub.s32 128, 128
          %104 = vsyncadd [#allocation4], %s103
          %s106 = sshll.u32 [#allocation5], 4
          %s107 = int_to_ptr.vmem [resolvable:$true] %s106
          %109 = dma.vmem_to_hbm [thread:$0]  %s107, 128, %s1, [#allocation4]
        $region32: #{tpu_custom_call.1} parent=23 // pred_fallthru
          _
        // Predicated region
        $region33: #{tpu_custom_call.1} parent=23 // pred_check
          %p110 = pneg %p48
        $region34: #{tpu_custom_call.1} parent=23 // pred_check_branch
          %112 = sbr.rel (%p110) target = $region36
        $region35: #{tpu_custom_call.1} parent=23 // pred_region
          %113 = dma.done [#allocation4], 128
        $region36: #{tpu_custom_call.1} parent=23 // pred_fallthru
          _
      $region24: #{tpu_custom_call.1} parent=5 // pred_fallthru
        _
      %p114 = scmp.le.s32.totalorder 2, %s9
      // Predicated region
      $region37: #{tpu_custom_call.1} parent=5 // pred_check
        %p115 = pneg %p114
      $region38: #{tpu_custom_call.1} parent=5 // pred_check_branch
        %117 = sbr.rel (%p115) target = $region40
      $region39: #{tpu_custom_call.1} parent=5 // pred_region
        %s118 = ssub.s32 %s9, 2
      $region40: #{tpu_custom_call.1} parent=5 // pred_fallthru
        _
    $region6: #{tpu_custom_call.1} parent=1 // loop_footer
      %s13 = sadd.s32 1, %s9
    $region7: #{tpu_custom_call.1} parent=1 // loop_footer_branch
      %8 = sbr.rel target = $region3
    $region8: #{tpu_custom_call.1} parent=1 // loop_exit
      _
    %119 = vsyncpa [#allocation3], 1
    %s120 = scalar_lea.sflag [#allocation3], 1
    %121 = vsyncpa %s120, 1
    %122 = vsyncpa [#allocation4], 1
    %s123 = scalar_lea.sflag [#allocation4], 1
    %124 = vsyncpa %s123, 1

// kernel: gru_forward.3
$region0: #{gru_forward.3}
  #allocation0 [shape = 'u32[]', space=smem, size = 0x4, offset = 0x4, fixed_abs, tag = 'smem constant byte address 0x4 - core index']
  #allocation1 [shape = 'u32[144,128]{1,0:T(1,128)}', space=vmem, size = 0x12000, scoped, tag = 'internal scratch']
  %s0 = inlined_call_operand.vmem [shape: bf16[128,128], index: 0, kind: input, shape index: {}]
  %s1 = inlined_call_operand.vmem [shape: bf16[128,384], index: 1, kind: input, shape index: {}]
  %s2 = inlined_call_operand.vmem [shape: f32[1,384], index: 2, kind: input, shape index: {}]
  %s3 = inlined_call_operand.vmem [shape: f32[128,384], index: 3, kind: output, shape index: {}]
  %s4 = sld [smem:[#allocation0]]
  $region45: #{gru_forward.3} parent=0
    _
  %s6 = ssub.s32 1, %s4
  %s7 = scalar_select 0, %s6, %s4
  loop: start=0, step=1, limit=4
  $region2: #{gru_forward.3} parent=0 // loop_pre_header
    _
  $region3: #{gru_forward.3} parent=0 // loop_header
    %s9 = sphi 0, %s13
    %p10 = scmp.ge.s32.totalorder %s9, 4
    %s19 = sphi 0, %s21
    %s22 = sphi 0, %s19
    %s23 = sphi 0, %s22
    %s39 = sphi 0, %s23
    %s43 = sphi 0, %s43
    %s45 = sphi 0, %s43
    %s46 = sphi 0, %s45
    %s60 = sphi 0, %s46
    %s64 = sphi 0, %s64
    %s66 = sphi 0, %s64
    %s67 = sphi 0, %s66
    %s81 = sphi 0, %s67
    %s87 = sphi 0, %s89
    %s90 = sphi 0, %s87
    %s91 = sphi 0, %s90
    %s107 = sphi 0, %s91
  $region4: #{gru_forward.3} parent=0 // loop_header_branch
    %12 = sbr.rel (%p10) target = $region8
  $region5: #{gru_forward.3} parent=0 // loop_body
    %s14 = ssub.s32 %s9, 1
    %s15 = ssub.s32 %s9, 2
    %s16 = sadd.s32 %s9, 1
    %s17 = ssub.s32 %s9, %s16
    %p18 = scmp.eq.s32.totalorder %s17, 0
    %s20 = sadd.s32 %s19, 1
    %s21 = scalar_select %p18, %s19, %s20
    %p24 = pneg %p18
    %p25 = scmp.eq.s32.totalorder %s9, 1
    %p26 = por %p24, %p25
    %p27 = scmp.ne.s32.totalorder %s19, %s22
    %p28 = scmp.eq.s32.totalorder %s9, 0
    %p29 = por %p27, %p28
    %p30 = scmp.ne.s32.totalorder %s19, %s22
    %p31 = scmp.eq.s32.totalorder %s14, 1
    %p32 = por %p30, %p31
    %p33 = scmp.ne.s32.totalorder %s22, %s23
    %p34 = scmp.eq.s32.totalorder %s14, 0
    %p35 = por %p33, %p34
    %p36 = scmp.ne.s32.totalorder %s22, %s23
    %p37 = scmp.eq.s32.totalorder %s15, 1
    %p38 = por %p36, %p37
    %p40 = scmp.ne.s32.totalorder %s23, %s39
    %p41 = scmp.eq.s32.totalorder %s15, 0
    %p42 = por %p40, %p41
    %s44 = sadd.s32 %s43, 1
    %p47 = scmp.eq.s32.totalorder %s9, 1
    %p48 = scmp.ne.s32.totalorder %s43, %s45
    %p49 = scmp.eq.s32.totalorder %s9, 0
    %p50 = por %p48, %p49
    %p51 = scmp.ne.s32.totalorder %s43, %s45
    %p52 = scmp.eq.s32.totalorder %s14, 1
    %p53 = por %p51, %p52
    %p54 = scmp.ne.s32.totalorder %s45, %s46
    %p55 = scmp.eq.s32.totalorder %s14, 0
    %p56 = por %p54, %p55
    %p57 = scmp.ne.s32.totalorder %s45, %s46
    %p58 = scmp.eq.s32.totalorder %s15, 1
    %p59 = por %p57, %p58
    %p61 = scmp.ne.s32.totalorder %s46, %s60
    %p62 = scmp.eq.s32.totalorder %s15, 0
    %p63 = por %p61, %p62
    %s65 = sadd.s32 %s64, 1
    %p68 = scmp.eq.s32.totalorder %s9, 1
    %p69 = scmp.ne.s32.totalorder %s64, %s66
    %p70 = scmp.eq.s32.totalorder %s9, 0
    %p71 = por %p69, %p70
    %p72 = scmp.ne.s32.totalorder %s64, %s66
    %p73 = scmp.eq.s32.totalorder %s14, 1
    %p74 = por %p72, %p73
    %p75 = scmp.ne.s32.totalorder %s66, %s67
    %p76 = scmp.eq.s32.totalorder %s14, 0
    %p77 = por %p75, %p76
    %p78 = scmp.ne.s32.totalorder %s66, %s67
    %p79 = scmp.eq.s32.totalorder %s15, 1
    %p80 = por %p78, %p79
    %p82 = scmp.ne.s32.totalorder %s67, %s81
    %p83 = scmp.eq.s32.totalorder %s15, 0
    %p84 = por %p82, %p83
    %s85 = ssub.s32 %s9, %s16
    %p86 = scmp.eq.s32.totalorder %s85, 0
    %s88 = sadd.s32 %s87, 1
    %s89 = scalar_select %p86, %s87, %s88
    %p92 = pneg %p86
    %p93 = scmp.eq.s32.totalorder %s9, 1
    %p94 = por %p92, %p93
    %p95 = scmp.ne.s32.totalorder %s87, %s90
    %p96 = scmp.eq.s32.totalorder %s9, 0
    %p97 = por %p95, %p96
    %p98 = scmp.ne.s32.totalorder %s87, %s90
    %p99 = scmp.eq.s32.totalorder %s14, 1
    %p100 = por %p98, %p99
    %p101 = scmp.ne.s32.totalorder %s90, %s91
    %p102 = scmp.eq.s32.totalorder %s14, 0
    %p103 = por %p101, %p102
    %p104 = scmp.ne.s32.totalorder %s90, %s91
    %p105 = scmp.eq.s32.totalorder %s15, 1
    %p106 = por %p104, %p105
    %p108 = scmp.ne.s32.totalorder %s91, %s107
    %p109 = scmp.eq.s32.totalorder %s15, 0
    %p110 = por %p108, %p109
    %p111 = scmp.le.s32.totalorder 1, %s9
    %p112 = scmp.lt.s32.totalorder %s9, 3
    %p113 = pnand %p111, %p112
    %p114 = pneg %p113
    // Predicated region
    $region9: #{gru_forward.3} parent=5 // pred_check
      _
    $region10: #{gru_forward.3} parent=5 // pred_check_branch
      %116 = sbr.rel (%p113) target = $region12
    $region11: #{gru_forward.3} parent=5 // pred_region
      %s117 = ssub.s32 %s9, 1
      // Predicated region
      $region13: #{gru_forward.3} parent=11 // pred_check
        %p118 = pneg %p56
      $region14: #{gru_forward.3} parent=11 // pred_check_branch
        %120 = sbr.rel (%p118) target = $region16
      $region15: #{gru_forward.3} parent=11 // pred_region
        _
      $region16: #{gru_forward.3} parent=11 // pred_fallthru
        _
      // Predicated region
      $region17: #{gru_forward.3} parent=11 // pred_check
        %p121 = pneg %p77
      $region18: #{gru_forward.3} parent=11 // pred_check_branch
        %123 = sbr.rel (%p121) target = $region20
      $region19: #{gru_forward.3} parent=11 // pred_region
        _
      $region20: #{gru_forward.3} parent=11 // pred_fallthru
        _
    $region12: #{gru_forward.3} parent=5 // pred_fallthru
      _
    %p124 = scmp.lt.s32.totalorder %s9, 2
    // Predicated region
    $region21: #{gru_forward.3} parent=5 // pred_check
      %p125 = pneg %p124
    $region22: #{gru_forward.3} parent=5 // pred_check_branch
      %127 = sbr.rel (%p125) target = $region24
    $region23: #{gru_forward.3} parent=5 // pred_region
      // Predicated region
      $region25: #{gru_forward.3} parent=23 // pred_check
        %p128 = pneg %p29
      $region26: #{gru_forward.3} parent=23 // pred_check_branch
        %130 = sbr.rel (%p128) target = $region28
      $region27: #{gru_forward.3} parent=23 // pred_region
        %s131 = smul.u32 8, %s9
        %p132 = scmp.lt.s32.totalorder %s131, 15
        %s133 = scalar_select %p132, %s131, 15
        %s134 = smul.addr %s133, 4
        %s135 = scalar_lea.vmem %s0, %s134
        %s136 = smul.u32 8, %s9
      $region28: #{gru_forward.3} parent=23 // pred_fallthru
        _
    $region24: #{gru_forward.3} parent=5 // pred_fallthru
      _
    %p137 = scmp.le.s32.totalorder 1, %s9
    %p138 = scmp.lt.s32.totalorder %s9, 3
    %p139 = pnand %p137, %p138
    %p140 = pneg %p139
    // Predicated region
    $region29: #{gru_forward.3} parent=5 // pred_check
      _
    $region30: #{gru_forward.3} parent=5 // pred_check_branch
      %142 = sbr.rel (%p139) target = $region32
    $region31: #{gru_forward.3} parent=5 // pred_region
      %s143 = ssub.s32 %s9, 1
      %s144 = smul.u32 8, %s14
      %p145 = scmp.lt.s32.totalorder %s144, 15
      %s146 = scalar_select %p145, %s144, 15
      %s147 = smul.addr %s146, 4
      %s148 = scalar_lea.vmem %s0, %s147
      %p149 = pneg %p35
      %p150 = pneg %p32
      %p151 = pneg %p56
      %p152 = pneg %p53
      %p153 = pneg %p77
      %p154 = pneg %p74
      %p155 = pneg %p103
      %p156 = pneg %p100
      %s157 = smul.u32 8, %s14
      %p158 = scmp.lt.s32.totalorder %s157, 15
      %s159 = scalar_select %p158, %s157, 15
      %s160 = smul.addr %s159, 3
      %s161 = smul.addr %s160, 8
      %s162 = scalar_lea.vmem %s3, %s161
      %s163 = smul.u32 8, %s14
      %p164 = scmp.lt.s32.totalorder %s163, 15
      %s165 = scalar_select %p164, %s163, 15
      %s166 = smul.addr %s165, 4
      %s167 = scalar_lea.vmem %s0, %s166
      %s168 = smul.u32 8, %s14
      %s169 = smul.u32 8, %s14
      %p170 = scmp.lt.s32.totalorder %s169, 15
      %s171 = scalar_select %p170, %s169, 15
      %s172 = smul.addr %s171, 3
      %s173 = smul.addr %s172, 8
      %s174 = scalar_lea.vmem %s3, %s173
      %s175 = smul.u32 8, %s14
      %v177 = vld [vmem:[%s167] sm:$0xf]
      %v178 = vld [vmem:[%s167 + $0x4] sm:$0xf]
      %v179 = vld [vmem:[%s167 + $0x8] sm:$0xf]
      %v180 = vld [vmem:[%s167 + $0xc] sm:$0xf]
      %v181 = vld [vmem:[%s167 + $0x10] sm:$0xf]
      %v182 = vld [vmem:[%s167 + $0x14] sm:$0xf]
      %v183 = vld [vmem:[%s167 + $0x18] sm:$0xf]
      %v184 = vld [vmem:[%s167 + $0x1c] sm:$0xf]
      %v185 = vld [vmem:[%s1] sm:$0xff]
      %v186 = vld [vmem:[%s1 + $0x8] sm:$0xf]
      %v187 = vld [vmem:[%s1 + $0xc] sm:$0xff]
      %v188 = vld [vmem:[%s1 + $0x14] sm:$0xf]
      %v189 = vld [vmem:[%s1 + $0x18] sm:$0xff]
      %v190 = vld [vmem:[%s1 + $0x20] sm:$0xf]
      %v191 = vld [vmem:[%s1 + $0x24] sm:$0xff]
      %v192 = vld [vmem:[%s1 + $0x2c] sm:$0xf]
      %v193 = vld [vmem:[%s1 + $0x30] sm:$0xff]
      %v194 = vld [vmem:[%s1 + $0x38] sm:$0xf]
      %v195 = vld [vmem:[%s1 + $0x3c] sm:$0xff]
      %v196 = vld [vmem:[%s1 + $0x44] sm:$0xf]
      %v197 = vld [vmem:[%s1 + $0x48] sm:$0xff]
      %v198 = vld [vmem:[%s1 + $0x50] sm:$0xf]
      %v199 = vld [vmem:[%s1 + $0x54] sm:$0xff]
      %v200 = vld [vmem:[%s1 + $0x5c] sm:$0xf]
      %v201 = vld [vmem:[%s1 + $0x60] sm:$0xff]
      %v202 = vld [vmem:[%s1 + $0x68] sm:$0xf]
      %v203 = vld [vmem:[%s1 + $0x6c] sm:$0xff]
      %v204 = vld [vmem:[%s1 + $0x74] sm:$0xf]
      %v205 = vld [vmem:[%s1 + $0x78] sm:$0xff]
      %v206 = vld [vmem:[%s1 + $0x80] sm:$0xf]
      %v207 = vld [vmem:[%s1 + $0x84] sm:$0xff]
      %v208 = vld [vmem:[%s1 + $0x8c] sm:$0xf]
      %v209 = vld [vmem:[%s1 + $0x90] sm:$0xff]
      %v210 = vld [vmem:[%s1 + $0x98] sm:$0xf]
      %v211 = vld [vmem:[%s1 + $0x9c] sm:$0xff]
      %v212 = vld [vmem:[%s1 + $0xa4] sm:$0xf]
      %v213 = vld [vmem:[%s1 + $0xa8] sm:$0xff]
      %v214 = vld [vmem:[%s1 + $0xb0] sm:$0xf]
      %v215 = vld [vmem:[%s1 + $0xb4] sm:$0xff]
      %v216 = vld [vmem:[%s1 + $0xbc] sm:$0xf]
      %v217 = vld [vmem:[%s2] sm:$0x7]
      %v219 = vlaneseq
      %v220 = vshrl.u32 %v219, 7
      %v221 = vsub.s32 0, %v220
      %v222 = vrot.slane %v217, %v221
      %v223 = vlaneseq
      %v224 = vshrl.u32 %v223, 7
      %v225 = vsub.s32 1, %v224
      %v226 = vrot.slane %v217, %v225
      %v227 = vlaneseq
      %v228 = vshrl.u32 %v227, 7
      %v229 = vsub.s32 2, %v228
      %v230 = vrot.slane %v217, %v229
      %v242 = vunpack.c.l.b16 %v177
      %v243 = vunpack.c.l.b16 %v178
      %v244 = vunpack.c.l.b16 %v179
      %v245 = vunpack.c.l.b16 %v180
      %v246 = vunpack.c.l.b16 %v181
      %v247 = vunpack.c.l.b16 %v182
      %v248 = vunpack.c.l.b16 %v183
      %v249 = vunpack.c.l.b16 %v184
      %v250 = vpack.c.b16 %v243, %v242
      %v251 = vpack.c.b16 %v245, %v244
      %v252 = vpack.c.b16 %v247, %v246
      %v253 = vpack.c.b16 %v249, %v248
      %v290 = vunpack.c.l.b16 %v185
      %v291 = vunpack.c.h.b16 %v185
      %v292 = vunpack.c.l.b16 %v186
      %v293 = vunpack.c.l.b16 %v187
      %v294 = vunpack.c.h.b16 %v187
      %v295 = vunpack.c.l.b16 %v188
      %v296 = vunpack.c.l.b16 %v189
      %v297 = vunpack.c.h.b16 %v189
      %v298 = vunpack.c.l.b16 %v190
      %v299 = vunpack.c.l.b16 %v191
      %v300 = vunpack.c.h.b16 %v191
      %v301 = vunpack.c.l.b16 %v192
      %v302 = vunpack.c.l.b16 %v193
      %v303 = vunpack.c.h.b16 %v193
      %v304 = vunpack.c.l.b16 %v194
      %v305 = vunpack.c.l.b16 %v195
      %v306 = vunpack.c.h.b16 %v195
      %v307 = vunpack.c.l.b16 %v196
      %v308 = vunpack.c.l.b16 %v197
      %v309 = vunpack.c.h.b16 %v197
      %v310 = vunpack.c.l.b16 %v198
      %v311 = vunpack.c.l.b16 %v199
      %v312 = vunpack.c.h.b16 %v199
      %v313 = vunpack.c.l.b16 %v200
      %v314 = vunpack.c.l.b16 %v201
      %v315 = vunpack.c.h.b16 %v201
      %v316 = vunpack.c.l.b16 %v202
      %v317 = vunpack.c.l.b16 %v203
      %v318 = vunpack.c.h.b16 %v203
      %v319 = vunpack.c.l.b16 %v204
      %v320 = vunpack.c.l.b16 %v205
      %v321 = vunpack.c.h.b16 %v205
      %v322 = vunpack.c.l.b16 %v206
      %v323 = vunpack.c.l.b16 %v207
      %v324 = vunpack.c.h.b16 %v207
      %v325 = vunpack.c.l.b16 %v208
      %v326 = vunpack.c.l.b16 %v209
      %v327 = vunpack.c.h.b16 %v209
      %v328 = vunpack.c.l.b16 %v210
      %v329 = vunpack.c.l.b16 %v211
      %v330 = vunpack.c.h.b16 %v211
      %v331 = vunpack.c.l.b16 %v212
      %v332 = vunpack.c.l.b16 %v213
      %v333 = vunpack.c.h.b16 %v213
      %v334 = vunpack.c.l.b16 %v214
      %v335 = vunpack.c.l.b16 %v215
      %v336 = vunpack.c.h.b16 %v215
      %v337 = vunpack.c.l.b16 %v216
      %v338 = vpack.c.b16 %v293, %v290
      %v339 = vpack.c.b16 %v294, %v291
      %v340 = vpack.c.b16 %v295, %v292
      %v341 = vpack.c.b16 %v299, %v296
      %v342 = vpack.c.b16 %v300, %v297
      %v343 = vpack.c.b16 %v301, %v298
      %v344 = vpack.c.b16 %v305, %v302
      %v345 = vpack.c.b16 %v306, %v303
      %v346 = vpack.c.b16 %v307, %v304
      %v347 = vpack.c.b16 %v311, %v308
      %v348 = vpack.c.b16 %v312, %v309
      %v349 = vpack.c.b16 %v313, %v310
      %v350 = vpack.c.b16 %v317, %v314
      %v351 = vpack.c.b16 %v318, %v315
      %v352 = vpack.c.b16 %v319, %v316
      %v353 = vpack.c.b16 %v323, %v320
      %v354 = vpack.c.b16 %v324, %v321
      %v355 = vpack.c.b16 %v325, %v322
      %v356 = vpack.c.b16 %v329, %v326
      %v357 = vpack.c.b16 %v330, %v327
      %v358 = vpack.c.b16 %v331, %v328
      %v359 = vpack.c.b16 %v335, %v332
      %v360 = vpack.c.b16 %v336, %v333
      %v361 = vpack.c.b16 %v337, %v334
      %386 = vmatprep.subr.bf16.mxu0 %v339
      %387 = vmatpush1.bf16.msra.mxu0 %v338
      %388 = vmatprep.subr.bf16.mxu0 %v342
      %389 = vmatpush1.bf16.msra.mxu0 %v341
      %390 = vmatprep.subr.bf16.mxu0 %v345
      %391 = vmatpush1.bf16.msra.mxu0 %v344
      %392 = vmatprep.subr.bf16.mxu0 %v348
      %393 = vmatpush1.bf16.msra.mxu0 %v347
      %394 = vmatprep.subr.bf16.mxu0 %v351
      %395 = vmatpush1.bf16.msra.mxu0 %v350
      %396 = vmatprep.subr.bf16.mxu0 %v354
      %397 = vmatpush1.bf16.msra.mxu0 %v353
      %398 = vmatprep.subr.bf16.mxu0 %v357
      %399 = vmatpush1.bf16.msra.mxu0 %v356
      %400 = vmatprep.subr.bf16.mxu0 %v360
      %401 = vmatpush1.bf16.msra.mxu0 %v359
      %402 = vmatprep.subr.bf16.mxu0 0
      %403 = vmatpush1.bf16.msra.mxu0 0
      %404 = vmatprep.subr.bf16.mxu0 0
      %405 = vmatpush1.bf16.msra.mxu0 0
      %406 = vmatprep.subr.bf16.mxu0 0
      %407 = vmatpush1.bf16.msra.mxu0 0
      %408 = vmatprep.subr.bf16.mxu0 0
      %409 = vmatpush1.bf16.msra.mxu0 0
      %410 = vmatprep.subr.bf16.mxu0 0
      %411 = vmatpush1.bf16.msra.mxu0 0
      %412 = vmatprep.subr.bf16.mxu0 0
      %413 = vmatpush1.bf16.msra.mxu0 0
      %414 = vmatprep.subr.bf16.mxu0 0
      %415 = vmatpush1.bf16.msra.mxu0 0
      %416 = vmatprep.subr.bf16.mxu0 0
      %417 = vmatpush1.bf16.msra.mxu0 0
      %418 = vmatprep.mubr.bf16.mxu0 0
      %419 = vmatmul.mubr.bf16.gmra.mrb[0].mxu0 %v250
      %v420 = vpop.f32.mrb[0].mxu0
      %v421 = vadd.f32 %v222, %v420
      %v422 = vpop.f32.mrb[0].mxu0
      %v423 = vadd.f32 %v226, %v422
      %v424 = vpop.f32.mrb[0].mxu0
      %v425 = vadd.f32 %v222, %v424
      %v426 = vpop.f32.mrb[0].mxu0
      %v427 = vadd.f32 %v226, %v426
      %428 = vmatprep.mubr.bf16.mxu0 0
      %429 = vmatmul.mubr.bf16.gmra.mrb[0].mxu0 %v251
      %v430 = vpop.f32.mrb[0].mxu0
      %v431 = vadd.f32 %v222, %v430
      %v432 = vpop.f32.mrb[0].mxu0
      %v433 = vadd.f32 %v226, %v432
      %v434 = vpop.f32.mrb[0].mxu0
      %v435 = vadd.f32 %v222, %v434
      %v436 = vpop.f32.mrb[0].mxu0
      %v437 = vadd.f32 %v226, %v436
      %438 = vmatprep.mubr.bf16.mxu0 0
      %439 = vmatmul.mubr.bf16.gmra.mrb[0].mxu0 %v252
      %v440 = vpop.f32.mrb[0].mxu0
      %v441 = vadd.f32 %v222, %v440
      %v442 = vpop.f32.mrb[0].mxu0
      %v443 = vadd.f32 %v226, %v442
      %v444 = vpop.f32.mrb[0].mxu0
      %v445 = vadd.f32 %v222, %v444
      %v446 = vpop.f32.mrb[0].mxu0
      %v447 = vadd.f32 %v226, %v446
      %448 = vmatprep.mubr.bf16.mxu0 0
      %449 = vmatmul.mubr.bf16.gmra.mrb[0].mxu0 %v253
      %v450 = vpop.f32.mrb[0].mxu0
      %v451 = vadd.f32 %v222, %v450
      %v452 = vpop.f32.mrb[0].mxu0
      %v453 = vadd.f32 %v226, %v452
      %v454 = vpop.f32.mrb[0].mxu0
      %v455 = vadd.f32 %v222, %v454
      %v456 = vpop.f32.mrb[0].mxu0
      %v457 = vadd.f32 %v226, %v456
      %458 = vdwg.mxu0
      %459 = vmatprep.subr.bf16.mxu0 0
      %460 = vmatpush1.bf16.msra.mxu0 %v340
      %461 = vmatprep.subr.bf16.mxu0 0
      %462 = vmatpush1.bf16.msra.mxu0 %v343
      %463 = vmatprep.subr.bf16.mxu0 0
      %464 = vmatpush1.bf16.msra.mxu0 %v346
      %465 = vmatprep.subr.bf16.mxu0 0
      %466 = vmatpush1.bf16.msra.mxu0 %v349
      %467 = vmatprep.subr.bf16.mxu0 0
      %468 = vmatpush1.bf16.msra.mxu0 %v352
      %469 = vmatprep.subr.bf16.mxu0 0
      %470 = vmatpush1.bf16.msra.mxu0 %v355
      %471 = vmatprep.subr.bf16.mxu0 0
      %472 = vmatpush1.bf16.msra.mxu0 %v358
      %473 = vmatprep.subr.bf16.mxu0 0
      %474 = vmatpush1.bf16.msra.mxu0 %v361
      %475 = vmatprep.subr.bf16.mxu0 0
      %476 = vmatpush1.bf16.msra.mxu0 0
      %477 = vmatprep.subr.bf16.mxu0 0
      %478 = vmatpush1.bf16.msra.mxu0 0
      %479 = vmatprep.subr.bf16.mxu0 0
      %480 = vmatpush1.bf16.msra.mxu0 0
      %481 = vmatprep.subr.bf16.mxu0 0
      %482 = vmatpush1.bf16.msra.mxu0 0
      %483 = vmatprep.subr.bf16.mxu0 0
      %484 = vmatpush1.bf16.msra.mxu0 0
      %485 = vmatprep.subr.bf16.mxu0 0
      %486 = vmatpush1.bf16.msra.mxu0 0
      %487 = vmatprep.subr.bf16.mxu0 0
      %488 = vmatpush1.bf16.msra.mxu0 0
      %489 = vmatprep.subr.bf16.mxu0 0
      %490 = vmatpush1.bf16.msra.mxu0 0
      %491 = vmatprep.mubr.bf16.mxu0 0
      %492 = vmatmul.mubr.bf16.gmra.mrb[0].mxu0 %v250
      %v493 = vpop.f32.mrb[0].mxu0
      %v494 = vadd.f32 %v230, %v493
      %v495 = vpop.f32.mrb[0].mxu0
      %v496 = vpop.f32.mrb[0].mxu0
      %v497 = vadd.f32 %v230, %v496
      %v498 = vpop.f32.mrb[0].mxu0
      %499 = vmatprep.mubr.bf16.mxu0 0
      %500 = vmatmul.mubr.bf16.gmra.mrb[0].mxu0 %v251
      %v501 = vpop.f32.mrb[0].mxu0
      %v502 = vadd.f32 %v230, %v501
      %v503 = vpop.f32.mrb[0].mxu0
      %v504 = vpop.f32.mrb[0].mxu0
      %v505 = vadd.f32 %v230, %v504
      %v506 = vpop.f32.mrb[0].mxu0
      %507 = vmatprep.mubr.bf16.mxu0 0
      %508 = vmatmul.mubr.bf16.gmra.mrb[0].mxu0 %v252
      %v509 = vpop.f32.mrb[0].mxu0
      %v510 = vadd.f32 %v230, %v509
      %v511 = vpop.f32.mrb[0].mxu0
      %v512 = vpop.f32.mrb[0].mxu0
      %v513 = vadd.f32 %v230, %v512
      %v514 = vpop.f32.mrb[0].mxu0
      %515 = vmatprep.mubr.bf16.mxu0 0
      %516 = vmatmul.mubr.bf16.gmra.mrb[0].mxu0 %v253
      %v517 = vpop.f32.mrb[0].mxu0
      %v518 = vadd.f32 %v230, %v517
      %v519 = vpop.f32.mrb[0].mxu0
      %v520 = vpop.f32.mrb[0].mxu0
      %v521 = vadd.f32 %v230, %v520
      %v522 = vpop.f32.mrb[0].mxu0
      %523 = vdwg.mxu0
      %524 = vst [vmem:[%s174] sm:$0xff] %v421
      %525 = vst [vmem:[%s174 + $0x8] sm:$0xff] %v423
      %526 = vst [vmem:[%s174 + $0x10] sm:$0xff] %v494
      %527 = vst [vmem:[%s174 + $0x18] sm:$0xff] %v425
      %528 = vst [vmem:[%s174 + $0x20] sm:$0xff] %v427
      %529 = vst [vmem:[%s174 + $0x28] sm:$0xff] %v497
      %530 = vst [vmem:[%s174 + $0x30] sm:$0xff] %v431
      %531 = vst [vmem:[%s174 + $0x38] sm:$0xff] %v433
      %532 = vst [vmem:[%s174 + $0x40] sm:$0xff] %v502
      %533 = vst [vmem:[%s174 + $0x48] sm:$0xff] %v435
      %534 = vst [vmem:[%s174 + $0x50] sm:$0xff] %v437
      %535 = vst [vmem:[%s174 + $0x58] sm:$0xff] %v505
      %536 = vst [vmem:[%s174 + $0x60] sm:$0xff] %v441
      %537 = vst [vmem:[%s174 + $0x68] sm:$0xff] %v443
      %538 = vst [vmem:[%s174 + $0x70] sm:$0xff] %v510
      %539 = vst [vmem:[%s174 + $0x78] sm:$0xff] %v445
      %540 = vst [vmem:[%s174 + $0x80] sm:$0xff] %v447
      %541 = vst [vmem:[%s174 + $0x88] sm:$0xff] %v513
      %542 = vst [vmem:[%s174 + $0x90] sm:$0xff] %v451
      %543 = vst [vmem:[%s174 + $0x98] sm:$0xff] %v453
      %544 = vst [vmem:[%s174 + $0xa0] sm:$0xff] %v518
      %545 = vst [vmem:[%s174 + $0xa8] sm:$0xff] %v455
      %546 = vst [vmem:[%s174 + $0xb0] sm:$0xff] %v457
      %547 = vst [vmem:[%s174 + $0xb8] sm:$0xff] %v521
      %s548 = smul.u32 8, %s14
      %p549 = scmp.lt.s32.totalorder %s548, 15
      %s550 = scalar_select %p549, %s548, 15
      %s551 = smul.addr %s550, 3
      %s552 = smul.addr %s551, 8
      %s553 = scalar_lea.vmem %s3, %s552
      // Predicated region
      $region33: #{gru_forward.3} parent=31 // pred_check
        %p554 = pneg %p100
      $region34: #{gru_forward.3} parent=31 // pred_check_branch
        %556 = sbr.rel (%p554) target = $region36
      $region35: #{gru_forward.3} parent=31 // pred_region
        %s557 = smul.u32 8, %s14
      $region36: #{gru_forward.3} parent=31 // pred_fallthru
        _
    $region32: #{gru_forward.3} parent=5 // pred_fallthru
      _
    %p558 = scmp.le.s32.totalorder 2, %s9
    // Predicated region
    $region37: #{gru_forward.3} parent=5 // pred_check
      %p559 = pneg %p558
    $region38: #{gru_forward.3} parent=5 // pred_check_branch
      %561 = sbr.rel (%p559) target = $region40
    $region39: #{gru_forward.3} parent=5 // pred_region
      %s562 = ssub.s32 %s9, 2
      // Predicated region
      $region41: #{gru_forward.3} parent=39 // pred_check
        %p563 = pneg %p106
      $region42: #{gru_forward.3} parent=39 // pred_check_branch
        %565 = sbr.rel (%p563) target = $region44
      $region43: #{gru_forward.3} parent=39 // pred_region
        %s566 = smul.u32 8, %s15
        %p567 = scmp.lt.s32.totalorder %s566, 15
        %s568 = scalar_select %p567, %s566, 15
        %s569 = smul.addr %s568, 3
        %s570 = smul.addr %s569, 8
        %s571 = scalar_lea.vmem %s3, %s570
      $region44: #{gru_forward.3} parent=39 // pred_fallthru
        _
    $region40: #{gru_forward.3} parent=5 // pred_fallthru
      _
  $region6: #{gru_forward.3} parent=0 // loop_footer
    %s13 = sadd.s32 1, %s9
  $region7: #{gru_forward.3} parent=0 // loop_footer_branch
    %8 = sbr.rel target = $region3
  $region8: #{gru_forward.3} parent=0 // loop_exit
    _

// kernel: gru_forward.5
$region0: #{gru_forward.5}
  #allocation0 [shape = 'u32[]', space=smem, size = 0x4, offset = 0x4, fixed_abs, tag = 'smem constant byte address 0x4 - core index']
  #allocation1 [shape = 'u32[144,128]{1,0:T(1,128)}', space=vmem, size = 0x12000, scoped, tag = 'internal scratch']
  %s0 = inlined_call_operand.vmem [shape: f32[128,128], index: 0, kind: input, shape index: {}]
  %s1 = inlined_call_operand.vmem [shape: bf16[128,128], index: 1, kind: input, shape index: {}]
  %s2 = inlined_call_operand.vmem [shape: f32[1,128], index: 2, kind: input, shape index: {}]
  %s3 = inlined_call_operand.vmem [shape: f32[128,128], index: 3, kind: output, shape index: {}]
  %s4 = sld [smem:[#allocation0]]
  $region22: #{gru_forward.5} parent=0
    _
  %s6 = ssub.s32 1, %s4
  %s7 = scalar_select 0, %s6, %s4
  // Predicated region
  $region2: #{gru_forward.5} parent=0 // pred_check
    _
  $region3: #{gru_forward.5} parent=0 // pred_check_branch
    %9 = sbr.rel (0) target = $region5
  $region4: #{gru_forward.5} parent=0 // pred_region
    _
  $region5: #{gru_forward.5} parent=0 // pred_fallthru
    _
  // Predicated region
  $region6: #{gru_forward.5} parent=0 // pred_check
    _
  $region7: #{gru_forward.5} parent=0 // pred_check_branch
    %11 = sbr.rel (0) target = $region9
  $region8: #{gru_forward.5} parent=0 // pred_region
    _
  $region9: #{gru_forward.5} parent=0 // pred_fallthru
    _
  // Predicated region
  $region10: #{gru_forward.5} parent=0 // pred_check
    _
  $region11: #{gru_forward.5} parent=0 // pred_check_branch
    %13 = sbr.rel (0) target = $region13
  $region12: #{gru_forward.5} parent=0 // pred_region
    _
  $region13: #{gru_forward.5} parent=0 // pred_fallthru
    _
  %v15 = vld [vmem:[%s0] sm:$0xff]
  %v16 = vld [vmem:[%s0 + $0x8] sm:$0xff]
  %v17 = vld [vmem:[%s0 + $0x10] sm:$0xff]
  %v18 = vld [vmem:[%s0 + $0x18] sm:$0xff]
  %v19 = vld [vmem:[%s0 + $0x20] sm:$0xff]
  %v20 = vld [vmem:[%s0 + $0x28] sm:$0xff]
  %v21 = vld [vmem:[%s0 + $0x30] sm:$0xff]
  %v22 = vld [vmem:[%s0 + $0x38] sm:$0xff]
  %v23 = vld [vmem:[%s0 + $0x40] sm:$0xff]
  %v24 = vld [vmem:[%s0 + $0x48] sm:$0xff]
  %v25 = vld [vmem:[%s0 + $0x50] sm:$0xff]
  %v26 = vld [vmem:[%s0 + $0x58] sm:$0xff]
  %v27 = vld [vmem:[%s0 + $0x60] sm:$0xff]
  %v28 = vld [vmem:[%s0 + $0x68] sm:$0xff]
  %v29 = vld [vmem:[%s0 + $0x70] sm:$0xff]
  %v30 = vld [vmem:[%s0 + $0x78] sm:$0xff]
  %v31 = vpack.c.bf16 %v16, %v15
  %v32 = vpack.c.bf16 %v18, %v17
  %v33 = vpack.c.bf16 %v20, %v19
  %v34 = vpack.c.bf16 %v22, %v21
  %v35 = vpack.c.bf16 %v24, %v23
  %v36 = vpack.c.bf16 %v26, %v25
  %v37 = vpack.c.bf16 %v28, %v27
  %v38 = vpack.c.bf16 %v30, %v29
  %v39 = vld [vmem:[%s1] sm:$0xf]
  %v40 = vld [vmem:[%s1 + $0x4] sm:$0xf]
  %v41 = vld [vmem:[%s1 + $0x8] sm:$0xf]
  %v42 = vld [vmem:[%s1 + $0xc] sm:$0xf]
  %v43 = vld [vmem:[%s1 + $0x10] sm:$0xf]
  %v44 = vld [vmem:[%s1 + $0x14] sm:$0xf]
  %v45 = vld [vmem:[%s1 + $0x18] sm:$0xf]
  %v46 = vld [vmem:[%s1 + $0x1c] sm:$0xf]
  %v47 = vld [vmem:[%s1 + $0x20] sm:$0xf]
  %v48 = vld [vmem:[%s1 + $0x24] sm:$0xf]
  %v49 = vld [vmem:[%s1 + $0x28] sm:$0xf]
  %v50 = vld [vmem:[%s1 + $0x2c] sm:$0xf]
  %v51 = vld [vmem:[%s1 + $0x30] sm:$0xf]
  %v52 = vld [vmem:[%s1 + $0x34] sm:$0xf]
  %v53 = vld [vmem:[%s1 + $0x38] sm:$0xf]
  %v54 = vld [vmem:[%s1 + $0x3c] sm:$0xf]
  %v55 = vld [vmem:[%s2] sm:$0x1]
  %v57 = vlaneseq
  %v58 = vshrl.u32 %v57, 7
  %v59 = vsub.s32 0, %v58
  %v60 = vrot.slane %v55, %v59
  %v78 = vunpack.c.l.b16 %v39
  %v79 = vunpack.c.l.b16 %v40
  %v80 = vunpack.c.l.b16 %v41
  %v81 = vunpack.c.l.b16 %v42
  %v82 = vunpack.c.l.b16 %v43
  %v83 = vunpack.c.l.b16 %v44
  %v84 = vunpack.c.l.b16 %v45
  %v85 = vunpack.c.l.b16 %v46
  %v86 = vunpack.c.l.b16 %v47
  %v87 = vunpack.c.l.b16 %v48
  %v88 = vunpack.c.l.b16 %v49
  %v89 = vunpack.c.l.b16 %v50
  %v90 = vunpack.c.l.b16 %v51
  %v91 = vunpack.c.l.b16 %v52
  %v92 = vunpack.c.l.b16 %v53
  %v93 = vunpack.c.l.b16 %v54
  %v94 = vpack.c.b16 %v79, %v78
  %v95 = vpack.c.b16 %v81, %v80
  %v96 = vpack.c.b16 %v83, %v82
  %v97 = vpack.c.b16 %v85, %v84
  %v98 = vpack.c.b16 %v87, %v86
  %v99 = vpack.c.b16 %v89, %v88
  %v100 = vpack.c.b16 %v91, %v90
  %v101 = vpack.c.b16 %v93, %v92
  %110 = vmatprep.subr.bf16.mxu0 0
  %111 = vmatpush1.bf16.msra.mxu0 %v94
  %112 = vmatprep.subr.bf16.mxu0 0
  %113 = vmatpush1.bf16.msra.mxu0 %v95
  %114 = vmatprep.subr.bf16.mxu0 0
  %115 = vmatpush1.bf16.msra.mxu0 %v96
  %116 = vmatprep.subr.bf16.mxu0 0
  %117 = vmatpush1.bf16.msra.mxu0 %v97
  %118 = vmatprep.subr.bf16.mxu0 0
  %119 = vmatpush1.bf16.msra.mxu0 %v98
  %120 = vmatprep.subr.bf16.mxu0 0
  %121 = vmatpush1.bf16.msra.mxu0 %v99
  %122 = vmatprep.subr.bf16.mxu0 0
  %123 = vmatpush1.bf16.msra.mxu0 %v100
  %124 = vmatprep.subr.bf16.mxu0 0
  %125 = vmatpush1.bf16.msra.mxu0 %v101
  %126 = vmatprep.subr.bf16.mxu0 0
  %127 = vmatpush1.bf16.msra.mxu0 0
  %128 = vmatprep.subr.bf16.mxu0 0
  %129 = vmatpush1.bf16.msra.mxu0 0
  %130 = vmatprep.subr.bf16.mxu0 0
  %131 = vmatpush1.bf16.msra.mxu0 0
  %132 = vmatprep.subr.bf16.mxu0 0
  %133 = vmatpush1.bf16.msra.mxu0 0
  %134 = vmatprep.subr.bf16.mxu0 0
  %135 = vmatpush1.bf16.msra.mxu0 0
  %136 = vmatprep.subr.bf16.mxu0 0
  %137 = vmatpush1.bf16.msra.mxu0 0
  %138 = vmatprep.subr.bf16.mxu0 0
  %139 = vmatpush1.bf16.msra.mxu0 0
  %140 = vmatprep.subr.bf16.mxu0 0
  %141 = vmatpush1.bf16.msra.mxu0 0
  %142 = vmatprep.mubr.bf16.mxu0 0
  %143 = vmatmul.mubr.bf16.gmra.mrb[0].mxu0 %v31
  %v144 = vpop.f32.mrb[0].mxu0
  %v145 = vadd.f32 %v60, %v144
  %v146 = vpop.f32.mrb[0].mxu0
  %v147 = vpop.f32.mrb[0].mxu0
  %v148 = vadd.f32 %v60, %v147
  %v149 = vpop.f32.mrb[0].mxu0
  %150 = vmatprep.mubr.bf16.mxu0 0
  %151 = vmatmul.mubr.bf16.gmra.mrb[0].mxu0 %v32
  %v152 = vpop.f32.mrb[0].mxu0
  %v153 = vadd.f32 %v60, %v152
  %v154 = vpop.f32.mrb[0].mxu0
  %v155 = vpop.f32.mrb[0].mxu0
  %v156 = vadd.f32 %v60, %v155
  %v157 = vpop.f32.mrb[0].mxu0
  %158 = vmatprep.mubr.bf16.mxu0 0
  %159 = vmatmul.mubr.bf16.gmra.mrb[0].mxu0 %v33
  %v160 = vpop.f32.mrb[0].mxu0
  %v161 = vadd.f32 %v60, %v160
  %v162 = vpop.f32.mrb[0].mxu0
  %v163 = vpop.f32.mrb[0].mxu0
  %v164 = vadd.f32 %v60, %v163
  %v165 = vpop.f32.mrb[0].mxu0
  %166 = vmatprep.mubr.bf16.mxu0 0
  %167 = vmatmul.mubr.bf16.gmra.mrb[0].mxu0 %v34
  %v168 = vpop.f32.mrb[0].mxu0
  %v169 = vadd.f32 %v60, %v168
  %v170 = vpop.f32.mrb[0].mxu0
  %v171 = vpop.f32.mrb[0].mxu0
  %v172 = vadd.f32 %v60, %v171
  %v173 = vpop.f32.mrb[0].mxu0
  %174 = vmatprep.mubr.bf16.mxu0 0
  %175 = vmatmul.mubr.bf16.gmra.mrb[0].mxu0 %v35
  %v176 = vpop.f32.mrb[0].mxu0
  %v177 = vadd.f32 %v60, %v176
  %v178 = vpop.f32.mrb[0].mxu0
  %v179 = vpop.f32.mrb[0].mxu0
  %v180 = vadd.f32 %v60, %v179
  %v181 = vpop.f32.mrb[0].mxu0
  %182 = vmatprep.mubr.bf16.mxu0 0
  %183 = vmatmul.mubr.bf16.gmra.mrb[0].mxu0 %v36
  %v184 = vpop.f32.mrb[0].mxu0
  %v185 = vadd.f32 %v60, %v184
  %v186 = vpop.f32.mrb[0].mxu0
  %v187 = vpop.f32.mrb[0].mxu0
  %v188 = vadd.f32 %v60, %v187
  %v189 = vpop.f32.mrb[0].mxu0
  %190 = vmatprep.mubr.bf16.mxu0 0
  %191 = vmatmul.mubr.bf16.gmra.mrb[0].mxu0 %v37
  %v192 = vpop.f32.mrb[0].mxu0
  %v193 = vadd.f32 %v60, %v192
  %v194 = vpop.f32.mrb[0].mxu0
  %v195 = vpop.f32.mrb[0].mxu0
  %v196 = vadd.f32 %v60, %v195
  %v197 = vpop.f32.mrb[0].mxu0
  %198 = vmatprep.mubr.bf16.mxu0 0
  %199 = vmatmul.mubr.bf16.gmra.mrb[0].mxu0 %v38
  %v200 = vpop.f32.mrb[0].mxu0
  %v201 = vadd.f32 %v60, %v200
  %v202 = vpop.f32.mrb[0].mxu0
  %v203 = vpop.f32.mrb[0].mxu0
  %v204 = vadd.f32 %v60, %v203
  %v205 = vpop.f32.mrb[0].mxu0
  %206 = vdwg.mxu0
  %207 = vst [vmem:[%s3] sm:$0xff] %v145
  %208 = vst [vmem:[%s3 + $0x8] sm:$0xff] %v148
  %209 = vst [vmem:[%s3 + $0x10] sm:$0xff] %v153
  %210 = vst [vmem:[%s3 + $0x18] sm:$0xff] %v156
  %211 = vst [vmem:[%s3 + $0x20] sm:$0xff] %v161
  %212 = vst [vmem:[%s3 + $0x28] sm:$0xff] %v164
  %213 = vst [vmem:[%s3 + $0x30] sm:$0xff] %v169
  %214 = vst [vmem:[%s3 + $0x38] sm:$0xff] %v172
  %215 = vst [vmem:[%s3 + $0x40] sm:$0xff] %v177
  %216 = vst [vmem:[%s3 + $0x48] sm:$0xff] %v180
  %217 = vst [vmem:[%s3 + $0x50] sm:$0xff] %v185
  %218 = vst [vmem:[%s3 + $0x58] sm:$0xff] %v188
  %219 = vst [vmem:[%s3 + $0x60] sm:$0xff] %v193
  %220 = vst [vmem:[%s3 + $0x68] sm:$0xff] %v196
  %221 = vst [vmem:[%s3 + $0x70] sm:$0xff] %v201
  %222 = vst [vmem:[%s3 + $0x78] sm:$0xff] %v204
  // Predicated region
  $region14: #{gru_forward.5} parent=0 // pred_check
    _
  $region15: #{gru_forward.5} parent=0 // pred_check_branch
    %224 = sbr.rel (0) target = $region17
  $region16: #{gru_forward.5} parent=0 // pred_region
    _
  $region17: #{gru_forward.5} parent=0 // pred_fallthru
    _
  // Predicated region
  $region18: #{gru_forward.5} parent=0 // pred_check
    _
  $region19: #{gru_forward.5} parent=0 // pred_check_branch
    %226 = sbr.rel (0) target = $region21
  $region20: #{gru_forward.5} parent=0 // pred_region
    _
  $region21: #{gru_forward.5} parent=0 // pred_fallthru
    _

// kernel: gru_forward.4
$region0: #{gru_forward.4}
  #allocation0 [shape = 'u32[]', space=smem, size = 0x4, offset = 0x4, fixed_abs, tag = 'smem constant byte address 0x4 - core index']
  #allocation1 [shape = 'u32[144,128]{1,0:T(1,128)}', space=vmem, size = 0x12000, scoped, tag = 'internal scratch']
  %s0 = inlined_call_operand.vmem [shape: f32[128,384], index: 0, kind: input, shape index: {}]
  %s1 = inlined_call_operand.vmem [shape: bf16[1,128,384], index: 1, kind: input, shape index: {}]
  %s2 = inlined_call_operand.vmem [shape: bf16[2,128,256], index: 2, kind: input, shape index: {}]
  %s3 = inlined_call_operand.vmem [shape: bf16[2,128,128], index: 3, kind: input, shape index: {}]
  %s4 = inlined_call_operand.vmem [shape: f32[1,1,384], index: 4, kind: input, shape index: {}]
  %s5 = inlined_call_operand.vmem [shape: f32[2,8,128], index: 5, kind: input, shape index: {}, may-alias: {5,7}]
  %s6 = inlined_call_operand.vmem [shape: f32[128,128], index: 6, kind: output, shape index: {0}]
  %s7 = inlined_call_operand.vmem [shape: f32[2,8,128], index: 7, kind: output, shape index: {1}, may-alias: {5,7}]
  %8 = xla_tuple %s6, %s7
  %s9 = sld [smem:[#allocation0]]
  $region69: #{gru_forward.4} parent=0
    _
  %s11 = ssub.s32 1, %s9
  %s12 = scalar_select 0, %s11, %s9
  loop: start=0, step=1, limit=4
  $region2: #{gru_forward.4} parent=0 // loop_pre_header
    _
  $region3: #{gru_forward.4} parent=0 // loop_header
    %s14 = sphi 0, %s18
    %p15 = scmp.ge.s32.totalorder %s14, 4
    %s24 = sphi 0, %s26
    %s27 = sphi 0, %s24
    %s28 = sphi 0, %s27
    %s44 = sphi 0, %s28
    %s48 = sphi 0, %s48
    %s50 = sphi 0, %s48
    %s51 = sphi 0, %s50
    %s65 = sphi 0, %s51
    %s69 = sphi 0, %s69
    %s71 = sphi 0, %s69
    %s72 = sphi 0, %s71
    %s86 = sphi 0, %s72
    %s90 = sphi 0, %s90
    %s92 = sphi 0, %s90
    %s93 = sphi 0, %s92
    %s107 = sphi 0, %s93
    %s111 = sphi 0, %s111
    %s113 = sphi 0, %s111
    %s114 = sphi 0, %s113
    %s128 = sphi 0, %s114
    %s132 = sphi 0, %s132
    %s134 = sphi 0, %s132
    %s135 = sphi 0, %s134
    %s149 = sphi 0, %s135
    %s155 = sphi 0, %s157
    %s158 = sphi 0, %s155
    %s159 = sphi 0, %s158
    %s175 = sphi 0, %s159
    %s179 = sphi 0, %s179
    %s181 = sphi 0, %s179
    %s182 = sphi 0, %s181
    %s196 = sphi 0, %s182
  $region4: #{gru_forward.4} parent=0 // loop_header_branch
    %17 = sbr.rel (%p15) target = $region8
  $region5: #{gru_forward.4} parent=0 // loop_body
    %s19 = ssub.s32 %s14, 1
    %s20 = ssub.s32 %s14, 2
    %s21 = sadd.s32 %s14, 1
    %s22 = ssub.s32 %s14, %s21
    %p23 = scmp.eq.s32.totalorder %s22, 0
    %s25 = sadd.s32 %s24, 1
    %s26 = scalar_select %p23, %s24, %s25
    %p29 = pneg %p23
    %p30 = scmp.eq.s32.totalorder %s14, 1
    %p31 = por %p29, %p30
    %p32 = scmp.ne.s32.totalorder %s24, %s27
    %p33 = scmp.eq.s32.totalorder %s14, 0
    %p34 = por %p32, %p33
    %p35 = scmp.ne.s32.totalorder %s24, %s27
    %p36 = scmp.eq.s32.totalorder %s19, 1
    %p37 = por %p35, %p36
    %p38 = scmp.ne.s32.totalorder %s27, %s28
    %p39 = scmp.eq.s32.totalorder %s19, 0
    %p40 = por %p38, %p39
    %p41 = scmp.ne.s32.totalorder %s27, %s28
    %p42 = scmp.eq.s32.totalorder %s20, 1
    %p43 = por %p41, %p42
    %p45 = scmp.ne.s32.totalorder %s28, %s44
    %p46 = scmp.eq.s32.totalorder %s20, 0
    %p47 = por %p45, %p46
    %s49 = sadd.s32 %s48, 1
    %p52 = scmp.eq.s32.totalorder %s14, 1
    %p53 = scmp.ne.s32.totalorder %s48, %s50
    %p54 = scmp.eq.s32.totalorder %s14, 0
    %p55 = por %p53, %p54
    %p56 = scmp.ne.s32.totalorder %s48, %s50
    %p57 = scmp.eq.s32.totalorder %s19, 1
    %p58 = por %p56, %p57
    %p59 = scmp.ne.s32.totalorder %s50, %s51
    %p60 = scmp.eq.s32.totalorder %s19, 0
    %p61 = por %p59, %p60
    %p62 = scmp.ne.s32.totalorder %s50, %s51
    %p63 = scmp.eq.s32.totalorder %s20, 1
    %p64 = por %p62, %p63
    %p66 = scmp.ne.s32.totalorder %s51, %s65
    %p67 = scmp.eq.s32.totalorder %s20, 0
    %p68 = por %p66, %p67
    %s70 = sadd.s32 %s69, 1
    %p73 = scmp.eq.s32.totalorder %s14, 1
    %p74 = scmp.ne.s32.totalorder %s69, %s71
    %p75 = scmp.eq.s32.totalorder %s14, 0
    %p76 = por %p74, %p75
    %p77 = scmp.ne.s32.totalorder %s69, %s71
    %p78 = scmp.eq.s32.totalorder %s19, 1
    %p79 = por %p77, %p78
    %p80 = scmp.ne.s32.totalorder %s71, %s72
    %p81 = scmp.eq.s32.totalorder %s19, 0
    %p82 = por %p80, %p81
    %p83 = scmp.ne.s32.totalorder %s71, %s72
    %p84 = scmp.eq.s32.totalorder %s20, 1
    %p85 = por %p83, %p84
    %p87 = scmp.ne.s32.totalorder %s72, %s86
    %p88 = scmp.eq.s32.totalorder %s20, 0
    %p89 = por %p87, %p88
    %s91 = sadd.s32 %s90, 1
    %p94 = scmp.eq.s32.totalorder %s14, 1
    %p95 = scmp.ne.s32.totalorder %s90, %s92
    %p96 = scmp.eq.s32.totalorder %s14, 0
    %p97 = por %p95, %p96
    %p98 = scmp.ne.s32.totalorder %s90, %s92
    %p99 = scmp.eq.s32.totalorder %s19, 1
    %p100 = por %p98, %p99
    %p101 = scmp.ne.s32.totalorder %s92, %s93
    %p102 = scmp.eq.s32.totalorder %s19, 0
    %p103 = por %p101, %p102
    %p104 = scmp.ne.s32.totalorder %s92, %s93
    %p105 = scmp.eq.s32.totalorder %s20, 1
    %p106 = por %p104, %p105
    %p108 = scmp.ne.s32.totalorder %s93, %s107
    %p109 = scmp.eq.s32.totalorder %s20, 0
    %p110 = por %p108, %p109
    %s112 = sadd.s32 %s111, 1
    %p115 = scmp.eq.s32.totalorder %s14, 1
    %p116 = scmp.ne.s32.totalorder %s111, %s113
    %p117 = scmp.eq.s32.totalorder %s14, 0
    %p118 = por %p116, %p117
    %p119 = scmp.ne.s32.totalorder %s111, %s113
    %p120 = scmp.eq.s32.totalorder %s19, 1
    %p121 = por %p119, %p120
    %p122 = scmp.ne.s32.totalorder %s113, %s114
    %p123 = scmp.eq.s32.totalorder %s19, 0
    %p124 = por %p122, %p123
    %p125 = scmp.ne.s32.totalorder %s113, %s114
    %p126 = scmp.eq.s32.totalorder %s20, 1
    %p127 = por %p125, %p126
    %p129 = scmp.ne.s32.totalorder %s114, %s128
    %p130 = scmp.eq.s32.totalorder %s20, 0
    %p131 = por %p129, %p130
    %s133 = sadd.s32 %s132, 1
    %p136 = scmp.eq.s32.totalorder %s14, 1
    %p137 = scmp.ne.s32.totalorder %s132, %s134
    %p138 = scmp.eq.s32.totalorder %s14, 0
    %p139 = por %p137, %p138
    %p140 = scmp.ne.s32.totalorder %s132, %s134
    %p141 = scmp.eq.s32.totalorder %s19, 1
    %p142 = por %p140, %p141
    %p143 = scmp.ne.s32.totalorder %s134, %s135
    %p144 = scmp.eq.s32.totalorder %s19, 0
    %p145 = por %p143, %p144
    %p146 = scmp.ne.s32.totalorder %s134, %s135
    %p147 = scmp.eq.s32.totalorder %s20, 1
    %p148 = por %p146, %p147
    %p150 = scmp.ne.s32.totalorder %s135, %s149
    %p151 = scmp.eq.s32.totalorder %s20, 0
    %p152 = por %p150, %p151
    %s153 = ssub.s32 %s14, %s21
    %p154 = scmp.eq.s32.totalorder %s153, 0
    %s156 = sadd.s32 %s155, 1
    %s157 = scalar_select %p154, %s155, %s156
    %p160 = pneg %p154
    %p161 = scmp.eq.s32.totalorder %s14, 1
    %p162 = por %p160, %p161
    %p163 = scmp.ne.s32.totalorder %s155, %s158
    %p164 = scmp.eq.s32.totalorder %s14, 0
    %p165 = por %p163, %p164
    %p166 = scmp.ne.s32.totalorder %s155, %s158
    %p167 = scmp.eq.s32.totalorder %s19, 1
    %p168 = por %p166, %p167
    %p169 = scmp.ne.s32.totalorder %s158, %s159
    %p170 = scmp.eq.s32.totalorder %s19, 0
    %p171 = por %p169, %p170
    %p172 = scmp.ne.s32.totalorder %s158, %s159
    %p173 = scmp.eq.s32.totalorder %s20, 1
    %p174 = por %p172, %p173
    %p176 = scmp.ne.s32.totalorder %s159, %s175
    %p177 = scmp.eq.s32.totalorder %s20, 0
    %p178 = por %p176, %p177
    %s180 = sadd.s32 %s179, 1
    %p183 = scmp.eq.s32.totalorder %s14, 1
    %p184 = scmp.ne.s32.totalorder %s179, %s181
    %p185 = scmp.eq.s32.totalorder %s14, 0
    %p186 = por %p184, %p185
    %p187 = scmp.ne.s32.totalorder %s179, %s181
    %p188 = scmp.eq.s32.totalorder %s19, 1
    %p189 = por %p187, %p188
    %p190 = scmp.ne.s32.totalorder %s181, %s182
    %p191 = scmp.eq.s32.totalorder %s19, 0
    %p192 = por %p190, %p191
    %p193 = scmp.ne.s32.totalorder %s181, %s182
    %p194 = scmp.eq.s32.totalorder %s20, 1
    %p195 = por %p193, %p194
    %p197 = scmp.ne.s32.totalorder %s182, %s196
    %p198 = scmp.eq.s32.totalorder %s20, 0
    %p199 = por %p197, %p198
    %p200 = scmp.le.s32.totalorder 1, %s14
    %p201 = scmp.lt.s32.totalorder %s14, 3
    %p202 = pnand %p200, %p201
    %p203 = pneg %p202
    // Predicated region
    $region9: #{gru_forward.4} parent=5 // pred_check
      _
    $region10: #{gru_forward.4} parent=5 // pred_check_branch
      %205 = sbr.rel (%p202) target = $region12
    $region11: #{gru_forward.4} parent=5 // pred_region
      %s206 = ssub.s32 %s14, 1
      // Predicated region
      $region13: #{gru_forward.4} parent=11 // pred_check
        %p207 = pneg %p61
      $region14: #{gru_forward.4} parent=11 // pred_check_branch
        %209 = sbr.rel (%p207) target = $region16
      $region15: #{gru_forward.4} parent=11 // pred_region
        _
      $region16: #{gru_forward.4} parent=11 // pred_fallthru
        _
      // Predicated region
      $region17: #{gru_forward.4} parent=11 // pred_check
        %p210 = pneg %p82
      $region18: #{gru_forward.4} parent=11 // pred_check_branch
        %212 = sbr.rel (%p210) target = $region20
      $region19: #{gru_forward.4} parent=11 // pred_region
        _
      $region20: #{gru_forward.4} parent=11 // pred_fallthru
        _
      // Predicated region
      $region21: #{gru_forward.4} parent=11 // pred_check
        %p213 = pneg %p103
      $region22: #{gru_forward.4} parent=11 // pred_check_branch
        %215 = sbr.rel (%p213) target = $region24
      $region23: #{gru_forward.4} parent=11 // pred_region
        _
      $region24: #{gru_forward.4} parent=11 // pred_fallthru
        _
      // Predicated region
      $region25: #{gru_forward.4} parent=11 // pred_check
        %p216 = pneg %p124
      $region26: #{gru_forward.4} parent=11 // pred_check_branch
        %218 = sbr.rel (%p216) target = $region28
      $region27: #{gru_forward.4} parent=11 // pred_region
        _
      $region28: #{gru_forward.4} parent=11 // pred_fallthru
        _
      // Predicated region
      $region29: #{gru_forward.4} parent=11 // pred_check
        %p219 = pneg %p145
      $region30: #{gru_forward.4} parent=11 // pred_check_branch
        %221 = sbr.rel (%p219) target = $region32
      $region31: #{gru_forward.4} parent=11 // pred_region
        _
      $region32: #{gru_forward.4} parent=11 // pred_fallthru
        _
    $region12: #{gru_forward.4} parent=5 // pred_fallthru
      _
    %p222 = scmp.lt.s32.totalorder %s14, 2
    // Predicated region
    $region33: #{gru_forward.4} parent=5 // pred_check
      %p223 = pneg %p222
    $region34: #{gru_forward.4} parent=5 // pred_check_branch
      %225 = sbr.rel (%p223) target = $region36
    $region35: #{gru_forward.4} parent=5 // pred_region
      // Predicated region
      $region37: #{gru_forward.4} parent=35 // pred_check
        %p226 = pneg %p34
      $region38: #{gru_forward.4} parent=35 // pred_check_branch
        %228 = sbr.rel (%p226) target = $region40
      $region39: #{gru_forward.4} parent=35 // pred_region
        %s229 = smul.u32 8, %s14
        %p230 = scmp.lt.s32.totalorder %s229, 15
        %s231 = scalar_select %p230, %s229, 15
        %s232 = smul.addr %s231, 3
        %s233 = smul.addr %s232, 8
        %s234 = scalar_lea.vmem %s0, %s233
        %s235 = smul.u32 8, %s14
      $region40: #{gru_forward.4} parent=35 // pred_fallthru
        _
    $region36: #{gru_forward.4} parent=5 // pred_fallthru
      _
    %p236 = scmp.le.s32.totalorder 1, %s14
    %p237 = scmp.lt.s32.totalorder %s14, 3
    %p238 = pnand %p236, %p237
    %p239 = pneg %p238
    // Predicated region
    $region41: #{gru_forward.4} parent=5 // pred_check
      _
    $region42: #{gru_forward.4} parent=5 // pred_check_branch
      %241 = sbr.rel (%p238) target = $region44
    $region43: #{gru_forward.4} parent=5 // pred_region
      %s242 = ssub.s32 %s14, 1
      %s243 = smul.u32 8, %s19
      %p244 = scmp.lt.s32.totalorder %s243, 15
      %s245 = scalar_select %p244, %s243, 15
      %s246 = smul.addr %s245, 3
      %s247 = smul.addr %s246, 8
      %s248 = scalar_lea.vmem %s0, %s247
      %p249 = pneg %p40
      %p250 = pneg %p37
      %p251 = pneg %p61
      %p252 = pneg %p58
      %p253 = pneg %p82
      %p254 = pneg %p79
      %p255 = pneg %p103
      %p256 = pneg %p100
      %p257 = pneg %p124
      %p258 = pneg %p121
      %p259 = pneg %p145
      %p260 = pneg %p142
      %p261 = pneg %p171
      %p262 = pneg %p168
      %s263 = smul.u32 8, %s19
      %p264 = scmp.lt.s32.totalorder %s263, 15
      %s265 = scalar_select %p264, %s263, 15
      %s266 = smul.addr %s265, 8
      %s267 = scalar_lea.vmem %s6, %s266
      %p268 = pneg %p192
      %p269 = pneg %p189
      %s270 = smul.u32 8, %s19
      %p271 = scmp.lt.s32.totalorder %s270, 15
      %s272 = scalar_select %p271, %s270, 15
      %s273 = smul.addr %s272, 3
      %s274 = smul.addr %s273, 8
      %s275 = scalar_lea.vmem %s0, %s274
      %s276 = smul.u32 8, %s19
      %s277 = smul.u32 8, %s19
      %p278 = scmp.lt.s32.totalorder %s277, 15
      %s279 = scalar_select %p278, %s277, 15
      %s280 = smul.addr %s279, 8
      %s281 = scalar_lea.vmem %s6, %s280
      %s282 = smul.u32 8, %s19
      %p284 = scmp.eq.s32.totalorder %s19, 0
      // Predicated region
      $region45: #{gru_forward.4} parent=43 // pred_check
        %p285 = pneg %p284
      $region46: #{gru_forward.4} parent=43 // pred_check_branch
        %287 = sbr.rel (%p285) target = $region48
      $region47: #{gru_forward.4} parent=43 // pred_region
        %v288 = vld [vmem:[%s5] sm:$0xff]
        %v289 = vld [vmem:[%s5 + $0x8] sm:$0xff]
        %290 = vst [vmem:[%s7] sm:$0xff] %v288
        %291 = vst [vmem:[%s7 + $0x8] sm:$0xff] %v289
      $region48: #{gru_forward.4} parent=43 // pred_fallthru
        _
      %v292 = vld [vmem:[%s275] sm:$0xff]
      %v293 = vld [vmem:[%s275 + $0x8] sm:$0xff]
      %v294 = vld [vmem:[%s275 + $0x10] sm:$0xff]
      %v295 = vld [vmem:[%s7] sm:$0xff]
      %v296 = vld [vmem:[%s2] sm:$0xff]
      %v297 = vld [vmem:[%s2 + $0x8] sm:$0xff]
      %v298 = vld [vmem:[%s2 + $0x10] sm:$0xff]
      %v299 = vld [vmem:[%s2 + $0x18] sm:$0xff]
      %v300 = vld [vmem:[%s2 + $0x20] sm:$0xff]
      %v301 = vld [vmem:[%s2 + $0x28] sm:$0xff]
      %v302 = vld [vmem:[%s2 + $0x30] sm:$0xff]
      %v303 = vld [vmem:[%s2 + $0x38] sm:$0xff]
      %v304 = vld [vmem:[%s2 + $0x40] sm:$0xff]
      %v305 = vld [vmem:[%s2 + $0x48] sm:$0xff]
      %v306 = vld [vmem:[%s2 + $0x50] sm:$0xff]
      %v307 = vld [vmem:[%s2 + $0x58] sm:$0xff]
      %v308 = vld [vmem:[%s2 + $0x60] sm:$0xff]
      %v309 = vld [vmem:[%s2 + $0x68] sm:$0xff]
      %v310 = vld [vmem:[%s2 + $0x70] sm:$0xff]
      %v311 = vld [vmem:[%s2 + $0x78] sm:$0xff]
      %v312 = vld [vmem:[%s3] sm:$0xf]
      %v313 = vld [vmem:[%s3 + $0x4] sm:$0xf]
      %v314 = vld [vmem:[%s3 + $0x8] sm:$0xf]
      %v315 = vld [vmem:[%s3 + $0xc] sm:$0xf]
      %v316 = vld [vmem:[%s3 + $0x10] sm:$0xf]
      %v317 = vld [vmem:[%s3 + $0x14] sm:$0xf]
      %v318 = vld [vmem:[%s3 + $0x18] sm:$0xf]
      %v319 = vld [vmem:[%s3 + $0x1c] sm:$0xf]
      %v320 = vld [vmem:[%s3 + $0x20] sm:$0xf]
      %v321 = vld [vmem:[%s3 + $0x24] sm:$0xf]
      %v322 = vld [vmem:[%s3 + $0x28] sm:$0xf]
      %v323 = vld [vmem:[%s3 + $0x2c] sm:$0xf]
      %v324 = vld [vmem:[%s3 + $0x30] sm:$0xf]
      %v325 = vld [vmem:[%s3 + $0x34] sm:$0xf]
      %v326 = vld [vmem:[%s3 + $0x38] sm:$0xf]
      %v327 = vld [vmem:[%s3 + $0x3c] sm:$0xf]
      %v328 = vpack.c.bf16 %v295, %v295
      %v345 = vunpack.c.l.b16 %v296
      %v346 = vunpack.c.h.b16 %v296
      %v347 = vunpack.c.l.b16 %v297
      %v348 = vunpack.c.h.b16 %v297
      %v349 = vunpack.c.l.b16 %v298
      %v350 = vunpack.c.h.b16 %v298
      %v351 = vunpack.c.l.b16 %v299
      %v352 = vunpack.c.h.b16 %v299
      %v353 = vunpack.c.l.b16 %v300
      %v354 = vunpack.c.h.b16 %v300
      %v355 = vunpack.c.l.b16 %v301
      %v356 = vunpack.c.h.b16 %v301
      %v357 = vunpack.c.l.b16 %v302
      %v358 = vunpack.c.h.b16 %v302
      %v359 = vunpack.c.l.b16 %v303
      %v360 = vunpack.c.h.b16 %v303
      %v361 = vunpack.c.l.b16 %v304
      %v362 = vunpack.c.h.b16 %v304
      %v363 = vunpack.c.l.b16 %v305
      %v364 = vunpack.c.h.b16 %v305
      %v365 = vunpack.c.l.b16 %v306
      %v366 = vunpack.c.h.b16 %v306
      %v367 = vunpack.c.l.b16 %v307
      %v368 = vunpack.c.h.b16 %v307
      %v369 = vunpack.c.l.b16 %v308
      %v370 = vunpack.c.h.b16 %v308
      %v371 = vunpack.c.l.b16 %v309
      %v372 = vunpack.c.h.b16 %v309
      %v373 = vunpack.c.l.b16 %v310
      %v374 = vunpack.c.h.b16 %v310
      %v375 = vunpack.c.l.b16 %v311
      %v376 = vunpack.c.h.b16 %v311
      %v377 = vpack.c.b16 %v347, %v345
      %v378 = vpack.c.b16 %v348, %v346
      %v379 = vpack.c.b16 %v351, %v349
      %v380 = vpack.c.b16 %v352, %v350
      %v381 = vpack.c.b16 %v355, %v353
      %v382 = vpack.c.b16 %v356, %v354
      %v383 = vpack.c.b16 %v359, %v357
      %v384 = vpack.c.b16 %v360, %v358
      %v385 = vpack.c.b16 %v363, %v361
      %v386 = vpack.c.b16 %v364, %v362
      %v387 = vpack.c.b16 %v367, %v365
      %v388 = vpack.c.b16 %v368, %v366
      %v389 = vpack.c.b16 %v371, %v369
      %v390 = vpack.c.b16 %v372, %v370
      %v391 = vpack.c.b16 %v375, %v373
      %v392 = vpack.c.b16 %v376, %v374
      %409 = vmatprep.subr.bf16.mxu0 %v378
      %410 = vmatpush1.bf16.msra.mxu0 %v377
      %411 = vmatprep.subr.bf16.mxu0 %v380
      %412 = vmatpush1.bf16.msra.mxu0 %v379
      %413 = vmatprep.subr.bf16.mxu0 %v382
      %414 = vmatpush1.bf16.msra.mxu0 %v381
      %415 = vmatprep.subr.bf16.mxu0 %v384
      %416 = vmatpush1.bf16.msra.mxu0 %v383
      %417 = vmatprep.subr.bf16.mxu0 %v386
      %418 = vmatpush1.bf16.msra.mxu0 %v385
      %419 = vmatprep.subr.bf16.mxu0 %v388
      %420 = vmatpush1.bf16.msra.mxu0 %v387
      %421 = vmatprep.subr.bf16.mxu0 %v390
      %422 = vmatpush1.bf16.msra.mxu0 %v389
      %423 = vmatprep.subr.bf16.mxu0 %v392
      %424 = vmatpush1.bf16.msra.mxu0 %v391
      %425 = vmatprep.subr.bf16.mxu0 0
      %426 = vmatpush1.bf16.msra.mxu0 0
      %427 = vmatprep.subr.bf16.mxu0 0
      %428 = vmatpush1.bf16.msra.mxu0 0
      %429 = vmatprep.subr.bf16.mxu0 0
      %430 = vmatpush1.bf16.msra.mxu0 0
      %431 = vmatprep.subr.bf16.mxu0 0
      %432 = vmatpush1.bf16.msra.mxu0 0
      %433 = vmatprep.subr.bf16.mxu0 0
      %434 = vmatpush1.bf16.msra.mxu0 0
      %435 = vmatprep.subr.bf16.mxu0 0
      %436 = vmatpush1.bf16.msra.mxu0 0
      %437 = vmatprep.subr.bf16.mxu0 0
      %438 = vmatpush1.bf16.msra.mxu0 0
      %439 = vmatprep.subr.bf16.mxu0 0
      %440 = vmatpush1.bf16.msra.mxu0 0
      %441 = vmatprep.mubr.bf16.mxu0 0
      %442 = vmatmul.mubr.bf16.gmra.mrb[0].mxu0 %v328
      %v443 = vpop.f32.mrb[0].mxu0
      %v444 = vadd.f32 0.0, %v443
      %v445 = vpop.f32.mrb[0].mxu0
      %v446 = vadd.f32 0.0, %v445
      %v447 = vpop.f32.mrb[0].mxu0
      %v448 = vpop.f32.mrb[0].mxu0
      %449 = vdwg.mxu0
      %v450 = vadd.f32 %v292, %v444
      %v451 = vxor.u32 %v450, 2147483648
      %v452 = vmul.f32 %v451, 1.442695
      %v453 = vpow.pop %v452
      %v454 = vadd.f32 %v453, 1.0
      %v455 = vrcp.pop %v454
      %v456 = vmul.f32 1.0, %v455
      %v457 = vadd.f32 %v293, %v446
      %v458 = vxor.u32 %v457, 2147483648
      %v459 = vmul.f32 %v458, 1.442695
      %v460 = vpow.pop %v459
      %v461 = vadd.f32 %v460, 1.0
      %v462 = vrcp.pop %v461
      %v463 = vmul.f32 1.0, %v462
      %v464 = vmul.f32 %v456, %v295
      %v465 = vpack.c.bf16 %v464, %v464
      %v482 = vunpack.c.l.b16 %v312
      %v483 = vunpack.c.l.b16 %v313
      %v484 = vunpack.c.l.b16 %v314
      %v485 = vunpack.c.l.b16 %v315
      %v486 = vunpack.c.l.b16 %v316
      %v487 = vunpack.c.l.b16 %v317
      %v488 = vunpack.c.l.b16 %v318
      %v489 = vunpack.c.l.b16 %v319
      %v490 = vunpack.c.l.b16 %v320
      %v491 = vunpack.c.l.b16 %v321
      %v492 = vunpack.c.l.b16 %v322
      %v493 = vunpack.c.l.b16 %v323
      %v494 = vunpack.c.l.b16 %v324
      %v495 = vunpack.c.l.b16 %v325
      %v496 = vunpack.c.l.b16 %v326
      %v497 = vunpack.c.l.b16 %v327
      %v498 = vpack.c.b16 %v483, %v482
      %v499 = vpack.c.b16 %v485, %v484
      %v500 = vpack.c.b16 %v487, %v486
      %v501 = vpack.c.b16 %v489, %v488
      %v502 = vpack.c.b16 %v491, %v490
      %v503 = vpack.c.b16 %v493, %v492
      %v504 = vpack.c.b16 %v495, %v494
      %v505 = vpack.c.b16 %v497, %v496
      %514 = vmatprep.subr.bf16.mxu0 0
      %515 = vmatpush1.bf16.msra.mxu0 %v498
      %516 = vmatprep.subr.bf16.mxu0 0
      %517 = vmatpush1.bf16.msra.mxu0 %v499
      %518 = vmatprep.subr.bf16.mxu0 0
      %519 = vmatpush1.bf16.msra.mxu0 %v500
      %520 = vmatprep.subr.bf16.mxu0 0
      %521 = vmatpush1.bf16.msra.mxu0 %v501
      %522 = vmatprep.subr.bf16.mxu0 0
      %523 = vmatpush1.bf16.msra.mxu0 %v502
      %524 = vmatprep.subr.bf16.mxu0 0
      %525 = vmatpush1.bf16.msra.mxu0 %v503
      %526 = vmatprep.subr.bf16.mxu0 0
      %527 = vmatpush1.bf16.msra.mxu0 %v504
      %528 = vmatprep.subr.bf16.mxu0 0
      %529 = vmatpush1.bf16.msra.mxu0 %v505
      %530 = vmatprep.subr.bf16.mxu0 0
      %531 = vmatpush1.bf16.msra.mxu0 0
      %532 = vmatprep.subr.bf16.mxu0 0
      %533 = vmatpush1.bf16.msra.mxu0 0
      %534 = vmatprep.subr.bf16.mxu0 0
      %535 = vmatpush1.bf16.msra.mxu0 0
      %536 = vmatprep.subr.bf16.mxu0 0
      %537 = vmatpush1.bf16.msra.mxu0 0
      %538 = vmatprep.subr.bf16.mxu0 0
      %539 = vmatpush1.bf16.msra.mxu0 0
      %540 = vmatprep.subr.bf16.mxu0 0
      %541 = vmatpush1.bf16.msra.mxu0 0
      %542 = vmatprep.subr.bf16.mxu0 0
      %543 = vmatpush1.bf16.msra.mxu0 0
      %544 = vmatprep.subr.bf16.mxu0 0
      %545 = vmatpush1.bf16.msra.mxu0 0
      %546 = vmatprep.mubr.bf16.mxu0 0
      %547 = vmatmul.mubr.bf16.gmra.mrb[0].mxu0 %v465
      %v548 = vpop.f32.mrb[0].mxu0
      %v549 = vadd.f32 0.0, %v548
      %v550 = vpop.f32.mrb[0].mxu0
      %v551 = vpop.f32.mrb[0].mxu0
      %v552 = vpop.f32.mrb[0].mxu0
      %553 = vdwg.mxu0
      %v554 = vadd.f32 %v294, %v549
      %v555 = vtanh.pop %v554
      %v556 = vsub.f32 1.0, %v463
      %v557 = vmul.f32 %v556, %v295
      %v558 = vmul.f32 %v463, %v555
      %v559 = vadd.f32 %v557, %v558
      %560 = vst [vmem:[%s7] sm:$0xff] %v559
      %v561 = vpack.c.bf16 %v559, %v559
      %v562 = vld [vmem:[%s1] sm:$0xff]
      %v563 = vld [vmem:[%s1 + $0x8] sm:$0xf]
      %v564 = vld [vmem:[%s1 + $0xc] sm:$0xff]
      %v565 = vld [vmem:[%s1 + $0x14] sm:$0xf]
      %v566 = vld [vmem:[%s1 + $0x18] sm:$0xff]
      %v567 = vld [vmem:[%s1 + $0x20] sm:$0xf]
      %v568 = vld [vmem:[%s1 + $0x24] sm:$0xff]
      %v569 = vld [vmem:[%s1 + $0x2c] sm:$0xf]
      %v570 = vld [vmem:[%s1 + $0x30] sm:$0xff]
      %v571 = vld [vmem:[%s1 + $0x38] sm:$0xf]
      %v572 = vld [vmem:[%s1 + $0x3c] sm:$0xff]
      %v573 = vld [vmem:[%s1 + $0x44] sm:$0xf]
      %v574 = vld [vmem:[%s1 + $0x48] sm:$0xff]
      %v575 = vld [vmem:[%s1 + $0x50] sm:$0xf]
      %v576 = vld [vmem:[%s1 + $0x54] sm:$0xff]
      %v577 = vld [vmem:[%s1 + $0x5c] sm:$0xf]
      %v578 = vld [vmem:[%s1 + $0x60] sm:$0xff]
      %v579 = vld [vmem:[%s1 + $0x68] sm:$0xf]
      %v580 = vld [vmem:[%s1 + $0x6c] sm:$0xff]
      %v581 = vld [vmem:[%s1 + $0x74] sm:$0xf]
      %v582 = vld [vmem:[%s1 + $0x78] sm:$0xff]
      %v583 = vld [vmem:[%s1 + $0x80] sm:$0xf]
      %v584 = vld [vmem:[%s1 + $0x84] sm:$0xff]
      %v585 = vld [vmem:[%s1 + $0x8c] sm:$0xf]
      %v586 = vld [vmem:[%s1 + $0x90] sm:$0xff]
      %v587 = vld [vmem:[%s1 + $0x98] sm:$0xf]
      %v588 = vld [vmem:[%s1 + $0x9c] sm:$0xff]
      %v589 = vld [vmem:[%s1 + $0xa4] sm:$0xf]
      %v590 = vld [vmem:[%s1 + $0xa8] sm:$0xff]
      %v591 = vld [vmem:[%s1 + $0xb0] sm:$0xf]
      %v592 = vld [vmem:[%s1 + $0xb4] sm:$0xff]
      %v593 = vld [vmem:[%s1 + $0xbc] sm:$0xf]
      %v594 = vld [vmem:[%s4] sm:$0x7]
      %v596 = vlaneseq
      %v597 = vshrl.u32 %v596, 7
      %v598 = vsub.s32 0, %v597
      %v599 = vrot.slane %v594, %v598
      %v600 = vlaneseq
      %v601 = vshrl.u32 %v600, 7
      %v602 = vsub.s32 1, %v601
      %v603 = vrot.slane %v594, %v602
      %v604 = vlaneseq
      %v605 = vshrl.u32 %v604, 7
      %v606 = vsub.s32 2, %v605
      %v607 = vrot.slane %v594, %v606
      %v643 = vunpack.c.l.b16 %v562
      %v644 = vunpack.c.h.b16 %v562
      %v645 = vunpack.c.l.b16 %v563
      %v646 = vunpack.c.l.b16 %v564
      %v647 = vunpack.c.h.b16 %v564
      %v648 = vunpack.c.l.b16 %v565
      %v649 = vunpack.c.l.b16 %v566
      %v650 = vunpack.c.h.b16 %v566
      %v651 = vunpack.c.l.b16 %v567
      %v652 = vunpack.c.l.b16 %v568
      %v653 = vunpack.c.h.b16 %v568
      %v654 = vunpack.c.l.b16 %v569
      %v655 = vunpack.c.l.b16 %v570
      %v656 = vunpack.c.h.b16 %v570
      %v657 = vunpack.c.l.b16 %v571
      %v658 = vunpack.c.l.b16 %v572
      %v659 = vunpack.c.h.b16 %v572
      %v660 = vunpack.c.l.b16 %v573
      %v661 = vunpack.c.l.b16 %v574
      %v662 = vunpack.c.h.b16 %v574
      %v663 = vunpack.c.l.b16 %v575
      %v664 = vunpack.c.l.b16 %v576
      %v665 = vunpack.c.h.b16 %v576
      %v666 = vunpack.c.l.b16 %v577
      %v667 = vunpack.c.l.b16 %v578
      %v668 = vunpack.c.h.b16 %v578
      %v669 = vunpack.c.l.b16 %v579
      %v670 = vunpack.c.l.b16 %v580
      %v671 = vunpack.c.h.b16 %v580
      %v672 = vunpack.c.l.b16 %v581
      %v673 = vunpack.c.l.b16 %v582
      %v674 = vunpack.c.h.b16 %v582
      %v675 = vunpack.c.l.b16 %v583
      %v676 = vunpack.c.l.b16 %v584
      %v677 = vunpack.c.h.b16 %v584
      %v678 = vunpack.c.l.b16 %v585
      %v679 = vunpack.c.l.b16 %v586
      %v680 = vunpack.c.h.b16 %v586
      %v681 = vunpack.c.l.b16 %v587
      %v682 = vunpack.c.l.b16 %v588
      %v683 = vunpack.c.h.b16 %v588
      %v684 = vunpack.c.l.b16 %v589
      %v685 = vunpack.c.l.b16 %v590
      %v686 = vunpack.c.h.b16 %v590
      %v687 = vunpack.c.l.b16 %v591
      %v688 = vunpack.c.l.b16 %v592
      %v689 = vunpack.c.h.b16 %v592
      %v690 = vunpack.c.l.b16 %v593
      %v691 = vpack.c.b16 %v646, %v643
      %v692 = vpack.c.b16 %v647, %v644
      %v693 = vpack.c.b16 %v648, %v645
      %v694 = vpack.c.b16 %v652, %v649
      %v695 = vpack.c.b16 %v653, %v650
      %v696 = vpack.c.b16 %v654, %v651
      %v697 = vpack.c.b16 %v658, %v655
      %v698 = vpack.c.b16 %v659, %v656
      %v699 = vpack.c.b16 %v660, %v657
      %v700 = vpack.c.b16 %v664, %v661
      %v701 = vpack.c.b16 %v665, %v662
      %v702 = vpack.c.b16 %v666, %v663
      %v703 = vpack.c.b16 %v670, %v667
      %v704 = vpack.c.b16 %v671, %v668
      %v705 = vpack.c.b16 %v672, %v669
      %v706 = vpack.c.b16 %v676, %v673
      %v707 = vpack.c.b16 %v677, %v674
      %v708 = vpack.c.b16 %v678, %v675
      %v709 = vpack.c.b16 %v682, %v679
      %v710 = vpack.c.b16 %v683, %v680
      %v711 = vpack.c.b16 %v684, %v681
      %v712 = vpack.c.b16 %v688, %v685
      %v713 = vpack.c.b16 %v689, %v686
      %v714 = vpack.c.b16 %v690, %v687
      %739 = vmatprep.subr.bf16.mxu0 %v692
      %740 = vmatpush1.bf16.msra.mxu0 %v691
      %741 = vmatprep.subr.bf16.mxu0 %v695
      %742 = vmatpush1.bf16.msra.mxu0 %v694
      %743 = vmatprep.subr.bf16.mxu0 %v698
      %744 = vmatpush1.bf16.msra.mxu0 %v697
      %745 = vmatprep.subr.bf16.mxu0 %v701
      %746 = vmatpush1.bf16.msra.mxu0 %v700
      %747 = vmatprep.subr.bf16.mxu0 %v704
      %748 = vmatpush1.bf16.msra.mxu0 %v703
      %749 = vmatprep.subr.bf16.mxu0 %v707
      %750 = vmatpush1.bf16.msra.mxu0 %v706
      %751 = vmatprep.subr.bf16.mxu0 %v710
      %752 = vmatpush1.bf16.msra.mxu0 %v709
      %753 = vmatprep.subr.bf16.mxu0 %v713
      %754 = vmatpush1.bf16.msra.mxu0 %v712
      %755 = vmatprep.subr.bf16.mxu0 0
      %756 = vmatpush1.bf16.msra.mxu0 0
      %757 = vmatprep.subr.bf16.mxu0 0
      %758 = vmatpush1.bf16.msra.mxu0 0
      %759 = vmatprep.subr.bf16.mxu0 0
      %760 = vmatpush1.bf16.msra.mxu0 0
      %761 = vmatprep.subr.bf16.mxu0 0
      %762 = vmatpush1.bf16.msra.mxu0 0
      %763 = vmatprep.subr.bf16.mxu0 0
      %764 = vmatpush1.bf16.msra.mxu0 0
      %765 = vmatprep.subr.bf16.mxu0 0
      %766 = vmatpush1.bf16.msra.mxu0 0
      %767 = vmatprep.subr.bf16.mxu0 0
      %768 = vmatpush1.bf16.msra.mxu0 0
      %769 = vmatprep.subr.bf16.mxu0 0
      %770 = vmatpush1.bf16.msra.mxu0 0
      %771 = vmatprep.mubr.bf16.mxu0 0
      %772 = vmatmul.mubr.bf16.gmra.mrb[0].mxu0 %v561
      %v773 = vpop.f32.mrb[0].mxu0
      %v774 = vadd.f32 %v599, %v773
      %v775 = vpop.f32.mrb[0].mxu0
      %v776 = vadd.f32 %v603, %v775
      %v777 = vpop.f32.mrb[0].mxu0
      %v778 = vpop.f32.mrb[0].mxu0
      %779 = vdwg.mxu0
      %780 = vmatprep.subr.bf16.mxu0 0
      %781 = vmatpush1.bf16.msra.mxu0 %v693
      %782 = vmatprep.subr.bf16.mxu0 0
      %783 = vmatpush1.bf16.msra.mxu0 %v696
      %784 = vmatprep.subr.bf16.mxu0 0
      %785 = vmatpush1.bf16.msra.mxu0 %v699
      %786 = vmatprep.subr.bf16.mxu0 0
      %787 = vmatpush1.bf16.msra.mxu0 %v702
      %788 = vmatprep.subr.bf16.mxu0 0
      %789 = vmatpush1.bf16.msra.mxu0 %v705
      %790 = vmatprep.subr.bf16.mxu0 0
      %791 = vmatpush1.bf16.msra.mxu0 %v708
      %792 = vmatprep.subr.bf16.mxu0 0
      %793 = vmatpush1.bf16.msra.mxu0 %v711
      %794 = vmatprep.subr.bf16.mxu0 0
      %795 = vmatpush1.bf16.msra.mxu0 %v714
      %796 = vmatprep.subr.bf16.mxu0 0
      %797 = vmatpush1.bf16.msra.mxu0 0
      %798 = vmatprep.subr.bf16.mxu0 0
      %799 = vmatpush1.bf16.msra.mxu0 0
      %800 = vmatprep.subr.bf16.mxu0 0
      %801 = vmatpush1.bf16.msra.mxu0 0
      %802 = vmatprep.subr.bf16.mxu0 0
      %803 = vmatpush1.bf16.msra.mxu0 0
      %804 = vmatprep.subr.bf16.mxu0 0
      %805 = vmatpush1.bf16.msra.mxu0 0
      %806 = vmatprep.subr.bf16.mxu0 0
      %807 = vmatpush1.bf16.msra.mxu0 0
      %808 = vmatprep.subr.bf16.mxu0 0
      %809 = vmatpush1.bf16.msra.mxu0 0
      %810 = vmatprep.subr.bf16.mxu0 0
      %811 = vmatpush1.bf16.msra.mxu0 0
      %812 = vmatprep.mubr.bf16.mxu0 0
      %813 = vmatmul.mubr.bf16.gmra.mrb[0].mxu0 %v561
      %v814 = vpop.f32.mrb[0].mxu0
      %v815 = vadd.f32 %v607, %v814
      %v816 = vpop.f32.mrb[0].mxu0
      %v817 = vpop.f32.mrb[0].mxu0
      %v818 = vpop.f32.mrb[0].mxu0
      %819 = vdwg.mxu0
      %s820 = scalar_lea.vmem %s7, 8
      %v821 = vld [vmem:[%s820] sm:$0xff]
      %s822 = scalar_lea.vmem %s2, 128
      %v823 = vld [vmem:[%s822] sm:$0xff]
      %v824 = vld [vmem:[%s822 + $0x8] sm:$0xff]
      %v825 = vld [vmem:[%s822 + $0x10] sm:$0xff]
      %v826 = vld [vmem:[%s822 + $0x18] sm:$0xff]
      %v827 = vld [vmem:[%s822 + $0x20] sm:$0xff]
      %v828 = vld [vmem:[%s822 + $0x28] sm:$0xff]
      %v829 = vld [vmem:[%s822 + $0x30] sm:$0xff]
      %v830 = vld [vmem:[%s822 + $0x38] sm:$0xff]
      %v831 = vld [vmem:[%s822 + $0x40] sm:$0xff]
      %v832 = vld [vmem:[%s822 + $0x48] sm:$0xff]
      %v833 = vld [vmem:[%s822 + $0x50] sm:$0xff]
      %v834 = vld [vmem:[%s822 + $0x58] sm:$0xff]
      %v835 = vld [vmem:[%s822 + $0x60] sm:$0xff]
      %v836 = vld [vmem:[%s822 + $0x68] sm:$0xff]
      %v837 = vld [vmem:[%s822 + $0x70] sm:$0xff]
      %v838 = vld [vmem:[%s822 + $0x78] sm:$0xff]
      %s839 = scalar_lea.vmem %s3, 64
      %v840 = vld [vmem:[%s839] sm:$0xf]
      %v841 = vld [vmem:[%s839 + $0x4] sm:$0xf]
      %v842 = vld [vmem:[%s839 + $0x8] sm:$0xf]
      %v843 = vld [vmem:[%s839 + $0xc] sm:$0xf]
      %v844 = vld [vmem:[%s839 + $0x10] sm:$0xf]
      %v845 = vld [vmem:[%s839 + $0x14] sm:$0xf]
      %v846 = vld [vmem:[%s839 + $0x18] sm:$0xf]
      %v847 = vld [vmem:[%s839 + $0x1c] sm:$0xf]
      %v848 = vld [vmem:[%s839 + $0x20] sm:$0xf]
      %v849 = vld [vmem:[%s839 + $0x24] sm:$0xf]
      %v850 = vld [vmem:[%s839 + $0x28] sm:$0xf]
      %v851 = vld [vmem:[%s839 + $0x2c] sm:$0xf]
      %v852 = vld [vmem:[%s839 + $0x30] sm:$0xf]
      %v853 = vld [vmem:[%s839 + $0x34] sm:$0xf]
      %v854 = vld [vmem:[%s839 + $0x38] sm:$0xf]
      %v855 = vld [vmem:[%s839 + $0x3c] sm:$0xf]
      %v856 = vpack.c.bf16 %v821, %v821
      %v873 = vunpack.c.l.b16 %v823
      %v874 = vunpack.c.h.b16 %v823
      %v875 = vunpack.c.l.b16 %v824
      %v876 = vunpack.c.h.b16 %v824
      %v877 = vunpack.c.l.b16 %v825
      %v878 = vunpack.c.h.b16 %v825
      %v879 = vunpack.c.l.b16 %v826
      %v880 = vunpack.c.h.b16 %v826
      %v881 = vunpack.c.l.b16 %v827
      %v882 = vunpack.c.h.b16 %v827
      %v883 = vunpack.c.l.b16 %v828
      %v884 = vunpack.c.h.b16 %v828
      %v885 = vunpack.c.l.b16 %v829
      %v886 = vunpack.c.h.b16 %v829
      %v887 = vunpack.c.l.b16 %v830
      %v888 = vunpack.c.h.b16 %v830
      %v889 = vunpack.c.l.b16 %v831
      %v890 = vunpack.c.h.b16 %v831
      %v891 = vunpack.c.l.b16 %v832
      %v892 = vunpack.c.h.b16 %v832
      %v893 = vunpack.c.l.b16 %v833
      %v894 = vunpack.c.h.b16 %v833
      %v895 = vunpack.c.l.b16 %v834
      %v896 = vunpack.c.h.b16 %v834
      %v897 = vunpack.c.l.b16 %v835
      %v898 = vunpack.c.h.b16 %v835
      %v899 = vunpack.c.l.b16 %v836
      %v900 = vunpack.c.h.b16 %v836
      %v901 = vunpack.c.l.b16 %v837
      %v902 = vunpack.c.h.b16 %v837
      %v903 = vunpack.c.l.b16 %v838
      %v904 = vunpack.c.h.b16 %v838
      %v905 = vpack.c.b16 %v875, %v873
      %v906 = vpack.c.b16 %v876, %v874
      %v907 = vpack.c.b16 %v879, %v877
      %v908 = vpack.c.b16 %v880, %v878
      %v909 = vpack.c.b16 %v883, %v881
      %v910 = vpack.c.b16 %v884, %v882
      %v911 = vpack.c.b16 %v887, %v885
      %v912 = vpack.c.b16 %v888, %v886
      %v913 = vpack.c.b16 %v891, %v889
      %v914 = vpack.c.b16 %v892, %v890
      %v915 = vpack.c.b16 %v895, %v893
      %v916 = vpack.c.b16 %v896, %v894
      %v917 = vpack.c.b16 %v899, %v897
      %v918 = vpack.c.b16 %v900, %v898
      %v919 = vpack.c.b16 %v903, %v901
      %v920 = vpack.c.b16 %v904, %v902
      %937 = vmatprep.subr.bf16.mxu0 %v906
      %938 = vmatpush1.bf16.msra.mxu0 %v905
      %939 = vmatprep.subr.bf16.mxu0 %v908
      %940 = vmatpush1.bf16.msra.mxu0 %v907
      %941 = vmatprep.subr.bf16.mxu0 %v910
      %942 = vmatpush1.bf16.msra.mxu0 %v909
      %943 = vmatprep.subr.bf16.mxu0 %v912
      %944 = vmatpush1.bf16.msra.mxu0 %v911
      %945 = vmatprep.subr.bf16.mxu0 %v914
      %946 = vmatpush1.bf16.msra.mxu0 %v913
      %947 = vmatprep.subr.bf16.mxu0 %v916
      %948 = vmatpush1.bf16.msra.mxu0 %v915
      %949 = vmatprep.subr.bf16.mxu0 %v918
      %950 = vmatpush1.bf16.msra.mxu0 %v917
      %951 = vmatprep.subr.bf16.mxu0 %v920
      %952 = vmatpush1.bf16.msra.mxu0 %v919
      %953 = vmatprep.subr.bf16.mxu0 0
      %954 = vmatpush1.bf16.msra.mxu0 0
      %955 = vmatprep.subr.bf16.mxu0 0
      %956 = vmatpush1.bf16.msra.mxu0 0
      %957 = vmatprep.subr.bf16.mxu0 0
      %958 = vmatpush1.bf16.msra.mxu0 0
      %959 = vmatprep.subr.bf16.mxu0 0
      %960 = vmatpush1.bf16.msra.mxu0 0
      %961 = vmatprep.subr.bf16.mxu0 0
      %962 = vmatpush1.bf16.msra.mxu0 0
      %963 = vmatprep.subr.bf16.mxu0 0
      %964 = vmatpush1.bf16.msra.mxu0 0
      %965 = vmatprep.subr.bf16.mxu0 0
      %966 = vmatpush1.bf16.msra.mxu0 0
      %967 = vmatprep.subr.bf16.mxu0 0
      %968 = vmatpush1.bf16.msra.mxu0 0
      %969 = vmatprep.mubr.bf16.mxu0 0
      %970 = vmatmul.mubr.bf16.gmra.mrb[0].mxu0 %v856
      %v971 = vpop.f32.mrb[0].mxu0
      %v972 = vadd.f32 0.0, %v971
      %v973 = vpop.f32.mrb[0].mxu0
      %v974 = vadd.f32 0.0, %v973
      %v975 = vpop.f32.mrb[0].mxu0
      %v976 = vpop.f32.mrb[0].mxu0
      %977 = vdwg.mxu0
      %v978 = vadd.f32 %v774, %v972
      %v979 = vxor.u32 %v978, 2147483648
      %v980 = vmul.f32 %v979, 1.442695
      %v981 = vpow.pop %v980
      %v982 = vadd.f32 %v981, 1.0
      %v983 = vrcp.pop %v982
      %v984 = vmul.f32 1.0, %v983
      %v985 = vadd.f32 %v776, %v974
      %v986 = vxor.u32 %v985, 2147483648
      %v987 = vmul.f32 %v986, 1.442695
      %v988 = vpow.pop %v987
      %v989 = vadd.f32 %v988, 1.0
      %v990 = vrcp.pop %v989
      %v991 = vmul.f32 1.0, %v990
      %v992 = vmul.f32 %v984, %v821
      %v993 = vpack.c.bf16 %v992, %v992
      %v1010 = vunpack.c.l.b16 %v840
      %v1011 = vunpack.c.l.b16 %v841
      %v1012 = vunpack.c.l.b16 %v842
      %v1013 = vunpack.c.l.b16 %v843
      %v1014 = vunpack.c.l.b16 %v844
      %v1015 = vunpack.c.l.b16 %v845
      %v1016 = vunpack.c.l.b16 %v846
      %v1017 = vunpack.c.l.b16 %v847
      %v1018 = vunpack.c.l.b16 %v848
      %v1019 = vunpack.c.l.b16 %v849
      %v1020 = vunpack.c.l.b16 %v850
      %v1021 = vunpack.c.l.b16 %v851
      %v1022 = vunpack.c.l.b16 %v852
      %v1023 = vunpack.c.l.b16 %v853
      %v1024 = vunpack.c.l.b16 %v854
      %v1025 = vunpack.c.l.b16 %v855
      %v1026 = vpack.c.b16 %v1011, %v1010
      %v1027 = vpack.c.b16 %v1013, %v1012
      %v1028 = vpack.c.b16 %v1015, %v1014
      %v1029 = vpack.c.b16 %v1017, %v1016
      %v1030 = vpack.c.b16 %v1019, %v1018
      %v1031 = vpack.c.b16 %v1021, %v1020
      %v1032 = vpack.c.b16 %v1023, %v1022
      %v1033 = vpack.c.b16 %v1025, %v1024
      %1042 = vmatprep.subr.bf16.mxu0 0
      %1043 = vmatpush1.bf16.msra.mxu0 %v1026
      %1044 = vmatprep.subr.bf16.mxu0 0
      %1045 = vmatpush1.bf16.msra.mxu0 %v1027
      %1046 = vmatprep.subr.bf16.mxu0 0
      %1047 = vmatpush1.bf16.msra.mxu0 %v1028
      %1048 = vmatprep.subr.bf16.mxu0 0
      %1049 = vmatpush1.bf16.msra.mxu0 %v1029
      %1050 = vmatprep.subr.bf16.mxu0 0
      %1051 = vmatpush1.bf16.msra.mxu0 %v1030
      %1052 = vmatprep.subr.bf16.mxu0 0
      %1053 = vmatpush1.bf16.msra.mxu0 %v1031
      %1054 = vmatprep.subr.bf16.mxu0 0
      %1055 = vmatpush1.bf16.msra.mxu0 %v1032
      %1056 = vmatprep.subr.bf16.mxu0 0
      %1057 = vmatpush1.bf16.msra.mxu0 %v1033
      %1058 = vmatprep.subr.bf16.mxu0 0
      %1059 = vmatpush1.bf16.msra.mxu0 0
      %1060 = vmatprep.subr.bf16.mxu0 0
      %1061 = vmatpush1.bf16.msra.mxu0 0
      %1062 = vmatprep.subr.bf16.mxu0 0
      %1063 = vmatpush1.bf16.msra.mxu0 0
      %1064 = vmatprep.subr.bf16.mxu0 0
      %1065 = vmatpush1.bf16.msra.mxu0 0
      %1066 = vmatprep.subr.bf16.mxu0 0
      %1067 = vmatpush1.bf16.msra.mxu0 0
      %1068 = vmatprep.subr.bf16.mxu0 0
      %1069 = vmatpush1.bf16.msra.mxu0 0
      %1070 = vmatprep.subr.bf16.mxu0 0
      %1071 = vmatpush1.bf16.msra.mxu0 0
      %1072 = vmatprep.subr.bf16.mxu0 0
      %1073 = vmatpush1.bf16.msra.mxu0 0
      %1074 = vmatprep.mubr.bf16.mxu0 0
      %1075 = vmatmul.mubr.bf16.gmra.mrb[0].mxu0 %v993
      %v1076 = vpop.f32.mrb[0].mxu0
      %v1077 = vadd.f32 0.0, %v1076
      %v1078 = vpop.f32.mrb[0].mxu0
      %v1079 = vpop.f32.mrb[0].mxu0
      %v1080 = vpop.f32.mrb[0].mxu0
      %1081 = vdwg.mxu0
      %v1082 = vadd.f32 %v815, %v1077
      %v1083 = vtanh.pop %v1082
      %v1084 = vsub.f32 1.0, %v991
      %v1085 = vmul.f32 %v1084, %v821
      %v1086 = vmul.f32 %v991, %v1083
      %v1087 = vadd.f32 %v1085, %v1086
      %1088 = vst [vmem:[%s820] sm:$0xff] %v1087
      %1089 = vst [vmem:[%s281] sm:$0xff] %v1087
      %v1090 = vld [vmem:[%s275 + $0x18] sm:$0xff]
      %v1091 = vld [vmem:[%s275 + $0x20] sm:$0xff]
      %v1092 = vld [vmem:[%s275 + $0x28] sm:$0xff]
      %v1093 = vld [vmem:[%s7] sm:$0xff]
      %v1094 = vld [vmem:[%s2] sm:$0xff]
      %v1095 = vld [vmem:[%s2 + $0x8] sm:$0xff]
      %v1096 = vld [vmem:[%s2 + $0x10] sm:$0xff]
      %v1097 = vld [vmem:[%s2 + $0x18] sm:$0xff]
      %v1098 = vld [vmem:[%s2 + $0x20] sm:$0xff]
      %v1099 = vld [vmem:[%s2 + $0x28] sm:$0xff]
      %v1100 = vld [vmem:[%s2 + $0x30] sm:$0xff]
      %v1101 = vld [vmem:[%s2 + $0x38] sm:$0xff]
      %v1102 = vld [vmem:[%s2 + $0x40] sm:$0xff]
      %v1103 = vld [vmem:[%s2 + $0x48] sm:$0xff]
      %v1104 = vld [vmem:[%s2 + $0x50] sm:$0xff]
      %v1105 = vld [vmem:[%s2 + $0x58] sm:$0xff]
      %v1106 = vld [vmem:[%s2 + $0x60] sm:$0xff]
      %v1107 = vld [vmem:[%s2 + $0x68] sm:$0xff]
      %v1108 = vld [vmem:[%s2 + $0x70] sm:$0xff]
      %v1109 = vld [vmem:[%s2 + $0x78] sm:$0xff]
      %v1110 = vld [vmem:[%s3] sm:$0xf]
      %v1111 = vld [vmem:[%s3 + $0x4] sm:$0xf]
      %v1112 = vld [vmem:[%s3 + $0x8] sm:$0xf]
      %v1113 = vld [vmem:[%s3 + $0xc] sm:$0xf]
      %v1114 = vld [vmem:[%s3 + $0x10] sm:$0xf]
      %v1115 = vld [vmem:[%s3 + $0x14] sm:$0xf]
      %v1116 = vld [vmem:[%s3 + $0x18] sm:$0xf]
      %v1117 = vld [vmem:[%s3 + $0x1c] sm:$0xf]
      %v1118 = vld [vmem:[%s3 + $0x20] sm:$0xf]
      %v1119 = vld [vmem:[%s3 + $0x24] sm:$0xf]
      %v1120 = vld [vmem:[%s3 + $0x28] sm:$0xf]
      %v1121 = vld [vmem:[%s3 + $0x2c] sm:$0xf]
      %v1122 = vld [vmem:[%s3 + $0x30] sm:$0xf]
      %v1123 = vld [vmem:[%s3 + $0x34] sm:$0xf]
      %v1124 = vld [vmem:[%s3 + $0x38] sm:$0xf]
      %v1125 = vld [vmem:[%s3 + $0x3c] sm:$0xf]
      %v1126 = vpack.c.bf16 %v1093, %v1093
      %v1143 = vunpack.c.l.b16 %v1094
      %v1144 = vunpack.c.h.b16 %v1094
      %v1145 = vunpack.c.l.b16 %v1095
      %v1146 = vunpack.c.h.b16 %v1095
      %v1147 = vunpack.c.l.b16 %v1096
      %v1148 = vunpack.c.h.b16 %v1096
      %v1149 = vunpack.c.l.b16 %v1097
      %v1150 = vunpack.c.h.b16 %v1097
      %v1151 = vunpack.c.l.b16 %v1098
      %v1152 = vunpack.c.h.b16 %v1098
      %v1153 = vunpack.c.l.b16 %v1099
      %v1154 = vunpack.c.h.b16 %v1099
      %v1155 = vunpack.c.l.b16 %v1100
      %v1156 = vunpack.c.h.b16 %v1100
      %v1157 = vunpack.c.l.b16 %v1101
      %v1158 = vunpack.c.h.b16 %v1101
      %v1159 = vunpack.c.l.b16 %v1102
      %v1160 = vunpack.c.h.b16 %v1102
      %v1161 = vunpack.c.l.b16 %v1103
      %v1162 = vunpack.c.h.b16 %v1103
      %v1163 = vunpack.c.l.b16 %v1104
      %v1164 = vunpack.c.h.b16 %v1104
      %v1165 = vunpack.c.l.b16 %v1105
      %v1166 = vunpack.c.h.b16 %v1105
      %v1167 = vunpack.c.l.b16 %v1106
      %v1168 = vunpack.c.h.b16 %v1106
      %v1169 = vunpack.c.l.b16 %v1107
      %v1170 = vunpack.c.h.b16 %v1107
      %v1171 = vunpack.c.l.b16 %v1108
      %v1172 = vunpack.c.h.b16 %v1108
      %v1173 = vunpack.c.l.b16 %v1109
      %v1174 = vunpack.c.h.b16 %v1109
      %v1175 = vpack.c.b16 %v1145, %v1143
      %v1176 = vpack.c.b16 %v1146, %v1144
      %v1177 = vpack.c.b16 %v1149, %v1147
      %v1178 = vpack.c.b16 %v1150, %v1148
      %v1179 = vpack.c.b16 %v1153, %v1151
      %v1180 = vpack.c.b16 %v1154, %v1152
      %v1181 = vpack.c.b16 %v1157, %v1155
      %v1182 = vpack.c.b16 %v1158, %v1156
      %v1183 = vpack.c.b16 %v1161, %v1159
      %v1184 = vpack.c.b16 %v1162, %v1160
      %v1185 = vpack.c.b16 %v1165, %v1163
      %v1186 = vpack.c.b16 %v1166, %v1164
      %v1187 = vpack.c.b16 %v1169, %v1167
      %v1188 = vpack.c.b16 %v1170, %v1168
      %v1189 = vpack.c.b16 %v1173, %v1171
      %v1190 = vpack.c.b16 %v1174, %v1172
      %1207 = vmatprep.subr.bf16.mxu0 %v1176
      %1208 = vmatpush1.bf16.msra.mxu0 %v1175
      %1209 = vmatprep.subr.bf16.mxu0 %v1178
      %1210 = vmatpush1.bf16.msra.mxu0 %v1177
      %1211 = vmatprep.subr.bf16.mxu0 %v1180
      %1212 = vmatpush1.bf16.msra.mxu0 %v1179
      %1213 = vmatprep.subr.bf16.mxu0 %v1182
      %1214 = vmatpush1.bf16.msra.mxu0 %v1181
      %1215 = vmatprep.subr.bf16.mxu0 %v1184
      %1216 = vmatpush1.bf16.msra.mxu0 %v1183
      %1217 = vmatprep.subr.bf16.mxu0 %v1186
      %1218 = vmatpush1.bf16.msra.mxu0 %v1185
      %1219 = vmatprep.subr.bf16.mxu0 %v1188
      %1220 = vmatpush1.bf16.msra.mxu0 %v1187
      %1221 = vmatprep.subr.bf16.mxu0 %v1190
      %1222 = vmatpush1.bf16.msra.mxu0 %v1189
      %1223 = vmatprep.subr.bf16.mxu0 0
      %1224 = vmatpush1.bf16.msra.mxu0 0
      %1225 = vmatprep.subr.bf16.mxu0 0
      %1226 = vmatpush1.bf16.msra.mxu0 0
      %1227 = vmatprep.subr.bf16.mxu0 0
      %1228 = vmatpush1.bf16.msra.mxu0 0
      %1229 = vmatprep.subr.bf16.mxu0 0
      %1230 = vmatpush1.bf16.msra.mxu0 0
      %1231 = vmatprep.subr.bf16.mxu0 0
      %1232 = vmatpush1.bf16.msra.mxu0 0
      %1233 = vmatprep.subr.bf16.mxu0 0
      %1234 = vmatpush1.bf16.msra.mxu0 0
      %1235 = vmatprep.subr.bf16.mxu0 0
      %1236 = vmatpush1.bf16.msra.mxu0 0
      %1237 = vmatprep.subr.bf16.mxu0 0
      %1238 = vmatpush1.bf16.msra.mxu0 0
      %1239 = vmatprep.mubr.bf16.mxu0 0
      %1240 = vmatmul.mubr.bf16.gmra.mrb[0].mxu0 %v1126
      %v1241 = vpop.f32.mrb[0].mxu0
      %v1242 = vadd.f32 0.0, %v1241
      %v1243 = vpop.f32.mrb[0].mxu0
      %v1244 = vadd.f32 0.0, %v1243
      %v1245 = vpop.f32.mrb[0].mxu0
      %v1246 = vpop.f32.mrb[0].mxu0
      %1247 = vdwg.mxu0
      %v1248 = vadd.f32 %v1090, %v1242
      %v1249 = vxor.u32 %v1248, 2147483648
      %v1250 = vmul.f32 %v1249, 1.442695
      %v1251 = vpow.pop %v1250
      %v1252 = vadd.f32 %v1251, 1.0
      %v1253 = vrcp.pop %v1252
      %v1254 = vmul.f32 1.0, %v1253
      %v1255 = vadd.f32 %v1091, %v1244
      %v1256 = vxor.u32 %v1255, 2147483648
      %v1257 = vmul.f32 %v1256, 1.442695
      %v1258 = vpow.pop %v1257
      %v1259 = vadd.f32 %v1258, 1.0
      %v1260 = vrcp.pop %v1259
      %v1261 = vmul.f32 1.0, %v1260
      %v1262 = vmul.f32 %v1254, %v1093
      %v1263 = vpack.c.bf16 %v1262, %v1262
      %v1280 = vunpack.c.l.b16 %v1110
      %v1281 = vunpack.c.l.b16 %v1111
      %v1282 = vunpack.c.l.b16 %v1112
      %v1283 = vunpack.c.l.b16 %v1113
      %v1284 = vunpack.c.l.b16 %v1114
      %v1285 = vunpack.c.l.b16 %v1115
      %v1286 = vunpack.c.l.b16 %v1116
      %v1287 = vunpack.c.l.b16 %v1117
      %v1288 = vunpack.c.l.b16 %v1118
      %v1289 = vunpack.c.l.b16 %v1119
      %v1290 = vunpack.c.l.b16 %v1120
      %v1291 = vunpack.c.l.b16 %v1121
      %v1292 = vunpack.c.l.b16 %v1122
      %v1293 = vunpack.c.l.b16 %v1123
      %v1294 = vunpack.c.l.b16 %v1124
      %v1295 = vunpack.c.l.b16 %v1125
      %v1296 = vpack.c.b16 %v1281, %v1280
      %v1297 = vpack.c.b16 %v1283, %v1282
      %v1298 = vpack.c.b16 %v1285, %v1284
      %v1299 = vpack.c.b16 %v1287, %v1286
      %v1300 = vpack.c.b16 %v1289, %v1288
      %v1301 = vpack.c.b16 %v1291, %v1290
      %v1302 = vpack.c.b16 %v1293, %v1292
      %v1303 = vpack.c.b16 %v1295, %v1294
      %1312 = vmatprep.subr.bf16.mxu0 0
      %1313 = vmatpush1.bf16.msra.mxu0 %v1296
      %1314 = vmatprep.subr.bf16.mxu0 0
      %1315 = vmatpush1.bf16.msra.mxu0 %v1297
      %1316 = vmatprep.subr.bf16.mxu0 0
      %1317 = vmatpush1.bf16.msra.mxu0 %v1298
      %1318 = vmatprep.subr.bf16.mxu0 0
      %1319 = vmatpush1.bf16.msra.mxu0 %v1299
      %1320 = vmatprep.subr.bf16.mxu0 0
      %1321 = vmatpush1.bf16.msra.mxu0 %v1300
      %1322 = vmatprep.subr.bf16.mxu0 0
      %1323 = vmatpush1.bf16.msra.mxu0 %v1301
      %1324 = vmatprep.subr.bf16.mxu0 0
      %1325 = vmatpush1.bf16.msra.mxu0 %v1302
      %1326 = vmatprep.subr.bf16.mxu0 0
      %1327 = vmatpush1.bf16.msra.mxu0 %v1303
      %1328 = vmatprep.subr.bf16.mxu0 0
      %1329 = vmatpush1.bf16.msra.mxu0 0
      %1330 = vmatprep.subr.bf16.mxu0 0
      %1331 = vmatpush1.bf16.msra.mxu0 0
      %1332 = vmatprep.subr.bf16.mxu0 0
      %1333 = vmatpush1.bf16.msra.mxu0 0
      %1334 = vmatprep.subr.bf16.mxu0 0
      %1335 = vmatpush1.bf16.msra.mxu0 0
      %1336 = vmatprep.subr.bf16.mxu0 0
      %1337 = vmatpush1.bf16.msra.mxu0 0
      %1338 = vmatprep.subr.bf16.mxu0 0
      %1339 = vmatpush1.bf16.msra.mxu0 0
      %1340 = vmatprep.subr.bf16.mxu0 0
      %1341 = vmatpush1.bf16.msra.mxu0 0
      %1342 = vmatprep.subr.bf16.mxu0 0
      %1343 = vmatpush1.bf16.msra.mxu0 0
      %1344 = vmatprep.mubr.bf16.mxu0 0
      %1345 = vmatmul.mubr.bf16.gmra.mrb[0].mxu0 %v1263
      %v1346 = vpop.f32.mrb[0].mxu0
      %v1347 = vadd.f32 0.0, %v1346
      %v1348 = vpop.f32.mrb[0].mxu0
      %v1349 = vpop.f32.mrb[0].mxu0
      %v1350 = vpop.f32.mrb[0].mxu0
      %1351 = vdwg.mxu0
      %v1352 = vadd.f32 %v1092, %v1347
      %v1353 = vtanh.pop %v1352
      %v1354 = vsub.f32 1.0, %v1261
      %v1355 = vmul.f32 %v1354, %v1093
      %v1356 = vmul.f32 %v1261, %v1353
      %v1357 = vadd.f32 %v1355, %v1356
      %1358 = vst [vmem:[%s7] sm:$0xff] %v1357
      %v1359 = vpack.c.bf16 %v1357, %v1357
      %v1360 = vld [vmem:[%s1] sm:$0xff]
      %v1361 = vld [vmem:[%s1 + $0x8] sm:$0xf]
      %v1362 = vld [vmem:[%s1 + $0xc] sm:$0xff]
      %v1363 = vld [vmem:[%s1 + $0x14] sm:$0xf]
      %v1364 = vld [vmem:[%s1 + $0x18] sm:$0xff]
      %v1365 = vld [vmem:[%s1 + $0x20] sm:$0xf]
      %v1366 = vld [vmem:[%s1 + $0x24] sm:$0xff]
      %v1367 = vld [vmem:[%s1 + $0x2c] sm:$0xf]
      %v1368 = vld [vmem:[%s1 + $0x30] sm:$0xff]
      %v1369 = vld [vmem:[%s1 + $0x38] sm:$0xf]
      %v1370 = vld [vmem:[%s1 + $0x3c] sm:$0xff]
      %v1371 = vld [vmem:[%s1 + $0x44] sm:$0xf]
      %v1372 = vld [vmem:[%s1 + $0x48] sm:$0xff]
      %v1373 = vld [vmem:[%s1 + $0x50] sm:$0xf]
      %v1374 = vld [vmem:[%s1 + $0x54] sm:$0xff]
      %v1375 = vld [vmem:[%s1 + $0x5c] sm:$0xf]
      %v1376 = vld [vmem:[%s1 + $0x60] sm:$0xff]
      %v1377 = vld [vmem:[%s1 + $0x68] sm:$0xf]
      %v1378 = vld [vmem:[%s1 + $0x6c] sm:$0xff]
      %v1379 = vld [vmem:[%s1 + $0x74] sm:$0xf]
      %v1380 = vld [vmem:[%s1 + $0x78] sm:$0xff]
      %v1381 = vld [vmem:[%s1 + $0x80] sm:$0xf]
      %v1382 = vld [vmem:[%s1 + $0x84] sm:$0xff]
      %v1383 = vld [vmem:[%s1 + $0x8c] sm:$0xf]
      %v1384 = vld [vmem:[%s1 + $0x90] sm:$0xff]
      %v1385 = vld [vmem:[%s1 + $0x98] sm:$0xf]
      %v1386 = vld [vmem:[%s1 + $0x9c] sm:$0xff]
      %v1387 = vld [vmem:[%s1 + $0xa4] sm:$0xf]
      %v1388 = vld [vmem:[%s1 + $0xa8] sm:$0xff]
      %v1389 = vld [vmem:[%s1 + $0xb0] sm:$0xf]
      %v1390 = vld [vmem:[%s1 + $0xb4] sm:$0xff]
      %v1391 = vld [vmem:[%s1 + $0xbc] sm:$0xf]
      %v1392 = vld [vmem:[%s4] sm:$0x7]
      %v1394 = vlaneseq
      %v1395 = vshrl.u32 %v1394, 7
      %v1396 = vsub.s32 0, %v1395
      %v1397 = vrot.slane %v1392, %v1396
      %v1398 = vlaneseq
      %v1399 = vshrl.u32 %v1398, 7
      %v1400 = vsub.s32 1, %v1399
      %v1401 = vrot.slane %v1392, %v1400
      %v1402 = vlaneseq
      %v1403 = vshrl.u32 %v1402, 7
      %v1404 = vsub.s32 2, %v1403
      %v1405 = vrot.slane %v1392, %v1404
      %v1441 = vunpack.c.l.b16 %v1360
      %v1442 = vunpack.c.h.b16 %v1360
      %v1443 = vunpack.c.l.b16 %v1361
      %v1444 = vunpack.c.l.b16 %v1362
      %v1445 = vunpack.c.h.b16 %v1362
      %v1446 = vunpack.c.l.b16 %v1363
      %v1447 = vunpack.c.l.b16 %v1364
      %v1448 = vunpack.c.h.b16 %v1364
      %v1449 = vunpack.c.l.b16 %v1365
      %v1450 = vunpack.c.l.b16 %v1366
      %v1451 = vunpack.c.h.b16 %v1366
      %v1452 = vunpack.c.l.b16 %v1367
      %v1453 = vunpack.c.l.b16 %v1368
      %v1454 = vunpack.c.h.b16 %v1368
      %v1455 = vunpack.c.l.b16 %v1369
      %v1456 = vunpack.c.l.b16 %v1370
      %v1457 = vunpack.c.h.b16 %v1370
      %v1458 = vunpack.c.l.b16 %v1371
      %v1459 = vunpack.c.l.b16 %v1372
      %v1460 = vunpack.c.h.b16 %v1372
      %v1461 = vunpack.c.l.b16 %v1373
      %v1462 = vunpack.c.l.b16 %v1374
      %v1463 = vunpack.c.h.b16 %v1374
      %v1464 = vunpack.c.l.b16 %v1375
      %v1465 = vunpack.c.l.b16 %v1376
      %v1466 = vunpack.c.h.b16 %v1376
      %v1467 = vunpack.c.l.b16 %v1377
      %v1468 = vunpack.c.l.b16 %v1378
      %v1469 = vunpack.c.h.b16 %v1378
      %v1470 = vunpack.c.l.b16 %v1379
      %v1471 = vunpack.c.l.b16 %v1380
      %v1472 = vunpack.c.h.b16 %v1380
      %v1473 = vunpack.c.l.b16 %v1381
      %v1474 = vunpack.c.l.b16 %v1382
      %v1475 = vunpack.c.h.b16 %v1382
      %v1476 = vunpack.c.l.b16 %v1383
      %v1477 = vunpack.c.l.b16 %v1384
      %v1478 = vunpack.c.h.b16 %v1384
      %v1479 = vunpack.c.l.b16 %v1385
      %v1480 = vunpack.c.l.b16 %v1386
      %v1481 = vunpack.c.h.b16 %v1386
      %v1482 = vunpack.c.l.b16 %v1387
      %v1483 = vunpack.c.l.b16 %v1388
      %v1484 = vunpack.c.h.b16 %v1388
      %v1485 = vunpack.c.l.b16 %v1389
      %v1486 = vunpack.c.l.b16 %v1390
      %v1487 = vunpack.c.h.b16 %v1390
      %v1488 = vunpack.c.l.b16 %v1391
      %v1489 = vpack.c.b16 %v1444, %v1441
      %v1490 = vpack.c.b16 %v1445, %v1442
      %v1491 = vpack.c.b16 %v1446, %v1443
      %v1492 = vpack.c.b16 %v1450, %v1447
      %v1493 = vpack.c.b16 %v1451, %v1448
      %v1494 = vpack.c.b16 %v1452, %v1449
      %v1495 = vpack.c.b16 %v1456, %v1453
      %v1496 = vpack.c.b16 %v1457, %v1454
      %v1497 = vpack.c.b16 %v1458, %v1455
      %v1498 = vpack.c.b16 %v1462, %v1459
      %v1499 = vpack.c.b16 %v1463, %v1460
      %v1500 = vpack.c.b16 %v1464, %v1461
      %v1501 = vpack.c.b16 %v1468, %v1465
      %v1502 = vpack.c.b16 %v1469, %v1466
      %v1503 = vpack.c.b16 %v1470, %v1467
      %v1504 = vpack.c.b16 %v1474, %v1471
      %v1505 = vpack.c.b16 %v1475, %v1472
      %v1506 = vpack.c.b16 %v1476, %v1473
      %v1507 = vpack.c.b16 %v1480, %v1477
      %v1508 = vpack.c.b16 %v1481, %v1478
      %v1509 = vpack.c.b16 %v1482, %v1479
      %v1510 = vpack.c.b16 %v1486, %v1483
      %v1511 = vpack.c.b16 %v1487, %v1484
      %v1512 = vpack.c.b16 %v1488, %v1485
      %1537 = vmatprep.subr.bf16.mxu0 %v1490
      %1538 = vmatpush1.bf16.msra.mxu0 %v1489
      %1539 = vmatprep.subr.bf16.mxu0 %v1493
      %1540 = vmatpush1.bf16.msra.mxu0 %v1492
      %1541 = vmatprep.subr.bf16.mxu0 %v1496
      %1542 = vmatpush1.bf16.msra.mxu0 %v1495
      %1543 = vmatprep.subr.bf16.mxu0 %v1499
      %1544 = vmatpush1.bf16.msra.mxu0 %v1498
      %1545 = vmatprep.subr.bf16.mxu0 %v1502
      %1546 = vmatpush1.bf16.msra.mxu0 %v1501
      %1547 = vmatprep.subr.bf16.mxu0 %v1505
      %1548 = vmatpush1.bf16.msra.mxu0 %v1504
      %1549 = vmatprep.subr.bf16.mxu0 %v1508
      %1550 = vmatpush1.bf16.msra.mxu0 %v1507
      %1551 = vmatprep.subr.bf16.mxu0 %v1511
      %1552 = vmatpush1.bf16.msra.mxu0 %v1510
      %1553 = vmatprep.subr.bf16.mxu0 0
      %1554 = vmatpush1.bf16.msra.mxu0 0
      %1555 = vmatprep.subr.bf16.mxu0 0
      %1556 = vmatpush1.bf16.msra.mxu0 0
      %1557 = vmatprep.subr.bf16.mxu0 0
      %1558 = vmatpush1.bf16.msra.mxu0 0
      %1559 = vmatprep.subr.bf16.mxu0 0
      %1560 = vmatpush1.bf16.msra.mxu0 0
      %1561 = vmatprep.subr.bf16.mxu0 0
      %1562 = vmatpush1.bf16.msra.mxu0 0
      %1563 = vmatprep.subr.bf16.mxu0 0
      %1564 = vmatpush1.bf16.msra.mxu0 0
      %1565 = vmatprep.subr.bf16.mxu0 0
      %1566 = vmatpush1.bf16.msra.mxu0 0
      %1567 = vmatprep.subr.bf16.mxu0 0
      %1568 = vmatpush1.bf16.msra.mxu0 0
      %1569 = vmatprep.mubr.bf16.mxu0 0
      %1570 = vmatmul.mubr.bf16.gmra.mrb[0].mxu0 %v1359
      %v1571 = vpop.f32.mrb[0].mxu0
      %v1572 = vadd.f32 %v1397, %v1571
      %v1573 = vpop.f32.mrb[0].mxu0
      %v1574 = vadd.f32 %v1401, %v1573
      %v1575 = vpop.f32.mrb[0].mxu0
      %v1576 = vpop.f32.mrb[0].mxu0
      %1577 = vdwg.mxu0
      %1578 = vmatprep.subr.bf16.mxu0 0
      %1579 = vmatpush1.bf16.msra.mxu0 %v1491
      %1580 = vmatprep.subr.bf16.mxu0 0
      %1581 = vmatpush1.bf16.msra.mxu0 %v1494
      %1582 = vmatprep.subr.bf16.mxu0 0
      %1583 = vmatpush1.bf16.msra.mxu0 %v1497
      %1584 = vmatprep.subr.bf16.mxu0 0
      %1585 = vmatpush1.bf16.msra.mxu0 %v1500
      %1586 = vmatprep.subr.bf16.mxu0 0
      %1587 = vmatpush1.bf16.msra.mxu0 %v1503
      %1588 = vmatprep.subr.bf16.mxu0 0
      %1589 = vmatpush1.bf16.msra.mxu0 %v1506
      %1590 = vmatprep.subr.bf16.mxu0 0
      %1591 = vmatpush1.bf16.msra.mxu0 %v1509
      %1592 = vmatprep.subr.bf16.mxu0 0
      %1593 = vmatpush1.bf16.msra.mxu0 %v1512
      %1594 = vmatprep.subr.bf16.mxu0 0
      %1595 = vmatpush1.bf16.msra.mxu0 0
      %1596 = vmatprep.subr.bf16.mxu0 0
      %1597 = vmatpush1.bf16.msra.mxu0 0
      %1598 = vmatprep.subr.bf16.mxu0 0
      %1599 = vmatpush1.bf16.msra.mxu0 0
      %1600 = vmatprep.subr.bf16.mxu0 0
      %1601 = vmatpush1.bf16.msra.mxu0 0
      %1602 = vmatprep.subr.bf16.mxu0 0
      %1603 = vmatpush1.bf16.msra.mxu0 0
      %1604 = vmatprep.subr.bf16.mxu0 0
      %1605 = vmatpush1.bf16.msra.mxu0 0
      %1606 = vmatprep.subr.bf16.mxu0 0
      %1607 = vmatpush1.bf16.msra.mxu0 0
      %1608 = vmatprep.subr.bf16.mxu0 0
      %1609 = vmatpush1.bf16.msra.mxu0 0
      %1610 = vmatprep.mubr.bf16.mxu0 0
      %1611 = vmatmul.mubr.bf16.gmra.mrb[0].mxu0 %v1359
      %v1612 = vpop.f32.mrb[0].mxu0
      %v1613 = vadd.f32 %v1405, %v1612
      %v1614 = vpop.f32.mrb[0].mxu0
      %v1615 = vpop.f32.mrb[0].mxu0
      %v1616 = vpop.f32.mrb[0].mxu0
      %1617 = vdwg.mxu0
      %v1618 = vld [vmem:[%s820] sm:$0xff]
      %v1619 = vld [vmem:[%s822] sm:$0xff]
      %v1620 = vld [vmem:[%s822 + $0x8] sm:$0xff]
      %v1621 = vld [vmem:[%s822 + $0x10] sm:$0xff]
      %v1622 = vld [vmem:[%s822 + $0x18] sm:$0xff]
      %v1623 = vld [vmem:[%s822 + $0x20] sm:$0xff]
      %v1624 = vld [vmem:[%s822 + $0x28] sm:$0xff]
      %v1625 = vld [vmem:[%s822 + $0x30] sm:$0xff]
      %v1626 = vld [vmem:[%s822 + $0x38] sm:$0xff]
      %v1627 = vld [vmem:[%s822 + $0x40] sm:$0xff]
      %v1628 = vld [vmem:[%s822 + $0x48] sm:$0xff]
      %v1629 = vld [vmem:[%s822 + $0x50] sm:$0xff]
      %v1630 = vld [vmem:[%s822 + $0x58] sm:$0xff]
      %v1631 = vld [vmem:[%s822 + $0x60] sm:$0xff]
      %v1632 = vld [vmem:[%s822 + $0x68] sm:$0xff]
      %v1633 = vld [vmem:[%s822 + $0x70] sm:$0xff]
      %v1634 = vld [vmem:[%s822 + $0x78] sm:$0xff]
      %v1635 = vld [vmem:[%s839] sm:$0xf]
      %v1636 = vld [vmem:[%s839 + $0x4] sm:$0xf]
      %v1637 = vld [vmem:[%s839 + $0x8] sm:$0xf]
      %v1638 = vld [vmem:[%s839 + $0xc] sm:$0xf]
      %v1639 = vld [vmem:[%s839 + $0x10] sm:$0xf]
      %v1640 = vld [vmem:[%s839 + $0x14] sm:$0xf]
      %v1641 = vld [vmem:[%s839 + $0x18] sm:$0xf]
      %v1642 = vld [vmem:[%s839 + $0x1c] sm:$0xf]
      %v1643 = vld [vmem:[%s839 + $0x20] sm:$0xf]
      %v1644 = vld [vmem:[%s839 + $0x24] sm:$0xf]
      %v1645 = vld [vmem:[%s839 + $0x28] sm:$0xf]
      %v1646 = vld [vmem:[%s839 + $0x2c] sm:$0xf]
      %v1647 = vld [vmem:[%s839 + $0x30] sm:$0xf]
      %v1648 = vld [vmem:[%s839 + $0x34] sm:$0xf]
      %v1649 = vld [vmem:[%s839 + $0x38] sm:$0xf]
      %v1650 = vld [vmem:[%s839 + $0x3c] sm:$0xf]
      %v1651 = vpack.c.bf16 %v1618, %v1618
      %v1668 = vunpack.c.l.b16 %v1619
      %v1669 = vunpack.c.h.b16 %v1619
      %v1670 = vunpack.c.l.b16 %v1620
      %v1671 = vunpack.c.h.b16 %v1620
      %v1672 = vunpack.c.l.b16 %v1621
      %v1673 = vunpack.c.h.b16 %v1621
      %v1674 = vunpack.c.l.b16 %v1622
      %v1675 = vunpack.c.h.b16 %v1622
      %v1676 = vunpack.c.l.b16 %v1623
      %v1677 = vunpack.c.h.b16 %v1623
      %v1678 = vunpack.c.l.b16 %v1624
      %v1679 = vunpack.c.h.b16 %v1624
      %v1680 = vunpack.c.l.b16 %v1625
      %v1681 = vunpack.c.h.b16 %v1625
      %v1682 = vunpack.c.l.b16 %v1626
      %v1683 = vunpack.c.h.b16 %v1626
      %v1684 = vunpack.c.l.b16 %v1627
      %v1685 = vunpack.c.h.b16 %v1627
      %v1686 = vunpack.c.l.b16 %v1628
      %v1687 = vunpack.c.h.b16 %v1628
      %v1688 = vunpack.c.l.b16 %v1629
      %v1689 = vunpack.c.h.b16 %v1629
      %v1690 = vunpack.c.l.b16 %v1630
      %v1691 = vunpack.c.h.b16 %v1630
      %v1692 = vunpack.c.l.b16 %v1631
      %v1693 = vunpack.c.h.b16 %v1631
      %v1694 = vunpack.c.l.b16 %v1632
      %v1695 = vunpack.c.h.b16 %v1632
      %v1696 = vunpack.c.l.b16 %v1633
      %v1697 = vunpack.c.h.b16 %v1633
      %v1698 = vunpack.c.l.b16 %v1634
      %v1699 = vunpack.c.h.b16 %v1634
      %v1700 = vpack.c.b16 %v1670, %v1668
      %v1701 = vpack.c.b16 %v1671, %v1669
      %v1702 = vpack.c.b16 %v1674, %v1672
      %v1703 = vpack.c.b16 %v1675, %v1673
      %v1704 = vpack.c.b16 %v1678, %v1676
      %v1705 = vpack.c.b16 %v1679, %v1677
      %v1706 = vpack.c.b16 %v1682, %v1680
      %v1707 = vpack.c.b16 %v1683, %v1681
      %v1708 = vpack.c.b16 %v1686, %v1684
      %v1709 = vpack.c.b16 %v1687, %v1685
      %v1710 = vpack.c.b16 %v1690, %v1688
      %v1711 = vpack.c.b16 %v1691, %v1689
      %v1712 = vpack.c.b16 %v1694, %v1692
      %v1713 = vpack.c.b16 %v1695, %v1693
      %v1714 = vpack.c.b16 %v1698, %v1696
      %v1715 = vpack.c.b16 %v1699, %v1697
      %1732 = vmatprep.subr.bf16.mxu0 %v1701
      %1733 = vmatpush1.bf16.msra.mxu0 %v1700
      %1734 = vmatprep.subr.bf16.mxu0 %v1703
      %1735 = vmatpush1.bf16.msra.mxu0 %v1702
      %1736 = vmatprep.subr.bf16.mxu0 %v1705
      %1737 = vmatpush1.bf16.msra.mxu0 %v1704
      %1738 = vmatprep.subr.bf16.mxu0 %v1707
      %1739 = vmatpush1.bf16.msra.mxu0 %v1706
      %1740 = vmatprep.subr.bf16.mxu0 %v1709
      %1741 = vmatpush1.bf16.msra.mxu0 %v1708
      %1742 = vmatprep.subr.bf16.mxu0 %v1711
      %1743 = vmatpush1.bf16.msra.mxu0 %v1710
      %1744 = vmatprep.subr.bf16.mxu0 %v1713
      %1745 = vmatpush1.bf16.msra.mxu0 %v1712
      %1746 = vmatprep.subr.bf16.mxu0 %v1715
      %1747 = vmatpush1.bf16.msra.mxu0 %v1714
      %1748 = vmatprep.subr.bf16.mxu0 0
      %1749 = vmatpush1.bf16.msra.mxu0 0
      %1750 = vmatprep.subr.bf16.mxu0 0
      %1751 = vmatpush1.bf16.msra.mxu0 0
      %1752 = vmatprep.subr.bf16.mxu0 0
      %1753 = vmatpush1.bf16.msra.mxu0 0
      %1754 = vmatprep.subr.bf16.mxu0 0
      %1755 = vmatpush1.bf16.msra.mxu0 0
      %1756 = vmatprep.subr.bf16.mxu0 0
      %1757 = vmatpush1.bf16.msra.mxu0 0
      %1758 = vmatprep.subr.bf16.mxu0 0
      %1759 = vmatpush1.bf16.msra.mxu0 0
      %1760 = vmatprep.subr.bf16.mxu0 0
      %1761 = vmatpush1.bf16.msra.mxu0 0
      %1762 = vmatprep.subr.bf16.mxu0 0
      %1763 = vmatpush1.bf16.msra.mxu0 0
      %1764 = vmatprep.mubr.bf16.mxu0 0
      %1765 = vmatmul.mubr.bf16.gmra.mrb[0].mxu0 %v1651
      %v1766 = vpop.f32.mrb[0].mxu0
      %v1767 = vadd.f32 0.0, %v1766
      %v1768 = vpop.f32.mrb[0].mxu0
      %v1769 = vadd.f32 0.0, %v1768
      %v1770 = vpop.f32.mrb[0].mxu0
      %v1771 = vpop.f32.mrb[0].mxu0
      %1772 = vdwg.mxu0
      %v1773 = vadd.f32 %v1572, %v1767
      %v1774 = vxor.u32 %v1773, 2147483648
      %v1775 = vmul.f32 %v1774, 1.442695
      %v1776 = vpow.pop %v1775
      %v1777 = vadd.f32 %v1776, 1.0
      %v1778 = vrcp.pop %v1777
      %v1779 = vmul.f32 1.0, %v1778
      %v1780 = vadd.f32 %v1574, %v1769
      %v1781 = vxor.u32 %v1780, 2147483648
      %v1782 = vmul.f32 %v1781, 1.442695
      %v1783 = vpow.pop %v1782
      %v1784 = vadd.f32 %v1783, 1.0
      %v1785 = vrcp.pop %v1784
      %v1786 = vmul.f32 1.0, %v1785
      %v1787 = vmul.f32 %v1779, %v1618
      %v1788 = vpack.c.bf16 %v1787, %v1787
      %v1805 = vunpack.c.l.b16 %v1635
      %v1806 = vunpack.c.l.b16 %v1636
      %v1807 = vunpack.c.l.b16 %v1637
      %v1808 = vunpack.c.l.b16 %v1638
      %v1809 = vunpack.c.l.b16 %v1639
      %v1810 = vunpack.c.l.b16 %v1640
      %v1811 = vunpack.c.l.b16 %v1641
      %v1812 = vunpack.c.l.b16 %v1642
      %v1813 = vunpack.c.l.b16 %v1643
      %v1814 = vunpack.c.l.b16 %v1644
      %v1815 = vunpack.c.l.b16 %v1645
      %v1816 = vunpack.c.l.b16 %v1646
      %v1817 = vunpack.c.l.b16 %v1647
      %v1818 = vunpack.c.l.b16 %v1648
      %v1819 = vunpack.c.l.b16 %v1649
      %v1820 = vunpack.c.l.b16 %v1650
      %v1821 = vpack.c.b16 %v1806, %v1805
      %v1822 = vpack.c.b16 %v1808, %v1807
      %v1823 = vpack.c.b16 %v1810, %v1809
      %v1824 = vpack.c.b16 %v1812, %v1811
      %v1825 = vpack.c.b16 %v1814, %v1813
      %v1826 = vpack.c.b16 %v1816, %v1815
      %v1827 = vpack.c.b16 %v1818, %v1817
      %v1828 = vpack.c.b16 %v1820, %v1819
      %1837 = vmatprep.subr.bf16.mxu0 0
      %1838 = vmatpush1.bf16.msra.mxu0 %v1821
      %1839 = vmatprep.subr.bf16.mxu0 0
      %1840 = vmatpush1.bf16.msra.mxu0 %v1822
      %1841 = vmatprep.subr.bf16.mxu0 0
      %1842 = vmatpush1.bf16.msra.mxu0 %v1823
      %1843 = vmatprep.subr.bf16.mxu0 0
      %1844 = vmatpush1.bf16.msra.mxu0 %v1824
      %1845 = vmatprep.subr.bf16.mxu0 0
      %1846 = vmatpush1.bf16.msra.mxu0 %v1825
      %1847 = vmatprep.subr.bf16.mxu0 0
      %1848 = vmatpush1.bf16.msra.mxu0 %v1826
      %1849 = vmatprep.subr.bf16.mxu0 0
      %1850 = vmatpush1.bf16.msra.mxu0 %v1827
      %1851 = vmatprep.subr.bf16.mxu0 0
      %1852 = vmatpush1.bf16.msra.mxu0 %v1828
      %1853 = vmatprep.subr.bf16.mxu0 0
      %1854 = vmatpush1.bf16.msra.mxu0 0
      %1855 = vmatprep.subr.bf16.mxu0 0
      %1856 = vmatpush1.bf16.msra.mxu0 0
      %1857 = vmatprep.subr.bf16.mxu0 0
      %1858 = vmatpush1.bf16.msra.mxu0 0
      %1859 = vmatprep.subr.bf16.mxu0 0
      %1860 = vmatpush1.bf16.msra.mxu0 0
      %1861 = vmatprep.subr.bf16.mxu0 0
      %1862 = vmatpush1.bf16.msra.mxu0 0
      %1863 = vmatprep.subr.bf16.mxu0 0
      %1864 = vmatpush1.bf16.msra.mxu0 0
      %1865 = vmatprep.subr.bf16.mxu0 0
      %1866 = vmatpush1.bf16.msra.mxu0 0
      %1867 = vmatprep.subr.bf16.mxu0 0
      %1868 = vmatpush1.bf16.msra.mxu0 0
      %1869 = vmatprep.mubr.bf16.mxu0 0
      %1870 = vmatmul.mubr.bf16.gmra.mrb[0].mxu0 %v1788
      %v1871 = vpop.f32.mrb[0].mxu0
      %v1872 = vadd.f32 0.0, %v1871
      %v1873 = vpop.f32.mrb[0].mxu0
      %v1874 = vpop.f32.mrb[0].mxu0
      %v1875 = vpop.f32.mrb[0].mxu0
      %1876 = vdwg.mxu0
      %v1877 = vadd.f32 %v1613, %v1872
      %v1878 = vtanh.pop %v1877
      %v1879 = vsub.f32 1.0, %v1786
      %v1880 = vmul.f32 %v1879, %v1618
      %v1881 = vmul.f32 %v1786, %v1878
      %v1882 = vadd.f32 %v1880, %v1881
      %1883 = vst [vmem:[%s820] sm:$0xff] %v1882
      %1884 = vst [vmem:[%s281 + $0x8] sm:$0xff] %v1882
      %v1885 = vld [vmem:[%s275 + $0x30] sm:$0xff]
      %v1886 = vld [vmem:[%s275 + $0x38] sm:$0xff]
      %v1887 = vld [vmem:[%s275 + $0x40] sm:$0xff]
      %v1888 = vld [vmem:[%s7] sm:$0xff]
      %v1889 = vld [vmem:[%s2] sm:$0xff]
      %v1890 = vld [vmem:[%s2 + $0x8] sm:$0xff]
      %v1891 = vld [vmem:[%s2 + $0x10] sm:$0xff]
      %v1892 = vld [vmem:[%s2 + $0x18] sm:$0xff]
      %v1893 = vld [vmem:[%s2 + $0x20] sm:$0xff]
      %v1894 = vld [vmem:[%s2 + $0x28] sm:$0xff]
      %v1895 = vld [vmem:[%s2 + $0x30] sm:$0xff]
      %v1896 = vld [vmem:[%s2 + $0x38] sm:$0xff]
      %v1897 = vld [vmem:[%s2 + $0x40] sm:$0xff]
      %v1898 = vld [vmem:[%s2 + $0x48] sm:$0xff]
      %v1899 = vld [vmem:[%s2 + $0x50] sm:$0xff]
      %v1900 = vld [vmem:[%s2 + $0x58] sm:$0xff]
      %v1901 = vld [vmem:[%s2 + $0x60] sm:$0xff]
      %v1902 = vld [vmem:[%s2 + $0x68] sm:$0xff]
      %v1903 = vld [vmem:[%s2 + $0x70] sm:$0xff]
      %v1904 = vld [vmem:[%s2 + $0x78] sm:$0xff]
      %v1905 = vld [vmem:[%s3] sm:$0xf]
      %v1906 = vld [vmem:[%s3 + $0x4] sm:$0xf]
      %v1907 = vld [vmem:[%s3 + $0x8] sm:$0xf]
      %v1908 = vld [vmem:[%s3 + $0xc] sm:$0xf]
      %v1909 = vld [vmem:[%s3 + $0x10] sm:$0xf]
      %v1910 = vld [vmem:[%s3 + $0x14] sm:$0xf]
      %v1911 = vld [vmem:[%s3 + $0x18] sm:$0xf]
      %v1912 = vld [vmem:[%s3 + $0x1c] sm:$0xf]
      %v1913 = vld [vmem:[%s3 + $0x20] sm:$0xf]
      %v1914 = vld [vmem:[%s3 + $0x24] sm:$0xf]
      %v1915 = vld [vmem:[%s3 + $0x28] sm:$0xf]
      %v1916 = vld [vmem:[%s3 + $0x2c] sm:$0xf]
      %v1917 = vld [vmem:[%s3 + $0x30] sm:$0xf]
      %v1918 = vld [vmem:[%s3 + $0x34] sm:$0xf]
      %v1919 = vld [vmem:[%s3 + $0x38] sm:$0xf]
      %v1920 = vld [vmem:[%s3 + $0x3c] sm:$0xf]
      %v1921 = vpack.c.bf16 %v1888, %v1888
      %v1938 = vunpack.c.l.b16 %v1889
      %v1939 = vunpack.c.h.b16 %v1889
      %v1940 = vunpack.c.l.b16 %v1890
      %v1941 = vunpack.c.h.b16 %v1890
      %v1942 = vunpack.c.l.b16 %v1891
      %v1943 = vunpack.c.h.b16 %v1891
      %v1944 = vunpack.c.l.b16 %v1892
      %v1945 = vunpack.c.h.b16 %v1892
      %v1946 = vunpack.c.l.b16 %v1893
      %v1947 = vunpack.c.h.b16 %v1893
      %v1948 = vunpack.c.l.b16 %v1894
      %v1949 = vunpack.c.h.b16 %v1894
      %v1950 = vunpack.c.l.b16 %v1895
      %v1951 = vunpack.c.h.b16 %v1895
      %v1952 = vunpack.c.l.b16 %v1896
      %v1953 = vunpack.c.h.b16 %v1896
      %v1954 = vunpack.c.l.b16 %v1897
      %v1955 = vunpack.c.h.b16 %v1897
      %v1956 = vunpack.c.l.b16 %v1898
      %v1957 = vunpack.c.h.b16 %v1898
      %v1958 = vunpack.c.l.b16 %v1899
      %v1959 = vunpack.c.h.b16 %v1899
      %v1960 = vunpack.c.l.b16 %v1900
      %v1961 = vunpack.c.h.b16 %v1900
      %v1962 = vunpack.c.l.b16 %v1901
      %v1963 = vunpack.c.h.b16 %v1901
      %v1964 = vunpack.c.l.b16 %v1902
      %v1965 = vunpack.c.h.b16 %v1902
      %v1966 = vunpack.c.l.b16 %v1903
      %v1967 = vunpack.c.h.b16 %v1903
      %v1968 = vunpack.c.l.b16 %v1904
      %v1969 = vunpack.c.h.b16 %v1904
      %v1970 = vpack.c.b16 %v1940, %v1938
      %v1971 = vpack.c.b16 %v1941, %v1939
      %v1972 = vpack.c.b16 %v1944, %v1942
      %v1973 = vpack.c.b16 %v1945, %v1943
      %v1974 = vpack.c.b16 %v1948, %v1946
      %v1975 = vpack.c.b16 %v1949, %v1947
      %v1976 = vpack.c.b16 %v1952, %v1950
      %v1977 = vpack.c.b16 %v1953, %v1951
      %v1978 = vpack.c.b16 %v1956, %v1954
      %v1979 = vpack.c.b16 %v1957, %v1955
      %v1980 = vpack.c.b16 %v1960, %v1958
      %v1981 = vpack.c.b16 %v1961, %v1959
      %v1982 = vpack.c.b16 %v1964, %v1962
      %v1983 = vpack.c.b16 %v1965, %v1963
      %v1984 = vpack.c.b16 %v1968, %v1966
      %v1985 = vpack.c.b16 %v1969, %v1967
      %2002 = vmatprep.subr.bf16.mxu0 %v1971
      %2003 = vmatpush1.bf16.msra.mxu0 %v1970
      %2004 = vmatprep.subr.bf16.mxu0 %v1973
      %2005 = vmatpush1.bf16.msra.mxu0 %v1972
      %2006 = vmatprep.subr.bf16.mxu0 %v1975
      %2007 = vmatpush1.bf16.msra.mxu0 %v1974
      %2008 = vmatprep.subr.bf16.mxu0 %v1977
      %2009 = vmatpush1.bf16.msra.mxu0 %v1976
      %2010 = vmatprep.subr.bf16.mxu0 %v1979
      %2011 = vmatpush1.bf16.msra.mxu0 %v1978
      %2012 = vmatprep.subr.bf16.mxu0 %v1981
      %2013 = vmatpush1.bf16.msra.mxu0 %v1980
      %2014 = vmatprep.subr.bf16.mxu0 %v1983
      %2015 = vmatpush1.bf16.msra.mxu0 %v1982
      %2016 = vmatprep.subr.bf16.mxu0 %v1985
      %2017 = vmatpush1.bf16.msra.mxu0 %v1984
      %2018 = vmatprep.subr.bf16.mxu0 0
      %2019 = vmatpush1.bf16.msra.mxu0 0
      %2020 = vmatprep.subr.bf16.mxu0 0
      %2021 = vmatpush1.bf16.msra.mxu0 0
      %2022 = vmatprep.subr.bf16.mxu0 0
      %2023 = vmatpush1.bf16.msra.mxu0 0
      %2024 = vmatprep.subr.bf16.mxu0 0
      %2025 = vmatpush1.bf16.msra.mxu0 0
      %2026 = vmatprep.subr.bf16.mxu0 0
      %2027 = vmatpush1.bf16.msra.mxu0 0
      %2028 = vmatprep.subr.bf16.mxu0 0
      %2029 = vmatpush1.bf16.msra.mxu0 0
      %2030 = vmatprep.subr.bf16.mxu0 0
      %2031 = vmatpush1.bf16.msra.mxu0 0
      %2032 = vmatprep.subr.bf16.mxu0 0
      %2033 = vmatpush1.bf16.msra.mxu0 0
      %2034 = vmatprep.mubr.bf16.mxu0 0
      %2035 = vmatmul.mubr.bf16.gmra.mrb[0].mxu0 %v1921
      %v2036 = vpop.f32.mrb[0].mxu0
      %v2037 = vadd.f32 0.0, %v2036
      %v2038 = vpop.f32.mrb[0].mxu0
      %v2039 = vadd.f32 0.0, %v2038
      %v2040 = vpop.f32.mrb[0].mxu0
      %v2041 = vpop.f32.mrb[0].mxu0
      %2042 = vdwg.mxu0
      %v2043 = vadd.f32 %v1885, %v2037
      %v2044 = vxor.u32 %v2043, 2147483648
      %v2045 = vmul.f32 %v2044, 1.442695
      %v2046 = vpow.pop %v2045
      %v2047 = vadd.f32 %v2046, 1.0
      %v2048 = vrcp.pop %v2047
      %v2049 = vmul.f32 1.0, %v2048
      %v2050 = vadd.f32 %v1886, %v2039
      %v2051 = vxor.u32 %v2050, 2147483648
      %v2052 = vmul.f32 %v2051, 1.442695
      %v2053 = vpow.pop %v2052
      %v2054 = vadd.f32 %v2053, 1.0
      %v2055 = vrcp.pop %v2054
      %v2056 = vmul.f32 1.0, %v2055
      %v2057 = vmul.f32 %v2049, %v1888
      %v2058 = vpack.c.bf16 %v2057, %v2057
      %v2075 = vunpack.c.l.b16 %v1905
      %v2076 = vunpack.c.l.b16 %v1906
      %v2077 = vunpack.c.l.b16 %v1907
      %v2078 = vunpack.c.l.b16 %v1908
      %v2079 = vunpack.c.l.b16 %v1909
      %v2080 = vunpack.c.l.b16 %v1910
      %v2081 = vunpack.c.l.b16 %v1911
      %v2082 = vunpack.c.l.b16 %v1912
      %v2083 = vunpack.c.l.b16 %v1913
      %v2084 = vunpack.c.l.b16 %v1914
      %v2085 = vunpack.c.l.b16 %v1915
      %v2086 = vunpack.c.l.b16 %v1916
      %v2087 = vunpack.c.l.b16 %v1917
      %v2088 = vunpack.c.l.b16 %v1918
      %v2089 = vunpack.c.l.b16 %v1919
      %v2090 = vunpack.c.l.b16 %v1920
      %v2091 = vpack.c.b16 %v2076, %v2075
      %v2092 = vpack.c.b16 %v2078, %v2077
      %v2093 = vpack.c.b16 %v2080, %v2079
      %v2094 = vpack.c.b16 %v2082, %v2081
      %v2095 = vpack.c.b16 %v2084, %v2083
      %v2096 = vpack.c.b16 %v2086, %v2085
      %v2097 = vpack.c.b16 %v2088, %v2087
      %v2098 = vpack.c.b16 %v2090, %v2089
      %2107 = vmatprep.subr.bf16.mxu0 0
      %2108 = vmatpush1.bf16.msra.mxu0 %v2091
      %2109 = vmatprep.subr.bf16.mxu0 0
      %2110 = vmatpush1.bf16.msra.mxu0 %v2092
      %2111 = vmatprep.subr.bf16.mxu0 0
      %2112 = vmatpush1.bf16.msra.mxu0 %v2093
      %2113 = vmatprep.subr.bf16.mxu0 0
      %2114 = vmatpush1.bf16.msra.mxu0 %v2094
      %2115 = vmatprep.subr.bf16.mxu0 0
      %2116 = vmatpush1.bf16.msra.mxu0 %v2095
      %2117 = vmatprep.subr.bf16.mxu0 0
      %2118 = vmatpush1.bf16.msra.mxu0 %v2096
      %2119 = vmatprep.subr.bf16.mxu0 0
      %2120 = vmatpush1.bf16.msra.mxu0 %v2097
      %2121 = vmatprep.subr.bf16.mxu0 0
      %2122 = vmatpush1.bf16.msra.mxu0 %v2098
      %2123 = vmatprep.subr.bf16.mxu0 0
      %2124 = vmatpush1.bf16.msra.mxu0 0
      %2125 = vmatprep.subr.bf16.mxu0 0
      %2126 = vmatpush1.bf16.msra.mxu0 0
      %2127 = vmatprep.subr.bf16.mxu0 0
      %2128 = vmatpush1.bf16.msra.mxu0 0
      %2129 = vmatprep.subr.bf16.mxu0 0
      %2130 = vmatpush1.bf16.msra.mxu0 0
      %2131 = vmatprep.subr.bf16.mxu0 0
      %2132 = vmatpush1.bf16.msra.mxu0 0
      %2133 = vmatprep.subr.bf16.mxu0 0
      %2134 = vmatpush1.bf16.msra.mxu0 0
      %2135 = vmatprep.subr.bf16.mxu0 0
      %2136 = vmatpush1.bf16.msra.mxu0 0
      %2137 = vmatprep.subr.bf16.mxu0 0
      %2138 = vmatpush1.bf16.msra.mxu0 0
      %2139 = vmatprep.mubr.bf16.mxu0 0
      %2140 = vmatmul.mubr.bf16.gmra.mrb[0].mxu0 %v2058
      %v2141 = vpop.f32.mrb[0].mxu0
      %v2142 = vadd.f32 0.0, %v2141
      %v2143 = vpop.f32.mrb[0].mxu0
      %v2144 = vpop.f32.mrb[0].mxu0
      %v2145 = vpop.f32.mrb[0].mxu0
      %2146 = vdwg.mxu0
      %v2147 = vadd.f32 %v1887, %v2142
      %v2148 = vtanh.pop %v2147
      %v2149 = vsub.f32 1.0, %v2056
      %v2150 = vmul.f32 %v2149, %v1888
      %v2151 = vmul.f32 %v2056, %v2148
      %v2152 = vadd.f32 %v2150, %v2151
      %2153 = vst [vmem:[%s7] sm:$0xff] %v2152
      %v2154 = vpack.c.bf16 %v2152, %v2152
      %v2155 = vld [vmem:[%s1] sm:$0xff]
      %v2156 = vld [vmem:[%s1 + $0x8] sm:$0xf]
      %v2157 = vld [vmem:[%s1 + $0xc] sm:$0xff]
      %v2158 = vld [vmem:[%s1 + $0x14] sm:$0xf]
      %v2159 = vld [vmem:[%s1 + $0x18] sm:$0xff]
      %v2160 = vld [vmem:[%s1 + $0x20] sm:$0xf]
      %v2161 = vld [vmem:[%s1 + $0x24] sm:$0xff]
      %v2162 = vld [vmem:[%s1 + $0x2c] sm:$0xf]
      %v2163 = vld [vmem:[%s1 + $0x30] sm:$0xff]
      %v2164 = vld [vmem:[%s1 + $0x38] sm:$0xf]
      %v2165 = vld [vmem:[%s1 + $0x3c] sm:$0xff]
      %v2166 = vld [vmem:[%s1 + $0x44] sm:$0xf]
      %v2167 = vld [vmem:[%s1 + $0x48] sm:$0xff]
      %v2168 = vld [vmem:[%s1 + $0x50] sm:$0xf]
      %v2169 = vld [vmem:[%s1 + $0x54] sm:$0xff]
      %v2170 = vld [vmem:[%s1 + $0x5c] sm:$0xf]
      %v2171 = vld [vmem:[%s1 + $0x60] sm:$0xff]
      %v2172 = vld [vmem:[%s1 + $0x68] sm:$0xf]
      %v2173 = vld [vmem:[%s1 + $0x6c] sm:$0xff]
      %v2174 = vld [vmem:[%s1 + $0x74] sm:$0xf]
      %v2175 = vld [vmem:[%s1 + $0x78] sm:$0xff]
      %v2176 = vld [vmem:[%s1 + $0x80] sm:$0xf]
      %v2177 = vld [vmem:[%s1 + $0x84] sm:$0xff]
      %v2178 = vld [vmem:[%s1 + $0x8c] sm:$0xf]
      %v2179 = vld [vmem:[%s1 + $0x90] sm:$0xff]
      %v2180 = vld [vmem:[%s1 + $0x98] sm:$0xf]
      %v2181 = vld [vmem:[%s1 + $0x9c] sm:$0xff]
      %v2182 = vld [vmem:[%s1 + $0xa4] sm:$0xf]
      %v2183 = vld [vmem:[%s1 + $0xa8] sm:$0xff]
      %v2184 = vld [vmem:[%s1 + $0xb0] sm:$0xf]
      %v2185 = vld [vmem:[%s1 + $0xb4] sm:$0xff]
      %v2186 = vld [vmem:[%s1 + $0xbc] sm:$0xf]
      %v2187 = vld [vmem:[%s4] sm:$0x7]
      %v2189 = vlaneseq
      %v2190 = vshrl.u32 %v2189, 7
      %v2191 = vsub.s32 0, %v2190
      %v2192 = vrot.slane %v2187, %v2191
      %v2193 = vlaneseq
      %v2194 = vshrl.u32 %v2193, 7
      %v2195 = vsub.s32 1, %v2194
      %v2196 = vrot.slane %v2187, %v2195
      %v2197 = vlaneseq
      %v2198 = vshrl.u32 %v2197, 7
      %v2199 = vsub.s32 2, %v2198
      %v2200 = vrot.slane %v2187, %v2199
      %v2236 = vunpack.c.l.b16 %v2155
      %v2237 = vunpack.c.h.b16 %v2155
      %v2238 = vunpack.c.l.b16 %v2156
      %v2239 = vunpack.c.l.b16 %v2157
      %v2240 = vunpack.c.h.b16 %v2157
      %v2241 = vunpack.c.l.b16 %v2158
      %v2242 = vunpack.c.l.b16 %v2159
      %v2243 = vunpack.c.h.b16 %v2159
      %v2244 = vunpack.c.l.b16 %v2160
      %v2245 = vunpack.c.l.b16 %v2161
      %v2246 = vunpack.c.h.b16 %v2161
      %v2247 = vunpack.c.l.b16 %v2162
      %v2248 = vunpack.c.l.b16 %v2163
      %v2249 = vunpack.c.h.b16 %v2163
      %v2250 = vunpack.c.l.b16 %v2164
      %v2251 = vunpack.c.l.b16 %v2165
      %v2252 = vunpack.c.h.b16 %v2165
      %v2253 = vunpack.c.l.b16 %v2166
      %v2254 = vunpack.c.l.b16 %v2167
      %v2255 = vunpack.c.h.b16 %v2167
      %v2256 = vunpack.c.l.b16 %v2168
      %v2257 = vunpack.c.l.b16 %v2169
      %v2258 = vunpack.c.h.b16 %v2169
      %v2259 = vunpack.c.l.b16 %v2170
      %v2260 = vunpack.c.l.b16 %v2171
      %v2261 = vunpack.c.h.b16 %v2171
      %v2262 = vunpack.c.l.b16 %v2172
      %v2263 = vunpack.c.l.b16 %v2173
      %v2264 = vunpack.c.h.b16 %v2173
      %v2265 = vunpack.c.l.b16 %v2174
      %v2266 = vunpack.c.l.b16 %v2175
      %v2267 = vunpack.c.h.b16 %v2175
      %v2268 = vunpack.c.l.b16 %v2176
      %v2269 = vunpack.c.l.b16 %v2177
      %v2270 = vunpack.c.h.b16 %v2177
      %v2271 = vunpack.c.l.b16 %v2178
      %v2272 = vunpack.c.l.b16 %v2179
      %v2273 = vunpack.c.h.b16 %v2179
      %v2274 = vunpack.c.l.b16 %v2180
      %v2275 = vunpack.c.l.b16 %v2181
      %v2276 = vunpack.c.h.b16 %v2181
      %v2277 = vunpack.c.l.b16 %v2182
      %v2278 = vunpack.c.l.b16 %v2183
      %v2279 = vunpack.c.h.b16 %v2183
      %v2280 = vunpack.c.l.b16 %v2184
      %v2281 = vunpack.c.l.b16 %v2185
      %v2282 = vunpack.c.h.b16 %v2185
      %v2283 = vunpack.c.l.b16 %v2186
      %v2284 = vpack.c.b16 %v2239, %v2236
      %v2285 = vpack.c.b16 %v2240, %v2237
      %v2286 = vpack.c.b16 %v2241, %v2238
      %v2287 = vpack.c.b16 %v2245, %v2242
      %v2288 = vpack.c.b16 %v2246, %v2243
      %v2289 = vpack.c.b16 %v2247, %v2244
      %v2290 = vpack.c.b16 %v2251, %v2248
      %v2291 = vpack.c.b16 %v2252, %v2249
      %v2292 = vpack.c.b16 %v2253, %v2250
      %v2293 = vpack.c.b16 %v2257, %v2254
      %v2294 = vpack.c.b16 %v2258, %v2255
      %v2295 = vpack.c.b16 %v2259, %v2256
      %v2296 = vpack.c.b16 %v2263, %v2260
      %v2297 = vpack.c.b16 %v2264, %v2261
      %v2298 = vpack.c.b16 %v2265, %v2262
      %v2299 = vpack.c.b16 %v2269, %v2266
      %v2300 = vpack.c.b16 %v2270, %v2267
      %v2301 = vpack.c.b16 %v2271, %v2268
      %v2302 = vpack.c.b16 %v2275, %v2272
      %v2303 = vpack.c.b16 %v2276, %v2273
      %v2304 = vpack.c.b16 %v2277, %v2274
      %v2305 = vpack.c.b16 %v2281, %v2278
      %v2306 = vpack.c.b16 %v2282, %v2279
      %v2307 = vpack.c.b16 %v2283, %v2280
      %2332 = vmatprep.subr.bf16.mxu0 %v2285
      %2333 = vmatpush1.bf16.msra.mxu0 %v2284
      %2334 = vmatprep.subr.bf16.mxu0 %v2288
      %2335 = vmatpush1.bf16.msra.mxu0 %v2287
      %2336 = vmatprep.subr.bf16.mxu0 %v2291
      %2337 = vmatpush1.bf16.msra.mxu0 %v2290
      %2338 = vmatprep.subr.bf16.mxu0 %v2294
      %2339 = vmatpush1.bf16.msra.mxu0 %v2293
      %2340 = vmatprep.subr.bf16.mxu0 %v2297
      %2341 = vmatpush1.bf16.msra.mxu0 %v2296
      %2342 = vmatprep.subr.bf16.mxu0 %v2300
      %2343 = vmatpush1.bf16.msra.mxu0 %v2299
      %2344 = vmatprep.subr.bf16.mxu0 %v2303
      %2345 = vmatpush1.bf16.msra.mxu0 %v2302
      %2346 = vmatprep.subr.bf16.mxu0 %v2306
      %2347 = vmatpush1.bf16.msra.mxu0 %v2305
      %2348 = vmatprep.subr.bf16.mxu0 0
      %2349 = vmatpush1.bf16.msra.mxu0 0
      %2350 = vmatprep.subr.bf16.mxu0 0
      %2351 = vmatpush1.bf16.msra.mxu0 0
      %2352 = vmatprep.subr.bf16.mxu0 0
      %2353 = vmatpush1.bf16.msra.mxu0 0
      %2354 = vmatprep.subr.bf16.mxu0 0
      %2355 = vmatpush1.bf16.msra.mxu0 0
      %2356 = vmatprep.subr.bf16.mxu0 0
      %2357 = vmatpush1.bf16.msra.mxu0 0
      %2358 = vmatprep.subr.bf16.mxu0 0
      %2359 = vmatpush1.bf16.msra.mxu0 0
      %2360 = vmatprep.subr.bf16.mxu0 0
      %2361 = vmatpush1.bf16.msra.mxu0 0
      %2362 = vmatprep.subr.bf16.mxu0 0
      %2363 = vmatpush1.bf16.msra.mxu0 0
      %2364 = vmatprep.mubr.bf16.mxu0 0
      %2365 = vmatmul.mubr.bf16.gmra.mrb[0].mxu0 %v2154
      %v2366 = vpop.f32.mrb[0].mxu0
      %v2367 = vadd.f32 %v2192, %v2366
      %v2368 = vpop.f32.mrb[0].mxu0
      %v2369 = vadd.f32 %v2196, %v2368
      %v2370 = vpop.f32.mrb[0].mxu0
      %v2371 = vpop.f32.mrb[0].mxu0
      %2372 = vdwg.mxu0
      %2373 = vmatprep.subr.bf16.mxu0 0
      %2374 = vmatpush1.bf16.msra.mxu0 %v2286
      %2375 = vmatprep.subr.bf16.mxu0 0
      %2376 = vmatpush1.bf16.msra.mxu0 %v2289
      %2377 = vmatprep.subr.bf16.mxu0 0
      %2378 = vmatpush1.bf16.msra.mxu0 %v2292
      %2379 = vmatprep.subr.bf16.mxu0 0
      %2380 = vmatpush1.bf16.msra.mxu0 %v2295
      %2381 = vmatprep.subr.bf16.mxu0 0
      %2382 = vmatpush1.bf16.msra.mxu0 %v2298
      %2383 = vmatprep.subr.bf16.mxu0 0
      %2384 = vmatpush1.bf16.msra.mxu0 %v2301
      %2385 = vmatprep.subr.bf16.mxu0 0
      %2386 = vmatpush1.bf16.msra.mxu0 %v2304
      %2387 = vmatprep.subr.bf16.mxu0 0
      %2388 = vmatpush1.bf16.msra.mxu0 %v2307
      %2389 = vmatprep.subr.bf16.mxu0 0
      %2390 = vmatpush1.bf16.msra.mxu0 0
      %2391 = vmatprep.subr.bf16.mxu0 0
      %2392 = vmatpush1.bf16.msra.mxu0 0
      %2393 = vmatprep.subr.bf16.mxu0 0
      %2394 = vmatpush1.bf16.msra.mxu0 0
      %2395 = vmatprep.subr.bf16.mxu0 0
      %2396 = vmatpush1.bf16.msra.mxu0 0
      %2397 = vmatprep.subr.bf16.mxu0 0
      %2398 = vmatpush1.bf16.msra.mxu0 0
      %2399 = vmatprep.subr.bf16.mxu0 0
      %2400 = vmatpush1.bf16.msra.mxu0 0
      %2401 = vmatprep.subr.bf16.mxu0 0
      %2402 = vmatpush1.bf16.msra.mxu0 0
      %2403 = vmatprep.subr.bf16.mxu0 0
      %2404 = vmatpush1.bf16.msra.mxu0 0
      %2405 = vmatprep.mubr.bf16.mxu0 0
      %2406 = vmatmul.mubr.bf16.gmra.mrb[0].mxu0 %v2154
      %v2407 = vpop.f32.mrb[0].mxu0
      %v2408 = vadd.f32 %v2200, %v2407
      %v2409 = vpop.f32.mrb[0].mxu0
      %v2410 = vpop.f32.mrb[0].mxu0
      %v2411 = vpop.f32.mrb[0].mxu0
      %2412 = vdwg.mxu0
      %v2413 = vld [vmem:[%s820] sm:$0xff]
      %v2414 = vld [vmem:[%s822] sm:$0xff]
      %v2415 = vld [vmem:[%s822 + $0x8] sm:$0xff]
      %v2416 = vld [vmem:[%s822 + $0x10] sm:$0xff]
      %v2417 = vld [vmem:[%s822 + $0x18] sm:$0xff]
      %v2418 = vld [vmem:[%s822 + $0x20] sm:$0xff]
      %v2419 = vld [vmem:[%s822 + $0x28] sm:$0xff]
      %v2420 = vld [vmem:[%s822 + $0x30] sm:$0xff]
      %v2421 = vld [vmem:[%s822 + $0x38] sm:$0xff]
      %v2422 = vld [vmem:[%s822 + $0x40] sm:$0xff]
      %v2423 = vld [vmem:[%s822 + $0x48] sm:$0xff]
      %v2424 = vld [vmem:[%s822 + $0x50] sm:$0xff]
      %v2425 = vld [vmem:[%s822 + $0x58] sm:$0xff]
      %v2426 = vld [vmem:[%s822 + $0x60] sm:$0xff]
      %v2427 = vld [vmem:[%s822 + $0x68] sm:$0xff]
      %v2428 = vld [vmem:[%s822 + $0x70] sm:$0xff]
      %v2429 = vld [vmem:[%s822 + $0x78] sm:$0xff]
      %v2430 = vld [vmem:[%s839] sm:$0xf]
      %v2431 = vld [vmem:[%s839 + $0x4] sm:$0xf]
      %v2432 = vld [vmem:[%s839 + $0x8] sm:$0xf]
      %v2433 = vld [vmem:[%s839 + $0xc] sm:$0xf]
      %v2434 = vld [vmem:[%s839 + $0x10] sm:$0xf]
      %v2435 = vld [vmem:[%s839 + $0x14] sm:$0xf]
      %v2436 = vld [vmem:[%s839 + $0x18] sm:$0xf]
      %v2437 = vld [vmem:[%s839 + $0x1c] sm:$0xf]
      %v2438 = vld [vmem:[%s839 + $0x20] sm:$0xf]
      %v2439 = vld [vmem:[%s839 + $0x24] sm:$0xf]
      %v2440 = vld [vmem:[%s839 + $0x28] sm:$0xf]
      %v2441 = vld [vmem:[%s839 + $0x2c] sm:$0xf]
      %v2442 = vld [vmem:[%s839 + $0x30] sm:$0xf]
      %v2443 = vld [vmem:[%s839 + $0x34] sm:$0xf]
      %v2444 = vld [vmem:[%s839 + $0x38] sm:$0xf]
      %v2445 = vld [vmem:[%s839 + $0x3c] sm:$0xf]
      %v2446 = vpack.c.bf16 %v2413, %v2413
      %v2463 = vunpack.c.l.b16 %v2414
      %v2464 = vunpack.c.h.b16 %v2414
      %v2465 = vunpack.c.l.b16 %v2415
      %v2466 = vunpack.c.h.b16 %v2415
      %v2467 = vunpack.c.l.b16 %v2416
      %v2468 = vunpack.c.h.b16 %v2416
      %v2469 = vunpack.c.l.b16 %v2417
      %v2470 = vunpack.c.h.b16 %v2417
      %v2471 = vunpack.c.l.b16 %v2418
      %v2472 = vunpack.c.h.b16 %v2418
      %v2473 = vunpack.c.l.b16 %v2419
      %v2474 = vunpack.c.h.b16 %v2419
      %v2475 = vunpack.c.l.b16 %v2420
      %v2476 = vunpack.c.h.b16 %v2420
      %v2477 = vunpack.c.l.b16 %v2421
      %v2478 = vunpack.c.h.b16 %v2421
      %v2479 = vunpack.c.l.b16 %v2422
      %v2480 = vunpack.c.h.b16 %v2422
      %v2481 = vunpack.c.l.b16 %v2423
      %v2482 = vunpack.c.h.b16 %v2423
      %v2483 = vunpack.c.l.b16 %v2424
      %v2484 = vunpack.c.h.b16 %v2424
      %v2485 = vunpack.c.l.b16 %v2425
      %v2486 = vunpack.c.h.b16 %v2425
      %v2487 = vunpack.c.l.b16 %v2426
      %v2488 = vunpack.c.h.b16 %v2426
      %v2489 = vunpack.c.l.b16 %v2427
      %v2490 = vunpack.c.h.b16 %v2427
      %v2491 = vunpack.c.l.b16 %v2428
      %v2492 = vunpack.c.h.b16 %v2428
      %v2493 = vunpack.c.l.b16 %v2429
      %v2494 = vunpack.c.h.b16 %v2429
      %v2495 = vpack.c.b16 %v2465, %v2463
      %v2496 = vpack.c.b16 %v2466, %v2464
      %v2497 = vpack.c.b16 %v2469, %v2467
      %v2498 = vpack.c.b16 %v2470, %v2468
      %v2499 = vpack.c.b16 %v2473, %v2471
      %v2500 = vpack.c.b16 %v2474, %v2472
      %v2501 = vpack.c.b16 %v2477, %v2475
      %v2502 = vpack.c.b16 %v2478, %v2476
      %v2503 = vpack.c.b16 %v2481, %v2479
      %v2504 = vpack.c.b16 %v2482, %v2480
      %v2505 = vpack.c.b16 %v2485, %v2483
      %v2506 = vpack.c.b16 %v2486, %v2484
      %v2507 = vpack.c.b16 %v2489, %v2487
      %v2508 = vpack.c.b16 %v2490, %v2488
      %v2509 = vpack.c.b16 %v2493, %v2491
      %v2510 = vpack.c.b16 %v2494, %v2492
      %2527 = vmatprep.subr.bf16.mxu0 %v2496
      %2528 = vmatpush1.bf16.msra.mxu0 %v2495
      %2529 = vmatprep.subr.bf16.mxu0 %v2498
      %2530 = vmatpush1.bf16.msra.mxu0 %v2497
      %2531 = vmatprep.subr.bf16.mxu0 %v2500
      %2532 = vmatpush1.bf16.msra.mxu0 %v2499
      %2533 = vmatprep.subr.bf16.mxu0 %v2502
      %2534 = vmatpush1.bf16.msra.mxu0 %v2501
      %2535 = vmatprep.subr.bf16.mxu0 %v2504
      %2536 = vmatpush1.bf16.msra.mxu0 %v2503
      %2537 = vmatprep.subr.bf16.mxu0 %v2506
      %2538 = vmatpush1.bf16.msra.mxu0 %v2505
      %2539 = vmatprep.subr.bf16.mxu0 %v2508
      %2540 = vmatpush1.bf16.msra.mxu0 %v2507
      %2541 = vmatprep.subr.bf16.mxu0 %v2510
      %2542 = vmatpush1.bf16.msra.mxu0 %v2509
      %2543 = vmatprep.subr.bf16.mxu0 0
      %2544 = vmatpush1.bf16.msra.mxu0 0
      %2545 = vmatprep.subr.bf16.mxu0 0
      %2546 = vmatpush1.bf16.msra.mxu0 0
      %2547 = vmatprep.subr.bf16.mxu0 0
      %2548 = vmatpush1.bf16.msra.mxu0 0
      %2549 = vmatprep.subr.bf16.mxu0 0
      %2550 = vmatpush1.bf16.msra.mxu0 0
      %2551 = vmatprep.subr.bf16.mxu0 0
      %2552 = vmatpush1.bf16.msra.mxu0 0
      %2553 = vmatprep.subr.bf16.mxu0 0
      %2554 = vmatpush1.bf16.msra.mxu0 0
      %2555 = vmatprep.subr.bf16.mxu0 0
      %2556 = vmatpush1.bf16.msra.mxu0 0
      %2557 = vmatprep.subr.bf16.mxu0 0
      %2558 = vmatpush1.bf16.msra.mxu0 0
      %2559 = vmatprep.mubr.bf16.mxu0 0
      %2560 = vmatmul.mubr.bf16.gmra.mrb[0].mxu0 %v2446
      %v2561 = vpop.f32.mrb[0].mxu0
      %v2562 = vadd.f32 0.0, %v2561
      %v2563 = vpop.f32.mrb[0].mxu0
      %v2564 = vadd.f32 0.0, %v2563
      %v2565 = vpop.f32.mrb[0].mxu0
      %v2566 = vpop.f32.mrb[0].mxu0
      %2567 = vdwg.mxu0
      %v2568 = vadd.f32 %v2367, %v2562
      %v2569 = vxor.u32 %v2568, 2147483648
      %v2570 = vmul.f32 %v2569, 1.442695
      %v2571 = vpow.pop %v2570
      %v2572 = vadd.f32 %v2571, 1.0
      %v2573 = vrcp.pop %v2572
      %v2574 = vmul.f32 1.0, %v2573
      %v2575 = vadd.f32 %v2369, %v2564
      %v2576 = vxor.u32 %v2575, 2147483648
      %v2577 = vmul.f32 %v2576, 1.442695
      %v2578 = vpow.pop %v2577
      %v2579 = vadd.f32 %v2578, 1.0
      %v2580 = vrcp.pop %v2579
      %v2581 = vmul.f32 1.0, %v2580
      %v2582 = vmul.f32 %v2574, %v2413
      %v2583 = vpack.c.bf16 %v2582, %v2582
      %v2600 = vunpack.c.l.b16 %v2430
      %v2601 = vunpack.c.l.b16 %v2431
      %v2602 = vunpack.c.l.b16 %v2432
      %v2603 = vunpack.c.l.b16 %v2433
      %v2604 = vunpack.c.l.b16 %v2434
      %v2605 = vunpack.c.l.b16 %v2435
      %v2606 = vunpack.c.l.b16 %v2436
      %v2607 = vunpack.c.l.b16 %v2437
      %v2608 = vunpack.c.l.b16 %v2438
      %v2609 = vunpack.c.l.b16 %v2439
      %v2610 = vunpack.c.l.b16 %v2440
      %v2611 = vunpack.c.l.b16 %v2441
      %v2612 = vunpack.c.l.b16 %v2442
      %v2613 = vunpack.c.l.b16 %v2443
      %v2614 = vunpack.c.l.b16 %v2444
      %v2615 = vunpack.c.l.b16 %v2445
      %v2616 = vpack.c.b16 %v2601, %v2600
      %v2617 = vpack.c.b16 %v2603, %v2602
      %v2618 = vpack.c.b16 %v2605, %v2604
      %v2619 = vpack.c.b16 %v2607, %v2606
      %v2620 = vpack.c.b16 %v2609, %v2608
      %v2621 = vpack.c.b16 %v2611, %v2610
      %v2622 = vpack.c.b16 %v2613, %v2612
      %v2623 = vpack.c.b16 %v2615, %v2614
      %2632 = vmatprep.subr.bf16.mxu0 0
      %2633 = vmatpush1.bf16.msra.mxu0 %v2616
      %2634 = vmatprep.subr.bf16.mxu0 0
      %2635 = vmatpush1.bf16.msra.mxu0 %v2617
      %2636 = vmatprep.subr.bf16.mxu0 0
      %2637 = vmatpush1.bf16.msra.mxu0 %v2618
      %2638 = vmatprep.subr.bf16.mxu0 0
      %2639 = vmatpush1.bf16.msra.mxu0 %v2619
      %2640 = vmatprep.subr.bf16.mxu0 0
      %2641 = vmatpush1.bf16.msra.mxu0 %v2620
      %2642 = vmatprep.subr.bf16.mxu0 0
      %2643 = vmatpush1.bf16.msra.mxu0 %v2621
      %2644 = vmatprep.subr.bf16.mxu0 0
      %2645 = vmatpush1.bf16.msra.mxu0 %v2622
      %2646 = vmatprep.subr.bf16.mxu0 0
      %2647 = vmatpush1.bf16.msra.mxu0 %v2623
      %2648 = vmatprep.subr.bf16.mxu0 0
      %2649 = vmatpush1.bf16.msra.mxu0 0
      %2650 = vmatprep.subr.bf16.mxu0 0
      %2651 = vmatpush1.bf16.msra.mxu0 0
      %2652 = vmatprep.subr.bf16.mxu0 0
      %2653 = vmatpush1.bf16.msra.mxu0 0
      %2654 = vmatprep.subr.bf16.mxu0 0
      %2655 = vmatpush1.bf16.msra.mxu0 0
      %2656 = vmatprep.subr.bf16.mxu0 0
      %2657 = vmatpush1.bf16.msra.mxu0 0
      %2658 = vmatprep.subr.bf16.mxu0 0
      %2659 = vmatpush1.bf16.msra.mxu0 0
      %2660 = vmatprep.subr.bf16.mxu0 0
      %2661 = vmatpush1.bf16.msra.mxu0 0
      %2662 = vmatprep.subr.bf16.mxu0 0
      %2663 = vmatpush1.bf16.msra.mxu0 0
      %2664 = vmatprep.mubr.bf16.mxu0 0
      %2665 = vmatmul.mubr.bf16.gmra.mrb[0].mxu0 %v2583
      %v2666 = vpop.f32.mrb[0].mxu0
      %v2667 = vadd.f32 0.0, %v2666
      %v2668 = vpop.f32.mrb[0].mxu0
      %v2669 = vpop.f32.mrb[0].mxu0
      %v2670 = vpop.f32.mrb[0].mxu0
      %2671 = vdwg.mxu0
      %v2672 = vadd.f32 %v2408, %v2667
      %v2673 = vtanh.pop %v2672
      %v2674 = vsub.f32 1.0, %v2581
      %v2675 = vmul.f32 %v2674, %v2413
      %v2676 = vmul.f32 %v2581, %v2673
      %v2677 = vadd.f32 %v2675, %v2676
      %2678 = vst [vmem:[%s820] sm:$0xff] %v2677
      %2679 = vst [vmem:[%s281 + $0x10] sm:$0xff] %v2677
      %v2680 = vld [vmem:[%s275 + $0x48] sm:$0xff]
      %v2681 = vld [vmem:[%s275 + $0x50] sm:$0xff]
      %v2682 = vld [vmem:[%s275 + $0x58] sm:$0xff]
      %v2683 = vld [vmem:[%s7] sm:$0xff]
      %v2684 = vld [vmem:[%s2] sm:$0xff]
      %v2685 = vld [vmem:[%s2 + $0x8] sm:$0xff]
      %v2686 = vld [vmem:[%s2 + $0x10] sm:$0xff]
      %v2687 = vld [vmem:[%s2 + $0x18] sm:$0xff]
      %v2688 = vld [vmem:[%s2 + $0x20] sm:$0xff]
      %v2689 = vld [vmem:[%s2 + $0x28] sm:$0xff]
      %v2690 = vld [vmem:[%s2 + $0x30] sm:$0xff]
      %v2691 = vld [vmem:[%s2 + $0x38] sm:$0xff]
      %v2692 = vld [vmem:[%s2 + $0x40] sm:$0xff]
      %v2693 = vld [vmem:[%s2 + $0x48] sm:$0xff]
      %v2694 = vld [vmem:[%s2 + $0x50] sm:$0xff]
      %v2695 = vld [vmem:[%s2 + $0x58] sm:$0xff]
      %v2696 = vld [vmem:[%s2 + $0x60] sm:$0xff]
      %v2697 = vld [vmem:[%s2 + $0x68] sm:$0xff]
      %v2698 = vld [vmem:[%s2 + $0x70] sm:$0xff]
      %v2699 = vld [vmem:[%s2 + $0x78] sm:$0xff]
      %v2700 = vld [vmem:[%s3] sm:$0xf]
      %v2701 = vld [vmem:[%s3 + $0x4] sm:$0xf]
      %v2702 = vld [vmem:[%s3 + $0x8] sm:$0xf]
      %v2703 = vld [vmem:[%s3 + $0xc] sm:$0xf]
      %v2704 = vld [vmem:[%s3 + $0x10] sm:$0xf]
      %v2705 = vld [vmem:[%s3 + $0x14] sm:$0xf]
      %v2706 = vld [vmem:[%s3 + $0x18] sm:$0xf]
      %v2707 = vld [vmem:[%s3 + $0x1c] sm:$0xf]
      %v2708 = vld [vmem:[%s3 + $0x20] sm:$0xf]
      %v2709 = vld [vmem:[%s3 + $0x24] sm:$0xf]
      %v2710 = vld [vmem:[%s3 + $0x28] sm:$0xf]
      %v2711 = vld [vmem:[%s3 + $0x2c] sm:$0xf]
      %v2712 = vld [vmem:[%s3 + $0x30] sm:$0xf]
      %v2713 = vld [vmem:[%s3 + $0x34] sm:$0xf]
      %v2714 = vld [vmem:[%s3 + $0x38] sm:$0xf]
      %v2715 = vld [vmem:[%s3 + $0x3c] sm:$0xf]
      %v2716 = vpack.c.bf16 %v2683, %v2683
      %v2733 = vunpack.c.l.b16 %v2684
      %v2734 = vunpack.c.h.b16 %v2684
      %v2735 = vunpack.c.l.b16 %v2685
      %v2736 = vunpack.c.h.b16 %v2685
      %v2737 = vunpack.c.l.b16 %v2686
      %v2738 = vunpack.c.h.b16 %v2686
      %v2739 = vunpack.c.l.b16 %v2687
      %v2740 = vunpack.c.h.b16 %v2687
      %v2741 = vunpack.c.l.b16 %v2688
      %v2742 = vunpack.c.h.b16 %v2688
      %v2743 = vunpack.c.l.b16 %v2689
      %v2744 = vunpack.c.h.b16 %v2689
      %v2745 = vunpack.c.l.b16 %v2690
      %v2746 = vunpack.c.h.b16 %v2690
      %v2747 = vunpack.c.l.b16 %v2691
      %v2748 = vunpack.c.h.b16 %v2691
      %v2749 = vunpack.c.l.b16 %v2692
      %v2750 = vunpack.c.h.b16 %v2692
      %v2751 = vunpack.c.l.b16 %v2693
      %v2752 = vunpack.c.h.b16 %v2693
      %v2753 = vunpack.c.l.b16 %v2694
      %v2754 = vunpack.c.h.b16 %v2694
      %v2755 = vunpack.c.l.b16 %v2695
      %v2756 = vunpack.c.h.b16 %v2695
      %v2757 = vunpack.c.l.b16 %v2696
      %v2758 = vunpack.c.h.b16 %v2696
      %v2759 = vunpack.c.l.b16 %v2697
      %v2760 = vunpack.c.h.b16 %v2697
      %v2761 = vunpack.c.l.b16 %v2698
      %v2762 = vunpack.c.h.b16 %v2698
      %v2763 = vunpack.c.l.b16 %v2699
      %v2764 = vunpack.c.h.b16 %v2699
      %v2765 = vpack.c.b16 %v2735, %v2733
      %v2766 = vpack.c.b16 %v2736, %v2734
      %v2767 = vpack.c.b16 %v2739, %v2737
      %v2768 = vpack.c.b16 %v2740, %v2738
      %v2769 = vpack.c.b16 %v2743, %v2741
      %v2770 = vpack.c.b16 %v2744, %v2742
      %v2771 = vpack.c.b16 %v2747, %v2745
      %v2772 = vpack.c.b16 %v2748, %v2746
      %v2773 = vpack.c.b16 %v2751, %v2749
      %v2774 = vpack.c.b16 %v2752, %v2750
      %v2775 = vpack.c.b16 %v2755, %v2753
      %v2776 = vpack.c.b16 %v2756, %v2754
      %v2777 = vpack.c.b16 %v2759, %v2757
      %v2778 = vpack.c.b16 %v2760, %v2758
      %v2779 = vpack.c.b16 %v2763, %v2761
      %v2780 = vpack.c.b16 %v2764, %v2762
      %2797 = vmatprep.subr.bf16.mxu0 %v2766
      %2798 = vmatpush1.bf16.msra.mxu0 %v2765
      %2799 = vmatprep.subr.bf16.mxu0 %v2768
      %2800 = vmatpush1.bf16.msra.mxu0 %v2767
      %2801 = vmatprep.subr.bf16.mxu0 %v2770
      %2802 = vmatpush1.bf16.msra.mxu0 %v2769
      %2803 = vmatprep.subr.bf16.mxu0 %v2772
      %2804 = vmatpush1.bf16.msra.mxu0 %v2771
      %2805 = vmatprep.subr.bf16.mxu0 %v2774
      %2806 = vmatpush1.bf16.msra.mxu0 %v2773
      %2807 = vmatprep.subr.bf16.mxu0 %v2776
      %2808 = vmatpush1.bf16.msra.mxu0 %v2775
      %2809 = vmatprep.subr.bf16.mxu0 %v2778
      %2810 = vmatpush1.bf16.msra.mxu0 %v2777
      %2811 = vmatprep.subr.bf16.mxu0 %v2780
      %2812 = vmatpush1.bf16.msra.mxu0 %v2779
      %2813 = vmatprep.subr.bf16.mxu0 0
      %2814 = vmatpush1.bf16.msra.mxu0 0
      %2815 = vmatprep.subr.bf16.mxu0 0
      %2816 = vmatpush1.bf16.msra.mxu0 0
      %2817 = vmatprep.subr.bf16.mxu0 0
      %2818 = vmatpush1.bf16.msra.mxu0 0
      %2819 = vmatprep.subr.bf16.mxu0 0
      %2820 = vmatpush1.bf16.msra.mxu0 0
      %2821 = vmatprep.subr.bf16.mxu0 0
      %2822 = vmatpush1.bf16.msra.mxu0 0
      %2823 = vmatprep.subr.bf16.mxu0 0
      %2824 = vmatpush1.bf16.msra.mxu0 0
      %2825 = vmatprep.subr.bf16.mxu0 0
      %2826 = vmatpush1.bf16.msra.mxu0 0
      %2827 = vmatprep.subr.bf16.mxu0 0
      %2828 = vmatpush1.bf16.msra.mxu0 0
      %2829 = vmatprep.mubr.bf16.mxu0 0
      %2830 = vmatmul.mubr.bf16.gmra.mrb[0].mxu0 %v2716
      %v2831 = vpop.f32.mrb[0].mxu0
      %v2832 = vadd.f32 0.0, %v2831
      %v2833 = vpop.f32.mrb[0].mxu0
      %v2834 = vadd.f32 0.0, %v2833
      %v2835 = vpop.f32.mrb[0].mxu0
      %v2836 = vpop.f32.mrb[0].mxu0
      %2837 = vdwg.mxu0
      %v2838 = vadd.f32 %v2680, %v2832
      %v2839 = vxor.u32 %v2838, 2147483648
      %v2840 = vmul.f32 %v2839, 1.442695
      %v2841 = vpow.pop %v2840
      %v2842 = vadd.f32 %v2841, 1.0
      %v2843 = vrcp.pop %v2842
      %v2844 = vmul.f32 1.0, %v2843
      %v2845 = vadd.f32 %v2681, %v2834
      %v2846 = vxor.u32 %v2845, 2147483648
      %v2847 = vmul.f32 %v2846, 1.442695
      %v2848 = vpow.pop %v2847
      %v2849 = vadd.f32 %v2848, 1.0
      %v2850 = vrcp.pop %v2849
      %v2851 = vmul.f32 1.0, %v2850
      %v2852 = vmul.f32 %v2844, %v2683
      %v2853 = vpack.c.bf16 %v2852, %v2852
      %v2870 = vunpack.c.l.b16 %v2700
      %v2871 = vunpack.c.l.b16 %v2701
      %v2872 = vunpack.c.l.b16 %v2702
      %v2873 = vunpack.c.l.b16 %v2703
      %v2874 = vunpack.c.l.b16 %v2704
      %v2875 = vunpack.c.l.b16 %v2705
      %v2876 = vunpack.c.l.b16 %v2706
      %v2877 = vunpack.c.l.b16 %v2707
      %v2878 = vunpack.c.l.b16 %v2708
      %v2879 = vunpack.c.l.b16 %v2709
      %v2880 = vunpack.c.l.b16 %v2710
      %v2881 = vunpack.c.l.b16 %v2711
      %v2882 = vunpack.c.l.b16 %v2712
      %v2883 = vunpack.c.l.b16 %v2713
      %v2884 = vunpack.c.l.b16 %v2714
      %v2885 = vunpack.c.l.b16 %v2715
      %v2886 = vpack.c.b16 %v2871, %v2870
      %v2887 = vpack.c.b16 %v2873, %v2872
      %v2888 = vpack.c.b16 %v2875, %v2874
      %v2889 = vpack.c.b16 %v2877, %v2876
      %v2890 = vpack.c.b16 %v2879, %v2878
      %v2891 = vpack.c.b16 %v2881, %v2880
      %v2892 = vpack.c.b16 %v2883, %v2882
      %v2893 = vpack.c.b16 %v2885, %v2884
      %2902 = vmatprep.subr.bf16.mxu0 0
      %2903 = vmatpush1.bf16.msra.mxu0 %v2886
      %2904 = vmatprep.subr.bf16.mxu0 0
      %2905 = vmatpush1.bf16.msra.mxu0 %v2887
      %2906 = vmatprep.subr.bf16.mxu0 0
      %2907 = vmatpush1.bf16.msra.mxu0 %v2888
      %2908 = vmatprep.subr.bf16.mxu0 0
      %2909 = vmatpush1.bf16.msra.mxu0 %v2889
      %2910 = vmatprep.subr.bf16.mxu0 0
      %2911 = vmatpush1.bf16.msra.mxu0 %v2890
      %2912 = vmatprep.subr.bf16.mxu0 0
      %2913 = vmatpush1.bf16.msra.mxu0 %v2891
      %2914 = vmatprep.subr.bf16.mxu0 0
      %2915 = vmatpush1.bf16.msra.mxu0 %v2892
      %2916 = vmatprep.subr.bf16.mxu0 0
      %2917 = vmatpush1.bf16.msra.mxu0 %v2893
      %2918 = vmatprep.subr.bf16.mxu0 0
      %2919 = vmatpush1.bf16.msra.mxu0 0
      %2920 = vmatprep.subr.bf16.mxu0 0
      %2921 = vmatpush1.bf16.msra.mxu0 0
      %2922 = vmatprep.subr.bf16.mxu0 0
      %2923 = vmatpush1.bf16.msra.mxu0 0
      %2924 = vmatprep.subr.bf16.mxu0 0
      %2925 = vmatpush1.bf16.msra.mxu0 0
      %2926 = vmatprep.subr.bf16.mxu0 0
      %2927 = vmatpush1.bf16.msra.mxu0 0
      %2928 = vmatprep.subr.bf16.mxu0 0
      %2929 = vmatpush1.bf16.msra.mxu0 0
      %2930 = vmatprep.subr.bf16.mxu0 0
      %2931 = vmatpush1.bf16.msra.mxu0 0
      %2932 = vmatprep.subr.bf16.mxu0 0
      %2933 = vmatpush1.bf16.msra.mxu0 0
      %2934 = vmatprep.mubr.bf16.mxu0 0
      %2935 = vmatmul.mubr.bf16.gmra.mrb[0].mxu0 %v2853
      %v2936 = vpop.f32.mrb[0].mxu0
      %v2937 = vadd.f32 0.0, %v2936
      %v2938 = vpop.f32.mrb[0].mxu0
      %v2939 = vpop.f32.mrb[0].mxu0
      %v2940 = vpop.f32.mrb[0].mxu0
      %2941 = vdwg.mxu0
      %v2942 = vadd.f32 %v2682, %v2937
      %v2943 = vtanh.pop %v2942
      %v2944 = vsub.f32 1.0, %v2851
      %v2945 = vmul.f32 %v2944, %v2683
      %v2946 = vmul.f32 %v2851, %v2943
      %v2947 = vadd.f32 %v2945, %v2946
      %2948 = vst [vmem:[%s7] sm:$0xff] %v2947
      %v2949 = vpack.c.bf16 %v2947, %v2947
      %v2950 = vld [vmem:[%s1] sm:$0xff]
      %v2951 = vld [vmem:[%s1 + $0x8] sm:$0xf]
      %v2952 = vld [vmem:[%s1 + $0xc] sm:$0xff]
      %v2953 = vld [vmem:[%s1 + $0x14] sm:$0xf]
      %v2954 = vld [vmem:[%s1 + $0x18] sm:$0xff]
      %v2955 = vld [vmem:[%s1 + $0x20] sm:$0xf]
      %v2956 = vld [vmem:[%s1 + $0x24] sm:$0xff]
      %v2957 = vld [vmem:[%s1 + $0x2c] sm:$0xf]
      %v2958 = vld [vmem:[%s1 + $0x30] sm:$0xff]
      %v2959 = vld [vmem:[%s1 + $0x38] sm:$0xf]
      %v2960 = vld [vmem:[%s1 + $0x3c] sm:$0xff]
      %v2961 = vld [vmem:[%s1 + $0x44] sm:$0xf]
      %v2962 = vld [vmem:[%s1 + $0x48] sm:$0xff]
      %v2963 = vld [vmem:[%s1 + $0x50] sm:$0xf]
      %v2964 = vld [vmem:[%s1 + $0x54] sm:$0xff]
      %v2965 = vld [vmem:[%s1 + $0x5c] sm:$0xf]
      %v2966 = vld [vmem:[%s1 + $0x60] sm:$0xff]
      %v2967 = vld [vmem:[%s1 + $0x68] sm:$0xf]
      %v2968 = vld [vmem:[%s1 + $0x6c] sm:$0xff]
      %v2969 = vld [vmem:[%s1 + $0x74] sm:$0xf]
      %v2970 = vld [vmem:[%s1 + $0x78] sm:$0xff]
      %v2971 = vld [vmem:[%s1 + $0x80] sm:$0xf]
      %v2972 = vld [vmem:[%s1 + $0x84] sm:$0xff]
      %v2973 = vld [vmem:[%s1 + $0x8c] sm:$0xf]
      %v2974 = vld [vmem:[%s1 + $0x90] sm:$0xff]
      %v2975 = vld [vmem:[%s1 + $0x98] sm:$0xf]
      %v2976 = vld [vmem:[%s1 + $0x9c] sm:$0xff]
      %v2977 = vld [vmem:[%s1 + $0xa4] sm:$0xf]
      %v2978 = vld [vmem:[%s1 + $0xa8] sm:$0xff]
      %v2979 = vld [vmem:[%s1 + $0xb0] sm:$0xf]
      %v2980 = vld [vmem:[%s1 + $0xb4] sm:$0xff]
      %v2981 = vld [vmem:[%s1 + $0xbc] sm:$0xf]
      %v2982 = vld [vmem:[%s4] sm:$0x7]
      %v2984 = vlaneseq
      %v2985 = vshrl.u32 %v2984, 7
      %v2986 = vsub.s32 0, %v2985
      %v2987 = vrot.slane %v2982, %v2986
      %v2988 = vlaneseq
      %v2989 = vshrl.u32 %v2988, 7
      %v2990 = vsub.s32 1, %v2989
      %v2991 = vrot.slane %v2982, %v2990
      %v2992 = vlaneseq
      %v2993 = vshrl.u32 %v2992, 7
      %v2994 = vsub.s32 2, %v2993
      %v2995 = vrot.slane %v2982, %v2994
      %v3031 = vunpack.c.l.b16 %v2950
      %v3032 = vunpack.c.h.b16 %v2950
      %v3033 = vunpack.c.l.b16 %v2951
      %v3034 = vunpack.c.l.b16 %v2952
      %v3035 = vunpack.c.h.b16 %v2952
      %v3036 = vunpack.c.l.b16 %v2953
      %v3037 = vunpack.c.l.b16 %v2954
      %v3038 = vunpack.c.h.b16 %v2954
      %v3039 = vunpack.c.l.b16 %v2955
      %v3040 = vunpack.c.l.b16 %v2956
      %v3041 = vunpack.c.h.b16 %v2956
      %v3042 = vunpack.c.l.b16 %v2957
      %v3043 = vunpack.c.l.b16 %v2958
      %v3044 = vunpack.c.h.b16 %v2958
      %v3045 = vunpack.c.l.b16 %v2959
      %v3046 = vunpack.c.l.b16 %v2960
      %v3047 = vunpack.c.h.b16 %v2960
      %v3048 = vunpack.c.l.b16 %v2961
      %v3049 = vunpack.c.l.b16 %v2962
      %v3050 = vunpack.c.h.b16 %v2962
      %v3051 = vunpack.c.l.b16 %v2963
      %v3052 = vunpack.c.l.b16 %v2964
      %v3053 = vunpack.c.h.b16 %v2964
      %v3054 = vunpack.c.l.b16 %v2965
      %v3055 = vunpack.c.l.b16 %v2966
      %v3056 = vunpack.c.h.b16 %v2966
      %v3057 = vunpack.c.l.b16 %v2967
      %v3058 = vunpack.c.l.b16 %v2968
      %v3059 = vunpack.c.h.b16 %v2968
      %v3060 = vunpack.c.l.b16 %v2969
      %v3061 = vunpack.c.l.b16 %v2970
      %v3062 = vunpack.c.h.b16 %v2970
      %v3063 = vunpack.c.l.b16 %v2971
      %v3064 = vunpack.c.l.b16 %v2972
      %v3065 = vunpack.c.h.b16 %v2972
      %v3066 = vunpack.c.l.b16 %v2973
      %v3067 = vunpack.c.l.b16 %v2974
      %v3068 = vunpack.c.h.b16 %v2974
      %v3069 = vunpack.c.l.b16 %v2975
      %v3070 = vunpack.c.l.b16 %v2976
      %v3071 = vunpack.c.h.b16 %v2976
      %v3072 = vunpack.c.l.b16 %v2977
      %v3073 = vunpack.c.l.b16 %v2978
      %v3074 = vunpack.c.h.b16 %v2978
      %v3075 = vunpack.c.l.b16 %v2979
      %v3076 = vunpack.c.l.b16 %v2980
      %v3077 = vunpack.c.h.b16 %v2980
      %v3078 = vunpack.c.l.b16 %v2981
      %v3079 = vpack.c.b16 %v3034, %v3031
      %v3080 = vpack.c.b16 %v3035, %v3032
      %v3081 = vpack.c.b16 %v3036, %v3033
      %v3082 = vpack.c.b16 %v3040, %v3037
      %v3083 = vpack.c.b16 %v3041, %v3038
      %v3084 = vpack.c.b16 %v3042, %v3039
      %v3085 = vpack.c.b16 %v3046, %v3043
      %v3086 = vpack.c.b16 %v3047, %v3044
      %v3087 = vpack.c.b16 %v3048, %v3045
      %v3088 = vpack.c.b16 %v3052, %v3049
      %v3089 = vpack.c.b16 %v3053, %v3050
      %v3090 = vpack.c.b16 %v3054, %v3051
      %v3091 = vpack.c.b16 %v3058, %v3055
      %v3092 = vpack.c.b16 %v3059, %v3056
      %v3093 = vpack.c.b16 %v3060, %v3057
      %v3094 = vpack.c.b16 %v3064, %v3061
      %v3095 = vpack.c.b16 %v3065, %v3062
      %v3096 = vpack.c.b16 %v3066, %v3063
      %v3097 = vpack.c.b16 %v3070, %v3067
      %v3098 = vpack.c.b16 %v3071, %v3068
      %v3099 = vpack.c.b16 %v3072, %v3069
      %v3100 = vpack.c.b16 %v3076, %v3073
      %v3101 = vpack.c.b16 %v3077, %v3074
      %v3102 = vpack.c.b16 %v3078, %v3075
      %3127 = vmatprep.subr.bf16.mxu0 %v3080
      %3128 = vmatpush1.bf16.msra.mxu0 %v3079
      %3129 = vmatprep.subr.bf16.mxu0 %v3083
      %3130 = vmatpush1.bf16.msra.mxu0 %v3082
      %3131 = vmatprep.subr.bf16.mxu0 %v3086
      %3132 = vmatpush1.bf16.msra.mxu0 %v3085
      %3133 = vmatprep.subr.bf16.mxu0 %v3089
      %3134 = vmatpush1.bf16.msra.mxu0 %v3088
      %3135 = vmatprep.subr.bf16.mxu0 %v3092
      %3136 = vmatpush1.bf16.msra.mxu0 %v3091
      %3137 = vmatprep.subr.bf16.mxu0 %v3095
      %3138 = vmatpush1.bf16.msra.mxu0 %v3094
      %3139 = vmatprep.subr.bf16.mxu0 %v3098
      %3140 = vmatpush1.bf16.msra.mxu0 %v3097
      %3141 = vmatprep.subr.bf16.mxu0 %v3101
      %3142 = vmatpush1.bf16.msra.mxu0 %v3100
      %3143 = vmatprep.subr.bf16.mxu0 0
      %3144 = vmatpush1.bf16.msra.mxu0 0
      %3145 = vmatprep.subr.bf16.mxu0 0
      %3146 = vmatpush1.bf16.msra.mxu0 0
      %3147 = vmatprep.subr.bf16.mxu0 0
      %3148 = vmatpush1.bf16.msra.mxu0 0
      %3149 = vmatprep.subr.bf16.mxu0 0
      %3150 = vmatpush1.bf16.msra.mxu0 0
      %3151 = vmatprep.subr.bf16.mxu0 0
      %3152 = vmatpush1.bf16.msra.mxu0 0
      %3153 = vmatprep.subr.bf16.mxu0 0
      %3154 = vmatpush1.bf16.msra.mxu0 0
      %3155 = vmatprep.subr.bf16.mxu0 0
      %3156 = vmatpush1.bf16.msra.mxu0 0
      %3157 = vmatprep.subr.bf16.mxu0 0
      %3158 = vmatpush1.bf16.msra.mxu0 0
      %3159 = vmatprep.mubr.bf16.mxu0 0
      %3160 = vmatmul.mubr.bf16.gmra.mrb[0].mxu0 %v2949
      %v3161 = vpop.f32.mrb[0].mxu0
      %v3162 = vadd.f32 %v2987, %v3161
      %v3163 = vpop.f32.mrb[0].mxu0
      %v3164 = vadd.f32 %v2991, %v3163
      %v3165 = vpop.f32.mrb[0].mxu0
      %v3166 = vpop.f32.mrb[0].mxu0
      %3167 = vdwg.mxu0
      %3168 = vmatprep.subr.bf16.mxu0 0
      %3169 = vmatpush1.bf16.msra.mxu0 %v3081
      %3170 = vmatprep.subr.bf16.mxu0 0
      %3171 = vmatpush1.bf16.msra.mxu0 %v3084
      %3172 = vmatprep.subr.bf16.mxu0 0
      %3173 = vmatpush1.bf16.msra.mxu0 %v3087
      %3174 = vmatprep.subr.bf16.mxu0 0
      %3175 = vmatpush1.bf16.msra.mxu0 %v3090
      %3176 = vmatprep.subr.bf16.mxu0 0
      %3177 = vmatpush1.bf16.msra.mxu0 %v3093
      %3178 = vmatprep.subr.bf16.mxu0 0
      %3179 = vmatpush1.bf16.msra.mxu0 %v3096
      %3180 = vmatprep.subr.bf16.mxu0 0
      %3181 = vmatpush1.bf16.msra.mxu0 %v3099
      %3182 = vmatprep.subr.bf16.mxu0 0
      %3183 = vmatpush1.bf16.msra.mxu0 %v3102
      %3184 = vmatprep.subr.bf16.mxu0 0
      %3185 = vmatpush1.bf16.msra.mxu0 0
      %3186 = vmatprep.subr.bf16.mxu0 0
      %3187 = vmatpush1.bf16.msra.mxu0 0
      %3188 = vmatprep.subr.bf16.mxu0 0
      %3189 = vmatpush1.bf16.msra.mxu0 0
      %3190 = vmatprep.subr.bf16.mxu0 0
      %3191 = vmatpush1.bf16.msra.mxu0 0
      %3192 = vmatprep.subr.bf16.mxu0 0
      %3193 = vmatpush1.bf16.msra.mxu0 0
      %3194 = vmatprep.subr.bf16.mxu0 0
      %3195 = vmatpush1.bf16.msra.mxu0 0
      %3196 = vmatprep.subr.bf16.mxu0 0
      %3197 = vmatpush1.bf16.msra.mxu0 0
      %3198 = vmatprep.subr.bf16.mxu0 0
      %3199 = vmatpush1.bf16.msra.mxu0 0
      %3200 = vmatprep.mubr.bf16.mxu0 0
      %3201 = vmatmul.mubr.bf16.gmra.mrb[0].mxu0 %v2949
      %v3202 = vpop.f32.mrb[0].mxu0
      %v3203 = vadd.f32 %v2995, %v3202
      %v3204 = vpop.f32.mrb[0].mxu0
      %v3205 = vpop.f32.mrb[0].mxu0
      %v3206 = vpop.f32.mrb[0].mxu0
      %3207 = vdwg.mxu0
      %v3208 = vld [vmem:[%s820] sm:$0xff]
      %v3209 = vld [vmem:[%s822] sm:$0xff]
      %v3210 = vld [vmem:[%s822 + $0x8] sm:$0xff]
      %v3211 = vld [vmem:[%s822 + $0x10] sm:$0xff]
      %v3212 = vld [vmem:[%s822 + $0x18] sm:$0xff]
      %v3213 = vld [vmem:[%s822 + $0x20] sm:$0xff]
      %v3214 = vld [vmem:[%s822 + $0x28] sm:$0xff]
      %v3215 = vld [vmem:[%s822 + $0x30] sm:$0xff]
      %v3216 = vld [vmem:[%s822 + $0x38] sm:$0xff]
      %v3217 = vld [vmem:[%s822 + $0x40] sm:$0xff]
      %v3218 = vld [vmem:[%s822 + $0x48] sm:$0xff]
      %v3219 = vld [vmem:[%s822 + $0x50] sm:$0xff]
      %v3220 = vld [vmem:[%s822 + $0x58] sm:$0xff]
      %v3221 = vld [vmem:[%s822 + $0x60] sm:$0xff]
      %v3222 = vld [vmem:[%s822 + $0x68] sm:$0xff]
      %v3223 = vld [vmem:[%s822 + $0x70] sm:$0xff]
      %v3224 = vld [vmem:[%s822 + $0x78] sm:$0xff]
      %v3225 = vld [vmem:[%s839] sm:$0xf]
      %v3226 = vld [vmem:[%s839 + $0x4] sm:$0xf]
      %v3227 = vld [vmem:[%s839 + $0x8] sm:$0xf]
      %v3228 = vld [vmem:[%s839 + $0xc] sm:$0xf]
      %v3229 = vld [vmem:[%s839 + $0x10] sm:$0xf]
      %v3230 = vld [vmem:[%s839 + $0x14] sm:$0xf]
      %v3231 = vld [vmem:[%s839 + $0x18] sm:$0xf]
      %v3232 = vld [vmem:[%s839 + $0x1c] sm:$0xf]
      %v3233 = vld [vmem:[%s839 + $0x20] sm:$0xf]
      %v3234 = vld [vmem:[%s839 + $0x24] sm:$0xf]
      %v3235 = vld [vmem:[%s839 + $0x28] sm:$0xf]
      %v3236 = vld [vmem:[%s839 + $0x2c] sm:$0xf]
      %v3237 = vld [vmem:[%s839 + $0x30] sm:$0xf]
      %v3238 = vld [vmem:[%s839 + $0x34] sm:$0xf]
      %v3239 = vld [vmem:[%s839 + $0x38] sm:$0xf]
      %v3240 = vld [vmem:[%s839 + $0x3c] sm:$0xf]
      %v3241 = vpack.c.bf16 %v3208, %v3208
      %v3258 = vunpack.c.l.b16 %v3209
      %v3259 = vunpack.c.h.b16 %v3209
      %v3260 = vunpack.c.l.b16 %v3210
      %v3261 = vunpack.c.h.b16 %v3210
      %v3262 = vunpack.c.l.b16 %v3211
      %v3263 = vunpack.c.h.b16 %v3211
      %v3264 = vunpack.c.l.b16 %v3212
      %v3265 = vunpack.c.h.b16 %v3212
      %v3266 = vunpack.c.l.b16 %v3213
      %v3267 = vunpack.c.h.b16 %v3213
      %v3268 = vunpack.c.l.b16 %v3214
      %v3269 = vunpack.c.h.b16 %v3214
      %v3270 = vunpack.c.l.b16 %v3215
      %v3271 = vunpack.c.h.b16 %v3215
      %v3272 = vunpack.c.l.b16 %v3216
      %v3273 = vunpack.c.h.b16 %v3216
      %v3274 = vunpack.c.l.b16 %v3217
      %v3275 = vunpack.c.h.b16 %v3217
      %v3276 = vunpack.c.l.b16 %v3218
      %v3277 = vunpack.c.h.b16 %v3218
      %v3278 = vunpack.c.l.b16 %v3219
      %v3279 = vunpack.c.h.b16 %v3219
      %v3280 = vunpack.c.l.b16 %v3220
      %v3281 = vunpack.c.h.b16 %v3220
      %v3282 = vunpack.c.l.b16 %v3221
      %v3283 = vunpack.c.h.b16 %v3221
      %v3284 = vunpack.c.l.b16 %v3222
      %v3285 = vunpack.c.h.b16 %v3222
      %v3286 = vunpack.c.l.b16 %v3223
      %v3287 = vunpack.c.h.b16 %v3223
      %v3288 = vunpack.c.l.b16 %v3224
      %v3289 = vunpack.c.h.b16 %v3224
      %v3290 = vpack.c.b16 %v3260, %v3258
      %v3291 = vpack.c.b16 %v3261, %v3259
      %v3292 = vpack.c.b16 %v3264, %v3262
      %v3293 = vpack.c.b16 %v3265, %v3263
      %v3294 = vpack.c.b16 %v3268, %v3266
      %v3295 = vpack.c.b16 %v3269, %v3267
      %v3296 = vpack.c.b16 %v3272, %v3270
      %v3297 = vpack.c.b16 %v3273, %v3271
      %v3298 = vpack.c.b16 %v3276, %v3274
      %v3299 = vpack.c.b16 %v3277, %v3275
      %v3300 = vpack.c.b16 %v3280, %v3278
      %v3301 = vpack.c.b16 %v3281, %v3279
      %v3302 = vpack.c.b16 %v3284, %v3282
      %v3303 = vpack.c.b16 %v3285, %v3283
      %v3304 = vpack.c.b16 %v3288, %v3286
      %v3305 = vpack.c.b16 %v3289, %v3287
      %3322 = vmatprep.subr.bf16.mxu0 %v3291
      %3323 = vmatpush1.bf16.msra.mxu0 %v3290
      %3324 = vmatprep.subr.bf16.mxu0 %v3293
      %3325 = vmatpush1.bf16.msra.mxu0 %v3292
      %3326 = vmatprep.subr.bf16.mxu0 %v3295
      %3327 = vmatpush1.bf16.msra.mxu0 %v3294
      %3328 = vmatprep.subr.bf16.mxu0 %v3297
      %3329 = vmatpush1.bf16.msra.mxu0 %v3296
      %3330 = vmatprep.subr.bf16.mxu0 %v3299
      %3331 = vmatpush1.bf16.msra.mxu0 %v3298
      %3332 = vmatprep.subr.bf16.mxu0 %v3301
      %3333 = vmatpush1.bf16.msra.mxu0 %v3300
      %3334 = vmatprep.subr.bf16.mxu0 %v3303
      %3335 = vmatpush1.bf16.msra.mxu0 %v3302
      %3336 = vmatprep.subr.bf16.mxu0 %v3305
      %3337 = vmatpush1.bf16.msra.mxu0 %v3304
      %3338 = vmatprep.subr.bf16.mxu0 0
      %3339 = vmatpush1.bf16.msra.mxu0 0
      %3340 = vmatprep.subr.bf16.mxu0 0
      %3341 = vmatpush1.bf16.msra.mxu0 0
      %3342 = vmatprep.subr.bf16.mxu0 0
      %3343 = vmatpush1.bf16.msra.mxu0 0
      %3344 = vmatprep.subr.bf16.mxu0 0
      %3345 = vmatpush1.bf16.msra.mxu0 0
      %3346 = vmatprep.subr.bf16.mxu0 0
      %3347 = vmatpush1.bf16.msra.mxu0 0
      %3348 = vmatprep.subr.bf16.mxu0 0
      %3349 = vmatpush1.bf16.msra.mxu0 0
      %3350 = vmatprep.subr.bf16.mxu0 0
      %3351 = vmatpush1.bf16.msra.mxu0 0
      %3352 = vmatprep.subr.bf16.mxu0 0
      %3353 = vmatpush1.bf16.msra.mxu0 0
      %3354 = vmatprep.mubr.bf16.mxu0 0
      %3355 = vmatmul.mubr.bf16.gmra.mrb[0].mxu0 %v3241
      %v3356 = vpop.f32.mrb[0].mxu0
      %v3357 = vadd.f32 0.0, %v3356
      %v3358 = vpop.f32.mrb[0].mxu0
      %v3359 = vadd.f32 0.0, %v3358
      %v3360 = vpop.f32.mrb[0].mxu0
      %v3361 = vpop.f32.mrb[0].mxu0
      %3362 = vdwg.mxu0
      %v3363 = vadd.f32 %v3162, %v3357
      %v3364 = vxor.u32 %v3363, 2147483648
      %v3365 = vmul.f32 %v3364, 1.442695
      %v3366 = vpow.pop %v3365
      %v3367 = vadd.f32 %v3366, 1.0
      %v3368 = vrcp.pop %v3367
      %v3369 = vmul.f32 1.0, %v3368
      %v3370 = vadd.f32 %v3164, %v3359
      %v3371 = vxor.u32 %v3370, 2147483648
      %v3372 = vmul.f32 %v3371, 1.442695
      %v3373 = vpow.pop %v3372
      %v3374 = vadd.f32 %v3373, 1.0
      %v3375 = vrcp.pop %v3374
      %v3376 = vmul.f32 1.0, %v3375
      %v3377 = vmul.f32 %v3369, %v3208
      %v3378 = vpack.c.bf16 %v3377, %v3377
      %v3395 = vunpack.c.l.b16 %v3225
      %v3396 = vunpack.c.l.b16 %v3226
      %v3397 = vunpack.c.l.b16 %v3227
      %v3398 = vunpack.c.l.b16 %v3228
      %v3399 = vunpack.c.l.b16 %v3229
      %v3400 = vunpack.c.l.b16 %v3230
      %v3401 = vunpack.c.l.b16 %v3231
      %v3402 = vunpack.c.l.b16 %v3232
      %v3403 = vunpack.c.l.b16 %v3233
      %v3404 = vunpack.c.l.b16 %v3234
      %v3405 = vunpack.c.l.b16 %v3235
      %v3406 = vunpack.c.l.b16 %v3236
      %v3407 = vunpack.c.l.b16 %v3237
      %v3408 = vunpack.c.l.b16 %v3238
      %v3409 = vunpack.c.l.b16 %v3239
      %v3410 = vunpack.c.l.b16 %v3240
      %v3411 = vpack.c.b16 %v3396, %v3395
      %v3412 = vpack.c.b16 %v3398, %v3397
      %v3413 = vpack.c.b16 %v3400, %v3399
      %v3414 = vpack.c.b16 %v3402, %v3401
      %v3415 = vpack.c.b16 %v3404, %v3403
      %v3416 = vpack.c.b16 %v3406, %v3405
      %v3417 = vpack.c.b16 %v3408, %v3407
      %v3418 = vpack.c.b16 %v3410, %v3409
      %3427 = vmatprep.subr.bf16.mxu0 0
      %3428 = vmatpush1.bf16.msra.mxu0 %v3411
      %3429 = vmatprep.subr.bf16.mxu0 0
      %3430 = vmatpush1.bf16.msra.mxu0 %v3412
      %3431 = vmatprep.subr.bf16.mxu0 0
      %3432 = vmatpush1.bf16.msra.mxu0 %v3413
      %3433 = vmatprep.subr.bf16.mxu0 0
      %3434 = vmatpush1.bf16.msra.mxu0 %v3414
      %3435 = vmatprep.subr.bf16.mxu0 0
      %3436 = vmatpush1.bf16.msra.mxu0 %v3415
      %3437 = vmatprep.subr.bf16.mxu0 0
      %3438 = vmatpush1.bf16.msra.mxu0 %v3416
      %3439 = vmatprep.subr.bf16.mxu0 0
      %3440 = vmatpush1.bf16.msra.mxu0 %v3417
      %3441 = vmatprep.subr.bf16.mxu0 0
      %3442 = vmatpush1.bf16.msra.mxu0 %v3418
      %3443 = vmatprep.subr.bf16.mxu0 0
      %3444 = vmatpush1.bf16.msra.mxu0 0
      %3445 = vmatprep.subr.bf16.mxu0 0
      %3446 = vmatpush1.bf16.msra.mxu0 0
      %3447 = vmatprep.subr.bf16.mxu0 0
      %3448 = vmatpush1.bf16.msra.mxu0 0
      %3449 = vmatprep.subr.bf16.mxu0 0
      %3450 = vmatpush1.bf16.msra.mxu0 0
      %3451 = vmatprep.subr.bf16.mxu0 0
      %3452 = vmatpush1.bf16.msra.mxu0 0
      %3453 = vmatprep.subr.bf16.mxu0 0
      %3454 = vmatpush1.bf16.msra.mxu0 0
      %3455 = vmatprep.subr.bf16.mxu0 0
      %3456 = vmatpush1.bf16.msra.mxu0 0
      %3457 = vmatprep.subr.bf16.mxu0 0
      %3458 = vmatpush1.bf16.msra.mxu0 0
      %3459 = vmatprep.mubr.bf16.mxu0 0
      %3460 = vmatmul.mubr.bf16.gmra.mrb[0].mxu0 %v3378
      %v3461 = vpop.f32.mrb[0].mxu0
      %v3462 = vadd.f32 0.0, %v3461
      %v3463 = vpop.f32.mrb[0].mxu0
      %v3464 = vpop.f32.mrb[0].mxu0
      %v3465 = vpop.f32.mrb[0].mxu0
      %3466 = vdwg.mxu0
      %v3467 = vadd.f32 %v3203, %v3462
      %v3468 = vtanh.pop %v3467
      %v3469 = vsub.f32 1.0, %v3376
      %v3470 = vmul.f32 %v3469, %v3208
      %v3471 = vmul.f32 %v3376, %v3468
      %v3472 = vadd.f32 %v3470, %v3471
      %3473 = vst [vmem:[%s820] sm:$0xff] %v3472
      %3474 = vst [vmem:[%s281 + $0x18] sm:$0xff] %v3472
      %v3475 = vld [vmem:[%s275 + $0x60] sm:$0xff]
      %v3476 = vld [vmem:[%s275 + $0x68] sm:$0xff]
      %v3477 = vld [vmem:[%s275 + $0x70] sm:$0xff]
      %v3478 = vld [vmem:[%s7] sm:$0xff]
      %v3479 = vld [vmem:[%s2] sm:$0xff]
      %v3480 = vld [vmem:[%s2 + $0x8] sm:$0xff]
      %v3481 = vld [vmem:[%s2 + $0x10] sm:$0xff]
      %v3482 = vld [vmem:[%s2 + $0x18] sm:$0xff]
      %v3483 = vld [vmem:[%s2 + $0x20] sm:$0xff]
      %v3484 = vld [vmem:[%s2 + $0x28] sm:$0xff]
      %v3485 = vld [vmem:[%s2 + $0x30] sm:$0xff]
      %v3486 = vld [vmem:[%s2 + $0x38] sm:$0xff]
      %v3487 = vld [vmem:[%s2 + $0x40] sm:$0xff]
      %v3488 = vld [vmem:[%s2 + $0x48] sm:$0xff]
      %v3489 = vld [vmem:[%s2 + $0x50] sm:$0xff]
      %v3490 = vld [vmem:[%s2 + $0x58] sm:$0xff]
      %v3491 = vld [vmem:[%s2 + $0x60] sm:$0xff]
      %v3492 = vld [vmem:[%s2 + $0x68] sm:$0xff]
      %v3493 = vld [vmem:[%s2 + $0x70] sm:$0xff]
      %v3494 = vld [vmem:[%s2 + $0x78] sm:$0xff]
      %v3495 = vld [vmem:[%s3] sm:$0xf]
      %v3496 = vld [vmem:[%s3 + $0x4] sm:$0xf]
      %v3497 = vld [vmem:[%s3 + $0x8] sm:$0xf]
      %v3498 = vld [vmem:[%s3 + $0xc] sm:$0xf]
      %v3499 = vld [vmem:[%s3 + $0x10] sm:$0xf]
      %v3500 = vld [vmem:[%s3 + $0x14] sm:$0xf]
      %v3501 = vld [vmem:[%s3 + $0x18] sm:$0xf]
      %v3502 = vld [vmem:[%s3 + $0x1c] sm:$0xf]
      %v3503 = vld [vmem:[%s3 + $0x20] sm:$0xf]
      %v3504 = vld [vmem:[%s3 + $0x24] sm:$0xf]
      %v3505 = vld [vmem:[%s3 + $0x28] sm:$0xf]
      %v3506 = vld [vmem:[%s3 + $0x2c] sm:$0xf]
      %v3507 = vld [vmem:[%s3 + $0x30] sm:$0xf]
      %v3508 = vld [vmem:[%s3 + $0x34] sm:$0xf]
      %v3509 = vld [vmem:[%s3 + $0x38] sm:$0xf]
      %v3510 = vld [vmem:[%s3 + $0x3c] sm:$0xf]
      %v3511 = vpack.c.bf16 %v3478, %v3478
      %v3528 = vunpack.c.l.b16 %v3479
      %v3529 = vunpack.c.h.b16 %v3479
      %v3530 = vunpack.c.l.b16 %v3480
      %v3531 = vunpack.c.h.b16 %v3480
      %v3532 = vunpack.c.l.b16 %v3481
      %v3533 = vunpack.c.h.b16 %v3481
      %v3534 = vunpack.c.l.b16 %v3482
      %v3535 = vunpack.c.h.b16 %v3482
      %v3536 = vunpack.c.l.b16 %v3483
      %v3537 = vunpack.c.h.b16 %v3483
      %v3538 = vunpack.c.l.b16 %v3484
      %v3539 = vunpack.c.h.b16 %v3484
      %v3540 = vunpack.c.l.b16 %v3485
      %v3541 = vunpack.c.h.b16 %v3485
      %v3542 = vunpack.c.l.b16 %v3486
      %v3543 = vunpack.c.h.b16 %v3486
      %v3544 = vunpack.c.l.b16 %v3487
      %v3545 = vunpack.c.h.b16 %v3487
      %v3546 = vunpack.c.l.b16 %v3488
      %v3547 = vunpack.c.h.b16 %v3488
      %v3548 = vunpack.c.l.b16 %v3489
      %v3549 = vunpack.c.h.b16 %v3489
      %v3550 = vunpack.c.l.b16 %v3490
      %v3551 = vunpack.c.h.b16 %v3490
      %v3552 = vunpack.c.l.b16 %v3491
      %v3553 = vunpack.c.h.b16 %v3491
      %v3554 = vunpack.c.l.b16 %v3492
      %v3555 = vunpack.c.h.b16 %v3492
      %v3556 = vunpack.c.l.b16 %v3493
      %v3557 = vunpack.c.h.b16 %v3493
      %v3558 = vunpack.c.l.b16 %v3494
      %v3559 = vunpack.c.h.b16 %v3494
      %v3560 = vpack.c.b16 %v3530, %v3528
      %v3561 = vpack.c.b16 %v3531, %v3529
      %v3562 = vpack.c.b16 %v3534, %v3532
      %v3563 = vpack.c.b16 %v3535, %v3533
      %v3564 = vpack.c.b16 %v3538, %v3536
      %v3565 = vpack.c.b16 %v3539, %v3537
      %v3566 = vpack.c.b16 %v3542, %v3540
      %v3567 = vpack.c.b16 %v3543, %v3541
      %v3568 = vpack.c.b16 %v3546, %v3544
      %v3569 = vpack.c.b16 %v3547, %v3545
      %v3570 = vpack.c.b16 %v3550, %v3548
      %v3571 = vpack.c.b16 %v3551, %v3549
      %v3572 = vpack.c.b16 %v3554, %v3552
      %v3573 = vpack.c.b16 %v3555, %v3553
      %v3574 = vpack.c.b16 %v3558, %v3556
      %v3575 = vpack.c.b16 %v3559, %v3557
      %3592 = vmatprep.subr.bf16.mxu0 %v3561
      %3593 = vmatpush1.bf16.msra.mxu0 %v3560
      %3594 = vmatprep.subr.bf16.mxu0 %v3563
      %3595 = vmatpush1.bf16.msra.mxu0 %v3562
      %3596 = vmatprep.subr.bf16.mxu0 %v3565
      %3597 = vmatpush1.bf16.msra.mxu0 %v3564
      %3598 = vmatprep.subr.bf16.mxu0 %v3567
      %3599 = vmatpush1.bf16.msra.mxu0 %v3566
      %3600 = vmatprep.subr.bf16.mxu0 %v3569
      %3601 = vmatpush1.bf16.msra.mxu0 %v3568
      %3602 = vmatprep.subr.bf16.mxu0 %v3571
      %3603 = vmatpush1.bf16.msra.mxu0 %v3570
      %3604 = vmatprep.subr.bf16.mxu0 %v3573
      %3605 = vmatpush1.bf16.msra.mxu0 %v3572
      %3606 = vmatprep.subr.bf16.mxu0 %v3575
      %3607 = vmatpush1.bf16.msra.mxu0 %v3574
      %3608 = vmatprep.subr.bf16.mxu0 0
      %3609 = vmatpush1.bf16.msra.mxu0 0
      %3610 = vmatprep.subr.bf16.mxu0 0
      %3611 = vmatpush1.bf16.msra.mxu0 0
      %3612 = vmatprep.subr.bf16.mxu0 0
      %3613 = vmatpush1.bf16.msra.mxu0 0
      %3614 = vmatprep.subr.bf16.mxu0 0
      %3615 = vmatpush1.bf16.msra.mxu0 0
      %3616 = vmatprep.subr.bf16.mxu0 0
      %3617 = vmatpush1.bf16.msra.mxu0 0
      %3618 = vmatprep.subr.bf16.mxu0 0
      %3619 = vmatpush1.bf16.msra.mxu0 0
      %3620 = vmatprep.subr.bf16.mxu0 0
      %3621 = vmatpush1.bf16.msra.mxu0 0
      %3622 = vmatprep.subr.bf16.mxu0 0
      %3623 = vmatpush1.bf16.msra.mxu0 0
      %3624 = vmatprep.mubr.bf16.mxu0 0
      %3625 = vmatmul.mubr.bf16.gmra.mrb[0].mxu0 %v3511
      %v3626 = vpop.f32.mrb[0].mxu0
      %v3627 = vadd.f32 0.0, %v3626
      %v3628 = vpop.f32.mrb[0].mxu0
      %v3629 = vadd.f32 0.0, %v3628
      %v3630 = vpop.f32.mrb[0].mxu0
      %v3631 = vpop.f32.mrb[0].mxu0
      %3632 = vdwg.mxu0
      %v3633 = vadd.f32 %v3475, %v3627
      %v3634 = vxor.u32 %v3633, 2147483648
      %v3635 = vmul.f32 %v3634, 1.442695
      %v3636 = vpow.pop %v3635
      %v3637 = vadd.f32 %v3636, 1.0
      %v3638 = vrcp.pop %v3637
      %v3639 = vmul.f32 1.0, %v3638
      %v3640 = vadd.f32 %v3476, %v3629
      %v3641 = vxor.u32 %v3640, 2147483648
      %v3642 = vmul.f32 %v3641, 1.442695
      %v3643 = vpow.pop %v3642
      %v3644 = vadd.f32 %v3643, 1.0
      %v3645 = vrcp.pop %v3644
      %v3646 = vmul.f32 1.0, %v3645
      %v3647 = vmul.f32 %v3639, %v3478
      %v3648 = vpack.c.bf16 %v3647, %v3647
      %v3665 = vunpack.c.l.b16 %v3495
      %v3666 = vunpack.c.l.b16 %v3496
      %v3667 = vunpack.c.l.b16 %v3497
      %v3668 = vunpack.c.l.b16 %v3498
      %v3669 = vunpack.c.l.b16 %v3499
      %v3670 = vunpack.c.l.b16 %v3500
      %v3671 = vunpack.c.l.b16 %v3501
      %v3672 = vunpack.c.l.b16 %v3502
      %v3673 = vunpack.c.l.b16 %v3503
      %v3674 = vunpack.c.l.b16 %v3504
      %v3675 = vunpack.c.l.b16 %v3505
      %v3676 = vunpack.c.l.b16 %v3506
      %v3677 = vunpack.c.l.b16 %v3507
      %v3678 = vunpack.c.l.b16 %v3508
      %v3679 = vunpack.c.l.b16 %v3509
      %v3680 = vunpack.c.l.b16 %v3510
      %v3681 = vpack.c.b16 %v3666, %v3665
      %v3682 = vpack.c.b16 %v3668, %v3667
      %v3683 = vpack.c.b16 %v3670, %v3669
      %v3684 = vpack.c.b16 %v3672, %v3671
      %v3685 = vpack.c.b16 %v3674, %v3673
      %v3686 = vpack.c.b16 %v3676, %v3675
      %v3687 = vpack.c.b16 %v3678, %v3677
      %v3688 = vpack.c.b16 %v3680, %v3679
      %3697 = vmatprep.subr.bf16.mxu0 0
      %3698 = vmatpush1.bf16.msra.mxu0 %v3681
      %3699 = vmatprep.subr.bf16.mxu0 0
      %3700 = vmatpush1.bf16.msra.mxu0 %v3682
      %3701 = vmatprep.subr.bf16.mxu0 0
      %3702 = vmatpush1.bf16.msra.mxu0 %v3683
      %3703 = vmatprep.subr.bf16.mxu0 0
      %3704 = vmatpush1.bf16.msra.mxu0 %v3684
      %3705 = vmatprep.subr.bf16.mxu0 0
      %3706 = vmatpush1.bf16.msra.mxu0 %v3685
      %3707 = vmatprep.subr.bf16.mxu0 0
      %3708 = vmatpush1.bf16.msra.mxu0 %v3686
      %3709 = vmatprep.subr.bf16.mxu0 0
      %3710 = vmatpush1.bf16.msra.mxu0 %v3687
      %3711 = vmatprep.subr.bf16.mxu0 0
      %3712 = vmatpush1.bf16.msra.mxu0 %v3688
      %3713 = vmatprep.subr.bf16.mxu0 0
      %3714 = vmatpush1.bf16.msra.mxu0 0
      %3715 = vmatprep.subr.bf16.mxu0 0
      %3716 = vmatpush1.bf16.msra.mxu0 0
      %3717 = vmatprep.subr.bf16.mxu0 0
      %3718 = vmatpush1.bf16.msra.mxu0 0
      %3719 = vmatprep.subr.bf16.mxu0 0
      %3720 = vmatpush1.bf16.msra.mxu0 0
      %3721 = vmatprep.subr.bf16.mxu0 0
      %3722 = vmatpush1.bf16.msra.mxu0 0
      %3723 = vmatprep.subr.bf16.mxu0 0
      %3724 = vmatpush1.bf16.msra.mxu0 0
      %3725 = vmatprep.subr.bf16.mxu0 0
      %3726 = vmatpush1.bf16.msra.mxu0 0
      %3727 = vmatprep.subr.bf16.mxu0 0
      %3728 = vmatpush1.bf16.msra.mxu0 0
      %3729 = vmatprep.mubr.bf16.mxu0 0
      %3730 = vmatmul.mubr.bf16.gmra.mrb[0].mxu0 %v3648
      %v3731 = vpop.f32.mrb[0].mxu0
      %v3732 = vadd.f32 0.0, %v3731
      %v3733 = vpop.f32.mrb[0].mxu0
      %v3734 = vpop.f32.mrb[0].mxu0
      %v3735 = vpop.f32.mrb[0].mxu0
      %3736 = vdwg.mxu0
      %v3737 = vadd.f32 %v3477, %v3732
      %v3738 = vtanh.pop %v3737
      %v3739 = vsub.f32 1.0, %v3646
      %v3740 = vmul.f32 %v3739, %v3478
      %v3741 = vmul.f32 %v3646, %v3738
      %v3742 = vadd.f32 %v3740, %v3741
      %3743 = vst [vmem:[%s7] sm:$0xff] %v3742
      %v3744 = vpack.c.bf16 %v3742, %v3742
      %v3745 = vld [vmem:[%s1] sm:$0xff]
      %v3746 = vld [vmem:[%s1 + $0x8] sm:$0xf]
      %v3747 = vld [vmem:[%s1 + $0xc] sm:$0xff]
      %v3748 = vld [vmem:[%s1 + $0x14] sm:$0xf]
      %v3749 = vld [vmem:[%s1 + $0x18] sm:$0xff]
      %v3750 = vld [vmem:[%s1 + $0x20] sm:$0xf]
      %v3751 = vld [vmem:[%s1 + $0x24] sm:$0xff]
      %v3752 = vld [vmem:[%s1 + $0x2c] sm:$0xf]
      %v3753 = vld [vmem:[%s1 + $0x30] sm:$0xff]
      %v3754 = vld [vmem:[%s1 + $0x38] sm:$0xf]
      %v3755 = vld [vmem:[%s1 + $0x3c] sm:$0xff]
      %v3756 = vld [vmem:[%s1 + $0x44] sm:$0xf]
      %v3757 = vld [vmem:[%s1 + $0x48] sm:$0xff]
      %v3758 = vld [vmem:[%s1 + $0x50] sm:$0xf]
      %v3759 = vld [vmem:[%s1 + $0x54] sm:$0xff]
      %v3760 = vld [vmem:[%s1 + $0x5c] sm:$0xf]
      %v3761 = vld [vmem:[%s1 + $0x60] sm:$0xff]
      %v3762 = vld [vmem:[%s1 + $0x68] sm:$0xf]
      %v3763 = vld [vmem:[%s1 + $0x6c] sm:$0xff]
      %v3764 = vld [vmem:[%s1 + $0x74] sm:$0xf]
      %v3765 = vld [vmem:[%s1 + $0x78] sm:$0xff]
      %v3766 = vld [vmem:[%s1 + $0x80] sm:$0xf]
      %v3767 = vld [vmem:[%s1 + $0x84] sm:$0xff]
      %v3768 = vld [vmem:[%s1 + $0x8c] sm:$0xf]
      %v3769 = vld [vmem:[%s1 + $0x90] sm:$0xff]
      %v3770 = vld [vmem:[%s1 + $0x98] sm:$0xf]
      %v3771 = vld [vmem:[%s1 + $0x9c] sm:$0xff]
      %v3772 = vld [vmem:[%s1 + $0xa4] sm:$0xf]
      %v3773 = vld [vmem:[%s1 + $0xa8] sm:$0xff]
      %v3774 = vld [vmem:[%s1 + $0xb0] sm:$0xf]
      %v3775 = vld [vmem:[%s1 + $0xb4] sm:$0xff]
      %v3776 = vld [vmem:[%s1 + $0xbc] sm:$0xf]
      %v3777 = vld [vmem:[%s4] sm:$0x7]
      %v3779 = vlaneseq
      %v3780 = vshrl.u32 %v3779, 7
      %v3781 = vsub.s32 0, %v3780
      %v3782 = vrot.slane %v3777, %v3781
      %v3783 = vlaneseq
      %v3784 = vshrl.u32 %v3783, 7
      %v3785 = vsub.s32 1, %v3784
      %v3786 = vrot.slane %v3777, %v3785
      %v3787 = vlaneseq
      %v3788 = vshrl.u32 %v3787, 7
      %v3789 = vsub.s32 2, %v3788
      %v3790 = vrot.slane %v3777, %v3789
      %v3826 = vunpack.c.l.b16 %v3745
      %v3827 = vunpack.c.h.b16 %v3745
      %v3828 = vunpack.c.l.b16 %v3746
      %v3829 = vunpack.c.l.b16 %v3747
      %v3830 = vunpack.c.h.b16 %v3747
      %v3831 = vunpack.c.l.b16 %v3748
      %v3832 = vunpack.c.l.b16 %v3749
      %v3833 = vunpack.c.h.b16 %v3749
      %v3834 = vunpack.c.l.b16 %v3750
      %v3835 = vunpack.c.l.b16 %v3751
      %v3836 = vunpack.c.h.b16 %v3751
      %v3837 = vunpack.c.l.b16 %v3752
      %v3838 = vunpack.c.l.b16 %v3753
      %v3839 = vunpack.c.h.b16 %v3753
      %v3840 = vunpack.c.l.b16 %v3754
      %v3841 = vunpack.c.l.b16 %v3755
      %v3842 = vunpack.c.h.b16 %v3755
      %v3843 = vunpack.c.l.b16 %v3756
      %v3844 = vunpack.c.l.b16 %v3757
      %v3845 = vunpack.c.h.b16 %v3757
      %v3846 = vunpack.c.l.b16 %v3758
      %v3847 = vunpack.c.l.b16 %v3759
      %v3848 = vunpack.c.h.b16 %v3759
      %v3849 = vunpack.c.l.b16 %v3760
      %v3850 = vunpack.c.l.b16 %v3761
      %v3851 = vunpack.c.h.b16 %v3761
      %v3852 = vunpack.c.l.b16 %v3762
      %v3853 = vunpack.c.l.b16 %v3763
      %v3854 = vunpack.c.h.b16 %v3763
      %v3855 = vunpack.c.l.b16 %v3764
      %v3856 = vunpack.c.l.b16 %v3765
      %v3857 = vunpack.c.h.b16 %v3765
      %v3858 = vunpack.c.l.b16 %v3766
      %v3859 = vunpack.c.l.b16 %v3767
      %v3860 = vunpack.c.h.b16 %v3767
      %v3861 = vunpack.c.l.b16 %v3768
      %v3862 = vunpack.c.l.b16 %v3769
      %v3863 = vunpack.c.h.b16 %v3769
      %v3864 = vunpack.c.l.b16 %v3770
      %v3865 = vunpack.c.l.b16 %v3771
      %v3866 = vunpack.c.h.b16 %v3771
      %v3867 = vunpack.c.l.b16 %v3772
      %v3868 = vunpack.c.l.b16 %v3773
      %v3869 = vunpack.c.h.b16 %v3773
      %v3870 = vunpack.c.l.b16 %v3774
      %v3871 = vunpack.c.l.b16 %v3775
      %v3872 = vunpack.c.h.b16 %v3775
      %v3873 = vunpack.c.l.b16 %v3776
      %v3874 = vpack.c.b16 %v3829, %v3826
      %v3875 = vpack.c.b16 %v3830, %v3827
      %v3876 = vpack.c.b16 %v3831, %v3828
      %v3877 = vpack.c.b16 %v3835, %v3832
      %v3878 = vpack.c.b16 %v3836, %v3833
      %v3879 = vpack.c.b16 %v3837, %v3834
      %v3880 = vpack.c.b16 %v3841, %v3838
      %v3881 = vpack.c.b16 %v3842, %v3839
      %v3882 = vpack.c.b16 %v3843, %v3840
      %v3883 = vpack.c.b16 %v3847, %v3844
      %v3884 = vpack.c.b16 %v3848, %v3845
      %v3885 = vpack.c.b16 %v3849, %v3846
      %v3886 = vpack.c.b16 %v3853, %v3850
      %v3887 = vpack.c.b16 %v3854, %v3851
      %v3888 = vpack.c.b16 %v3855, %v3852
      %v3889 = vpack.c.b16 %v3859, %v3856
      %v3890 = vpack.c.b16 %v3860, %v3857
      %v3891 = vpack.c.b16 %v3861, %v3858
      %v3892 = vpack.c.b16 %v3865, %v3862
      %v3893 = vpack.c.b16 %v3866, %v3863
      %v3894 = vpack.c.b16 %v3867, %v3864
      %v3895 = vpack.c.b16 %v3871, %v3868
      %v3896 = vpack.c.b16 %v3872, %v3869
      %v3897 = vpack.c.b16 %v3873, %v3870
      %3922 = vmatprep.subr.bf16.mxu0 %v3875
      %3923 = vmatpush1.bf16.msra.mxu0 %v3874
      %3924 = vmatprep.subr.bf16.mxu0 %v3878
      %3925 = vmatpush1.bf16.msra.mxu0 %v3877
      %3926 = vmatprep.subr.bf16.mxu0 %v3881
      %3927 = vmatpush1.bf16.msra.mxu0 %v3880
      %3928 = vmatprep.subr.bf16.mxu0 %v3884
      %3929 = vmatpush1.bf16.msra.mxu0 %v3883
      %3930 = vmatprep.subr.bf16.mxu0 %v3887
      %3931 = vmatpush1.bf16.msra.mxu0 %v3886
      %3932 = vmatprep.subr.bf16.mxu0 %v3890
      %3933 = vmatpush1.bf16.msra.mxu0 %v3889
      %3934 = vmatprep.subr.bf16.mxu0 %v3893
      %3935 = vmatpush1.bf16.msra.mxu0 %v3892
      %3936 = vmatprep.subr.bf16.mxu0 %v3896
      %3937 = vmatpush1.bf16.msra.mxu0 %v3895
      %3938 = vmatprep.subr.bf16.mxu0 0
      %3939 = vmatpush1.bf16.msra.mxu0 0
      %3940 = vmatprep.subr.bf16.mxu0 0
      %3941 = vmatpush1.bf16.msra.mxu0 0
      %3942 = vmatprep.subr.bf16.mxu0 0
      %3943 = vmatpush1.bf16.msra.mxu0 0
      %3944 = vmatprep.subr.bf16.mxu0 0
      %3945 = vmatpush1.bf16.msra.mxu0 0
      %3946 = vmatprep.subr.bf16.mxu0 0
      %3947 = vmatpush1.bf16.msra.mxu0 0
      %3948 = vmatprep.subr.bf16.mxu0 0
      %3949 = vmatpush1.bf16.msra.mxu0 0
      %3950 = vmatprep.subr.bf16.mxu0 0
      %3951 = vmatpush1.bf16.msra.mxu0 0
      %3952 = vmatprep.subr.bf16.mxu0 0
      %3953 = vmatpush1.bf16.msra.mxu0 0
      %3954 = vmatprep.mubr.bf16.mxu0 0
      %3955 = vmatmul.mubr.bf16.gmra.mrb[0].mxu0 %v3744
      %v3956 = vpop.f32.mrb[0].mxu0
      %v3957 = vadd.f32 %v3782, %v3956
      %v3958 = vpop.f32.mrb[0].mxu0
      %v3959 = vadd.f32 %v3786, %v3958
      %v3960 = vpop.f32.mrb[0].mxu0
      %v3961 = vpop.f32.mrb[0].mxu0
      %3962 = vdwg.mxu0
      %3963 = vmatprep.subr.bf16.mxu0 0
      %3964 = vmatpush1.bf16.msra.mxu0 %v3876
      %3965 = vmatprep.subr.bf16.mxu0 0
      %3966 = vmatpush1.bf16.msra.mxu0 %v3879
      %3967 = vmatprep.subr.bf16.mxu0 0
      %3968 = vmatpush1.bf16.msra.mxu0 %v3882
      %3969 = vmatprep.subr.bf16.mxu0 0
      %3970 = vmatpush1.bf16.msra.mxu0 %v3885
      %3971 = vmatprep.subr.bf16.mxu0 0
      %3972 = vmatpush1.bf16.msra.mxu0 %v3888
      %3973 = vmatprep.subr.bf16.mxu0 0
      %3974 = vmatpush1.bf16.msra.mxu0 %v3891
      %3975 = vmatprep.subr.bf16.mxu0 0
      %3976 = vmatpush1.bf16.msra.mxu0 %v3894
      %3977 = vmatprep.subr.bf16.mxu0 0
      %3978 = vmatpush1.bf16.msra.mxu0 %v3897
      %3979 = vmatprep.subr.bf16.mxu0 0
      %3980 = vmatpush1.bf16.msra.mxu0 0
      %3981 = vmatprep.subr.bf16.mxu0 0
      %3982 = vmatpush1.bf16.msra.mxu0 0
      %3983 = vmatprep.subr.bf16.mxu0 0
      %3984 = vmatpush1.bf16.msra.mxu0 0
      %3985 = vmatprep.subr.bf16.mxu0 0
      %3986 = vmatpush1.bf16.msra.mxu0 0
      %3987 = vmatprep.subr.bf16.mxu0 0
      %3988 = vmatpush1.bf16.msra.mxu0 0
      %3989 = vmatprep.subr.bf16.mxu0 0
      %3990 = vmatpush1.bf16.msra.mxu0 0
      %3991 = vmatprep.subr.bf16.mxu0 0
      %3992 = vmatpush1.bf16.msra.mxu0 0
      %3993 = vmatprep.subr.bf16.mxu0 0
      %3994 = vmatpush1.bf16.msra.mxu0 0
      %3995 = vmatprep.mubr.bf16.mxu0 0
      %3996 = vmatmul.mubr.bf16.gmra.mrb[0].mxu0 %v3744
      %v3997 = vpop.f32.mrb[0].mxu0
      %v3998 = vadd.f32 %v3790, %v3997
      %v3999 = vpop.f32.mrb[0].mxu0
      %v4000 = vpop.f32.mrb[0].mxu0
      %v4001 = vpop.f32.mrb[0].mxu0
      %4002 = vdwg.mxu0
      %v4003 = vld [vmem:[%s820] sm:$0xff]
      %v4004 = vld [vmem:[%s822] sm:$0xff]
      %v4005 = vld [vmem:[%s822 + $0x8] sm:$0xff]
      %v4006 = vld [vmem:[%s822 + $0x10] sm:$0xff]
      %v4007 = vld [vmem:[%s822 + $0x18] sm:$0xff]
      %v4008 = vld [vmem:[%s822 + $0x20] sm:$0xff]
      %v4009 = vld [vmem:[%s822 + $0x28] sm:$0xff]
      %v4010 = vld [vmem:[%s822 + $0x30] sm:$0xff]
      %v4011 = vld [vmem:[%s822 + $0x38] sm:$0xff]
      %v4012 = vld [vmem:[%s822 + $0x40] sm:$0xff]
      %v4013 = vld [vmem:[%s822 + $0x48] sm:$0xff]
      %v4014 = vld [vmem:[%s822 + $0x50] sm:$0xff]
      %v4015 = vld [vmem:[%s822 + $0x58] sm:$0xff]
      %v4016 = vld [vmem:[%s822 + $0x60] sm:$0xff]
      %v4017 = vld [vmem:[%s822 + $0x68] sm:$0xff]
      %v4018 = vld [vmem:[%s822 + $0x70] sm:$0xff]
      %v4019 = vld [vmem:[%s822 + $0x78] sm:$0xff]
      %v4020 = vld [vmem:[%s839] sm:$0xf]
      %v4021 = vld [vmem:[%s839 + $0x4] sm:$0xf]
      %v4022 = vld [vmem:[%s839 + $0x8] sm:$0xf]
      %v4023 = vld [vmem:[%s839 + $0xc] sm:$0xf]
      %v4024 = vld [vmem:[%s839 + $0x10] sm:$0xf]
      %v4025 = vld [vmem:[%s839 + $0x14] sm:$0xf]
      %v4026 = vld [vmem:[%s839 + $0x18] sm:$0xf]
      %v4027 = vld [vmem:[%s839 + $0x1c] sm:$0xf]
      %v4028 = vld [vmem:[%s839 + $0x20] sm:$0xf]
      %v4029 = vld [vmem:[%s839 + $0x24] sm:$0xf]
      %v4030 = vld [vmem:[%s839 + $0x28] sm:$0xf]
      %v4031 = vld [vmem:[%s839 + $0x2c] sm:$0xf]
      %v4032 = vld [vmem:[%s839 + $0x30] sm:$0xf]
      %v4033 = vld [vmem:[%s839 + $0x34] sm:$0xf]
      %v4034 = vld [vmem:[%s839 + $0x38] sm:$0xf]
      %v4035 = vld [vmem:[%s839 + $0x3c] sm:$0xf]
      %v4036 = vpack.c.bf16 %v4003, %v4003
      %v4053 = vunpack.c.l.b16 %v4004
      %v4054 = vunpack.c.h.b16 %v4004
      %v4055 = vunpack.c.l.b16 %v4005
      %v4056 = vunpack.c.h.b16 %v4005
      %v4057 = vunpack.c.l.b16 %v4006
      %v4058 = vunpack.c.h.b16 %v4006
      %v4059 = vunpack.c.l.b16 %v4007
      %v4060 = vunpack.c.h.b16 %v4007
      %v4061 = vunpack.c.l.b16 %v4008
      %v4062 = vunpack.c.h.b16 %v4008
      %v4063 = vunpack.c.l.b16 %v4009
      %v4064 = vunpack.c.h.b16 %v4009
      %v4065 = vunpack.c.l.b16 %v4010
      %v4066 = vunpack.c.h.b16 %v4010
      %v4067 = vunpack.c.l.b16 %v4011
      %v4068 = vunpack.c.h.b16 %v4011
      %v4069 = vunpack.c.l.b16 %v4012
      %v4070 = vunpack.c.h.b16 %v4012
      %v4071 = vunpack.c.l.b16 %v4013
      %v4072 = vunpack.c.h.b16 %v4013
      %v4073 = vunpack.c.l.b16 %v4014
      %v4074 = vunpack.c.h.b16 %v4014
      %v4075 = vunpack.c.l.b16 %v4015
      %v4076 = vunpack.c.h.b16 %v4015
      %v4077 = vunpack.c.l.b16 %v4016
      %v4078 = vunpack.c.h.b16 %v4016
      %v4079 = vunpack.c.l.b16 %v4017
      %v4080 = vunpack.c.h.b16 %v4017
      %v4081 = vunpack.c.l.b16 %v4018
      %v4082 = vunpack.c.h.b16 %v4018
      %v4083 = vunpack.c.l.b16 %v4019
      %v4084 = vunpack.c.h.b16 %v4019
      %v4085 = vpack.c.b16 %v4055, %v4053
      %v4086 = vpack.c.b16 %v4056, %v4054
      %v4087 = vpack.c.b16 %v4059, %v4057
      %v4088 = vpack.c.b16 %v4060, %v4058
      %v4089 = vpack.c.b16 %v4063, %v4061
      %v4090 = vpack.c.b16 %v4064, %v4062
      %v4091 = vpack.c.b16 %v4067, %v4065
      %v4092 = vpack.c.b16 %v4068, %v4066
      %v4093 = vpack.c.b16 %v4071, %v4069
      %v4094 = vpack.c.b16 %v4072, %v4070
      %v4095 = vpack.c.b16 %v4075, %v4073
      %v4096 = vpack.c.b16 %v4076, %v4074
      %v4097 = vpack.c.b16 %v4079, %v4077
      %v4098 = vpack.c.b16 %v4080, %v4078
      %v4099 = vpack.c.b16 %v4083, %v4081
      %v4100 = vpack.c.b16 %v4084, %v4082
      %4117 = vmatprep.subr.bf16.mxu0 %v4086
      %4118 = vmatpush1.bf16.msra.mxu0 %v4085
      %4119 = vmatprep.subr.bf16.mxu0 %v4088
      %4120 = vmatpush1.bf16.msra.mxu0 %v4087
      %4121 = vmatprep.subr.bf16.mxu0 %v4090
      %4122 = vmatpush1.bf16.msra.mxu0 %v4089
      %4123 = vmatprep.subr.bf16.mxu0 %v4092
      %4124 = vmatpush1.bf16.msra.mxu0 %v4091
      %4125 = vmatprep.subr.bf16.mxu0 %v4094
      %4126 = vmatpush1.bf16.msra.mxu0 %v4093
      %4127 = vmatprep.subr.bf16.mxu0 %v4096
      %4128 = vmatpush1.bf16.msra.mxu0 %v4095
      %4129 = vmatprep.subr.bf16.mxu0 %v4098
      %4130 = vmatpush1.bf16.msra.mxu0 %v4097
      %4131 = vmatprep.subr.bf16.mxu0 %v4100
      %4132 = vmatpush1.bf16.msra.mxu0 %v4099
      %4133 = vmatprep.subr.bf16.mxu0 0
      %4134 = vmatpush1.bf16.msra.mxu0 0
      %4135 = vmatprep.subr.bf16.mxu0 0
      %4136 = vmatpush1.bf16.msra.mxu0 0
      %4137 = vmatprep.subr.bf16.mxu0 0
      %4138 = vmatpush1.bf16.msra.mxu0 0
      %4139 = vmatprep.subr.bf16.mxu0 0
      %4140 = vmatpush1.bf16.msra.mxu0 0
      %4141 = vmatprep.subr.bf16.mxu0 0
      %4142 = vmatpush1.bf16.msra.mxu0 0
      %4143 = vmatprep.subr.bf16.mxu0 0
      %4144 = vmatpush1.bf16.msra.mxu0 0
      %4145 = vmatprep.subr.bf16.mxu0 0
      %4146 = vmatpush1.bf16.msra.mxu0 0
      %4147 = vmatprep.subr.bf16.mxu0 0
      %4148 = vmatpush1.bf16.msra.mxu0 0
      %4149 = vmatprep.mubr.bf16.mxu0 0
      %4150 = vmatmul.mubr.bf16.gmra.mrb[0].mxu0 %v4036
      %v4151 = vpop.f32.mrb[0].mxu0
      %v4152 = vadd.f32 0.0, %v4151
      %v4153 = vpop.f32.mrb[0].mxu0
      %v4154 = vadd.f32 0.0, %v4153
      %v4155 = vpop.f32.mrb[0].mxu0
      %v4156 = vpop.f32.mrb[0].mxu0
      %4157 = vdwg.mxu0
      %v4158 = vadd.f32 %v3957, %v4152
      %v4159 = vxor.u32 %v4158, 2147483648
      %v4160 = vmul.f32 %v4159, 1.442695
      %v4161 = vpow.pop %v4160
      %v4162 = vadd.f32 %v4161, 1.0
      %v4163 = vrcp.pop %v4162
      %v4164 = vmul.f32 1.0, %v4163
      %v4165 = vadd.f32 %v3959, %v4154
      %v4166 = vxor.u32 %v4165, 2147483648
      %v4167 = vmul.f32 %v4166, 1.442695
      %v4168 = vpow.pop %v4167
      %v4169 = vadd.f32 %v4168, 1.0
      %v4170 = vrcp.pop %v4169
      %v4171 = vmul.f32 1.0, %v4170
      %v4172 = vmul.f32 %v4164, %v4003
      %v4173 = vpack.c.bf16 %v4172, %v4172
      %v4190 = vunpack.c.l.b16 %v4020
      %v4191 = vunpack.c.l.b16 %v4021
      %v4192 = vunpack.c.l.b16 %v4022
      %v4193 = vunpack.c.l.b16 %v4023
      %v4194 = vunpack.c.l.b16 %v4024
      %v4195 = vunpack.c.l.b16 %v4025
      %v4196 = vunpack.c.l.b16 %v4026
      %v4197 = vunpack.c.l.b16 %v4027
      %v4198 = vunpack.c.l.b16 %v4028
      %v4199 = vunpack.c.l.b16 %v4029
      %v4200 = vunpack.c.l.b16 %v4030
      %v4201 = vunpack.c.l.b16 %v4031
      %v4202 = vunpack.c.l.b16 %v4032
      %v4203 = vunpack.c.l.b16 %v4033
      %v4204 = vunpack.c.l.b16 %v4034
      %v4205 = vunpack.c.l.b16 %v4035
      %v4206 = vpack.c.b16 %v4191, %v4190
      %v4207 = vpack.c.b16 %v4193, %v4192
      %v4208 = vpack.c.b16 %v4195, %v4194
      %v4209 = vpack.c.b16 %v4197, %v4196
      %v4210 = vpack.c.b16 %v4199, %v4198
      %v4211 = vpack.c.b16 %v4201, %v4200
      %v4212 = vpack.c.b16 %v4203, %v4202
      %v4213 = vpack.c.b16 %v4205, %v4204
      %4222 = vmatprep.subr.bf16.mxu0 0
      %4223 = vmatpush1.bf16.msra.mxu0 %v4206
      %4224 = vmatprep.subr.bf16.mxu0 0
      %4225 = vmatpush1.bf16.msra.mxu0 %v4207
      %4226 = vmatprep.subr.bf16.mxu0 0
      %4227 = vmatpush1.bf16.msra.mxu0 %v4208
      %4228 = vmatprep.subr.bf16.mxu0 0
      %4229 = vmatpush1.bf16.msra.mxu0 %v4209
      %4230 = vmatprep.subr.bf16.mxu0 0
      %4231 = vmatpush1.bf16.msra.mxu0 %v4210
      %4232 = vmatprep.subr.bf16.mxu0 0
      %4233 = vmatpush1.bf16.msra.mxu0 %v4211
      %4234 = vmatprep.subr.bf16.mxu0 0
      %4235 = vmatpush1.bf16.msra.mxu0 %v4212
      %4236 = vmatprep.subr.bf16.mxu0 0
      %4237 = vmatpush1.bf16.msra.mxu0 %v4213
      %4238 = vmatprep.subr.bf16.mxu0 0
      %4239 = vmatpush1.bf16.msra.mxu0 0
      %4240 = vmatprep.subr.bf16.mxu0 0
      %4241 = vmatpush1.bf16.msra.mxu0 0
      %4242 = vmatprep.subr.bf16.mxu0 0
      %4243 = vmatpush1.bf16.msra.mxu0 0
      %4244 = vmatprep.subr.bf16.mxu0 0
      %4245 = vmatpush1.bf16.msra.mxu0 0
      %4246 = vmatprep.subr.bf16.mxu0 0
      %4247 = vmatpush1.bf16.msra.mxu0 0
      %4248 = vmatprep.subr.bf16.mxu0 0
      %4249 = vmatpush1.bf16.msra.mxu0 0
      %4250 = vmatprep.subr.bf16.mxu0 0
      %4251 = vmatpush1.bf16.msra.mxu0 0
      %4252 = vmatprep.subr.bf16.mxu0 0
      %4253 = vmatpush1.bf16.msra.mxu0 0
      %4254 = vmatprep.mubr.bf16.mxu0 0
      %4255 = vmatmul.mubr.bf16.gmra.mrb[0].mxu0 %v4173
      %v4256 = vpop.f32.mrb[0].mxu0
      %v4257 = vadd.f32 0.0, %v4256
      %v4258 = vpop.f32.mrb[0].mxu0
      %v4259 = vpop.f32.mrb[0].mxu0
      %v4260 = vpop.f32.mrb[0].mxu0
      %4261 = vdwg.mxu0
      %v4262 = vadd.f32 %v3998, %v4257
      %v4263 = vtanh.pop %v4262
      %v4264 = vsub.f32 1.0, %v4171
      %v4265 = vmul.f32 %v4264, %v4003
      %v4266 = vmul.f32 %v4171, %v4263
      %v4267 = vadd.f32 %v4265, %v4266
      %4268 = vst [vmem:[%s820] sm:$0xff] %v4267
      %4269 = vst [vmem:[%s281 + $0x20] sm:$0xff] %v4267
      %v4270 = vld [vmem:[%s275 + $0x78] sm:$0xff]
      %v4271 = vld [vmem:[%s275 + $0x80] sm:$0xff]
      %v4272 = vld [vmem:[%s275 + $0x88] sm:$0xff]
      %v4273 = vld [vmem:[%s7] sm:$0xff]
      %v4274 = vld [vmem:[%s2] sm:$0xff]
      %v4275 = vld [vmem:[%s2 + $0x8] sm:$0xff]
      %v4276 = vld [vmem:[%s2 + $0x10] sm:$0xff]
      %v4277 = vld [vmem:[%s2 + $0x18] sm:$0xff]
      %v4278 = vld [vmem:[%s2 + $0x20] sm:$0xff]
      %v4279 = vld [vmem:[%s2 + $0x28] sm:$0xff]
      %v4280 = vld [vmem:[%s2 + $0x30] sm:$0xff]
      %v4281 = vld [vmem:[%s2 + $0x38] sm:$0xff]
      %v4282 = vld [vmem:[%s2 + $0x40] sm:$0xff]
      %v4283 = vld [vmem:[%s2 + $0x48] sm:$0xff]
      %v4284 = vld [vmem:[%s2 + $0x50] sm:$0xff]
      %v4285 = vld [vmem:[%s2 + $0x58] sm:$0xff]
      %v4286 = vld [vmem:[%s2 + $0x60] sm:$0xff]
      %v4287 = vld [vmem:[%s2 + $0x68] sm:$0xff]
      %v4288 = vld [vmem:[%s2 + $0x70] sm:$0xff]
      %v4289 = vld [vmem:[%s2 + $0x78] sm:$0xff]
      %v4290 = vld [vmem:[%s3] sm:$0xf]
      %v4291 = vld [vmem:[%s3 + $0x4] sm:$0xf]
      %v4292 = vld [vmem:[%s3 + $0x8] sm:$0xf]
      %v4293 = vld [vmem:[%s3 + $0xc] sm:$0xf]
      %v4294 = vld [vmem:[%s3 + $0x10] sm:$0xf]
      %v4295 = vld [vmem:[%s3 + $0x14] sm:$0xf]
      %v4296 = vld [vmem:[%s3 + $0x18] sm:$0xf]
      %v4297 = vld [vmem:[%s3 + $0x1c] sm:$0xf]
      %v4298 = vld [vmem:[%s3 + $0x20] sm:$0xf]
      %v4299 = vld [vmem:[%s3 + $0x24] sm:$0xf]
      %v4300 = vld [vmem:[%s3 + $0x28] sm:$0xf]
      %v4301 = vld [vmem:[%s3 + $0x2c] sm:$0xf]
      %v4302 = vld [vmem:[%s3 + $0x30] sm:$0xf]
      %v4303 = vld [vmem:[%s3 + $0x34] sm:$0xf]
      %v4304 = vld [vmem:[%s3 + $0x38] sm:$0xf]
      %v4305 = vld [vmem:[%s3 + $0x3c] sm:$0xf]
      %v4306 = vpack.c.bf16 %v4273, %v4273
      %v4323 = vunpack.c.l.b16 %v4274
      %v4324 = vunpack.c.h.b16 %v4274
      %v4325 = vunpack.c.l.b16 %v4275
      %v4326 = vunpack.c.h.b16 %v4275
      %v4327 = vunpack.c.l.b16 %v4276
      %v4328 = vunpack.c.h.b16 %v4276
      %v4329 = vunpack.c.l.b16 %v4277
      %v4330 = vunpack.c.h.b16 %v4277
      %v4331 = vunpack.c.l.b16 %v4278
      %v4332 = vunpack.c.h.b16 %v4278
      %v4333 = vunpack.c.l.b16 %v4279
      %v4334 = vunpack.c.h.b16 %v4279
      %v4335 = vunpack.c.l.b16 %v4280
      %v4336 = vunpack.c.h.b16 %v4280
      %v4337 = vunpack.c.l.b16 %v4281
      %v4338 = vunpack.c.h.b16 %v4281
      %v4339 = vunpack.c.l.b16 %v4282
      %v4340 = vunpack.c.h.b16 %v4282
      %v4341 = vunpack.c.l.b16 %v4283
      %v4342 = vunpack.c.h.b16 %v4283
      %v4343 = vunpack.c.l.b16 %v4284
      %v4344 = vunpack.c.h.b16 %v4284
      %v4345 = vunpack.c.l.b16 %v4285
      %v4346 = vunpack.c.h.b16 %v4285
      %v4347 = vunpack.c.l.b16 %v4286
      %v4348 = vunpack.c.h.b16 %v4286
      %v4349 = vunpack.c.l.b16 %v4287
      %v4350 = vunpack.c.h.b16 %v4287
      %v4351 = vunpack.c.l.b16 %v4288
      %v4352 = vunpack.c.h.b16 %v4288
      %v4353 = vunpack.c.l.b16 %v4289
      %v4354 = vunpack.c.h.b16 %v4289
      %v4355 = vpack.c.b16 %v4325, %v4323
      %v4356 = vpack.c.b16 %v4326, %v4324
      %v4357 = vpack.c.b16 %v4329, %v4327
      %v4358 = vpack.c.b16 %v4330, %v4328
      %v4359 = vpack.c.b16 %v4333, %v4331
      %v4360 = vpack.c.b16 %v4334, %v4332
      %v4361 = vpack.c.b16 %v4337, %v4335
      %v4362 = vpack.c.b16 %v4338, %v4336
      %v4363 = vpack.c.b16 %v4341, %v4339
      %v4364 = vpack.c.b16 %v4342, %v4340
      %v4365 = vpack.c.b16 %v4345, %v4343
      %v4366 = vpack.c.b16 %v4346, %v4344
      %v4367 = vpack.c.b16 %v4349, %v4347
      %v4368 = vpack.c.b16 %v4350, %v4348
      %v4369 = vpack.c.b16 %v4353, %v4351
      %v4370 = vpack.c.b16 %v4354, %v4352
      %4387 = vmatprep.subr.bf16.mxu0 %v4356
      %4388 = vmatpush1.bf16.msra.mxu0 %v4355
      %4389 = vmatprep.subr.bf16.mxu0 %v4358
      %4390 = vmatpush1.bf16.msra.mxu0 %v4357
      %4391 = vmatprep.subr.bf16.mxu0 %v4360
      %4392 = vmatpush1.bf16.msra.mxu0 %v4359
      %4393 = vmatprep.subr.bf16.mxu0 %v4362
      %4394 = vmatpush1.bf16.msra.mxu0 %v4361
      %4395 = vmatprep.subr.bf16.mxu0 %v4364
      %4396 = vmatpush1.bf16.msra.mxu0 %v4363
      %4397 = vmatprep.subr.bf16.mxu0 %v4366
      %4398 = vmatpush1.bf16.msra.mxu0 %v4365
      %4399 = vmatprep.subr.bf16.mxu0 %v4368
      %4400 = vmatpush1.bf16.msra.mxu0 %v4367
      %4401 = vmatprep.subr.bf16.mxu0 %v4370
      %4402 = vmatpush1.bf16.msra.mxu0 %v4369
      %4403 = vmatprep.subr.bf16.mxu0 0
      %4404 = vmatpush1.bf16.msra.mxu0 0
      %4405 = vmatprep.subr.bf16.mxu0 0
      %4406 = vmatpush1.bf16.msra.mxu0 0
      %4407 = vmatprep.subr.bf16.mxu0 0
      %4408 = vmatpush1.bf16.msra.mxu0 0
      %4409 = vmatprep.subr.bf16.mxu0 0
      %4410 = vmatpush1.bf16.msra.mxu0 0
      %4411 = vmatprep.subr.bf16.mxu0 0
      %4412 = vmatpush1.bf16.msra.mxu0 0
      %4413 = vmatprep.subr.bf16.mxu0 0
      %4414 = vmatpush1.bf16.msra.mxu0 0
      %4415 = vmatprep.subr.bf16.mxu0 0
      %4416 = vmatpush1.bf16.msra.mxu0 0
      %4417 = vmatprep.subr.bf16.mxu0 0
      %4418 = vmatpush1.bf16.msra.mxu0 0
      %4419 = vmatprep.mubr.bf16.mxu0 0
      %4420 = vmatmul.mubr.bf16.gmra.mrb[0].mxu0 %v4306
      %v4421 = vpop.f32.mrb[0].mxu0
      %v4422 = vadd.f32 0.0, %v4421
      %v4423 = vpop.f32.mrb[0].mxu0
      %v4424 = vadd.f32 0.0, %v4423
      %v4425 = vpop.f32.mrb[0].mxu0
      %v4426 = vpop.f32.mrb[0].mxu0
      %4427 = vdwg.mxu0
      %v4428 = vadd.f32 %v4270, %v4422
      %v4429 = vxor.u32 %v4428, 2147483648
      %v4430 = vmul.f32 %v4429, 1.442695
      %v4431 = vpow.pop %v4430
      %v4432 = vadd.f32 %v4431, 1.0
      %v4433 = vrcp.pop %v4432
      %v4434 = vmul.f32 1.0, %v4433
      %v4435 = vadd.f32 %v4271, %v4424
      %v4436 = vxor.u32 %v4435, 2147483648
      %v4437 = vmul.f32 %v4436, 1.442695
      %v4438 = vpow.pop %v4437
      %v4439 = vadd.f32 %v4438, 1.0
      %v4440 = vrcp.pop %v4439
      %v4441 = vmul.f32 1.0, %v4440
      %v4442 = vmul.f32 %v4434, %v4273
      %v4443 = vpack.c.bf16 %v4442, %v4442
      %v4460 = vunpack.c.l.b16 %v4290
      %v4461 = vunpack.c.l.b16 %v4291
      %v4462 = vunpack.c.l.b16 %v4292
      %v4463 = vunpack.c.l.b16 %v4293
      %v4464 = vunpack.c.l.b16 %v4294
      %v4465 = vunpack.c.l.b16 %v4295
      %v4466 = vunpack.c.l.b16 %v4296
      %v4467 = vunpack.c.l.b16 %v4297
      %v4468 = vunpack.c.l.b16 %v4298
      %v4469 = vunpack.c.l.b16 %v4299
      %v4470 = vunpack.c.l.b16 %v4300
      %v4471 = vunpack.c.l.b16 %v4301
      %v4472 = vunpack.c.l.b16 %v4302
      %v4473 = vunpack.c.l.b16 %v4303
      %v4474 = vunpack.c.l.b16 %v4304
      %v4475 = vunpack.c.l.b16 %v4305
      %v4476 = vpack.c.b16 %v4461, %v4460
      %v4477 = vpack.c.b16 %v4463, %v4462
      %v4478 = vpack.c.b16 %v4465, %v4464
      %v4479 = vpack.c.b16 %v4467, %v4466
      %v4480 = vpack.c.b16 %v4469, %v4468
      %v4481 = vpack.c.b16 %v4471, %v4470
      %v4482 = vpack.c.b16 %v4473, %v4472
      %v4483 = vpack.c.b16 %v4475, %v4474
      %4492 = vmatprep.subr.bf16.mxu0 0
      %4493 = vmatpush1.bf16.msra.mxu0 %v4476
      %4494 = vmatprep.subr.bf16.mxu0 0
      %4495 = vmatpush1.bf16.msra.mxu0 %v4477
      %4496 = vmatprep.subr.bf16.mxu0 0
      %4497 = vmatpush1.bf16.msra.mxu0 %v4478
      %4498 = vmatprep.subr.bf16.mxu0 0
      %4499 = vmatpush1.bf16.msra.mxu0 %v4479
      %4500 = vmatprep.subr.bf16.mxu0 0
      %4501 = vmatpush1.bf16.msra.mxu0 %v4480
      %4502 = vmatprep.subr.bf16.mxu0 0
      %4503 = vmatpush1.bf16.msra.mxu0 %v4481
      %4504 = vmatprep.subr.bf16.mxu0 0
      %4505 = vmatpush1.bf16.msra.mxu0 %v4482
      %4506 = vmatprep.subr.bf16.mxu0 0
      %4507 = vmatpush1.bf16.msra.mxu0 %v4483
      %4508 = vmatprep.subr.bf16.mxu0 0
      %4509 = vmatpush1.bf16.msra.mxu0 0
      %4510 = vmatprep.subr.bf16.mxu0 0
      %4511 = vmatpush1.bf16.msra.mxu0 0
      %4512 = vmatprep.subr.bf16.mxu0 0
      %4513 = vmatpush1.bf16.msra.mxu0 0
      %4514 = vmatprep.subr.bf16.mxu0 0
      %4515 = vmatpush1.bf16.msra.mxu0 0
      %4516 = vmatprep.subr.bf16.mxu0 0
      %4517 = vmatpush1.bf16.msra.mxu0 0
      %4518 = vmatprep.subr.bf16.mxu0 0
      %4519 = vmatpush1.bf16.msra.mxu0 0
      %4520 = vmatprep.subr.bf16.mxu0 0
      %4521 = vmatpush1.bf16.msra.mxu0 0
      %4522 = vmatprep.subr.bf16.mxu0 0
      %4523 = vmatpush1.bf16.msra.mxu0 0
      %4524 = vmatprep.mubr.bf16.mxu0 0
      %4525 = vmatmul.mubr.bf16.gmra.mrb[0].mxu0 %v4443
      %v4526 = vpop.f32.mrb[0].mxu0
      %v4527 = vadd.f32 0.0, %v4526
      %v4528 = vpop.f32.mrb[0].mxu0
      %v4529 = vpop.f32.mrb[0].mxu0
      %v4530 = vpop.f32.mrb[0].mxu0
      %4531 = vdwg.mxu0
      %v4532 = vadd.f32 %v4272, %v4527
      %v4533 = vtanh.pop %v4532
      %v4534 = vsub.f32 1.0, %v4441
      %v4535 = vmul.f32 %v4534, %v4273
      %v4536 = vmul.f32 %v4441, %v4533
      %v4537 = vadd.f32 %v4535, %v4536
      %4538 = vst [vmem:[%s7] sm:$0xff] %v4537
      %v4539 = vpack.c.bf16 %v4537, %v4537
      %v4540 = vld [vmem:[%s1] sm:$0xff]
      %v4541 = vld [vmem:[%s1 + $0x8] sm:$0xf]
      %v4542 = vld [vmem:[%s1 + $0xc] sm:$0xff]
      %v4543 = vld [vmem:[%s1 + $0x14] sm:$0xf]
      %v4544 = vld [vmem:[%s1 + $0x18] sm:$0xff]
      %v4545 = vld [vmem:[%s1 + $0x20] sm:$0xf]
      %v4546 = vld [vmem:[%s1 + $0x24] sm:$0xff]
      %v4547 = vld [vmem:[%s1 + $0x2c] sm:$0xf]
      %v4548 = vld [vmem:[%s1 + $0x30] sm:$0xff]
      %v4549 = vld [vmem:[%s1 + $0x38] sm:$0xf]
      %v4550 = vld [vmem:[%s1 + $0x3c] sm:$0xff]
      %v4551 = vld [vmem:[%s1 + $0x44] sm:$0xf]
      %v4552 = vld [vmem:[%s1 + $0x48] sm:$0xff]
      %v4553 = vld [vmem:[%s1 + $0x50] sm:$0xf]
      %v4554 = vld [vmem:[%s1 + $0x54] sm:$0xff]
      %v4555 = vld [vmem:[%s1 + $0x5c] sm:$0xf]
      %v4556 = vld [vmem:[%s1 + $0x60] sm:$0xff]
      %v4557 = vld [vmem:[%s1 + $0x68] sm:$0xf]
      %v4558 = vld [vmem:[%s1 + $0x6c] sm:$0xff]
      %v4559 = vld [vmem:[%s1 + $0x74] sm:$0xf]
      %v4560 = vld [vmem:[%s1 + $0x78] sm:$0xff]
      %v4561 = vld [vmem:[%s1 + $0x80] sm:$0xf]
      %v4562 = vld [vmem:[%s1 + $0x84] sm:$0xff]
      %v4563 = vld [vmem:[%s1 + $0x8c] sm:$0xf]
      %v4564 = vld [vmem:[%s1 + $0x90] sm:$0xff]
      %v4565 = vld [vmem:[%s1 + $0x98] sm:$0xf]
      %v4566 = vld [vmem:[%s1 + $0x9c] sm:$0xff]
      %v4567 = vld [vmem:[%s1 + $0xa4] sm:$0xf]
      %v4568 = vld [vmem:[%s1 + $0xa8] sm:$0xff]
      %v4569 = vld [vmem:[%s1 + $0xb0] sm:$0xf]
      %v4570 = vld [vmem:[%s1 + $0xb4] sm:$0xff]
      %v4571 = vld [vmem:[%s1 + $0xbc] sm:$0xf]
      %v4572 = vld [vmem:[%s4] sm:$0x7]
      %v4574 = vlaneseq
      %v4575 = vshrl.u32 %v4574, 7
      %v4576 = vsub.s32 0, %v4575
      %v4577 = vrot.slane %v4572, %v4576
      %v4578 = vlaneseq
      %v4579 = vshrl.u32 %v4578, 7
      %v4580 = vsub.s32 1, %v4579
      %v4581 = vrot.slane %v4572, %v4580
      %v4582 = vlaneseq
      %v4583 = vshrl.u32 %v4582, 7
      %v4584 = vsub.s32 2, %v4583
      %v4585 = vrot.slane %v4572, %v4584
      %v4621 = vunpack.c.l.b16 %v4540
      %v4622 = vunpack.c.h.b16 %v4540
      %v4623 = vunpack.c.l.b16 %v4541
      %v4624 = vunpack.c.l.b16 %v4542
      %v4625 = vunpack.c.h.b16 %v4542
      %v4626 = vunpack.c.l.b16 %v4543
      %v4627 = vunpack.c.l.b16 %v4544
      %v4628 = vunpack.c.h.b16 %v4544
      %v4629 = vunpack.c.l.b16 %v4545
      %v4630 = vunpack.c.l.b16 %v4546
      %v4631 = vunpack.c.h.b16 %v4546
      %v4632 = vunpack.c.l.b16 %v4547
      %v4633 = vunpack.c.l.b16 %v4548
      %v4634 = vunpack.c.h.b16 %v4548
      %v4635 = vunpack.c.l.b16 %v4549
      %v4636 = vunpack.c.l.b16 %v4550
      %v4637 = vunpack.c.h.b16 %v4550
      %v4638 = vunpack.c.l.b16 %v4551
      %v4639 = vunpack.c.l.b16 %v4552
      %v4640 = vunpack.c.h.b16 %v4552
      %v4641 = vunpack.c.l.b16 %v4553
      %v4642 = vunpack.c.l.b16 %v4554
      %v4643 = vunpack.c.h.b16 %v4554
      %v4644 = vunpack.c.l.b16 %v4555
      %v4645 = vunpack.c.l.b16 %v4556
      %v4646 = vunpack.c.h.b16 %v4556
      %v4647 = vunpack.c.l.b16 %v4557
      %v4648 = vunpack.c.l.b16 %v4558
      %v4649 = vunpack.c.h.b16 %v4558
      %v4650 = vunpack.c.l.b16 %v4559
      %v4651 = vunpack.c.l.b16 %v4560
      %v4652 = vunpack.c.h.b16 %v4560
      %v4653 = vunpack.c.l.b16 %v4561
      %v4654 = vunpack.c.l.b16 %v4562
      %v4655 = vunpack.c.h.b16 %v4562
      %v4656 = vunpack.c.l.b16 %v4563
      %v4657 = vunpack.c.l.b16 %v4564
      %v4658 = vunpack.c.h.b16 %v4564
      %v4659 = vunpack.c.l.b16 %v4565
      %v4660 = vunpack.c.l.b16 %v4566
      %v4661 = vunpack.c.h.b16 %v4566
      %v4662 = vunpack.c.l.b16 %v4567
      %v4663 = vunpack.c.l.b16 %v4568
      %v4664 = vunpack.c.h.b16 %v4568
      %v4665 = vunpack.c.l.b16 %v4569
      %v4666 = vunpack.c.l.b16 %v4570
      %v4667 = vunpack.c.h.b16 %v4570
      %v4668 = vunpack.c.l.b16 %v4571
      %v4669 = vpack.c.b16 %v4624, %v4621
      %v4670 = vpack.c.b16 %v4625, %v4622
      %v4671 = vpack.c.b16 %v4626, %v4623
      %v4672 = vpack.c.b16 %v4630, %v4627
      %v4673 = vpack.c.b16 %v4631, %v4628
      %v4674 = vpack.c.b16 %v4632, %v4629
      %v4675 = vpack.c.b16 %v4636, %v4633
      %v4676 = vpack.c.b16 %v4637, %v4634
      %v4677 = vpack.c.b16 %v4638, %v4635
      %v4678 = vpack.c.b16 %v4642, %v4639
      %v4679 = vpack.c.b16 %v4643, %v4640
      %v4680 = vpack.c.b16 %v4644, %v4641
      %v4681 = vpack.c.b16 %v4648, %v4645
      %v4682 = vpack.c.b16 %v4649, %v4646
      %v4683 = vpack.c.b16 %v4650, %v4647
      %v4684 = vpack.c.b16 %v4654, %v4651
      %v4685 = vpack.c.b16 %v4655, %v4652
      %v4686 = vpack.c.b16 %v4656, %v4653
      %v4687 = vpack.c.b16 %v4660, %v4657
      %v4688 = vpack.c.b16 %v4661, %v4658
      %v4689 = vpack.c.b16 %v4662, %v4659
      %v4690 = vpack.c.b16 %v4666, %v4663
      %v4691 = vpack.c.b16 %v4667, %v4664
      %v4692 = vpack.c.b16 %v4668, %v4665
      %4717 = vmatprep.subr.bf16.mxu0 %v4670
      %4718 = vmatpush1.bf16.msra.mxu0 %v4669
      %4719 = vmatprep.subr.bf16.mxu0 %v4673
      %4720 = vmatpush1.bf16.msra.mxu0 %v4672
      %4721 = vmatprep.subr.bf16.mxu0 %v4676
      %4722 = vmatpush1.bf16.msra.mxu0 %v4675
      %4723 = vmatprep.subr.bf16.mxu0 %v4679
      %4724 = vmatpush1.bf16.msra.mxu0 %v4678
      %4725 = vmatprep.subr.bf16.mxu0 %v4682
      %4726 = vmatpush1.bf16.msra.mxu0 %v4681
      %4727 = vmatprep.subr.bf16.mxu0 %v4685
      %4728 = vmatpush1.bf16.msra.mxu0 %v4684
      %4729 = vmatprep.subr.bf16.mxu0 %v4688
      %4730 = vmatpush1.bf16.msra.mxu0 %v4687
      %4731 = vmatprep.subr.bf16.mxu0 %v4691
      %4732 = vmatpush1.bf16.msra.mxu0 %v4690
      %4733 = vmatprep.subr.bf16.mxu0 0
      %4734 = vmatpush1.bf16.msra.mxu0 0
      %4735 = vmatprep.subr.bf16.mxu0 0
      %4736 = vmatpush1.bf16.msra.mxu0 0
      %4737 = vmatprep.subr.bf16.mxu0 0
      %4738 = vmatpush1.bf16.msra.mxu0 0
      %4739 = vmatprep.subr.bf16.mxu0 0
      %4740 = vmatpush1.bf16.msra.mxu0 0
      %4741 = vmatprep.subr.bf16.mxu0 0
      %4742 = vmatpush1.bf16.msra.mxu0 0
      %4743 = vmatprep.subr.bf16.mxu0 0
      %4744 = vmatpush1.bf16.msra.mxu0 0
      %4745 = vmatprep.subr.bf16.mxu0 0
      %4746 = vmatpush1.bf16.msra.mxu0 0
      %4747 = vmatprep.subr.bf16.mxu0 0
      %4748 = vmatpush1.bf16.msra.mxu0 0
      %4749 = vmatprep.mubr.bf16.mxu0 0
      %4750 = vmatmul.mubr.bf16.gmra.mrb[0].mxu0 %v4539
      %v4751 = vpop.f32.mrb[0].mxu0
      %v4752 = vadd.f32 %v4577, %v4751
      %v4753 = vpop.f32.mrb[0].mxu0
      %v4754 = vadd.f32 %v4581, %v4753
      %v4755 = vpop.f32.mrb[0].mxu0
      %v4756 = vpop.f32.mrb[0].mxu0
      %4757 = vdwg.mxu0
      %4758 = vmatprep.subr.bf16.mxu0 0
      %4759 = vmatpush1.bf16.msra.mxu0 %v4671
      %4760 = vmatprep.subr.bf16.mxu0 0
      %4761 = vmatpush1.bf16.msra.mxu0 %v4674
      %4762 = vmatprep.subr.bf16.mxu0 0
      %4763 = vmatpush1.bf16.msra.mxu0 %v4677
      %4764 = vmatprep.subr.bf16.mxu0 0
      %4765 = vmatpush1.bf16.msra.mxu0 %v4680
      %4766 = vmatprep.subr.bf16.mxu0 0
      %4767 = vmatpush1.bf16.msra.mxu0 %v4683
      %4768 = vmatprep.subr.bf16.mxu0 0
      %4769 = vmatpush1.bf16.msra.mxu0 %v4686
      %4770 = vmatprep.subr.bf16.mxu0 0
      %4771 = vmatpush1.bf16.msra.mxu0 %v4689
      %4772 = vmatprep.subr.bf16.mxu0 0
      %4773 = vmatpush1.bf16.msra.mxu0 %v4692
      %4774 = vmatprep.subr.bf16.mxu0 0
      %4775 = vmatpush1.bf16.msra.mxu0 0
      %4776 = vmatprep.subr.bf16.mxu0 0
      %4777 = vmatpush1.bf16.msra.mxu0 0
      %4778 = vmatprep.subr.bf16.mxu0 0
      %4779 = vmatpush1.bf16.msra.mxu0 0
      %4780 = vmatprep.subr.bf16.mxu0 0
      %4781 = vmatpush1.bf16.msra.mxu0 0
      %4782 = vmatprep.subr.bf16.mxu0 0
      %4783 = vmatpush1.bf16.msra.mxu0 0
      %4784 = vmatprep.subr.bf16.mxu0 0
      %4785 = vmatpush1.bf16.msra.mxu0 0
      %4786 = vmatprep.subr.bf16.mxu0 0
      %4787 = vmatpush1.bf16.msra.mxu0 0
      %4788 = vmatprep.subr.bf16.mxu0 0
      %4789 = vmatpush1.bf16.msra.mxu0 0
      %4790 = vmatprep.mubr.bf16.mxu0 0
      %4791 = vmatmul.mubr.bf16.gmra.mrb[0].mxu0 %v4539
      %v4792 = vpop.f32.mrb[0].mxu0
      %v4793 = vadd.f32 %v4585, %v4792
      %v4794 = vpop.f32.mrb[0].mxu0
      %v4795 = vpop.f32.mrb[0].mxu0
      %v4796 = vpop.f32.mrb[0].mxu0
      %4797 = vdwg.mxu0
      %v4798 = vld [vmem:[%s820] sm:$0xff]
      %v4799 = vld [vmem:[%s822] sm:$0xff]
      %v4800 = vld [vmem:[%s822 + $0x8] sm:$0xff]
      %v4801 = vld [vmem:[%s822 + $0x10] sm:$0xff]
      %v4802 = vld [vmem:[%s822 + $0x18] sm:$0xff]
      %v4803 = vld [vmem:[%s822 + $0x20] sm:$0xff]
      %v4804 = vld [vmem:[%s822 + $0x28] sm:$0xff]
      %v4805 = vld [vmem:[%s822 + $0x30] sm:$0xff]
      %v4806 = vld [vmem:[%s822 + $0x38] sm:$0xff]
      %v4807 = vld [vmem:[%s822 + $0x40] sm:$0xff]
      %v4808 = vld [vmem:[%s822 + $0x48] sm:$0xff]
      %v4809 = vld [vmem:[%s822 + $0x50] sm:$0xff]
      %v4810 = vld [vmem:[%s822 + $0x58] sm:$0xff]
      %v4811 = vld [vmem:[%s822 + $0x60] sm:$0xff]
      %v4812 = vld [vmem:[%s822 + $0x68] sm:$0xff]
      %v4813 = vld [vmem:[%s822 + $0x70] sm:$0xff]
      %v4814 = vld [vmem:[%s822 + $0x78] sm:$0xff]
      %v4815 = vld [vmem:[%s839] sm:$0xf]
      %v4816 = vld [vmem:[%s839 + $0x4] sm:$0xf]
      %v4817 = vld [vmem:[%s839 + $0x8] sm:$0xf]
      %v4818 = vld [vmem:[%s839 + $0xc] sm:$0xf]
      %v4819 = vld [vmem:[%s839 + $0x10] sm:$0xf]
      %v4820 = vld [vmem:[%s839 + $0x14] sm:$0xf]
      %v4821 = vld [vmem:[%s839 + $0x18] sm:$0xf]
      %v4822 = vld [vmem:[%s839 + $0x1c] sm:$0xf]
      %v4823 = vld [vmem:[%s839 + $0x20] sm:$0xf]
      %v4824 = vld [vmem:[%s839 + $0x24] sm:$0xf]
      %v4825 = vld [vmem:[%s839 + $0x28] sm:$0xf]
      %v4826 = vld [vmem:[%s839 + $0x2c] sm:$0xf]
      %v4827 = vld [vmem:[%s839 + $0x30] sm:$0xf]
      %v4828 = vld [vmem:[%s839 + $0x34] sm:$0xf]
      %v4829 = vld [vmem:[%s839 + $0x38] sm:$0xf]
      %v4830 = vld [vmem:[%s839 + $0x3c] sm:$0xf]
      %v4831 = vpack.c.bf16 %v4798, %v4798
      %v4848 = vunpack.c.l.b16 %v4799
      %v4849 = vunpack.c.h.b16 %v4799
      %v4850 = vunpack.c.l.b16 %v4800
      %v4851 = vunpack.c.h.b16 %v4800
      %v4852 = vunpack.c.l.b16 %v4801
      %v4853 = vunpack.c.h.b16 %v4801
      %v4854 = vunpack.c.l.b16 %v4802
      %v4855 = vunpack.c.h.b16 %v4802
      %v4856 = vunpack.c.l.b16 %v4803
      %v4857 = vunpack.c.h.b16 %v4803
      %v4858 = vunpack.c.l.b16 %v4804
      %v4859 = vunpack.c.h.b16 %v4804
      %v4860 = vunpack.c.l.b16 %v4805
      %v4861 = vunpack.c.h.b16 %v4805
      %v4862 = vunpack.c.l.b16 %v4806
      %v4863 = vunpack.c.h.b16 %v4806
      %v4864 = vunpack.c.l.b16 %v4807
      %v4865 = vunpack.c.h.b16 %v4807
      %v4866 = vunpack.c.l.b16 %v4808
      %v4867 = vunpack.c.h.b16 %v4808
      %v4868 = vunpack.c.l.b16 %v4809
      %v4869 = vunpack.c.h.b16 %v4809
      %v4870 = vunpack.c.l.b16 %v4810
      %v4871 = vunpack.c.h.b16 %v4810
      %v4872 = vunpack.c.l.b16 %v4811
      %v4873 = vunpack.c.h.b16 %v4811
      %v4874 = vunpack.c.l.b16 %v4812
      %v4875 = vunpack.c.h.b16 %v4812
      %v4876 = vunpack.c.l.b16 %v4813
      %v4877 = vunpack.c.h.b16 %v4813
      %v4878 = vunpack.c.l.b16 %v4814
      %v4879 = vunpack.c.h.b16 %v4814
      %v4880 = vpack.c.b16 %v4850, %v4848
      %v4881 = vpack.c.b16 %v4851, %v4849
      %v4882 = vpack.c.b16 %v4854, %v4852
      %v4883 = vpack.c.b16 %v4855, %v4853
      %v4884 = vpack.c.b16 %v4858, %v4856
      %v4885 = vpack.c.b16 %v4859, %v4857
      %v4886 = vpack.c.b16 %v4862, %v4860
      %v4887 = vpack.c.b16 %v4863, %v4861
      %v4888 = vpack.c.b16 %v4866, %v4864
      %v4889 = vpack.c.b16 %v4867, %v4865
      %v4890 = vpack.c.b16 %v4870, %v4868
      %v4891 = vpack.c.b16 %v4871, %v4869
      %v4892 = vpack.c.b16 %v4874, %v4872
      %v4893 = vpack.c.b16 %v4875, %v4873
      %v4894 = vpack.c.b16 %v4878, %v4876
      %v4895 = vpack.c.b16 %v4879, %v4877
      %4912 = vmatprep.subr.bf16.mxu0 %v4881
      %4913 = vmatpush1.bf16.msra.mxu0 %v4880
      %4914 = vmatprep.subr.bf16.mxu0 %v4883
      %4915 = vmatpush1.bf16.msra.mxu0 %v4882
      %4916 = vmatprep.subr.bf16.mxu0 %v4885
      %4917 = vmatpush1.bf16.msra.mxu0 %v4884
      %4918 = vmatprep.subr.bf16.mxu0 %v4887
      %4919 = vmatpush1.bf16.msra.mxu0 %v4886
      %4920 = vmatprep.subr.bf16.mxu0 %v4889
      %4921 = vmatpush1.bf16.msra.mxu0 %v4888
      %4922 = vmatprep.subr.bf16.mxu0 %v4891
      %4923 = vmatpush1.bf16.msra.mxu0 %v4890
      %4924 = vmatprep.subr.bf16.mxu0 %v4893
      %4925 = vmatpush1.bf16.msra.mxu0 %v4892
      %4926 = vmatprep.subr.bf16.mxu0 %v4895
      %4927 = vmatpush1.bf16.msra.mxu0 %v4894
      %4928 = vmatprep.subr.bf16.mxu0 0
      %4929 = vmatpush1.bf16.msra.mxu0 0
      %4930 = vmatprep.subr.bf16.mxu0 0
      %4931 = vmatpush1.bf16.msra.mxu0 0
      %4932 = vmatprep.subr.bf16.mxu0 0
      %4933 = vmatpush1.bf16.msra.mxu0 0
      %4934 = vmatprep.subr.bf16.mxu0 0
      %4935 = vmatpush1.bf16.msra.mxu0 0
      %4936 = vmatprep.subr.bf16.mxu0 0
      %4937 = vmatpush1.bf16.msra.mxu0 0
      %4938 = vmatprep.subr.bf16.mxu0 0
      %4939 = vmatpush1.bf16.msra.mxu0 0
      %4940 = vmatprep.subr.bf16.mxu0 0
      %4941 = vmatpush1.bf16.msra.mxu0 0
      %4942 = vmatprep.subr.bf16.mxu0 0
      %4943 = vmatpush1.bf16.msra.mxu0 0
      %4944 = vmatprep.mubr.bf16.mxu0 0
      %4945 = vmatmul.mubr.bf16.gmra.mrb[0].mxu0 %v4831
      %v4946 = vpop.f32.mrb[0].mxu0
      %v4947 = vadd.f32 0.0, %v4946
      %v4948 = vpop.f32.mrb[0].mxu0
      %v4949 = vadd.f32 0.0, %v4948
      %v4950 = vpop.f32.mrb[0].mxu0
      %v4951 = vpop.f32.mrb[0].mxu0
      %4952 = vdwg.mxu0
      %v4953 = vadd.f32 %v4752, %v4947
      %v4954 = vxor.u32 %v4953, 2147483648
      %v4955 = vmul.f32 %v4954, 1.442695
      %v4956 = vpow.pop %v4955
      %v4957 = vadd.f32 %v4956, 1.0
      %v4958 = vrcp.pop %v4957
      %v4959 = vmul.f32 1.0, %v4958
      %v4960 = vadd.f32 %v4754, %v4949
      %v4961 = vxor.u32 %v4960, 2147483648
      %v4962 = vmul.f32 %v4961, 1.442695
      %v4963 = vpow.pop %v4962
      %v4964 = vadd.f32 %v4963, 1.0
      %v4965 = vrcp.pop %v4964
      %v4966 = vmul.f32 1.0, %v4965
      %v4967 = vmul.f32 %v4959, %v4798
      %v4968 = vpack.c.bf16 %v4967, %v4967
      %v4985 = vunpack.c.l.b16 %v4815
      %v4986 = vunpack.c.l.b16 %v4816
      %v4987 = vunpack.c.l.b16 %v4817
      %v4988 = vunpack.c.l.b16 %v4818
      %v4989 = vunpack.c.l.b16 %v4819
      %v4990 = vunpack.c.l.b16 %v4820
      %v4991 = vunpack.c.l.b16 %v4821
      %v4992 = vunpack.c.l.b16 %v4822
      %v4993 = vunpack.c.l.b16 %v4823
      %v4994 = vunpack.c.l.b16 %v4824
      %v4995 = vunpack.c.l.b16 %v4825
      %v4996 = vunpack.c.l.b16 %v4826
      %v4997 = vunpack.c.l.b16 %v4827
      %v4998 = vunpack.c.l.b16 %v4828
      %v4999 = vunpack.c.l.b16 %v4829
      %v5000 = vunpack.c.l.b16 %v4830
      %v5001 = vpack.c.b16 %v4986, %v4985
      %v5002 = vpack.c.b16 %v4988, %v4987
      %v5003 = vpack.c.b16 %v4990, %v4989
      %v5004 = vpack.c.b16 %v4992, %v4991
      %v5005 = vpack.c.b16 %v4994, %v4993
      %v5006 = vpack.c.b16 %v4996, %v4995
      %v5007 = vpack.c.b16 %v4998, %v4997
      %v5008 = vpack.c.b16 %v5000, %v4999
      %5017 = vmatprep.subr.bf16.mxu0 0
      %5018 = vmatpush1.bf16.msra.mxu0 %v5001
      %5019 = vmatprep.subr.bf16.mxu0 0
      %5020 = vmatpush1.bf16.msra.mxu0 %v5002
      %5021 = vmatprep.subr.bf16.mxu0 0
      %5022 = vmatpush1.bf16.msra.mxu0 %v5003
      %5023 = vmatprep.subr.bf16.mxu0 0
      %5024 = vmatpush1.bf16.msra.mxu0 %v5004
      %5025 = vmatprep.subr.bf16.mxu0 0
      %5026 = vmatpush1.bf16.msra.mxu0 %v5005
      %5027 = vmatprep.subr.bf16.mxu0 0
      %5028 = vmatpush1.bf16.msra.mxu0 %v5006
      %5029 = vmatprep.subr.bf16.mxu0 0
      %5030 = vmatpush1.bf16.msra.mxu0 %v5007
      %5031 = vmatprep.subr.bf16.mxu0 0
      %5032 = vmatpush1.bf16.msra.mxu0 %v5008
      %5033 = vmatprep.subr.bf16.mxu0 0
      %5034 = vmatpush1.bf16.msra.mxu0 0
      %5035 = vmatprep.subr.bf16.mxu0 0
      %5036 = vmatpush1.bf16.msra.mxu0 0
      %5037 = vmatprep.subr.bf16.mxu0 0
      %5038 = vmatpush1.bf16.msra.mxu0 0
      %5039 = vmatprep.subr.bf16.mxu0 0
      %5040 = vmatpush1.bf16.msra.mxu0 0
      %5041 = vmatprep.subr.bf16.mxu0 0
      %5042 = vmatpush1.bf16.msra.mxu0 0
      %5043 = vmatprep.subr.bf16.mxu0 0
      %5044 = vmatpush1.bf16.msra.mxu0 0
      %5045 = vmatprep.subr.bf16.mxu0 0
      %5046 = vmatpush1.bf16.msra.mxu0 0
      %5047 = vmatprep.subr.bf16.mxu0 0
      %5048 = vmatpush1.bf16.msra.mxu0 0
      %5049 = vmatprep.mubr.bf16.mxu0 0
      %5050 = vmatmul.mubr.bf16.gmra.mrb[0].mxu0 %v4968
      %v5051 = vpop.f32.mrb[0].mxu0
      %v5052 = vadd.f32 0.0, %v5051
      %v5053 = vpop.f32.mrb[0].mxu0
      %v5054 = vpop.f32.mrb[0].mxu0
      %v5055 = vpop.f32.mrb[0].mxu0
      %5056 = vdwg.mxu0
      %v5057 = vadd.f32 %v4793, %v5052
      %v5058 = vtanh.pop %v5057
      %v5059 = vsub.f32 1.0, %v4966
      %v5060 = vmul.f32 %v5059, %v4798
      %v5061 = vmul.f32 %v4966, %v5058
      %v5062 = vadd.f32 %v5060, %v5061
      %5063 = vst [vmem:[%s820] sm:$0xff] %v5062
      %5064 = vst [vmem:[%s281 + $0x28] sm:$0xff] %v5062
      %v5065 = vld [vmem:[%s275 + $0x90] sm:$0xff]
      %v5066 = vld [vmem:[%s275 + $0x98] sm:$0xff]
      %v5067 = vld [vmem:[%s275 + $0xa0] sm:$0xff]
      %v5068 = vld [vmem:[%s7] sm:$0xff]
      %v5069 = vld [vmem:[%s2] sm:$0xff]
      %v5070 = vld [vmem:[%s2 + $0x8] sm:$0xff]
      %v5071 = vld [vmem:[%s2 + $0x10] sm:$0xff]
      %v5072 = vld [vmem:[%s2 + $0x18] sm:$0xff]
      %v5073 = vld [vmem:[%s2 + $0x20] sm:$0xff]
      %v5074 = vld [vmem:[%s2 + $0x28] sm:$0xff]
      %v5075 = vld [vmem:[%s2 + $0x30] sm:$0xff]
      %v5076 = vld [vmem:[%s2 + $0x38] sm:$0xff]
      %v5077 = vld [vmem:[%s2 + $0x40] sm:$0xff]
      %v5078 = vld [vmem:[%s2 + $0x48] sm:$0xff]
      %v5079 = vld [vmem:[%s2 + $0x50] sm:$0xff]
      %v5080 = vld [vmem:[%s2 + $0x58] sm:$0xff]
      %v5081 = vld [vmem:[%s2 + $0x60] sm:$0xff]
      %v5082 = vld [vmem:[%s2 + $0x68] sm:$0xff]
      %v5083 = vld [vmem:[%s2 + $0x70] sm:$0xff]
      %v5084 = vld [vmem:[%s2 + $0x78] sm:$0xff]
      %v5085 = vld [vmem:[%s3] sm:$0xf]
      %v5086 = vld [vmem:[%s3 + $0x4] sm:$0xf]
      %v5087 = vld [vmem:[%s3 + $0x8] sm:$0xf]
      %v5088 = vld [vmem:[%s3 + $0xc] sm:$0xf]
      %v5089 = vld [vmem:[%s3 + $0x10] sm:$0xf]
      %v5090 = vld [vmem:[%s3 + $0x14] sm:$0xf]
      %v5091 = vld [vmem:[%s3 + $0x18] sm:$0xf]
      %v5092 = vld [vmem:[%s3 + $0x1c] sm:$0xf]
      %v5093 = vld [vmem:[%s3 + $0x20] sm:$0xf]
      %v5094 = vld [vmem:[%s3 + $0x24] sm:$0xf]
      %v5095 = vld [vmem:[%s3 + $0x28] sm:$0xf]
      %v5096 = vld [vmem:[%s3 + $0x2c] sm:$0xf]
      %v5097 = vld [vmem:[%s3 + $0x30] sm:$0xf]
      %v5098 = vld [vmem:[%s3 + $0x34] sm:$0xf]
      %v5099 = vld [vmem:[%s3 + $0x38] sm:$0xf]
      %v5100 = vld [vmem:[%s3 + $0x3c] sm:$0xf]
      %v5101 = vpack.c.bf16 %v5068, %v5068
      %v5118 = vunpack.c.l.b16 %v5069
      %v5119 = vunpack.c.h.b16 %v5069
      %v5120 = vunpack.c.l.b16 %v5070
      %v5121 = vunpack.c.h.b16 %v5070
      %v5122 = vunpack.c.l.b16 %v5071
      %v5123 = vunpack.c.h.b16 %v5071
      %v5124 = vunpack.c.l.b16 %v5072
      %v5125 = vunpack.c.h.b16 %v5072
      %v5126 = vunpack.c.l.b16 %v5073
      %v5127 = vunpack.c.h.b16 %v5073
      %v5128 = vunpack.c.l.b16 %v5074
      %v5129 = vunpack.c.h.b16 %v5074
      %v5130 = vunpack.c.l.b16 %v5075
      %v5131 = vunpack.c.h.b16 %v5075
      %v5132 = vunpack.c.l.b16 %v5076
      %v5133 = vunpack.c.h.b16 %v5076
      %v5134 = vunpack.c.l.b16 %v5077
      %v5135 = vunpack.c.h.b16 %v5077
      %v5136 = vunpack.c.l.b16 %v5078
      %v5137 = vunpack.c.h.b16 %v5078
      %v5138 = vunpack.c.l.b16 %v5079
      %v5139 = vunpack.c.h.b16 %v5079
      %v5140 = vunpack.c.l.b16 %v5080
      %v5141 = vunpack.c.h.b16 %v5080
      %v5142 = vunpack.c.l.b16 %v5081
      %v5143 = vunpack.c.h.b16 %v5081
      %v5144 = vunpack.c.l.b16 %v5082
      %v5145 = vunpack.c.h.b16 %v5082
      %v5146 = vunpack.c.l.b16 %v5083
      %v5147 = vunpack.c.h.b16 %v5083
      %v5148 = vunpack.c.l.b16 %v5084
      %v5149 = vunpack.c.h.b16 %v5084
      %v5150 = vpack.c.b16 %v5120, %v5118
      %v5151 = vpack.c.b16 %v5121, %v5119
      %v5152 = vpack.c.b16 %v5124, %v5122
      %v5153 = vpack.c.b16 %v5125, %v5123
      %v5154 = vpack.c.b16 %v5128, %v5126
      %v5155 = vpack.c.b16 %v5129, %v5127
      %v5156 = vpack.c.b16 %v5132, %v5130
      %v5157 = vpack.c.b16 %v5133, %v5131
      %v5158 = vpack.c.b16 %v5136, %v5134
      %v5159 = vpack.c.b16 %v5137, %v5135
      %v5160 = vpack.c.b16 %v5140, %v5138
      %v5161 = vpack.c.b16 %v5141, %v5139
      %v5162 = vpack.c.b16 %v5144, %v5142
      %v5163 = vpack.c.b16 %v5145, %v5143
      %v5164 = vpack.c.b16 %v5148, %v5146
      %v5165 = vpack.c.b16 %v5149, %v5147
      %5182 = vmatprep.subr.bf16.mxu0 %v5151
      %5183 = vmatpush1.bf16.msra.mxu0 %v5150
      %5184 = vmatprep.subr.bf16.mxu0 %v5153
      %5185 = vmatpush1.bf16.msra.mxu0 %v5152
      %5186 = vmatprep.subr.bf16.mxu0 %v5155
      %5187 = vmatpush1.bf16.msra.mxu0 %v5154
      %5188 = vmatprep.subr.bf16.mxu0 %v5157
      %5189 = vmatpush1.bf16.msra.mxu0 %v5156
      %5190 = vmatprep.subr.bf16.mxu0 %v5159
      %5191 = vmatpush1.bf16.msra.mxu0 %v5158
      %5192 = vmatprep.subr.bf16.mxu0 %v5161
      %5193 = vmatpush1.bf16.msra.mxu0 %v5160
      %5194 = vmatprep.subr.bf16.mxu0 %v5163
      %5195 = vmatpush1.bf16.msra.mxu0 %v5162
      %5196 = vmatprep.subr.bf16.mxu0 %v5165
      %5197 = vmatpush1.bf16.msra.mxu0 %v5164
      %5198 = vmatprep.subr.bf16.mxu0 0
      %5199 = vmatpush1.bf16.msra.mxu0 0
      %5200 = vmatprep.subr.bf16.mxu0 0
      %5201 = vmatpush1.bf16.msra.mxu0 0
      %5202 = vmatprep.subr.bf16.mxu0 0
      %5203 = vmatpush1.bf16.msra.mxu0 0
      %5204 = vmatprep.subr.bf16.mxu0 0
      %5205 = vmatpush1.bf16.msra.mxu0 0
      %5206 = vmatprep.subr.bf16.mxu0 0
      %5207 = vmatpush1.bf16.msra.mxu0 0
      %5208 = vmatprep.subr.bf16.mxu0 0
      %5209 = vmatpush1.bf16.msra.mxu0 0
      %5210 = vmatprep.subr.bf16.mxu0 0
      %5211 = vmatpush1.bf16.msra.mxu0 0
      %5212 = vmatprep.subr.bf16.mxu0 0
      %5213 = vmatpush1.bf16.msra.mxu0 0
      %5214 = vmatprep.mubr.bf16.mxu0 0
      %5215 = vmatmul.mubr.bf16.gmra.mrb[0].mxu0 %v5101
      %v5216 = vpop.f32.mrb[0].mxu0
      %v5217 = vadd.f32 0.0, %v5216
      %v5218 = vpop.f32.mrb[0].mxu0
      %v5219 = vadd.f32 0.0, %v5218
      %v5220 = vpop.f32.mrb[0].mxu0
      %v5221 = vpop.f32.mrb[0].mxu0
      %5222 = vdwg.mxu0
      %v5223 = vadd.f32 %v5065, %v5217
      %v5224 = vxor.u32 %v5223, 2147483648
      %v5225 = vmul.f32 %v5224, 1.442695
      %v5226 = vpow.pop %v5225
      %v5227 = vadd.f32 %v5226, 1.0
      %v5228 = vrcp.pop %v5227
      %v5229 = vmul.f32 1.0, %v5228
      %v5230 = vadd.f32 %v5066, %v5219
      %v5231 = vxor.u32 %v5230, 2147483648
      %v5232 = vmul.f32 %v5231, 1.442695
      %v5233 = vpow.pop %v5232
      %v5234 = vadd.f32 %v5233, 1.0
      %v5235 = vrcp.pop %v5234
      %v5236 = vmul.f32 1.0, %v5235
      %v5237 = vmul.f32 %v5229, %v5068
      %v5238 = vpack.c.bf16 %v5237, %v5237
      %v5255 = vunpack.c.l.b16 %v5085
      %v5256 = vunpack.c.l.b16 %v5086
      %v5257 = vunpack.c.l.b16 %v5087
      %v5258 = vunpack.c.l.b16 %v5088
      %v5259 = vunpack.c.l.b16 %v5089
      %v5260 = vunpack.c.l.b16 %v5090
      %v5261 = vunpack.c.l.b16 %v5091
      %v5262 = vunpack.c.l.b16 %v5092
      %v5263 = vunpack.c.l.b16 %v5093
      %v5264 = vunpack.c.l.b16 %v5094
      %v5265 = vunpack.c.l.b16 %v5095
      %v5266 = vunpack.c.l.b16 %v5096
      %v5267 = vunpack.c.l.b16 %v5097
      %v5268 = vunpack.c.l.b16 %v5098
      %v5269 = vunpack.c.l.b16 %v5099
      %v5270 = vunpack.c.l.b16 %v5100
      %v5271 = vpack.c.b16 %v5256, %v5255
      %v5272 = vpack.c.b16 %v5258, %v5257
      %v5273 = vpack.c.b16 %v5260, %v5259
      %v5274 = vpack.c.b16 %v5262, %v5261
      %v5275 = vpack.c.b16 %v5264, %v5263
      %v5276 = vpack.c.b16 %v5266, %v5265
      %v5277 = vpack.c.b16 %v5268, %v5267
      %v5278 = vpack.c.b16 %v5270, %v5269
      %5287 = vmatprep.subr.bf16.mxu0 0
      %5288 = vmatpush1.bf16.msra.mxu0 %v5271
      %5289 = vmatprep.subr.bf16.mxu0 0
      %5290 = vmatpush1.bf16.msra.mxu0 %v5272
      %5291 = vmatprep.subr.bf16.mxu0 0
      %5292 = vmatpush1.bf16.msra.mxu0 %v5273
      %5293 = vmatprep.subr.bf16.mxu0 0
      %5294 = vmatpush1.bf16.msra.mxu0 %v5274
      %5295 = vmatprep.subr.bf16.mxu0 0
      %5296 = vmatpush1.bf16.msra.mxu0 %v5275
      %5297 = vmatprep.subr.bf16.mxu0 0
      %5298 = vmatpush1.bf16.msra.mxu0 %v5276
      %5299 = vmatprep.subr.bf16.mxu0 0
      %5300 = vmatpush1.bf16.msra.mxu0 %v5277
      %5301 = vmatprep.subr.bf16.mxu0 0
      %5302 = vmatpush1.bf16.msra.mxu0 %v5278
      %5303 = vmatprep.subr.bf16.mxu0 0
      %5304 = vmatpush1.bf16.msra.mxu0 0
      %5305 = vmatprep.subr.bf16.mxu0 0
      %5306 = vmatpush1.bf16.msra.mxu0 0
      %5307 = vmatprep.subr.bf16.mxu0 0
      %5308 = vmatpush1.bf16.msra.mxu0 0
      %5309 = vmatprep.subr.bf16.mxu0 0
      %5310 = vmatpush1.bf16.msra.mxu0 0
      %5311 = vmatprep.subr.bf16.mxu0 0
      %5312 = vmatpush1.bf16.msra.mxu0 0
      %5313 = vmatprep.subr.bf16.mxu0 0
      %5314 = vmatpush1.bf16.msra.mxu0 0
      %5315 = vmatprep.subr.bf16.mxu0 0
      %5316 = vmatpush1.bf16.msra.mxu0 0
      %5317 = vmatprep.subr.bf16.mxu0 0
      %5318 = vmatpush1.bf16.msra.mxu0 0
      %5319 = vmatprep.mubr.bf16.mxu0 0
      %5320 = vmatmul.mubr.bf16.gmra.mrb[0].mxu0 %v5238
      %v5321 = vpop.f32.mrb[0].mxu0
      %v5322 = vadd.f32 0.0, %v5321
      %v5323 = vpop.f32.mrb[0].mxu0
      %v5324 = vpop.f32.mrb[0].mxu0
      %v5325 = vpop.f32.mrb[0].mxu0
      %5326 = vdwg.mxu0
      %v5327 = vadd.f32 %v5067, %v5322
      %v5328 = vtanh.pop %v5327
      %v5329 = vsub.f32 1.0, %v5236
      %v5330 = vmul.f32 %v5329, %v5068
      %v5331 = vmul.f32 %v5236, %v5328
      %v5332 = vadd.f32 %v5330, %v5331
      %5333 = vst [vmem:[%s7] sm:$0xff] %v5332
      %v5334 = vpack.c.bf16 %v5332, %v5332
      %v5335 = vld [vmem:[%s1] sm:$0xff]
      %v5336 = vld [vmem:[%s1 + $0x8] sm:$0xf]
      %v5337 = vld [vmem:[%s1 + $0xc] sm:$0xff]
      %v5338 = vld [vmem:[%s1 + $0x14] sm:$0xf]
      %v5339 = vld [vmem:[%s1 + $0x18] sm:$0xff]
      %v5340 = vld [vmem:[%s1 + $0x20] sm:$0xf]
      %v5341 = vld [vmem:[%s1 + $0x24] sm:$0xff]
      %v5342 = vld [vmem:[%s1 + $0x2c] sm:$0xf]
      %v5343 = vld [vmem:[%s1 + $0x30] sm:$0xff]
      %v5344 = vld [vmem:[%s1 + $0x38] sm:$0xf]
      %v5345 = vld [vmem:[%s1 + $0x3c] sm:$0xff]
      %v5346 = vld [vmem:[%s1 + $0x44] sm:$0xf]
      %v5347 = vld [vmem:[%s1 + $0x48] sm:$0xff]
      %v5348 = vld [vmem:[%s1 + $0x50] sm:$0xf]
      %v5349 = vld [vmem:[%s1 + $0x54] sm:$0xff]
      %v5350 = vld [vmem:[%s1 + $0x5c] sm:$0xf]
      %v5351 = vld [vmem:[%s1 + $0x60] sm:$0xff]
      %v5352 = vld [vmem:[%s1 + $0x68] sm:$0xf]
      %v5353 = vld [vmem:[%s1 + $0x6c] sm:$0xff]
      %v5354 = vld [vmem:[%s1 + $0x74] sm:$0xf]
      %v5355 = vld [vmem:[%s1 + $0x78] sm:$0xff]
      %v5356 = vld [vmem:[%s1 + $0x80] sm:$0xf]
      %v5357 = vld [vmem:[%s1 + $0x84] sm:$0xff]
      %v5358 = vld [vmem:[%s1 + $0x8c] sm:$0xf]
      %v5359 = vld [vmem:[%s1 + $0x90] sm:$0xff]
      %v5360 = vld [vmem:[%s1 + $0x98] sm:$0xf]
      %v5361 = vld [vmem:[%s1 + $0x9c] sm:$0xff]
      %v5362 = vld [vmem:[%s1 + $0xa4] sm:$0xf]
      %v5363 = vld [vmem:[%s1 + $0xa8] sm:$0xff]
      %v5364 = vld [vmem:[%s1 + $0xb0] sm:$0xf]
      %v5365 = vld [vmem:[%s1 + $0xb4] sm:$0xff]
      %v5366 = vld [vmem:[%s1 + $0xbc] sm:$0xf]
      %v5367 = vld [vmem:[%s4] sm:$0x7]
      %v5369 = vlaneseq
      %v5370 = vshrl.u32 %v5369, 7
      %v5371 = vsub.s32 0, %v5370
      %v5372 = vrot.slane %v5367, %v5371
      %v5373 = vlaneseq
      %v5374 = vshrl.u32 %v5373, 7
      %v5375 = vsub.s32 1, %v5374
      %v5376 = vrot.slane %v5367, %v5375
      %v5377 = vlaneseq
      %v5378 = vshrl.u32 %v5377, 7
      %v5379 = vsub.s32 2, %v5378
      %v5380 = vrot.slane %v5367, %v5379
      %v5416 = vunpack.c.l.b16 %v5335
      %v5417 = vunpack.c.h.b16 %v5335
      %v5418 = vunpack.c.l.b16 %v5336
      %v5419 = vunpack.c.l.b16 %v5337
      %v5420 = vunpack.c.h.b16 %v5337
      %v5421 = vunpack.c.l.b16 %v5338
      %v5422 = vunpack.c.l.b16 %v5339
      %v5423 = vunpack.c.h.b16 %v5339
      %v5424 = vunpack.c.l.b16 %v5340
      %v5425 = vunpack.c.l.b16 %v5341
      %v5426 = vunpack.c.h.b16 %v5341
      %v5427 = vunpack.c.l.b16 %v5342
      %v5428 = vunpack.c.l.b16 %v5343
      %v5429 = vunpack.c.h.b16 %v5343
      %v5430 = vunpack.c.l.b16 %v5344
      %v5431 = vunpack.c.l.b16 %v5345
      %v5432 = vunpack.c.h.b16 %v5345
      %v5433 = vunpack.c.l.b16 %v5346
      %v5434 = vunpack.c.l.b16 %v5347
      %v5435 = vunpack.c.h.b16 %v5347
      %v5436 = vunpack.c.l.b16 %v5348
      %v5437 = vunpack.c.l.b16 %v5349
      %v5438 = vunpack.c.h.b16 %v5349
      %v5439 = vunpack.c.l.b16 %v5350
      %v5440 = vunpack.c.l.b16 %v5351
      %v5441 = vunpack.c.h.b16 %v5351
      %v5442 = vunpack.c.l.b16 %v5352
      %v5443 = vunpack.c.l.b16 %v5353
      %v5444 = vunpack.c.h.b16 %v5353
      %v5445 = vunpack.c.l.b16 %v5354
      %v5446 = vunpack.c.l.b16 %v5355
      %v5447 = vunpack.c.h.b16 %v5355
      %v5448 = vunpack.c.l.b16 %v5356
      %v5449 = vunpack.c.l.b16 %v5357
      %v5450 = vunpack.c.h.b16 %v5357
      %v5451 = vunpack.c.l.b16 %v5358
      %v5452 = vunpack.c.l.b16 %v5359
      %v5453 = vunpack.c.h.b16 %v5359
      %v5454 = vunpack.c.l.b16 %v5360
      %v5455 = vunpack.c.l.b16 %v5361
      %v5456 = vunpack.c.h.b16 %v5361
      %v5457 = vunpack.c.l.b16 %v5362
      %v5458 = vunpack.c.l.b16 %v5363
      %v5459 = vunpack.c.h.b16 %v5363
      %v5460 = vunpack.c.l.b16 %v5364
      %v5461 = vunpack.c.l.b16 %v5365
      %v5462 = vunpack.c.h.b16 %v5365
      %v5463 = vunpack.c.l.b16 %v5366
      %v5464 = vpack.c.b16 %v5419, %v5416
      %v5465 = vpack.c.b16 %v5420, %v5417
      %v5466 = vpack.c.b16 %v5421, %v5418
      %v5467 = vpack.c.b16 %v5425, %v5422
      %v5468 = vpack.c.b16 %v5426, %v5423
      %v5469 = vpack.c.b16 %v5427, %v5424
      %v5470 = vpack.c.b16 %v5431, %v5428
      %v5471 = vpack.c.b16 %v5432, %v5429
      %v5472 = vpack.c.b16 %v5433, %v5430
      %v5473 = vpack.c.b16 %v5437, %v5434
      %v5474 = vpack.c.b16 %v5438, %v5435
      %v5475 = vpack.c.b16 %v5439, %v5436
      %v5476 = vpack.c.b16 %v5443, %v5440
      %v5477 = vpack.c.b16 %v5444, %v5441
      %v5478 = vpack.c.b16 %v5445, %v5442
      %v5479 = vpack.c.b16 %v5449, %v5446
      %v5480 = vpack.c.b16 %v5450, %v5447
      %v5481 = vpack.c.b16 %v5451, %v5448
      %v5482 = vpack.c.b16 %v5455, %v5452
      %v5483 = vpack.c.b16 %v5456, %v5453
      %v5484 = vpack.c.b16 %v5457, %v5454
      %v5485 = vpack.c.b16 %v5461, %v5458
      %v5486 = vpack.c.b16 %v5462, %v5459
      %v5487 = vpack.c.b16 %v5463, %v5460
      %5512 = vmatprep.subr.bf16.mxu0 %v5465
      %5513 = vmatpush1.bf16.msra.mxu0 %v5464
      %5514 = vmatprep.subr.bf16.mxu0 %v5468
      %5515 = vmatpush1.bf16.msra.mxu0 %v5467
      %5516 = vmatprep.subr.bf16.mxu0 %v5471
      %5517 = vmatpush1.bf16.msra.mxu0 %v5470
      %5518 = vmatprep.subr.bf16.mxu0 %v5474
      %5519 = vmatpush1.bf16.msra.mxu0 %v5473
      %5520 = vmatprep.subr.bf16.mxu0 %v5477
      %5521 = vmatpush1.bf16.msra.mxu0 %v5476
      %5522 = vmatprep.subr.bf16.mxu0 %v5480
      %5523 = vmatpush1.bf16.msra.mxu0 %v5479
      %5524 = vmatprep.subr.bf16.mxu0 %v5483
      %5525 = vmatpush1.bf16.msra.mxu0 %v5482
      %5526 = vmatprep.subr.bf16.mxu0 %v5486
      %5527 = vmatpush1.bf16.msra.mxu0 %v5485
      %5528 = vmatprep.subr.bf16.mxu0 0
      %5529 = vmatpush1.bf16.msra.mxu0 0
      %5530 = vmatprep.subr.bf16.mxu0 0
      %5531 = vmatpush1.bf16.msra.mxu0 0
      %5532 = vmatprep.subr.bf16.mxu0 0
      %5533 = vmatpush1.bf16.msra.mxu0 0
      %5534 = vmatprep.subr.bf16.mxu0 0
      %5535 = vmatpush1.bf16.msra.mxu0 0
      %5536 = vmatprep.subr.bf16.mxu0 0
      %5537 = vmatpush1.bf16.msra.mxu0 0
      %5538 = vmatprep.subr.bf16.mxu0 0
      %5539 = vmatpush1.bf16.msra.mxu0 0
      %5540 = vmatprep.subr.bf16.mxu0 0
      %5541 = vmatpush1.bf16.msra.mxu0 0
      %5542 = vmatprep.subr.bf16.mxu0 0
      %5543 = vmatpush1.bf16.msra.mxu0 0
      %5544 = vmatprep.mubr.bf16.mxu0 0
      %5545 = vmatmul.mubr.bf16.gmra.mrb[0].mxu0 %v5334
      %v5546 = vpop.f32.mrb[0].mxu0
      %v5547 = vadd.f32 %v5372, %v5546
      %v5548 = vpop.f32.mrb[0].mxu0
      %v5549 = vadd.f32 %v5376, %v5548
      %v5550 = vpop.f32.mrb[0].mxu0
      %v5551 = vpop.f32.mrb[0].mxu0
      %5552 = vdwg.mxu0
      %5553 = vmatprep.subr.bf16.mxu0 0
      %5554 = vmatpush1.bf16.msra.mxu0 %v5466
      %5555 = vmatprep.subr.bf16.mxu0 0
      %5556 = vmatpush1.bf16.msra.mxu0 %v5469
      %5557 = vmatprep.subr.bf16.mxu0 0
      %5558 = vmatpush1.bf16.msra.mxu0 %v5472
      %5559 = vmatprep.subr.bf16.mxu0 0
      %5560 = vmatpush1.bf16.msra.mxu0 %v5475
      %5561 = vmatprep.subr.bf16.mxu0 0
      %5562 = vmatpush1.bf16.msra.mxu0 %v5478
      %5563 = vmatprep.subr.bf16.mxu0 0
      %5564 = vmatpush1.bf16.msra.mxu0 %v5481
      %5565 = vmatprep.subr.bf16.mxu0 0
      %5566 = vmatpush1.bf16.msra.mxu0 %v5484
      %5567 = vmatprep.subr.bf16.mxu0 0
      %5568 = vmatpush1.bf16.msra.mxu0 %v5487
      %5569 = vmatprep.subr.bf16.mxu0 0
      %5570 = vmatpush1.bf16.msra.mxu0 0
      %5571 = vmatprep.subr.bf16.mxu0 0
      %5572 = vmatpush1.bf16.msra.mxu0 0
      %5573 = vmatprep.subr.bf16.mxu0 0
      %5574 = vmatpush1.bf16.msra.mxu0 0
      %5575 = vmatprep.subr.bf16.mxu0 0
      %5576 = vmatpush1.bf16.msra.mxu0 0
      %5577 = vmatprep.subr.bf16.mxu0 0
      %5578 = vmatpush1.bf16.msra.mxu0 0
      %5579 = vmatprep.subr.bf16.mxu0 0
      %5580 = vmatpush1.bf16.msra.mxu0 0
      %5581 = vmatprep.subr.bf16.mxu0 0
      %5582 = vmatpush1.bf16.msra.mxu0 0
      %5583 = vmatprep.subr.bf16.mxu0 0
      %5584 = vmatpush1.bf16.msra.mxu0 0
      %5585 = vmatprep.mubr.bf16.mxu0 0
      %5586 = vmatmul.mubr.bf16.gmra.mrb[0].mxu0 %v5334
      %v5587 = vpop.f32.mrb[0].mxu0
      %v5588 = vadd.f32 %v5380, %v5587
      %v5589 = vpop.f32.mrb[0].mxu0
      %v5590 = vpop.f32.mrb[0].mxu0
      %v5591 = vpop.f32.mrb[0].mxu0
      %5592 = vdwg.mxu0
      %v5593 = vld [vmem:[%s820] sm:$0xff]
      %v5594 = vld [vmem:[%s822] sm:$0xff]
      %v5595 = vld [vmem:[%s822 + $0x8] sm:$0xff]
      %v5596 = vld [vmem:[%s822 + $0x10] sm:$0xff]
      %v5597 = vld [vmem:[%s822 + $0x18] sm:$0xff]
      %v5598 = vld [vmem:[%s822 + $0x20] sm:$0xff]
      %v5599 = vld [vmem:[%s822 + $0x28] sm:$0xff]
      %v5600 = vld [vmem:[%s822 + $0x30] sm:$0xff]
      %v5601 = vld [vmem:[%s822 + $0x38] sm:$0xff]
      %v5602 = vld [vmem:[%s822 + $0x40] sm:$0xff]
      %v5603 = vld [vmem:[%s822 + $0x48] sm:$0xff]
      %v5604 = vld [vmem:[%s822 + $0x50] sm:$0xff]
      %v5605 = vld [vmem:[%s822 + $0x58] sm:$0xff]
      %v5606 = vld [vmem:[%s822 + $0x60] sm:$0xff]
      %v5607 = vld [vmem:[%s822 + $0x68] sm:$0xff]
      %v5608 = vld [vmem:[%s822 + $0x70] sm:$0xff]
      %v5609 = vld [vmem:[%s822 + $0x78] sm:$0xff]
      %v5610 = vld [vmem:[%s839] sm:$0xf]
      %v5611 = vld [vmem:[%s839 + $0x4] sm:$0xf]
      %v5612 = vld [vmem:[%s839 + $0x8] sm:$0xf]
      %v5613 = vld [vmem:[%s839 + $0xc] sm:$0xf]
      %v5614 = vld [vmem:[%s839 + $0x10] sm:$0xf]
      %v5615 = vld [vmem:[%s839 + $0x14] sm:$0xf]
      %v5616 = vld [vmem:[%s839 + $0x18] sm:$0xf]
      %v5617 = vld [vmem:[%s839 + $0x1c] sm:$0xf]
      %v5618 = vld [vmem:[%s839 + $0x20] sm:$0xf]
      %v5619 = vld [vmem:[%s839 + $0x24] sm:$0xf]
      %v5620 = vld [vmem:[%s839 + $0x28] sm:$0xf]
      %v5621 = vld [vmem:[%s839 + $0x2c] sm:$0xf]
      %v5622 = vld [vmem:[%s839 + $0x30] sm:$0xf]
      %v5623 = vld [vmem:[%s839 + $0x34] sm:$0xf]
      %v5624 = vld [vmem:[%s839 + $0x38] sm:$0xf]
      %v5625 = vld [vmem:[%s839 + $0x3c] sm:$0xf]
      %v5626 = vpack.c.bf16 %v5593, %v5593
      %v5643 = vunpack.c.l.b16 %v5594
      %v5644 = vunpack.c.h.b16 %v5594
      %v5645 = vunpack.c.l.b16 %v5595
      %v5646 = vunpack.c.h.b16 %v5595
      %v5647 = vunpack.c.l.b16 %v5596
      %v5648 = vunpack.c.h.b16 %v5596
      %v5649 = vunpack.c.l.b16 %v5597
      %v5650 = vunpack.c.h.b16 %v5597
      %v5651 = vunpack.c.l.b16 %v5598
      %v5652 = vunpack.c.h.b16 %v5598
      %v5653 = vunpack.c.l.b16 %v5599
      %v5654 = vunpack.c.h.b16 %v5599
      %v5655 = vunpack.c.l.b16 %v5600
      %v5656 = vunpack.c.h.b16 %v5600
      %v5657 = vunpack.c.l.b16 %v5601
      %v5658 = vunpack.c.h.b16 %v5601
      %v5659 = vunpack.c.l.b16 %v5602
      %v5660 = vunpack.c.h.b16 %v5602
      %v5661 = vunpack.c.l.b16 %v5603
      %v5662 = vunpack.c.h.b16 %v5603
      %v5663 = vunpack.c.l.b16 %v5604
      %v5664 = vunpack.c.h.b16 %v5604
      %v5665 = vunpack.c.l.b16 %v5605
      %v5666 = vunpack.c.h.b16 %v5605
      %v5667 = vunpack.c.l.b16 %v5606
      %v5668 = vunpack.c.h.b16 %v5606
      %v5669 = vunpack.c.l.b16 %v5607
      %v5670 = vunpack.c.h.b16 %v5607
      %v5671 = vunpack.c.l.b16 %v5608
      %v5672 = vunpack.c.h.b16 %v5608
      %v5673 = vunpack.c.l.b16 %v5609
      %v5674 = vunpack.c.h.b16 %v5609
      %v5675 = vpack.c.b16 %v5645, %v5643
      %v5676 = vpack.c.b16 %v5646, %v5644
      %v5677 = vpack.c.b16 %v5649, %v5647
      %v5678 = vpack.c.b16 %v5650, %v5648
      %v5679 = vpack.c.b16 %v5653, %v5651
      %v5680 = vpack.c.b16 %v5654, %v5652
      %v5681 = vpack.c.b16 %v5657, %v5655
      %v5682 = vpack.c.b16 %v5658, %v5656
      %v5683 = vpack.c.b16 %v5661, %v5659
      %v5684 = vpack.c.b16 %v5662, %v5660
      %v5685 = vpack.c.b16 %v5665, %v5663
      %v5686 = vpack.c.b16 %v5666, %v5664
      %v5687 = vpack.c.b16 %v5669, %v5667
      %v5688 = vpack.c.b16 %v5670, %v5668
      %v5689 = vpack.c.b16 %v5673, %v5671
      %v5690 = vpack.c.b16 %v5674, %v5672
      %5707 = vmatprep.subr.bf16.mxu0 %v5676
      %5708 = vmatpush1.bf16.msra.mxu0 %v5675
      %5709 = vmatprep.subr.bf16.mxu0 %v5678
      %5710 = vmatpush1.bf16.msra.mxu0 %v5677
      %5711 = vmatprep.subr.bf16.mxu0 %v5680
      %5712 = vmatpush1.bf16.msra.mxu0 %v5679
      %5713 = vmatprep.subr.bf16.mxu0 %v5682
      %5714 = vmatpush1.bf16.msra.mxu0 %v5681
      %5715 = vmatprep.subr.bf16.mxu0 %v5684
      %5716 = vmatpush1.bf16.msra.mxu0 %v5683
      %5717 = vmatprep.subr.bf16.mxu0 %v5686
      %5718 = vmatpush1.bf16.msra.mxu0 %v5685
      %5719 = vmatprep.subr.bf16.mxu0 %v5688
      %5720 = vmatpush1.bf16.msra.mxu0 %v5687
      %5721 = vmatprep.subr.bf16.mxu0 %v5690
      %5722 = vmatpush1.bf16.msra.mxu0 %v5689
      %5723 = vmatprep.subr.bf16.mxu0 0
      %5724 = vmatpush1.bf16.msra.mxu0 0
      %5725 = vmatprep.subr.bf16.mxu0 0
      %5726 = vmatpush1.bf16.msra.mxu0 0
      %5727 = vmatprep.subr.bf16.mxu0 0
      %5728 = vmatpush1.bf16.msra.mxu0 0
      %5729 = vmatprep.subr.bf16.mxu0 0
      %5730 = vmatpush1.bf16.msra.mxu0 0
      %5731 = vmatprep.subr.bf16.mxu0 0
      %5732 = vmatpush1.bf16.msra.mxu0 0
      %5733 = vmatprep.subr.bf16.mxu0 0
      %5734 = vmatpush1.bf16.msra.mxu0 0
      %5735 = vmatprep.subr.bf16.mxu0 0
      %5736 = vmatpush1.bf16.msra.mxu0 0
      %5737 = vmatprep.subr.bf16.mxu0 0
      %5738 = vmatpush1.bf16.msra.mxu0 0
      %5739 = vmatprep.mubr.bf16.mxu0 0
      %5740 = vmatmul.mubr.bf16.gmra.mrb[0].mxu0 %v5626
      %v5741 = vpop.f32.mrb[0].mxu0
      %v5742 = vadd.f32 0.0, %v5741
      %v5743 = vpop.f32.mrb[0].mxu0
      %v5744 = vadd.f32 0.0, %v5743
      %v5745 = vpop.f32.mrb[0].mxu0
      %v5746 = vpop.f32.mrb[0].mxu0
      %5747 = vdwg.mxu0
      %v5748 = vadd.f32 %v5547, %v5742
      %v5749 = vxor.u32 %v5748, 2147483648
      %v5750 = vmul.f32 %v5749, 1.442695
      %v5751 = vpow.pop %v5750
      %v5752 = vadd.f32 %v5751, 1.0
      %v5753 = vrcp.pop %v5752
      %v5754 = vmul.f32 1.0, %v5753
      %v5755 = vadd.f32 %v5549, %v5744
      %v5756 = vxor.u32 %v5755, 2147483648
      %v5757 = vmul.f32 %v5756, 1.442695
      %v5758 = vpow.pop %v5757
      %v5759 = vadd.f32 %v5758, 1.0
      %v5760 = vrcp.pop %v5759
      %v5761 = vmul.f32 1.0, %v5760
      %v5762 = vmul.f32 %v5754, %v5593
      %v5763 = vpack.c.bf16 %v5762, %v5762
      %v5780 = vunpack.c.l.b16 %v5610
      %v5781 = vunpack.c.l.b16 %v5611
      %v5782 = vunpack.c.l.b16 %v5612
      %v5783 = vunpack.c.l.b16 %v5613
      %v5784 = vunpack.c.l.b16 %v5614
      %v5785 = vunpack.c.l.b16 %v5615
      %v5786 = vunpack.c.l.b16 %v5616
      %v5787 = vunpack.c.l.b16 %v5617
      %v5788 = vunpack.c.l.b16 %v5618
      %v5789 = vunpack.c.l.b16 %v5619
      %v5790 = vunpack.c.l.b16 %v5620
      %v5791 = vunpack.c.l.b16 %v5621
      %v5792 = vunpack.c.l.b16 %v5622
      %v5793 = vunpack.c.l.b16 %v5623
      %v5794 = vunpack.c.l.b16 %v5624
      %v5795 = vunpack.c.l.b16 %v5625
      %v5796 = vpack.c.b16 %v5781, %v5780
      %v5797 = vpack.c.b16 %v5783, %v5782
      %v5798 = vpack.c.b16 %v5785, %v5784
      %v5799 = vpack.c.b16 %v5787, %v5786
      %v5800 = vpack.c.b16 %v5789, %v5788
      %v5801 = vpack.c.b16 %v5791, %v5790
      %v5802 = vpack.c.b16 %v5793, %v5792
      %v5803 = vpack.c.b16 %v5795, %v5794
      %5812 = vmatprep.subr.bf16.mxu0 0
      %5813 = vmatpush1.bf16.msra.mxu0 %v5796
      %5814 = vmatprep.subr.bf16.mxu0 0
      %5815 = vmatpush1.bf16.msra.mxu0 %v5797
      %5816 = vmatprep.subr.bf16.mxu0 0
      %5817 = vmatpush1.bf16.msra.mxu0 %v5798
      %5818 = vmatprep.subr.bf16.mxu0 0
      %5819 = vmatpush1.bf16.msra.mxu0 %v5799
      %5820 = vmatprep.subr.bf16.mxu0 0
      %5821 = vmatpush1.bf16.msra.mxu0 %v5800
      %5822 = vmatprep.subr.bf16.mxu0 0
      %5823 = vmatpush1.bf16.msra.mxu0 %v5801
      %5824 = vmatprep.subr.bf16.mxu0 0
      %5825 = vmatpush1.bf16.msra.mxu0 %v5802
      %5826 = vmatprep.subr.bf16.mxu0 0
      %5827 = vmatpush1.bf16.msra.mxu0 %v5803
      %5828 = vmatprep.subr.bf16.mxu0 0
      %5829 = vmatpush1.bf16.msra.mxu0 0
      %5830 = vmatprep.subr.bf16.mxu0 0
      %5831 = vmatpush1.bf16.msra.mxu0 0
      %5832 = vmatprep.subr.bf16.mxu0 0
      %5833 = vmatpush1.bf16.msra.mxu0 0
      %5834 = vmatprep.subr.bf16.mxu0 0
      %5835 = vmatpush1.bf16.msra.mxu0 0
      %5836 = vmatprep.subr.bf16.mxu0 0
      %5837 = vmatpush1.bf16.msra.mxu0 0
      %5838 = vmatprep.subr.bf16.mxu0 0
      %5839 = vmatpush1.bf16.msra.mxu0 0
      %5840 = vmatprep.subr.bf16.mxu0 0
      %5841 = vmatpush1.bf16.msra.mxu0 0
      %5842 = vmatprep.subr.bf16.mxu0 0
      %5843 = vmatpush1.bf16.msra.mxu0 0
      %5844 = vmatprep.mubr.bf16.mxu0 0
      %5845 = vmatmul.mubr.bf16.gmra.mrb[0].mxu0 %v5763
      %v5846 = vpop.f32.mrb[0].mxu0
      %v5847 = vadd.f32 0.0, %v5846
      %v5848 = vpop.f32.mrb[0].mxu0
      %v5849 = vpop.f32.mrb[0].mxu0
      %v5850 = vpop.f32.mrb[0].mxu0
      %5851 = vdwg.mxu0
      %v5852 = vadd.f32 %v5588, %v5847
      %v5853 = vtanh.pop %v5852
      %v5854 = vsub.f32 1.0, %v5761
      %v5855 = vmul.f32 %v5854, %v5593
      %v5856 = vmul.f32 %v5761, %v5853
      %v5857 = vadd.f32 %v5855, %v5856
      %5858 = vst [vmem:[%s820] sm:$0xff] %v5857
      %5859 = vst [vmem:[%s281 + $0x30] sm:$0xff] %v5857
      %v5860 = vld [vmem:[%s275 + $0xa8] sm:$0xff]
      %v5861 = vld [vmem:[%s275 + $0xb0] sm:$0xff]
      %v5862 = vld [vmem:[%s275 + $0xb8] sm:$0xff]
      %v5863 = vld [vmem:[%s7] sm:$0xff]
      %v5864 = vld [vmem:[%s2] sm:$0xff]
      %v5865 = vld [vmem:[%s2 + $0x8] sm:$0xff]
      %v5866 = vld [vmem:[%s2 + $0x10] sm:$0xff]
      %v5867 = vld [vmem:[%s2 + $0x18] sm:$0xff]
      %v5868 = vld [vmem:[%s2 + $0x20] sm:$0xff]
      %v5869 = vld [vmem:[%s2 + $0x28] sm:$0xff]
      %v5870 = vld [vmem:[%s2 + $0x30] sm:$0xff]
      %v5871 = vld [vmem:[%s2 + $0x38] sm:$0xff]
      %v5872 = vld [vmem:[%s2 + $0x40] sm:$0xff]
      %v5873 = vld [vmem:[%s2 + $0x48] sm:$0xff]
      %v5874 = vld [vmem:[%s2 + $0x50] sm:$0xff]
      %v5875 = vld [vmem:[%s2 + $0x58] sm:$0xff]
      %v5876 = vld [vmem:[%s2 + $0x60] sm:$0xff]
      %v5877 = vld [vmem:[%s2 + $0x68] sm:$0xff]
      %v5878 = vld [vmem:[%s2 + $0x70] sm:$0xff]
      %v5879 = vld [vmem:[%s2 + $0x78] sm:$0xff]
      %v5880 = vld [vmem:[%s3] sm:$0xf]
      %v5881 = vld [vmem:[%s3 + $0x4] sm:$0xf]
      %v5882 = vld [vmem:[%s3 + $0x8] sm:$0xf]
      %v5883 = vld [vmem:[%s3 + $0xc] sm:$0xf]
      %v5884 = vld [vmem:[%s3 + $0x10] sm:$0xf]
      %v5885 = vld [vmem:[%s3 + $0x14] sm:$0xf]
      %v5886 = vld [vmem:[%s3 + $0x18] sm:$0xf]
      %v5887 = vld [vmem:[%s3 + $0x1c] sm:$0xf]
      %v5888 = vld [vmem:[%s3 + $0x20] sm:$0xf]
      %v5889 = vld [vmem:[%s3 + $0x24] sm:$0xf]
      %v5890 = vld [vmem:[%s3 + $0x28] sm:$0xf]
      %v5891 = vld [vmem:[%s3 + $0x2c] sm:$0xf]
      %v5892 = vld [vmem:[%s3 + $0x30] sm:$0xf]
      %v5893 = vld [vmem:[%s3 + $0x34] sm:$0xf]
      %v5894 = vld [vmem:[%s3 + $0x38] sm:$0xf]
      %v5895 = vld [vmem:[%s3 + $0x3c] sm:$0xf]
      %v5896 = vpack.c.bf16 %v5863, %v5863
      %v5913 = vunpack.c.l.b16 %v5864
      %v5914 = vunpack.c.h.b16 %v5864
      %v5915 = vunpack.c.l.b16 %v5865
      %v5916 = vunpack.c.h.b16 %v5865
      %v5917 = vunpack.c.l.b16 %v5866
      %v5918 = vunpack.c.h.b16 %v5866
      %v5919 = vunpack.c.l.b16 %v5867
      %v5920 = vunpack.c.h.b16 %v5867
      %v5921 = vunpack.c.l.b16 %v5868
      %v5922 = vunpack.c.h.b16 %v5868
      %v5923 = vunpack.c.l.b16 %v5869
      %v5924 = vunpack.c.h.b16 %v5869
      %v5925 = vunpack.c.l.b16 %v5870
      %v5926 = vunpack.c.h.b16 %v5870
      %v5927 = vunpack.c.l.b16 %v5871
      %v5928 = vunpack.c.h.b16 %v5871
      %v5929 = vunpack.c.l.b16 %v5872
      %v5930 = vunpack.c.h.b16 %v5872
      %v5931 = vunpack.c.l.b16 %v5873
      %v5932 = vunpack.c.h.b16 %v5873
      %v5933 = vunpack.c.l.b16 %v5874
      %v5934 = vunpack.c.h.b16 %v5874
      %v5935 = vunpack.c.l.b16 %v5875
      %v5936 = vunpack.c.h.b16 %v5875
      %v5937 = vunpack.c.l.b16 %v5876
      %v5938 = vunpack.c.h.b16 %v5876
      %v5939 = vunpack.c.l.b16 %v5877
      %v5940 = vunpack.c.h.b16 %v5877
      %v5941 = vunpack.c.l.b16 %v5878
      %v5942 = vunpack.c.h.b16 %v5878
      %v5943 = vunpack.c.l.b16 %v5879
      %v5944 = vunpack.c.h.b16 %v5879
      %v5945 = vpack.c.b16 %v5915, %v5913
      %v5946 = vpack.c.b16 %v5916, %v5914
      %v5947 = vpack.c.b16 %v5919, %v5917
      %v5948 = vpack.c.b16 %v5920, %v5918
      %v5949 = vpack.c.b16 %v5923, %v5921
      %v5950 = vpack.c.b16 %v5924, %v5922
      %v5951 = vpack.c.b16 %v5927, %v5925
      %v5952 = vpack.c.b16 %v5928, %v5926
      %v5953 = vpack.c.b16 %v5931, %v5929
      %v5954 = vpack.c.b16 %v5932, %v5930
      %v5955 = vpack.c.b16 %v5935, %v5933
      %v5956 = vpack.c.b16 %v5936, %v5934
      %v5957 = vpack.c.b16 %v5939, %v5937
      %v5958 = vpack.c.b16 %v5940, %v5938
      %v5959 = vpack.c.b16 %v5943, %v5941
      %v5960 = vpack.c.b16 %v5944, %v5942
      %5977 = vmatprep.subr.bf16.mxu0 %v5946
      %5978 = vmatpush1.bf16.msra.mxu0 %v5945
      %5979 = vmatprep.subr.bf16.mxu0 %v5948
      %5980 = vmatpush1.bf16.msra.mxu0 %v5947
      %5981 = vmatprep.subr.bf16.mxu0 %v5950
      %5982 = vmatpush1.bf16.msra.mxu0 %v5949
      %5983 = vmatprep.subr.bf16.mxu0 %v5952
      %5984 = vmatpush1.bf16.msra.mxu0 %v5951
      %5985 = vmatprep.subr.bf16.mxu0 %v5954
      %5986 = vmatpush1.bf16.msra.mxu0 %v5953
      %5987 = vmatprep.subr.bf16.mxu0 %v5956
      %5988 = vmatpush1.bf16.msra.mxu0 %v5955
      %5989 = vmatprep.subr.bf16.mxu0 %v5958
      %5990 = vmatpush1.bf16.msra.mxu0 %v5957
      %5991 = vmatprep.subr.bf16.mxu0 %v5960
      %5992 = vmatpush1.bf16.msra.mxu0 %v5959
      %5993 = vmatprep.subr.bf16.mxu0 0
      %5994 = vmatpush1.bf16.msra.mxu0 0
      %5995 = vmatprep.subr.bf16.mxu0 0
      %5996 = vmatpush1.bf16.msra.mxu0 0
      %5997 = vmatprep.subr.bf16.mxu0 0
      %5998 = vmatpush1.bf16.msra.mxu0 0
      %5999 = vmatprep.subr.bf16.mxu0 0
      %6000 = vmatpush1.bf16.msra.mxu0 0
      %6001 = vmatprep.subr.bf16.mxu0 0
      %6002 = vmatpush1.bf16.msra.mxu0 0
      %6003 = vmatprep.subr.bf16.mxu0 0
      %6004 = vmatpush1.bf16.msra.mxu0 0
      %6005 = vmatprep.subr.bf16.mxu0 0
      %6006 = vmatpush1.bf16.msra.mxu0 0
      %6007 = vmatprep.subr.bf16.mxu0 0
      %6008 = vmatpush1.bf16.msra.mxu0 0
      %6009 = vmatprep.mubr.bf16.mxu0 0
      %6010 = vmatmul.mubr.bf16.gmra.mrb[0].mxu0 %v5896
      %v6011 = vpop.f32.mrb[0].mxu0
      %v6012 = vadd.f32 0.0, %v6011
      %v6013 = vpop.f32.mrb[0].mxu0
      %v6014 = vadd.f32 0.0, %v6013
      %v6015 = vpop.f32.mrb[0].mxu0
      %v6016 = vpop.f32.mrb[0].mxu0
      %6017 = vdwg.mxu0
      %v6018 = vadd.f32 %v5860, %v6012
      %v6019 = vxor.u32 %v6018, 2147483648
      %v6020 = vmul.f32 %v6019, 1.442695
      %v6021 = vpow.pop %v6020
      %v6022 = vadd.f32 %v6021, 1.0
      %v6023 = vrcp.pop %v6022
      %v6024 = vmul.f32 1.0, %v6023
      %v6025 = vadd.f32 %v5861, %v6014
      %v6026 = vxor.u32 %v6025, 2147483648
      %v6027 = vmul.f32 %v6026, 1.442695
      %v6028 = vpow.pop %v6027
      %v6029 = vadd.f32 %v6028, 1.0
      %v6030 = vrcp.pop %v6029
      %v6031 = vmul.f32 1.0, %v6030
      %v6032 = vmul.f32 %v6024, %v5863
      %v6033 = vpack.c.bf16 %v6032, %v6032
      %v6050 = vunpack.c.l.b16 %v5880
      %v6051 = vunpack.c.l.b16 %v5881
      %v6052 = vunpack.c.l.b16 %v5882
      %v6053 = vunpack.c.l.b16 %v5883
      %v6054 = vunpack.c.l.b16 %v5884
      %v6055 = vunpack.c.l.b16 %v5885
      %v6056 = vunpack.c.l.b16 %v5886
      %v6057 = vunpack.c.l.b16 %v5887
      %v6058 = vunpack.c.l.b16 %v5888
      %v6059 = vunpack.c.l.b16 %v5889
      %v6060 = vunpack.c.l.b16 %v5890
      %v6061 = vunpack.c.l.b16 %v5891
      %v6062 = vunpack.c.l.b16 %v5892
      %v6063 = vunpack.c.l.b16 %v5893
      %v6064 = vunpack.c.l.b16 %v5894
      %v6065 = vunpack.c.l.b16 %v5895
      %v6066 = vpack.c.b16 %v6051, %v6050
      %v6067 = vpack.c.b16 %v6053, %v6052
      %v6068 = vpack.c.b16 %v6055, %v6054
      %v6069 = vpack.c.b16 %v6057, %v6056
      %v6070 = vpack.c.b16 %v6059, %v6058
      %v6071 = vpack.c.b16 %v6061, %v6060
      %v6072 = vpack.c.b16 %v6063, %v6062
      %v6073 = vpack.c.b16 %v6065, %v6064
      %6082 = vmatprep.subr.bf16.mxu0 0
      %6083 = vmatpush1.bf16.msra.mxu0 %v6066
      %6084 = vmatprep.subr.bf16.mxu0 0
      %6085 = vmatpush1.bf16.msra.mxu0 %v6067
      %6086 = vmatprep.subr.bf16.mxu0 0
      %6087 = vmatpush1.bf16.msra.mxu0 %v6068
      %6088 = vmatprep.subr.bf16.mxu0 0
      %6089 = vmatpush1.bf16.msra.mxu0 %v6069
      %6090 = vmatprep.subr.bf16.mxu0 0
      %6091 = vmatpush1.bf16.msra.mxu0 %v6070
      %6092 = vmatprep.subr.bf16.mxu0 0
      %6093 = vmatpush1.bf16.msra.mxu0 %v6071
      %6094 = vmatprep.subr.bf16.mxu0 0
      %6095 = vmatpush1.bf16.msra.mxu0 %v6072
      %6096 = vmatprep.subr.bf16.mxu0 0
      %6097 = vmatpush1.bf16.msra.mxu0 %v6073
      %6098 = vmatprep.subr.bf16.mxu0 0
      %6099 = vmatpush1.bf16.msra.mxu0 0
      %6100 = vmatprep.subr.bf16.mxu0 0
      %6101 = vmatpush1.bf16.msra.mxu0 0
      %6102 = vmatprep.subr.bf16.mxu0 0
      %6103 = vmatpush1.bf16.msra.mxu0 0
      %6104 = vmatprep.subr.bf16.mxu0 0
      %6105 = vmatpush1.bf16.msra.mxu0 0
      %6106 = vmatprep.subr.bf16.mxu0 0
      %6107 = vmatpush1.bf16.msra.mxu0 0
      %6108 = vmatprep.subr.bf16.mxu0 0
      %6109 = vmatpush1.bf16.msra.mxu0 0
      %6110 = vmatprep.subr.bf16.mxu0 0
      %6111 = vmatpush1.bf16.msra.mxu0 0
      %6112 = vmatprep.subr.bf16.mxu0 0
      %6113 = vmatpush1.bf16.msra.mxu0 0
      %6114 = vmatprep.mubr.bf16.mxu0 0
      %6115 = vmatmul.mubr.bf16.gmra.mrb[0].mxu0 %v6033
      %v6116 = vpop.f32.mrb[0].mxu0
      %v6117 = vadd.f32 0.0, %v6116
      %v6118 = vpop.f32.mrb[0].mxu0
      %v6119 = vpop.f32.mrb[0].mxu0
      %v6120 = vpop.f32.mrb[0].mxu0
      %6121 = vdwg.mxu0
      %v6122 = vadd.f32 %v5862, %v6117
      %v6123 = vtanh.pop %v6122
      %v6124 = vsub.f32 1.0, %v6031
      %v6125 = vmul.f32 %v6124, %v5863
      %v6126 = vmul.f32 %v6031, %v6123
      %v6127 = vadd.f32 %v6125, %v6126
      %6128 = vst [vmem:[%s7] sm:$0xff] %v6127
      %v6129 = vpack.c.bf16 %v6127, %v6127
      %v6130 = vld [vmem:[%s1] sm:$0xff]
      %v6131 = vld [vmem:[%s1 + $0x8] sm:$0xf]
      %v6132 = vld [vmem:[%s1 + $0xc] sm:$0xff]
      %v6133 = vld [vmem:[%s1 + $0x14] sm:$0xf]
      %v6134 = vld [vmem:[%s1 + $0x18] sm:$0xff]
      %v6135 = vld [vmem:[%s1 + $0x20] sm:$0xf]
      %v6136 = vld [vmem:[%s1 + $0x24] sm:$0xff]
      %v6137 = vld [vmem:[%s1 + $0x2c] sm:$0xf]
      %v6138 = vld [vmem:[%s1 + $0x30] sm:$0xff]
      %v6139 = vld [vmem:[%s1 + $0x38] sm:$0xf]
      %v6140 = vld [vmem:[%s1 + $0x3c] sm:$0xff]
      %v6141 = vld [vmem:[%s1 + $0x44] sm:$0xf]
      %v6142 = vld [vmem:[%s1 + $0x48] sm:$0xff]
      %v6143 = vld [vmem:[%s1 + $0x50] sm:$0xf]
      %v6144 = vld [vmem:[%s1 + $0x54] sm:$0xff]
      %v6145 = vld [vmem:[%s1 + $0x5c] sm:$0xf]
      %v6146 = vld [vmem:[%s1 + $0x60] sm:$0xff]
      %v6147 = vld [vmem:[%s1 + $0x68] sm:$0xf]
      %v6148 = vld [vmem:[%s1 + $0x6c] sm:$0xff]
      %v6149 = vld [vmem:[%s1 + $0x74] sm:$0xf]
      %v6150 = vld [vmem:[%s1 + $0x78] sm:$0xff]
      %v6151 = vld [vmem:[%s1 + $0x80] sm:$0xf]
      %v6152 = vld [vmem:[%s1 + $0x84] sm:$0xff]
      %v6153 = vld [vmem:[%s1 + $0x8c] sm:$0xf]
      %v6154 = vld [vmem:[%s1 + $0x90] sm:$0xff]
      %v6155 = vld [vmem:[%s1 + $0x98] sm:$0xf]
      %v6156 = vld [vmem:[%s1 + $0x9c] sm:$0xff]
      %v6157 = vld [vmem:[%s1 + $0xa4] sm:$0xf]
      %v6158 = vld [vmem:[%s1 + $0xa8] sm:$0xff]
      %v6159 = vld [vmem:[%s1 + $0xb0] sm:$0xf]
      %v6160 = vld [vmem:[%s1 + $0xb4] sm:$0xff]
      %v6161 = vld [vmem:[%s1 + $0xbc] sm:$0xf]
      %v6162 = vld [vmem:[%s4] sm:$0x7]
      %v6164 = vlaneseq
      %v6165 = vshrl.u32 %v6164, 7
      %v6166 = vsub.s32 0, %v6165
      %v6167 = vrot.slane %v6162, %v6166
      %v6168 = vlaneseq
      %v6169 = vshrl.u32 %v6168, 7
      %v6170 = vsub.s32 1, %v6169
      %v6171 = vrot.slane %v6162, %v6170
      %v6172 = vlaneseq
      %v6173 = vshrl.u32 %v6172, 7
      %v6174 = vsub.s32 2, %v6173
      %v6175 = vrot.slane %v6162, %v6174
      %v6211 = vunpack.c.l.b16 %v6130
      %v6212 = vunpack.c.h.b16 %v6130
      %v6213 = vunpack.c.l.b16 %v6131
      %v6214 = vunpack.c.l.b16 %v6132
      %v6215 = vunpack.c.h.b16 %v6132
      %v6216 = vunpack.c.l.b16 %v6133
      %v6217 = vunpack.c.l.b16 %v6134
      %v6218 = vunpack.c.h.b16 %v6134
      %v6219 = vunpack.c.l.b16 %v6135
      %v6220 = vunpack.c.l.b16 %v6136
      %v6221 = vunpack.c.h.b16 %v6136
      %v6222 = vunpack.c.l.b16 %v6137
      %v6223 = vunpack.c.l.b16 %v6138
      %v6224 = vunpack.c.h.b16 %v6138
      %v6225 = vunpack.c.l.b16 %v6139
      %v6226 = vunpack.c.l.b16 %v6140
      %v6227 = vunpack.c.h.b16 %v6140
      %v6228 = vunpack.c.l.b16 %v6141
      %v6229 = vunpack.c.l.b16 %v6142
      %v6230 = vunpack.c.h.b16 %v6142
      %v6231 = vunpack.c.l.b16 %v6143
      %v6232 = vunpack.c.l.b16 %v6144
      %v6233 = vunpack.c.h.b16 %v6144
      %v6234 = vunpack.c.l.b16 %v6145
      %v6235 = vunpack.c.l.b16 %v6146
      %v6236 = vunpack.c.h.b16 %v6146
      %v6237 = vunpack.c.l.b16 %v6147
      %v6238 = vunpack.c.l.b16 %v6148
      %v6239 = vunpack.c.h.b16 %v6148
      %v6240 = vunpack.c.l.b16 %v6149
      %v6241 = vunpack.c.l.b16 %v6150
      %v6242 = vunpack.c.h.b16 %v6150
      %v6243 = vunpack.c.l.b16 %v6151
      %v6244 = vunpack.c.l.b16 %v6152
      %v6245 = vunpack.c.h.b16 %v6152
      %v6246 = vunpack.c.l.b16 %v6153
      %v6247 = vunpack.c.l.b16 %v6154
      %v6248 = vunpack.c.h.b16 %v6154
      %v6249 = vunpack.c.l.b16 %v6155
      %v6250 = vunpack.c.l.b16 %v6156
      %v6251 = vunpack.c.h.b16 %v6156
      %v6252 = vunpack.c.l.b16 %v6157
      %v6253 = vunpack.c.l.b16 %v6158
      %v6254 = vunpack.c.h.b16 %v6158
      %v6255 = vunpack.c.l.b16 %v6159
      %v6256 = vunpack.c.l.b16 %v6160
      %v6257 = vunpack.c.h.b16 %v6160
      %v6258 = vunpack.c.l.b16 %v6161
      %v6259 = vpack.c.b16 %v6214, %v6211
      %v6260 = vpack.c.b16 %v6215, %v6212
      %v6261 = vpack.c.b16 %v6216, %v6213
      %v6262 = vpack.c.b16 %v6220, %v6217
      %v6263 = vpack.c.b16 %v6221, %v6218
      %v6264 = vpack.c.b16 %v6222, %v6219
      %v6265 = vpack.c.b16 %v6226, %v6223
      %v6266 = vpack.c.b16 %v6227, %v6224
      %v6267 = vpack.c.b16 %v6228, %v6225
      %v6268 = vpack.c.b16 %v6232, %v6229
      %v6269 = vpack.c.b16 %v6233, %v6230
      %v6270 = vpack.c.b16 %v6234, %v6231
      %v6271 = vpack.c.b16 %v6238, %v6235
      %v6272 = vpack.c.b16 %v6239, %v6236
      %v6273 = vpack.c.b16 %v6240, %v6237
      %v6274 = vpack.c.b16 %v6244, %v6241
      %v6275 = vpack.c.b16 %v6245, %v6242
      %v6276 = vpack.c.b16 %v6246, %v6243
      %v6277 = vpack.c.b16 %v6250, %v6247
      %v6278 = vpack.c.b16 %v6251, %v6248
      %v6279 = vpack.c.b16 %v6252, %v6249
      %v6280 = vpack.c.b16 %v6256, %v6253
      %v6281 = vpack.c.b16 %v6257, %v6254
      %v6282 = vpack.c.b16 %v6258, %v6255
      %6307 = vmatprep.subr.bf16.mxu0 %v6260
      %6308 = vmatpush1.bf16.msra.mxu0 %v6259
      %6309 = vmatprep.subr.bf16.mxu0 %v6263
      %6310 = vmatpush1.bf16.msra.mxu0 %v6262
      %6311 = vmatprep.subr.bf16.mxu0 %v6266
      %6312 = vmatpush1.bf16.msra.mxu0 %v6265
      %6313 = vmatprep.subr.bf16.mxu0 %v6269
      %6314 = vmatpush1.bf16.msra.mxu0 %v6268
      %6315 = vmatprep.subr.bf16.mxu0 %v6272
      %6316 = vmatpush1.bf16.msra.mxu0 %v6271
      %6317 = vmatprep.subr.bf16.mxu0 %v6275
      %6318 = vmatpush1.bf16.msra.mxu0 %v6274
      %6319 = vmatprep.subr.bf16.mxu0 %v6278
      %6320 = vmatpush1.bf16.msra.mxu0 %v6277
      %6321 = vmatprep.subr.bf16.mxu0 %v6281
      %6322 = vmatpush1.bf16.msra.mxu0 %v6280
      %6323 = vmatprep.subr.bf16.mxu0 0
      %6324 = vmatpush1.bf16.msra.mxu0 0
      %6325 = vmatprep.subr.bf16.mxu0 0
      %6326 = vmatpush1.bf16.msra.mxu0 0
      %6327 = vmatprep.subr.bf16.mxu0 0
      %6328 = vmatpush1.bf16.msra.mxu0 0
      %6329 = vmatprep.subr.bf16.mxu0 0
      %6330 = vmatpush1.bf16.msra.mxu0 0
      %6331 = vmatprep.subr.bf16.mxu0 0
      %6332 = vmatpush1.bf16.msra.mxu0 0
      %6333 = vmatprep.subr.bf16.mxu0 0
      %6334 = vmatpush1.bf16.msra.mxu0 0
      %6335 = vmatprep.subr.bf16.mxu0 0
      %6336 = vmatpush1.bf16.msra.mxu0 0
      %6337 = vmatprep.subr.bf16.mxu0 0
      %6338 = vmatpush1.bf16.msra.mxu0 0
      %6339 = vmatprep.mubr.bf16.mxu0 0
      %6340 = vmatmul.mubr.bf16.gmra.mrb[0].mxu0 %v6129
      %v6341 = vpop.f32.mrb[0].mxu0
      %v6342 = vadd.f32 %v6167, %v6341
      %v6343 = vpop.f32.mrb[0].mxu0
      %v6344 = vadd.f32 %v6171, %v6343
      %v6345 = vpop.f32.mrb[0].mxu0
      %v6346 = vpop.f32.mrb[0].mxu0
      %6347 = vdwg.mxu0
      %6348 = vmatprep.subr.bf16.mxu0 0
      %6349 = vmatpush1.bf16.msra.mxu0 %v6261
      %6350 = vmatprep.subr.bf16.mxu0 0
      %6351 = vmatpush1.bf16.msra.mxu0 %v6264
      %6352 = vmatprep.subr.bf16.mxu0 0
      %6353 = vmatpush1.bf16.msra.mxu0 %v6267
      %6354 = vmatprep.subr.bf16.mxu0 0
      %6355 = vmatpush1.bf16.msra.mxu0 %v6270
      %6356 = vmatprep.subr.bf16.mxu0 0
      %6357 = vmatpush1.bf16.msra.mxu0 %v6273
      %6358 = vmatprep.subr.bf16.mxu0 0
      %6359 = vmatpush1.bf16.msra.mxu0 %v6276
      %6360 = vmatprep.subr.bf16.mxu0 0
      %6361 = vmatpush1.bf16.msra.mxu0 %v6279
      %6362 = vmatprep.subr.bf16.mxu0 0
      %6363 = vmatpush1.bf16.msra.mxu0 %v6282
      %6364 = vmatprep.subr.bf16.mxu0 0
      %6365 = vmatpush1.bf16.msra.mxu0 0
      %6366 = vmatprep.subr.bf16.mxu0 0
      %6367 = vmatpush1.bf16.msra.mxu0 0
      %6368 = vmatprep.subr.bf16.mxu0 0
      %6369 = vmatpush1.bf16.msra.mxu0 0
      %6370 = vmatprep.subr.bf16.mxu0 0
      %6371 = vmatpush1.bf16.msra.mxu0 0
      %6372 = vmatprep.subr.bf16.mxu0 0
      %6373 = vmatpush1.bf16.msra.mxu0 0
      %6374 = vmatprep.subr.bf16.mxu0 0
      %6375 = vmatpush1.bf16.msra.mxu0 0
      %6376 = vmatprep.subr.bf16.mxu0 0
      %6377 = vmatpush1.bf16.msra.mxu0 0
      %6378 = vmatprep.subr.bf16.mxu0 0
      %6379 = vmatpush1.bf16.msra.mxu0 0
      %6380 = vmatprep.mubr.bf16.mxu0 0
      %6381 = vmatmul.mubr.bf16.gmra.mrb[0].mxu0 %v6129
      %v6382 = vpop.f32.mrb[0].mxu0
      %v6383 = vadd.f32 %v6175, %v6382
      %v6384 = vpop.f32.mrb[0].mxu0
      %v6385 = vpop.f32.mrb[0].mxu0
      %v6386 = vpop.f32.mrb[0].mxu0
      %6387 = vdwg.mxu0
      %v6388 = vld [vmem:[%s820] sm:$0xff]
      %v6389 = vld [vmem:[%s822] sm:$0xff]
      %v6390 = vld [vmem:[%s822 + $0x8] sm:$0xff]
      %v6391 = vld [vmem:[%s822 + $0x10] sm:$0xff]
      %v6392 = vld [vmem:[%s822 + $0x18] sm:$0xff]
      %v6393 = vld [vmem:[%s822 + $0x20] sm:$0xff]
      %v6394 = vld [vmem:[%s822 + $0x28] sm:$0xff]
      %v6395 = vld [vmem:[%s822 + $0x30] sm:$0xff]
      %v6396 = vld [vmem:[%s822 + $0x38] sm:$0xff]
      %v6397 = vld [vmem:[%s822 + $0x40] sm:$0xff]
      %v6398 = vld [vmem:[%s822 + $0x48] sm:$0xff]
      %v6399 = vld [vmem:[%s822 + $0x50] sm:$0xff]
      %v6400 = vld [vmem:[%s822 + $0x58] sm:$0xff]
      %v6401 = vld [vmem:[%s822 + $0x60] sm:$0xff]
      %v6402 = vld [vmem:[%s822 + $0x68] sm:$0xff]
      %v6403 = vld [vmem:[%s822 + $0x70] sm:$0xff]
      %v6404 = vld [vmem:[%s822 + $0x78] sm:$0xff]
      %v6405 = vld [vmem:[%s839] sm:$0xf]
      %v6406 = vld [vmem:[%s839 + $0x4] sm:$0xf]
      %v6407 = vld [vmem:[%s839 + $0x8] sm:$0xf]
      %v6408 = vld [vmem:[%s839 + $0xc] sm:$0xf]
      %v6409 = vld [vmem:[%s839 + $0x10] sm:$0xf]
      %v6410 = vld [vmem:[%s839 + $0x14] sm:$0xf]
      %v6411 = vld [vmem:[%s839 + $0x18] sm:$0xf]
      %v6412 = vld [vmem:[%s839 + $0x1c] sm:$0xf]
      %v6413 = vld [vmem:[%s839 + $0x20] sm:$0xf]
      %v6414 = vld [vmem:[%s839 + $0x24] sm:$0xf]
      %v6415 = vld [vmem:[%s839 + $0x28] sm:$0xf]
      %v6416 = vld [vmem:[%s839 + $0x2c] sm:$0xf]
      %v6417 = vld [vmem:[%s839 + $0x30] sm:$0xf]
      %v6418 = vld [vmem:[%s839 + $0x34] sm:$0xf]
      %v6419 = vld [vmem:[%s839 + $0x38] sm:$0xf]
      %v6420 = vld [vmem:[%s839 + $0x3c] sm:$0xf]
      %v6421 = vpack.c.bf16 %v6388, %v6388
      %v6438 = vunpack.c.l.b16 %v6389
      %v6439 = vunpack.c.h.b16 %v6389
      %v6440 = vunpack.c.l.b16 %v6390
      %v6441 = vunpack.c.h.b16 %v6390
      %v6442 = vunpack.c.l.b16 %v6391
      %v6443 = vunpack.c.h.b16 %v6391
      %v6444 = vunpack.c.l.b16 %v6392
      %v6445 = vunpack.c.h.b16 %v6392
      %v6446 = vunpack.c.l.b16 %v6393
      %v6447 = vunpack.c.h.b16 %v6393
      %v6448 = vunpack.c.l.b16 %v6394
      %v6449 = vunpack.c.h.b16 %v6394
      %v6450 = vunpack.c.l.b16 %v6395
      %v6451 = vunpack.c.h.b16 %v6395
      %v6452 = vunpack.c.l.b16 %v6396
      %v6453 = vunpack.c.h.b16 %v6396
      %v6454 = vunpack.c.l.b16 %v6397
      %v6455 = vunpack.c.h.b16 %v6397
      %v6456 = vunpack.c.l.b16 %v6398
      %v6457 = vunpack.c.h.b16 %v6398
      %v6458 = vunpack.c.l.b16 %v6399
      %v6459 = vunpack.c.h.b16 %v6399
      %v6460 = vunpack.c.l.b16 %v6400
      %v6461 = vunpack.c.h.b16 %v6400
      %v6462 = vunpack.c.l.b16 %v6401
      %v6463 = vunpack.c.h.b16 %v6401
      %v6464 = vunpack.c.l.b16 %v6402
      %v6465 = vunpack.c.h.b16 %v6402
      %v6466 = vunpack.c.l.b16 %v6403
      %v6467 = vunpack.c.h.b16 %v6403
      %v6468 = vunpack.c.l.b16 %v6404
      %v6469 = vunpack.c.h.b16 %v6404
      %v6470 = vpack.c.b16 %v6440, %v6438
      %v6471 = vpack.c.b16 %v6441, %v6439
      %v6472 = vpack.c.b16 %v6444, %v6442
      %v6473 = vpack.c.b16 %v6445, %v6443
      %v6474 = vpack.c.b16 %v6448, %v6446
      %v6475 = vpack.c.b16 %v6449, %v6447
      %v6476 = vpack.c.b16 %v6452, %v6450
      %v6477 = vpack.c.b16 %v6453, %v6451
      %v6478 = vpack.c.b16 %v6456, %v6454
      %v6479 = vpack.c.b16 %v6457, %v6455
      %v6480 = vpack.c.b16 %v6460, %v6458
      %v6481 = vpack.c.b16 %v6461, %v6459
      %v6482 = vpack.c.b16 %v6464, %v6462
      %v6483 = vpack.c.b16 %v6465, %v6463
      %v6484 = vpack.c.b16 %v6468, %v6466
      %v6485 = vpack.c.b16 %v6469, %v6467
      %6502 = vmatprep.subr.bf16.mxu0 %v6471
      %6503 = vmatpush1.bf16.msra.mxu0 %v6470
      %6504 = vmatprep.subr.bf16.mxu0 %v6473
      %6505 = vmatpush1.bf16.msra.mxu0 %v6472
      %6506 = vmatprep.subr.bf16.mxu0 %v6475
      %6507 = vmatpush1.bf16.msra.mxu0 %v6474
      %6508 = vmatprep.subr.bf16.mxu0 %v6477
      %6509 = vmatpush1.bf16.msra.mxu0 %v6476
      %6510 = vmatprep.subr.bf16.mxu0 %v6479
      %6511 = vmatpush1.bf16.msra.mxu0 %v6478
      %6512 = vmatprep.subr.bf16.mxu0 %v6481
      %6513 = vmatpush1.bf16.msra.mxu0 %v6480
      %6514 = vmatprep.subr.bf16.mxu0 %v6483
      %6515 = vmatpush1.bf16.msra.mxu0 %v6482
      %6516 = vmatprep.subr.bf16.mxu0 %v6485
      %6517 = vmatpush1.bf16.msra.mxu0 %v6484
      %6518 = vmatprep.subr.bf16.mxu0 0
      %6519 = vmatpush1.bf16.msra.mxu0 0
      %6520 = vmatprep.subr.bf16.mxu0 0
      %6521 = vmatpush1.bf16.msra.mxu0 0
      %6522 = vmatprep.subr.bf16.mxu0 0
      %6523 = vmatpush1.bf16.msra.mxu0 0
      %6524 = vmatprep.subr.bf16.mxu0 0
      %6525 = vmatpush1.bf16.msra.mxu0 0
      %6526 = vmatprep.subr.bf16.mxu0 0
      %6527 = vmatpush1.bf16.msra.mxu0 0
      %6528 = vmatprep.subr.bf16.mxu0 0
      %6529 = vmatpush1.bf16.msra.mxu0 0
      %6530 = vmatprep.subr.bf16.mxu0 0
      %6531 = vmatpush1.bf16.msra.mxu0 0
      %6532 = vmatprep.subr.bf16.mxu0 0
      %6533 = vmatpush1.bf16.msra.mxu0 0
      %6534 = vmatprep.mubr.bf16.mxu0 0
      %6535 = vmatmul.mubr.bf16.gmra.mrb[0].mxu0 %v6421
      %v6536 = vpop.f32.mrb[0].mxu0
      %v6537 = vadd.f32 0.0, %v6536
      %v6538 = vpop.f32.mrb[0].mxu0
      %v6539 = vadd.f32 0.0, %v6538
      %v6540 = vpop.f32.mrb[0].mxu0
      %v6541 = vpop.f32.mrb[0].mxu0
      %6542 = vdwg.mxu0
      %v6543 = vadd.f32 %v6342, %v6537
      %v6544 = vxor.u32 %v6543, 2147483648
      %v6545 = vmul.f32 %v6544, 1.442695
      %v6546 = vpow.pop %v6545
      %v6547 = vadd.f32 %v6546, 1.0
      %v6548 = vrcp.pop %v6547
      %v6549 = vmul.f32 1.0, %v6548
      %v6550 = vadd.f32 %v6344, %v6539
      %v6551 = vxor.u32 %v6550, 2147483648
      %v6552 = vmul.f32 %v6551, 1.442695
      %v6553 = vpow.pop %v6552
      %v6554 = vadd.f32 %v6553, 1.0
      %v6555 = vrcp.pop %v6554
      %v6556 = vmul.f32 1.0, %v6555
      %v6557 = vmul.f32 %v6549, %v6388
      %v6558 = vpack.c.bf16 %v6557, %v6557
      %v6575 = vunpack.c.l.b16 %v6405
      %v6576 = vunpack.c.l.b16 %v6406
      %v6577 = vunpack.c.l.b16 %v6407
      %v6578 = vunpack.c.l.b16 %v6408
      %v6579 = vunpack.c.l.b16 %v6409
      %v6580 = vunpack.c.l.b16 %v6410
      %v6581 = vunpack.c.l.b16 %v6411
      %v6582 = vunpack.c.l.b16 %v6412
      %v6583 = vunpack.c.l.b16 %v6413
      %v6584 = vunpack.c.l.b16 %v6414
      %v6585 = vunpack.c.l.b16 %v6415
      %v6586 = vunpack.c.l.b16 %v6416
      %v6587 = vunpack.c.l.b16 %v6417
      %v6588 = vunpack.c.l.b16 %v6418
      %v6589 = vunpack.c.l.b16 %v6419
      %v6590 = vunpack.c.l.b16 %v6420
      %v6591 = vpack.c.b16 %v6576, %v6575
      %v6592 = vpack.c.b16 %v6578, %v6577
      %v6593 = vpack.c.b16 %v6580, %v6579
      %v6594 = vpack.c.b16 %v6582, %v6581
      %v6595 = vpack.c.b16 %v6584, %v6583
      %v6596 = vpack.c.b16 %v6586, %v6585
      %v6597 = vpack.c.b16 %v6588, %v6587
      %v6598 = vpack.c.b16 %v6590, %v6589
      %6607 = vmatprep.subr.bf16.mxu0 0
      %6608 = vmatpush1.bf16.msra.mxu0 %v6591
      %6609 = vmatprep.subr.bf16.mxu0 0
      %6610 = vmatpush1.bf16.msra.mxu0 %v6592
      %6611 = vmatprep.subr.bf16.mxu0 0
      %6612 = vmatpush1.bf16.msra.mxu0 %v6593
      %6613 = vmatprep.subr.bf16.mxu0 0
      %6614 = vmatpush1.bf16.msra.mxu0 %v6594
      %6615 = vmatprep.subr.bf16.mxu0 0
      %6616 = vmatpush1.bf16.msra.mxu0 %v6595
      %6617 = vmatprep.subr.bf16.mxu0 0
      %6618 = vmatpush1.bf16.msra.mxu0 %v6596
      %6619 = vmatprep.subr.bf16.mxu0 0
      %6620 = vmatpush1.bf16.msra.mxu0 %v6597
      %6621 = vmatprep.subr.bf16.mxu0 0
      %6622 = vmatpush1.bf16.msra.mxu0 %v6598
      %6623 = vmatprep.subr.bf16.mxu0 0
      %6624 = vmatpush1.bf16.msra.mxu0 0
      %6625 = vmatprep.subr.bf16.mxu0 0
      %6626 = vmatpush1.bf16.msra.mxu0 0
      %6627 = vmatprep.subr.bf16.mxu0 0
      %6628 = vmatpush1.bf16.msra.mxu0 0
      %6629 = vmatprep.subr.bf16.mxu0 0
      %6630 = vmatpush1.bf16.msra.mxu0 0
      %6631 = vmatprep.subr.bf16.mxu0 0
      %6632 = vmatpush1.bf16.msra.mxu0 0
      %6633 = vmatprep.subr.bf16.mxu0 0
      %6634 = vmatpush1.bf16.msra.mxu0 0
      %6635 = vmatprep.subr.bf16.mxu0 0
      %6636 = vmatpush1.bf16.msra.mxu0 0
      %6637 = vmatprep.subr.bf16.mxu0 0
      %6638 = vmatpush1.bf16.msra.mxu0 0
      %6639 = vmatprep.mubr.bf16.mxu0 0
      %6640 = vmatmul.mubr.bf16.gmra.mrb[0].mxu0 %v6558
      %v6641 = vpop.f32.mrb[0].mxu0
      %v6642 = vadd.f32 0.0, %v6641
      %v6643 = vpop.f32.mrb[0].mxu0
      %v6644 = vpop.f32.mrb[0].mxu0
      %v6645 = vpop.f32.mrb[0].mxu0
      %6646 = vdwg.mxu0
      %v6647 = vadd.f32 %v6383, %v6642
      %v6648 = vtanh.pop %v6647
      %v6649 = vsub.f32 1.0, %v6556
      %v6650 = vmul.f32 %v6649, %v6388
      %v6651 = vmul.f32 %v6556, %v6648
      %v6652 = vadd.f32 %v6650, %v6651
      %6653 = vst [vmem:[%s820] sm:$0xff] %v6652
      %6654 = vst [vmem:[%s281 + $0x38] sm:$0xff] %v6652
      %s6655 = smul.u32 8, %s19
      %p6656 = scmp.lt.s32.totalorder %s6655, 15
      %s6657 = scalar_select %p6656, %s6655, 15
      %s6658 = smul.addr %s6657, 8
      %s6659 = scalar_lea.vmem %s6, %s6658
      // Predicated region
      $region49: #{gru_forward.4} parent=43 // pred_check
        %p6660 = pneg %p168
      $region50: #{gru_forward.4} parent=43 // pred_check_branch
        %6662 = sbr.rel (%p6660) target = $region52
      $region51: #{gru_forward.4} parent=43 // pred_region
        %s6663 = smul.u32 8, %s19
      $region52: #{gru_forward.4} parent=43 // pred_fallthru
        _
      // Predicated region
      $region53: #{gru_forward.4} parent=43 // pred_check
        %p6664 = pneg %p189
      $region54: #{gru_forward.4} parent=43 // pred_check_branch
        %6666 = sbr.rel (%p6664) target = $region56
      $region55: #{gru_forward.4} parent=43 // pred_region
        _
      $region56: #{gru_forward.4} parent=43 // pred_fallthru
        _
      // Predicated region
      $region57: #{gru_forward.4} parent=43 // pred_check
        %p6667 = pneg %p189
      $region58: #{gru_forward.4} parent=43 // pred_check_branch
        %6669 = sbr.rel (%p6667) target = $region60
      $region59: #{gru_forward.4} parent=43 // pred_region
        _
      $region60: #{gru_forward.4} parent=43 // pred_fallthru
        _
    $region44: #{gru_forward.4} parent=5 // pred_fallthru
      _
    %p6670 = scmp.le.s32.totalorder 2, %s14
    // Predicated region
    $region61: #{gru_forward.4} parent=5 // pred_check
      %p6671 = pneg %p6670
    $region62: #{gru_forward.4} parent=5 // pred_check_branch
      %6673 = sbr.rel (%p6671) target = $region64
    $region63: #{gru_forward.4} parent=5 // pred_region
      %s6674 = ssub.s32 %s14, 2
      // Predicated region
      $region65: #{gru_forward.4} parent=63 // pred_check
        %p6675 = pneg %p174
      $region66: #{gru_forward.4} parent=63 // pred_check_branch
        %6677 = sbr.rel (%p6675) target = $region68
      $region67: #{gru_forward.4} parent=63 // pred_region
        %s6678 = smul.u32 8, %s20
        %p6679 = scmp.lt.s32.totalorder %s6678, 15
        %s6680 = scalar_select %p6679, %s6678, 15
        %s6681 = smul.addr %s6680, 8
        %s6682 = scalar_lea.vmem %s6, %s6681
      $region68: #{gru_forward.4} parent=63 // pred_fallthru
        _
    $region64: #{gru_forward.4} parent=5 // pred_fallthru
      _
  $region6: #{gru_forward.4} parent=0 // loop_footer
    %s18 = sadd.s32 1, %s14
  $region7: #{gru_forward.4} parent=0 // loop_footer_branch
    %13 = sbr.rel target = $region3
  $region8: #{gru_forward.4} parent=0 // loop_exit
    _

</llo_original>
